<compile_context>
chip_gen: v7x
topology: tpu7x:2x2x1
jax: 0.10.0
libtpu: 0.0.40
codegen_flags: <defaults>
</compile_context>

<pallas_src>
import jax
import jax.numpy as jnp
from jax.experimental import pallas as pl
from jax.experimental.pallas import tpu as pltpu

LN_EPS = 1e-5
LANE = 128        # lane alignment; use 256 on v6e/v7x for hidden widths > 128 (MXU is 2x256x256)
SUBLANE = 8
DEFAULT_TILE_B = 512   # perf review: 512 (1024 if VMEM allows); never tiny tiles in prod


def _round_up(n, m):
    return ((n + m - 1) // m) * m


# -----------------------------------------------------------------------------
# Kernel
# -----------------------------------------------------------------------------
def make_maml_kernel(layer_meta):
    """Build the fused MLP kernel.

    layer_meta: tuple of (d_out_real, p_out_padded, bias_row, gamma_row, beta_row)
                per layer; gamma_row/beta_row == -1 for the final (un-normed) layer.
    Kernel args: (x_ref, w_0, ..., w_{L-1}, vec_tbl_ref, o_ref)
    """
    n_layers = len(layer_meta)

    def kernel(x_ref, *refs):
        w_refs = refs[:n_layers]
        vec_ref = refs[n_layers]
        o_ref = refs[n_layers + 1]

        h_bf16 = x_ref[...]                              # bf16 [tile_b, p_in]
        for l, (d_out, p_out, b_row, g_row, be_row) in enumerate(layer_meta):
            w = w_refs[l][...]                           # bf16, VMEM-resident
            # MXU: bf16 x bf16 -> f32 accumulate
            acc = jnp.dot(h_bf16, w, preferred_element_type=jnp.float32)
            b = vec_ref[b_row:b_row + 1, 0:p_out]        # (1, p_out) f32
            h = acc + b

            if g_row >= 0:
                # ReLU
                h = jnp.maximum(h, 0.0)
                # One-pass LayerNorm statistics over the REAL feature width
                # (padded lanes of h are exactly zero, so padded sums are exact).
                gamma = vec_ref[g_row:g_row + 1, 0:p_out]
                beta = vec_ref[be_row:be_row + 1, 0:p_out]
                inv_d = 1.0 / float(d_out)
                s = jnp.sum(h, axis=-1, keepdims=True)
                ss = jnp.sum(h * h, axis=-1, keepdims=True)
                mean = s * inv_d
                var = jnp.maximum(ss * inv_d - mean * mean, 0.0)  # cancellation guard
                scale = gamma * jax.lax.rsqrt(var + LN_EPS)       # rsqrt -> EUP slot
                h = (h - mean) * scale + beta                     # padded lanes -> 0
                h_bf16 = h.astype(jnp.bfloat16)                   # next MXU pass
            else:
                # Final Linear: lane-dense bf16 store of the padded output tile.
                o_ref[...] = h.astype(o_ref.dtype)

    return kernel


# -----------------------------------------------------------------------------
# Host-side parameter packing (padding + bf16 weights + packed vector table)
# -----------------------------------------------------------------------------
def pack_maml_params(params, input_dim, hidden_dims, output_dim, lane_align=LANE):
    dims = [input_dim] + list(hidden_dims) + [output_dim]
    pdims = [_round_up(d, lane_align) for d in dims]
    n_hidden = len(hidden_dims)
    maxw = max(pdims[1:])

    weights = []
    vec_rows = []
    layer_meta = []
    row = 0
    idx = 0
    for l in range(n_hidden):
        w, b, gamma, beta = params[idx:idx + 4]
        idx += 4
        wp = jnp.zeros((pdims[l], pdims[l + 1]), jnp.float32)
        wp = wp.at[:dims[l], :dims[l + 1]].set(w)
        weights.append(wp.astype(jnp.bfloat16))
        for v in (b, gamma, beta):
            vec_rows.append(jnp.zeros((maxw,), jnp.float32).at[:dims[l + 1]].set(v.reshape(-1)))
        layer_meta.append((dims[l + 1], pdims[l + 1], row, row + 1, row + 2))
        row += 3

    w, b = params[idx], params[idx + 1]
    wp = jnp.zeros((pdims[-2], pdims[-1]), jnp.float32)
    wp = wp.at[:dims[-2], :dims[-1]].set(w)
    weights.append(wp.astype(jnp.bfloat16))
    vec_rows.append(jnp.zeros((maxw,), jnp.float32).at[:dims[-1]].set(b.reshape(-1)))
    layer_meta.append((dims[-1], pdims[-1], row, -1, -1))
    row += 1

    n_rows = _round_up(row, SUBLANE)
    vec_tbl = jnp.zeros((n_rows, maxw), jnp.float32)
    vec_tbl = vec_tbl.at[:row, :].set(jnp.stack(vec_rows, axis=0))

    return weights, vec_tbl, tuple(layer_meta), pdims


# -----------------------------------------------------------------------------
# VMEM sizing helpers (generation-aware)
# -----------------------------------------------------------------------------
def _vmem_budget_bytes():
    """~85% of this chip's physical VMEM; conservative 64 MiB fallback (v7x-safe)."""
    try:
        cap = int(pltpu.get_tpu_info().vmem_capacity_bytes)
    except Exception:
        cap = 64 << 20
    return int(cap * 0.85)


def _vmem_need_bytes(tile_b, pdims, weights, vec_tbl, x_bufs, param_bufs, out_bufs=2):
    x_tile = tile_b * pdims[0] * 2             # bf16 input tile
    out_tile = tile_b * pdims[-1] * 2          # bf16 output tile
    w_bytes = sum(int(w.size) * 2 for w in weights)   # bf16 resident weights
    v_bytes = int(vec_tbl.size) * 4                   # f32 resident vector table
    act_bytes = 4 * tile_b * max(pdims) * 4           # in-flight f32 activations/temps
    return (x_bufs * x_tile + out_bufs * out_tile
            + param_bufs * (w_bytes + v_bytes) + act_bytes)


# -----------------------------------------------------------------------------
# Wrapper
# -----------------------------------------------------------------------------
def maml_forward(x, weights, vec_tbl, layer_meta, pdims, output_dim, *, tile_b=None):
    batch, in_dim = x.shape
    in_pad, out_pad = pdims[0], pdims[-1]

    b_round = _round_up(batch, SUBLANE)
    if tile_b is None:
        tile_b = DEFAULT_TILE_B
    tile_b = min(_round_up(tile_b, SUBLANE), b_round)

    budget = _vmem_budget_bytes()

    def need(tb):
        # Pessimistic across both spec variants (buffered-x / default double-buffered).
        return max(_vmem_need_bytes(tb, pdims, weights, vec_tbl, x_bufs=3, param_bufs=1),
                   _vmem_need_bytes(tb, pdims, weights, vec_tbl, x_bufs=2, param_bufs=2))

    # Explicitly shrink tile_b instead of silently clamping the VMEM request.
    while tile_b > SUBLANE and need(tile_b) > budget:
        tile_b = max(SUBLANE, _round_up(tile_b // 2, SUBLANE))
    # TODO(synk): if need(SUBLANE) still exceeds the budget (very wide/deep nets),
    # stream per-layer weights with pltpu.emit_pipeline instead of keeping them resident.

    b_pad = _round_up(batch, tile_b)
    grid_steps = b_pad // tile_b
    grid = (grid_steps,)

    # bf16 input: the first MXU pass truncates to bf16 anyway, so host-casting halves
    # the dominant per-step HBM read. Padded rows/lanes are zero and sliced away after.
    xp = jnp.zeros((b_pad, in_pad), jnp.bfloat16).at[:batch, :in_dim].set(
        x.astype(jnp.bfloat16))

    vmem_limit = int(min(max(need(tile_b) + (4 << 20), 16 << 20), budget))

    kernel = make_maml_kernel(layer_meta)
    out_shape = jax.ShapeDtypeStruct((b_pad, out_pad), jnp.bfloat16)
    cparams = pltpu.CompilerParams(
        dimension_semantics=("parallel",),   # shard batch tiles across TCs (v7x)
        vmem_limit_bytes=vmem_limit,
    )

    def build_specs(use_pipeline_mode):
        if use_pipeline_mode:
            # Deeper pipeline on the streamed x tiles; single-buffer the
            # grid-invariant weights / vector table (constant index_map).
            x_bufs = max(1, min(3, grid_steps))
            x_spec = pl.BlockSpec((tile_b, in_pad), lambda i: (i, 0),
                                  pipeline_mode=pl.Buffered(x_bufs))
            w_specs = [pl.BlockSpec(w.shape, lambda i: (0, 0),
                                    pipeline_mode=pl.Buffered(1)) for w in weights]
            vec_spec = pl.BlockSpec(vec_tbl.shape, lambda i: (0, 0),
                                    pipeline_mode=pl.Buffered(1))
        else:
            x_spec = pl.BlockSpec((tile_b, in_pad), lambda i: (i, 0))
            w_specs = [pl.BlockSpec(w.shape, lambda i: (0, 0)) for w in weights]
            vec_spec = pl.BlockSpec(vec_tbl.shape, lambda i: (0, 0))
        out_spec = pl.BlockSpec((tile_b, out_pad), lambda i: (i, 0))
        return [x_spec] + w_specs + [vec_spec], out_spec

    def run(use_pipeline_mode):
        in_specs, out_spec = build_specs(use_pipeline_mode)
        return pl.pallas_call(
            kernel,
            out_shape=out_shape,
            grid=grid,
            in_specs=in_specs,
            out_specs=out_spec,
            compiler_params=cparams,
        )(xp, *weights, vec_tbl)

    try:
        out_p = run(True)
    except Exception:
        # Fallback for JAX versions without BlockSpec pipeline_mode / Buffered(1).
        out_p = run(False)

    return out_p[:batch, :output_dim].astype(jnp.float32)


# -----------------------------------------------------------------------------
# Parameter init (PyTorch-like fan-in uniform) and references
# -----------------------------------------------------------------------------
def init_maml_params(key, input_dim, hidden_dims, output_dim):
    params = []
    dims = [input_dim] + list(hidden_dims)
    for i in range(len(dims) - 1):
        fan_in, fan_out = dims[i], dims[i + 1]
        key, kw, kb = jax.random.split(key, 3)
        bound = 1.0 / jnp.sqrt(fan_in)
        w = jax.random.uniform(kw, (fan_in, fan_out), jnp.float32, -bound, bound)
        b = jax.random.uniform(kb, (1, fan_out), jnp.float32, -bound, bound)
        gamma = jnp.ones((1, fan_out), jnp.float32)
        beta = jnp.zeros((1, fan_out), jnp.float32)
        params.extend([w, b, gamma, beta])
    fan_in = dims[-1]
    key, kw, kb = jax.random.split(key, 3)
    bound = 1.0 / jnp.sqrt(fan_in)
    w_out = jax.random.uniform(kw, (fan_in, output_dim), jnp.float32, -bound, bound)
    b_out = jax.random.uniform(kb, (1, output_dim), jnp.float32, -bound, bound)
    params.extend([w_out, b_out])
    return params


def maml_forward_ref_f32(x, params):
    """Pure f32 reference matching PyTorch semantics exactly."""
    n_hidden = (len(params) - 2) // 4
    h = x.astype(jnp.float32)
    idx = 0
    for _ in range(n_hidden):
        w, b, gamma, beta = params[idx:idx + 4]
        idx += 4
        h = h @ w + b
        h = jnp.maximum(h, 0.0)
        mean = jnp.mean(h, axis=-1, keepdims=True)
        var = jnp.mean(jnp.square(h - mean), axis=-1, keepdims=True)
        h = (h - mean) * jax.lax.rsqrt(var + LN_EPS) * gamma + beta
    w_out, b_out = params[idx], params[idx + 1]
    return h @ w_out + b_out


def maml_forward_ref_mimic(x, params):
    """Reference mimicking the kernel numerics (bf16 MXU operands, f32 accum,
    one-pass LayerNorm statistics, bf16 output rounding)."""
    n_hidden = (len(params) - 2) // 4
    h = x.astype(jnp.float32)
    idx = 0
    for _ in range(n_hidden):
        w, b, gamma, beta = params[idx:idx + 4]
        idx += 4
        h = jnp.dot(h.astype(jnp.bfloat16), w.astype(jnp.bfloat16),
                    preferred_element_type=jnp.float32) + b
        h = jnp.maximum(h, 0.0)
        d = h.shape[-1]
        s = jnp.sum(h, axis=-1, keepdims=True)
        ss = jnp.sum(h * h, axis=-1, keepdims=True)
        mean = s / d
        var = jnp.maximum(ss / d - mean * mean, 0.0)
        h = (h - mean) * (gamma * jax.lax.rsqrt(var + LN_EPS)) + beta
    w_out, b_out = params[idx], params[idx + 1]
    out = jnp.dot(h.astype(jnp.bfloat16), w_out.astype(jnp.bfloat16),
                  preferred_element_type=jnp.float32) + b_out
    return out.astype(jnp.bfloat16).astype(jnp.float32)


if __name__ == "__main__":
    input_dim = 16
    hidden_dims = [64, 64]
    output_dim = 8
    batch = 1024   # default tile_b=512 -> grid=(2,): exercises the pipelined, multi-tile path

    key = jax.random.PRNGKey(0)
    key, kx = jax.random.split(key)
    x = jax.random.normal(kx, (batch, input_dim), jnp.float32)
    params = init_maml_params(key, input_dim, hidden_dims, output_dim)

    weights, vec_tbl, layer_meta, pdims = pack_maml_params(
        params, input_dim, hidden_dims, output_dim)

    out = maml_forward(x, weights, vec_tbl, layer_meta, pdims, output_dim)
    out = jax.block_until_ready(out)

    ref_mimic = maml_forward_ref_mimic(x, params)
    ref_f32 = maml_forward_ref_f32(x, params)

    assert out.shape == (batch, output_dim)
    assert jnp.allclose(out, ref_mimic, atol=2e-2, rtol=2e-2), \
        "mismatch vs bf16-mimicking JAX reference"
    assert jnp.allclose(out, ref_f32, atol=1.5e-1, rtol=1.5e-1), \
        "mismatch vs full-f32 JAX reference"

    print("KERNEL_OK")
</pallas_src>

<mosaic_0001>
module attributes {stable_mosaic.version = 11 : i64} {
  func.func @kernel(%arg0: i32, %arg1: memref<512x128xbf16, #tpu.memory_space<vmem>>, %arg2: memref<128x128xbf16, #tpu.memory_space<vmem>>, %arg3: memref<128x128xbf16, #tpu.memory_space<vmem>>, %arg4: memref<128x128xbf16, #tpu.memory_space<vmem>>, %arg5: memref<8x128xf32, #tpu.memory_space<vmem>>, %arg6: memref<512x128xbf16, #tpu.memory_space<vmem>>) attributes {dimension_semantics = [#tpu.dimension_semantics<parallel>], iteration_bounds = array<i64: 2>, scalar_prefetch = 0 : i64, scratch_operands = 0 : i64, tpu.core_type = #tpu.core_type<tc>, window_params = [{pipeline_mode = #tpu.pipeline_mode<double_buffered>, transform_indices = @transform_0, window_bounds = array<i64: 512, 128>}, {pipeline_mode = #tpu.pipeline_mode<synchronous>, transform_indices = @transform_1, window_bounds = array<i64: 128, 128>}, {pipeline_mode = #tpu.pipeline_mode<synchronous>, transform_indices = @transform_2, window_bounds = array<i64: 128, 128>}, {pipeline_mode = #tpu.pipeline_mode<synchronous>, transform_indices = @transform_3, window_bounds = array<i64: 128, 128>}, {pipeline_mode = #tpu.pipeline_mode<synchronous>, transform_indices = @transform_4, window_bounds = array<i64: 8, 128>}, {transform_indices = @transform_5, window_bounds = array<i64: 512, 128>}]} {
    %c0 = arith.constant 0 : index
    %c0_0 = arith.constant 0 : index
    %0 = vector.load %arg1[%c0, %c0_0] : memref<512x128xbf16, #tpu.memory_space<vmem>>, vector<512x128xbf16>
    %c0_1 = arith.constant 0 : index
    %c0_2 = arith.constant 0 : index
    %1 = vector.load %arg2[%c0_1, %c0_2] : memref<128x128xbf16, #tpu.memory_space<vmem>>, vector<128x128xbf16>
    %cst = arith.constant dense<0.000000e+00> : vector<512x128xf32>
    %2 = tpu.matmul %0, %1, %cst {dimension_numbers = #tpu.dot_dimension_numbers<[1], [0], [0], [1], [0, 0, 1, 1], [], []>} : vector<512x128xbf16>, vector<128x128xbf16>, vector<512x128xf32> -> vector<512x128xf32>
    %c0_3 = arith.constant 0 : index
    %c0_4 = arith.constant 0 : index
    %3 = vector.load %arg5[%c0_3, %c0_4] : memref<8x128xf32, #tpu.memory_space<vmem>>, vector<1x128xf32>
    %4 = vector.broadcast %3 : vector<1x128xf32> to vector<512x128xf32>
    %5 = arith.addf %2, %4 : vector<512x128xf32>
    %cst_5 = arith.constant 0.000000e+00 : f32
    %6 = vector.broadcast %cst_5 : f32 to vector<512x128xf32>
    %7 = arith.maximumf %5, %6 : vector<512x128xf32>
    %c1 = arith.constant 1 : index
    %c0_6 = arith.constant 0 : index
    %8 = vector.load %arg5[%c1, %c0_6] : memref<8x128xf32, #tpu.memory_space<vmem>>, vector<1x128xf32>
    %c2 = arith.constant 2 : index
    %c0_7 = arith.constant 0 : index
    %9 = vector.load %arg5[%c2, %c0_7] : memref<8x128xf32, #tpu.memory_space<vmem>>, vector<1x128xf32>
    %cst_8 = arith.constant dense<0.000000e+00> : vector<512xf32>
    %10 = vector.multi_reduction <add>, %7, %cst_8 [1] : vector<512x128xf32> to vector<512xf32>
    %11 = vector.shape_cast %10 : vector<512xf32> to vector<512x1xf32>
    %12 = arith.mulf %7, %7 : vector<512x128xf32>
    %cst_9 = arith.constant dense<0.000000e+00> : vector<512xf32>
    %13 = vector.multi_reduction <add>, %12, %cst_9 [1] : vector<512x128xf32> to vector<512xf32>
    %14 = vector.shape_cast %13 : vector<512xf32> to vector<512x1xf32>
    %cst_10 = arith.constant 1.562500e-02 : f32
    %15 = vector.broadcast %cst_10 : f32 to vector<512x1xf32>
    %16 = arith.mulf %11, %15 : vector<512x1xf32>
    %cst_11 = arith.constant 1.562500e-02 : f32
    %17 = vector.broadcast %cst_11 : f32 to vector<512x1xf32>
    %18 = arith.mulf %14, %17 : vector<512x1xf32>
    %19 = arith.mulf %16, %16 : vector<512x1xf32>
    %20 = arith.subf %18, %19 : vector<512x1xf32>
    %cst_12 = arith.constant 0.000000e+00 : f32
    %21 = vector.broadcast %cst_12 : f32 to vector<512x1xf32>
    %22 = arith.maximumf %20, %21 : vector<512x1xf32>
    %cst_13 = arith.constant 9.99999974E-6 : f32
    %23 = vector.broadcast %cst_13 : f32 to vector<512x1xf32>
    %24 = arith.addf %22, %23 : vector<512x1xf32>
    %25 = math.rsqrt %24 : vector<512x1xf32>
    %26 = vector.broadcast %8 : vector<1x128xf32> to vector<512x128xf32>
    %27 = vector.broadcast %25 : vector<512x1xf32> to vector<512x128xf32>
    %28 = arith.mulf %26, %27 : vector<512x128xf32>
    %29 = vector.broadcast %16 : vector<512x1xf32> to vector<512x128xf32>
    %30 = arith.subf %7, %29 : vector<512x128xf32>
    %31 = arith.mulf %30, %28 : vector<512x128xf32>
    %32 = vector.broadcast %9 : vector<1x128xf32> to vector<512x128xf32>
    %33 = arith.addf %31, %32 : vector<512x128xf32>
    %34 = arith.truncf %33 : vector<512x128xf32> to vector<512x128xbf16>
    %c0_14 = arith.constant 0 : index
    %c0_15 = arith.constant 0 : index
    %35 = vector.load %arg3[%c0_14, %c0_15] : memref<128x128xbf16, #tpu.memory_space<vmem>>, vector<128x128xbf16>
    %cst_16 = arith.constant dense<0.000000e+00> : vector<512x128xf32>
    %36 = tpu.matmul %34, %35, %cst_16 {dimension_numbers = #tpu.dot_dimension_numbers<[1], [0], [0], [1], [0, 0, 1, 1], [], []>} : vector<512x128xbf16>, vector<128x128xbf16>, vector<512x128xf32> -> vector<512x128xf32>
    %c3 = arith.constant 3 : index
    %c0_17 = arith.constant 0 : index
    %37 = vector.load %arg5[%c3, %c0_17] : memref<8x128xf32, #tpu.memory_space<vmem>>, vector<1x128xf32>
    %38 = vector.broadcast %37 : vector<1x128xf32> to vector<512x128xf32>
    %39 = arith.addf %36, %38 : vector<512x128xf32>
    %cst_18 = arith.constant 0.000000e+00 : f32
    %40 = vector.broadcast %cst_18 : f32 to vector<512x128xf32>
    %41 = arith.maximumf %39, %40 : vector<512x128xf32>
    %c4 = arith.constant 4 : index
    %c0_19 = arith.constant 0 : index
    %42 = vector.load %arg5[%c4, %c0_19] : memref<8x128xf32, #tpu.memory_space<vmem>>, vector<1x128xf32>
    %c5 = arith.constant 5 : index
    %c0_20 = arith.constant 0 : index
    %43 = vector.load %arg5[%c5, %c0_20] : memref<8x128xf32, #tpu.memory_space<vmem>>, vector<1x128xf32>
    %cst_21 = arith.constant dense<0.000000e+00> : vector<512xf32>
    %44 = vector.multi_reduction <add>, %41, %cst_21 [1] : vector<512x128xf32> to vector<512xf32>
    %45 = vector.shape_cast %44 : vector<512xf32> to vector<512x1xf32>
    %46 = arith.mulf %41, %41 : vector<512x128xf32>
    %cst_22 = arith.constant dense<0.000000e+00> : vector<512xf32>
    %47 = vector.multi_reduction <add>, %46, %cst_22 [1] : vector<512x128xf32> to vector<512xf32>
    %48 = vector.shape_cast %47 : vector<512xf32> to vector<512x1xf32>
    %cst_23 = arith.constant 1.562500e-02 : f32
    %49 = vector.broadcast %cst_23 : f32 to vector<512x1xf32>
    %50 = arith.mulf %45, %49 : vector<512x1xf32>
    %cst_24 = arith.constant 1.562500e-02 : f32
    %51 = vector.broadcast %cst_24 : f32 to vector<512x1xf32>
    %52 = arith.mulf %48, %51 : vector<512x1xf32>
    %53 = arith.mulf %50, %50 : vector<512x1xf32>
    %54 = arith.subf %52, %53 : vector<512x1xf32>
    %cst_25 = arith.constant 0.000000e+00 : f32
    %55 = vector.broadcast %cst_25 : f32 to vector<512x1xf32>
    %56 = arith.maximumf %54, %55 : vector<512x1xf32>
    %cst_26 = arith.constant 9.99999974E-6 : f32
    %57 = vector.broadcast %cst_26 : f32 to vector<512x1xf32>
    %58 = arith.addf %56, %57 : vector<512x1xf32>
    %59 = math.rsqrt %58 : vector<512x1xf32>
    %60 = vector.broadcast %42 : vector<1x128xf32> to vector<512x128xf32>
    %61 = vector.broadcast %59 : vector<512x1xf32> to vector<512x128xf32>
    %62 = arith.mulf %60, %61 : vector<512x128xf32>
    %63 = vector.broadcast %50 : vector<512x1xf32> to vector<512x128xf32>
    %64 = arith.subf %41, %63 : vector<512x128xf32>
    %65 = arith.mulf %64, %62 : vector<512x128xf32>
    %66 = vector.broadcast %43 : vector<1x128xf32> to vector<512x128xf32>
    %67 = arith.addf %65, %66 : vector<512x128xf32>
    %68 = arith.truncf %67 : vector<512x128xf32> to vector<512x128xbf16>
    %c0_27 = arith.constant 0 : index
    %c0_28 = arith.constant 0 : index
    %69 = vector.load %arg4[%c0_27, %c0_28] : memref<128x128xbf16, #tpu.memory_space<vmem>>, vector<128x128xbf16>
    %cst_29 = arith.constant dense<0.000000e+00> : vector<512x128xf32>
    %70 = tpu.matmul %68, %69, %cst_29 {dimension_numbers = #tpu.dot_dimension_numbers<[1], [0], [0], [1], [0, 0, 1, 1], [], []>} : vector<512x128xbf16>, vector<128x128xbf16>, vector<512x128xf32> -> vector<512x128xf32>
    %c6 = arith.constant 6 : index
    %c0_30 = arith.constant 0 : index
    %71 = vector.load %arg5[%c6, %c0_30] : memref<8x128xf32, #tpu.memory_space<vmem>>, vector<1x128xf32>
    %72 = vector.broadcast %71 : vector<1x128xf32> to vector<512x128xf32>
    %73 = arith.addf %70, %72 : vector<512x128xf32>
    %74 = arith.truncf %73 : vector<512x128xf32> to vector<512x128xbf16>
    %c0_31 = arith.constant 0 : index
    %c0_32 = arith.constant 0 : index
    %75 = vector.load %arg6[%c0_31, %c0_32] : memref<512x128xbf16, #tpu.memory_space<vmem>>, vector<512x128xbf16>
    tpu.vector_store %arg6[%c0_31, %c0_32], %74 {strides = array<i32>} : memref<512x128xbf16, #tpu.memory_space<vmem>>, vector<512x128xbf16>,
    return
  }
  func.func @transform_0(%arg0: i32) -> (i32, i32) {
    %c0_i32 = arith.constant 0 : i32
    %c0_i32_0 = arith.constant 0 : i32
    return %arg0, %c0_i32 : i32, i32
  }
  func.func @transform_1(%arg0: i32) -> (i32, i32) {
    %c0_i32 = arith.constant 0 : i32
    %c0_i32_0 = arith.constant 0 : i32
    %c0_i32_1 = arith.constant 0 : i32
    return %c0_i32, %c0_i32_0 : i32, i32
  }
  func.func @transform_2(%arg0: i32) -> (i32, i32) {
    %c0_i32 = arith.constant 0 : i32
    %c0_i32_0 = arith.constant 0 : i32
    %c0_i32_1 = arith.constant 0 : i32
    return %c0_i32, %c0_i32_0 : i32, i32
  }
  func.func @transform_3(%arg0: i32) -> (i32, i32) {
    %c0_i32 = arith.constant 0 : i32
    %c0_i32_0 = arith.constant 0 : i32
    %c0_i32_1 = arith.constant 0 : i32
    return %c0_i32, %c0_i32_0 : i32, i32
  }
  func.func @transform_4(%arg0: i32) -> (i32, i32) {
    %c0_i32 = arith.constant 0 : i32
    %c0_i32_0 = arith.constant 0 : i32
    %c0_i32_1 = arith.constant 0 : i32
    return %c0_i32, %c0_i32_0 : i32, i32
  }
  func.func @transform_5(%arg0: i32) -> (i32, i32) {
    %c0_i32 = arith.constant 0 : i32
    %c0_i32_0 = arith.constant 0 : i32
    return %arg0, %c0_i32 : i32, i32
  }
}

module attributes {stable_mosaic.version = 11 : i64} {
  func.func @kernel(%arg0: i32, %arg1: memref<512x128xbf16, #tpu.memory_space<vmem>>, %arg2: memref<128x128xbf16, #tpu.memory_space<vmem>>, %arg3: memref<128x128xbf16, #tpu.memory_space<vmem>>, %arg4: memref<128x128xbf16, #tpu.memory_space<vmem>>, %arg5: memref<8x128xf32, #tpu.memory_space<vmem>>, %arg6: memref<512x128xbf16, #tpu.memory_space<vmem>>) attributes {dimension_semantics = [#tpu.dimension_semantics<parallel>], iteration_bounds = array<i64: 2>, scalar_prefetch = 0 : i64, scratch_operands = 0 : i64, tpu.core_type = #tpu.core_type<tc>, window_params = [{transform_indices = @transform_0, window_bounds = array<i64: 512, 128>}, {pipeline_mode = #tpu.pipeline_mode<synchronous>, transform_indices = @transform_1, window_bounds = array<i64: 128, 128>}, {pipeline_mode = #tpu.pipeline_mode<synchronous>, transform_indices = @transform_2, window_bounds = array<i64: 128, 128>}, {pipeline_mode = #tpu.pipeline_mode<synchronous>, transform_indices = @transform_3, window_bounds = array<i64: 128, 128>}, {pipeline_mode = #tpu.pipeline_mode<synchronous>, transform_indices = @transform_4, window_bounds = array<i64: 8, 128>}, {transform_indices = @transform_5, window_bounds = array<i64: 512, 128>}]} {
    %c0 = arith.constant 0 : index
    %c0_0 = arith.constant 0 : index
    %0 = vector.load %arg1[%c0, %c0_0] : memref<512x128xbf16, #tpu.memory_space<vmem>>, vector<512x128xbf16>
    %c0_1 = arith.constant 0 : index
    %c0_2 = arith.constant 0 : index
    %1 = vector.load %arg2[%c0_1, %c0_2] : memref<128x128xbf16, #tpu.memory_space<vmem>>, vector<128x128xbf16>
    %cst = arith.constant dense<0.000000e+00> : vector<512x128xf32>
    %2 = tpu.matmul %0, %1, %cst {dimension_numbers = #tpu.dot_dimension_numbers<[1], [0], [0], [1], [0, 0, 1, 1], [], []>} : vector<512x128xbf16>, vector<128x128xbf16>, vector<512x128xf32> -> vector<512x128xf32>
    %c0_3 = arith.constant 0 : index
    %c0_4 = arith.constant 0 : index
    %3 = vector.load %arg5[%c0_3, %c0_4] : memref<8x128xf32, #tpu.memory_space<vmem>>, vector<1x128xf32>
    %4 = vector.broadcast %3 : vector<1x128xf32> to vector<512x128xf32>
    %5 = arith.addf %2, %4 : vector<512x128xf32>
    %cst_5 = arith.constant 0.000000e+00 : f32
    %6 = vector.broadcast %cst_5 : f32 to vector<512x128xf32>
    %7 = arith.maximumf %5, %6 : vector<512x128xf32>
    %c1 = arith.constant 1 : index
    %c0_6 = arith.constant 0 : index
    %8 = vector.load %arg5[%c1, %c0_6] : memref<8x128xf32, #tpu.memory_space<vmem>>, vector<1x128xf32>
    %c2 = arith.constant 2 : index
    %c0_7 = arith.constant 0 : index
    %9 = vector.load %arg5[%c2, %c0_7] : memref<8x128xf32, #tpu.memory_space<vmem>>, vector<1x128xf32>
    %cst_8 = arith.constant dense<0.000000e+00> : vector<512xf32>
    %10 = vector.multi_reduction <add>, %7, %cst_8 [1] : vector<512x128xf32> to vector<512xf32>
    %11 = vector.shape_cast %10 : vector<512xf32> to vector<512x1xf32>
    %12 = arith.mulf %7, %7 : vector<512x128xf32>
    %cst_9 = arith.constant dense<0.000000e+00> : vector<512xf32>
    %13 = vector.multi_reduction <add>, %12, %cst_9 [1] : vector<512x128xf32> to vector<512xf32>
    %14 = vector.shape_cast %13 : vector<512xf32> to vector<512x1xf32>
    %cst_10 = arith.constant 1.562500e-02 : f32
    %15 = vector.broadcast %cst_10 : f32 to vector<512x1xf32>
    %16 = arith.mulf %11, %15 : vector<512x1xf32>
    %cst_11 = arith.constant 1.562500e-02 : f32
    %17 = vector.broadcast %cst_11 : f32 to vector<512x1xf32>
    %18 = arith.mulf %14, %17 : vector<512x1xf32>
    %19 = arith.mulf %16, %16 : vector<512x1xf32>
    %20 = arith.subf %18, %19 : vector<512x1xf32>
    %cst_12 = arith.constant 0.000000e+00 : f32
    %21 = vector.broadcast %cst_12 : f32 to vector<512x1xf32>
    %22 = arith.maximumf %20, %21 : vector<512x1xf32>
    %cst_13 = arith.constant 9.99999974E-6 : f32
    %23 = vector.broadcast %cst_13 : f32 to vector<512x1xf32>
    %24 = arith.addf %22, %23 : vector<512x1xf32>
    %25 = math.rsqrt %24 : vector<512x1xf32>
    %26 = vector.broadcast %8 : vector<1x128xf32> to vector<512x128xf32>
    %27 = vector.broadcast %25 : vector<512x1xf32> to vector<512x128xf32>
    %28 = arith.mulf %26, %27 : vector<512x128xf32>
    %29 = vector.broadcast %16 : vector<512x1xf32> to vector<512x128xf32>
    %30 = arith.subf %7, %29 : vector<512x128xf32>
    %31 = arith.mulf %30, %28 : vector<512x128xf32>
    %32 = vector.broadcast %9 : vector<1x128xf32> to vector<512x128xf32>
    %33 = arith.addf %31, %32 : vector<512x128xf32>
    %34 = arith.truncf %33 : vector<512x128xf32> to vector<512x128xbf16>
    %c0_14 = arith.constant 0 : index
    %c0_15 = arith.constant 0 : index
    %35 = vector.load %arg3[%c0_14, %c0_15] : memref<128x128xbf16, #tpu.memory_space<vmem>>, vector<128x128xbf16>
    %cst_16 = arith.constant dense<0.000000e+00> : vector<512x128xf32>
    %36 = tpu.matmul %34, %35, %cst_16 {dimension_numbers = #tpu.dot_dimension_numbers<[1], [0], [0], [1], [0, 0, 1, 1], [], []>} : vector<512x128xbf16>, vector<128x128xbf16>, vector<512x128xf32> -> vector<512x128xf32>
    %c3 = arith.constant 3 : index
    %c0_17 = arith.constant 0 : index
    %37 = vector.load %arg5[%c3, %c0_17] : memref<8x128xf32, #tpu.memory_space<vmem>>, vector<1x128xf32>
    %38 = vector.broadcast %37 : vector<1x128xf32> to vector<512x128xf32>
    %39 = arith.addf %36, %38 : vector<512x128xf32>
    %cst_18 = arith.constant 0.000000e+00 : f32
    %40 = vector.broadcast %cst_18 : f32 to vector<512x128xf32>
    %41 = arith.maximumf %39, %40 : vector<512x128xf32>
    %c4 = arith.constant 4 : index
    %c0_19 = arith.constant 0 : index
    %42 = vector.load %arg5[%c4, %c0_19] : memref<8x128xf32, #tpu.memory_space<vmem>>, vector<1x128xf32>
    %c5 = arith.constant 5 : index
    %c0_20 = arith.constant 0 : index
    %43 = vector.load %arg5[%c5, %c0_20] : memref<8x128xf32, #tpu.memory_space<vmem>>, vector<1x128xf32>
    %cst_21 = arith.constant dense<0.000000e+00> : vector<512xf32>
    %44 = vector.multi_reduction <add>, %41, %cst_21 [1] : vector<512x128xf32> to vector<512xf32>
    %45 = vector.shape_cast %44 : vector<512xf32> to vector<512x1xf32>
    %46 = arith.mulf %41, %41 : vector<512x128xf32>
    %cst_22 = arith.constant dense<0.000000e+00> : vector<512xf32>
    %47 = vector.multi_reduction <add>, %46, %cst_22 [1] : vector<512x128xf32> to vector<512xf32>
    %48 = vector.shape_cast %47 : vector<512xf32> to vector<512x1xf32>
    %cst_23 = arith.constant 1.562500e-02 : f32
    %49 = vector.broadcast %cst_23 : f32 to vector<512x1xf32>
    %50 = arith.mulf %45, %49 : vector<512x1xf32>
    %cst_24 = arith.constant 1.562500e-02 : f32
    %51 = vector.broadcast %cst_24 : f32 to vector<512x1xf32>
    %52 = arith.mulf %48, %51 : vector<512x1xf32>
    %53 = arith.mulf %50, %50 : vector<512x1xf32>
    %54 = arith.subf %52, %53 : vector<512x1xf32>
    %cst_25 = arith.constant 0.000000e+00 : f32
    %55 = vector.broadcast %cst_25 : f32 to vector<512x1xf32>
    %56 = arith.maximumf %54, %55 : vector<512x1xf32>
    %cst_26 = arith.constant 9.99999974E-6 : f32
    %57 = vector.broadcast %cst_26 : f32 to vector<512x1xf32>
    %58 = arith.addf %56, %57 : vector<512x1xf32>
    %59 = math.rsqrt %58 : vector<512x1xf32>
    %60 = vector.broadcast %42 : vector<1x128xf32> to vector<512x128xf32>
    %61 = vector.broadcast %59 : vector<512x1xf32> to vector<512x128xf32>
    %62 = arith.mulf %60, %61 : vector<512x128xf32>
    %63 = vector.broadcast %50 : vector<512x1xf32> to vector<512x128xf32>
    %64 = arith.subf %41, %63 : vector<512x128xf32>
    %65 = arith.mulf %64, %62 : vector<512x128xf32>
    %66 = vector.broadcast %43 : vector<1x128xf32> to vector<512x128xf32>
    %67 = arith.addf %65, %66 : vector<512x128xf32>
    %68 = arith.truncf %67 : vector<512x128xf32> to vector<512x128xbf16>
    %c0_27 = arith.constant 0 : index
    %c0_28 = arith.constant 0 : index
    %69 = vector.load %arg4[%c0_27, %c0_28] : memref<128x128xbf16, #tpu.memory_space<vmem>>, vector<128x128xbf16>
    %cst_29 = arith.constant dense<0.000000e+00> : vector<512x128xf32>
    %70 = tpu.matmul %68, %69, %cst_29 {dimension_numbers = #tpu.dot_dimension_numbers<[1], [0], [0], [1], [0, 0, 1, 1], [], []>} : vector<512x128xbf16>, vector<128x128xbf16>, vector<512x128xf32> -> vector<512x128xf32>
    %c6 = arith.constant 6 : index
    %c0_30 = arith.constant 0 : index
    %71 = vector.load %arg5[%c6, %c0_30] : memref<8x128xf32, #tpu.memory_space<vmem>>, vector<1x128xf32>
    %72 = vector.broadcast %71 : vector<1x128xf32> to vector<512x128xf32>
    %73 = arith.addf %70, %72 : vector<512x128xf32>
    %74 = arith.truncf %73 : vector<512x128xf32> to vector<512x128xbf16>
    %c0_31 = arith.constant 0 : index
    %c0_32 = arith.constant 0 : index
    %75 = vector.load %arg6[%c0_31, %c0_32] : memref<512x128xbf16, #tpu.memory_space<vmem>>, vector<512x128xbf16>
    tpu.vector_store %arg6[%c0_31, %c0_32], %74 {strides = array<i32>} : memref<512x128xbf16, #tpu.memory_space<vmem>>, vector<512x128xbf16>,
    return
  }
  func.func @transform_0(%arg0: i32) -> (i32, i32) {
    %c0_i32 = arith.constant 0 : i32
    %c0_i32_0 = arith.constant 0 : i32
    return %arg0, %c0_i32 : i32, i32
  }
  func.func @transform_1(%arg0: i32) -> (i32, i32) {
    %c0_i32 = arith.constant 0 : i32
    %c0_i32_0 = arith.constant 0 : i32
    %c0_i32_1 = arith.constant 0 : i32
    return %c0_i32, %c0_i32_0 : i32, i32
  }
  func.func @transform_2(%arg0: i32) -> (i32, i32) {
    %c0_i32 = arith.constant 0 : i32
    %c0_i32_0 = arith.constant 0 : i32
    %c0_i32_1 = arith.constant 0 : i32
    return %c0_i32, %c0_i32_0 : i32, i32
  }
  func.func @transform_3(%arg0: i32) -> (i32, i32) {
    %c0_i32 = arith.constant 0 : i32
    %c0_i32_0 = arith.constant 0 : i32
    %c0_i32_1 = arith.constant 0 : i32
    return %c0_i32, %c0_i32_0 : i32, i32
  }
  func.func @transform_4(%arg0: i32) -> (i32, i32) {
    %c0_i32 = arith.constant 0 : i32
    %c0_i32_0 = arith.constant 0 : i32
    %c0_i32_1 = arith.constant 0 : i32
    return %c0_i32, %c0_i32_0 : i32, i32
  }
  func.func @transform_5(%arg0: i32) -> (i32, i32) {
    %c0_i32 = arith.constant 0 : i32
    %c0_i32_0 = arith.constant 0 : i32
    return %arg0, %c0_i32 : i32, i32
  }
}

</mosaic_0001>

<llo_original>
// kernel: tpu_custom_call.1
$region0: #{tpu_custom_call.1}
  #allocation0 [shape = 'u32[]', space=smem, size = 0x4, offset = 0x4, fixed_abs, tag = 'smem constant byte address 0x4 - core index']
  #allocation1 [shape = 'u32[144,128]{1,0:T(1,128)}', space=vmem, size = 0x12000, scoped, tag = 'internal scratch']
  %s0 = inlined_call_operand.hbm [shape: bf16[1024,128], index: 0, kind: input, shape index: {}]
  %s1 = inlined_call_operand.hbm [shape: bf16[128,128], index: 1, kind: input, shape index: {}]
  %s2 = inlined_call_operand.hbm [shape: bf16[128,128], index: 2, kind: input, shape index: {}]
  %s3 = inlined_call_operand.hbm [shape: bf16[128,128], index: 3, kind: input, shape index: {}]
  %s4 = inlined_call_operand.vmem [shape: f32[8,128], index: 4, kind: input, shape index: {}]
  %s5 = inlined_call_operand.hbm [shape: bf16[1024,128], index: 5, kind: output, shape index: {}]
  %s6 = sld [smem:[#allocation0]]
  $region69: #{tpu_custom_call.1} parent=0
    _
  %s8 = ssub.s32 1, %s6
  %s9 = scalar_select 0, %s8, %s6
  $region1: #{tpu_custom_call.1} parent=0
    #allocation2 [shape = 'u8[262144]{0}', space=vmem, size = 0x40000, scoped, tag = 'input window, operand 0']
    #allocation3 [shape = 's32[2]{0}', space=sflag, size = 0x8, scoped, tag = 'scoped memory for tpu_custom_call.1']
    #allocation4 [shape = 's32[2]{0}', space=sflag, size = 0x8, scoped, tag = 'scoped memory for tpu_custom_call.1']
    #allocation5 [shape = 'u8[32768]{0}', space=vmem, size = 0x8000, scoped, tag = 'input window, operand 1, single buffered']
    #allocation6 [shape = 's32[1]{0}', space=sflag, size = 0x4, scoped, tag = 'scoped memory for tpu_custom_call.1']
    #allocation7 [shape = 'u8[32768]{0}', space=vmem, size = 0x8000, scoped, tag = 'input window, operand 2, single buffered']
    #allocation8 [shape = 'u8[32768]{0}', space=vmem, size = 0x8000, scoped, tag = 'input window, operand 3, single buffered']
    #allocation9 [shape = 's32[1]{0}', space=sflag, size = 0x4, scoped, tag = 'scoped memory for tpu_custom_call.1']
    #allocation10 [shape = 'u8[262144]{0}', space=vmem, size = 0x40000, scoped, tag = 'output window, operand 0']
    %10 = vsyncpa [#allocation3], 0
    %s11 = scalar_lea.sflag [#allocation3], 1
    %12 = vsyncpa %s11, 0
    %13 = vsyncpa [#allocation6], 0
    %14 = vsyncpa [#allocation9], 0
    %15 = vsyncpa [#allocation4], 0
    %s16 = scalar_lea.sflag [#allocation4], 1
    %17 = vsyncpa %s16, 0
    loop: start=0, step=1, limit=4
    $region2: #{tpu_custom_call.1} parent=1 // loop_pre_header
      _
    $region3: #{tpu_custom_call.1} parent=1 // loop_header
      %s19 = sphi 0, %s23
      %p20 = scmp.ge.s32.totalorder %s19, 4
      %s29 = sphi 0, %s31
      %s32 = sphi 0, %s29
      %s33 = sphi 0, %s32
      %s49 = sphi 0, %s33
      %s53 = sphi 0, %s53
      %s55 = sphi 0, %s53
      %s56 = sphi 0, %s55
      %s70 = sphi 0, %s56
      %s74 = sphi 0, %s74
      %s76 = sphi 0, %s74
      %s77 = sphi 0, %s76
      %s91 = sphi 0, %s77
      %s95 = sphi 0, %s95
      %s97 = sphi 0, %s95
      %s98 = sphi 0, %s97
      %s112 = sphi 0, %s98
      %s116 = sphi 0, %s116
      %s118 = sphi 0, %s116
      %s119 = sphi 0, %s118
      %s133 = sphi 0, %s119
      %s139 = sphi 0, %s141
      %s142 = sphi 0, %s139
      %s143 = sphi 0, %s142
      %s159 = sphi 0, %s143
    $region4: #{tpu_custom_call.1} parent=1 // loop_header_branch
      %22 = sbr.rel (%p20) target = $region8
    $region5: #{tpu_custom_call.1} parent=1 // loop_body
      %s24 = ssub.s32 %s19, 1
      %s25 = ssub.s32 %s19, 2
      %s26 = sadd.s32 %s19, 1
      %s27 = ssub.s32 %s19, %s26
      %p28 = scmp.eq.s32.totalorder %s27, 0
      %s30 = sadd.s32 %s29, 1
      %s31 = scalar_select %p28, %s29, %s30
      %p34 = pneg %p28
      %p35 = scmp.eq.s32.totalorder %s19, 1
      %p36 = por %p34, %p35
      %p37 = scmp.ne.s32.totalorder %s29, %s32
      %p38 = scmp.eq.s32.totalorder %s19, 0
      %p39 = por %p37, %p38
      %p40 = scmp.ne.s32.totalorder %s29, %s32
      %p41 = scmp.eq.s32.totalorder %s24, 1
      %p42 = por %p40, %p41
      %p43 = scmp.ne.s32.totalorder %s32, %s33
      %p44 = scmp.eq.s32.totalorder %s24, 0
      %p45 = por %p43, %p44
      %p46 = scmp.ne.s32.totalorder %s32, %s33
      %p47 = scmp.eq.s32.totalorder %s25, 1
      %p48 = por %p46, %p47
      %p50 = scmp.ne.s32.totalorder %s33, %s49
      %p51 = scmp.eq.s32.totalorder %s25, 0
      %p52 = por %p50, %p51
      %s54 = sadd.s32 %s53, 1
      %p57 = scmp.eq.s32.totalorder %s19, 1
      %p58 = scmp.ne.s32.totalorder %s53, %s55
      %p59 = scmp.eq.s32.totalorder %s19, 0
      %p60 = por %p58, %p59
      %p61 = scmp.ne.s32.totalorder %s53, %s55
      %p62 = scmp.eq.s32.totalorder %s24, 1
      %p63 = por %p61, %p62
      %p64 = scmp.ne.s32.totalorder %s55, %s56
      %p65 = scmp.eq.s32.totalorder %s24, 0
      %p66 = por %p64, %p65
      %p67 = scmp.ne.s32.totalorder %s55, %s56
      %p68 = scmp.eq.s32.totalorder %s25, 1
      %p69 = por %p67, %p68
      %p71 = scmp.ne.s32.totalorder %s56, %s70
      %p72 = scmp.eq.s32.totalorder %s25, 0
      %p73 = por %p71, %p72
      %s75 = sadd.s32 %s74, 1
      %p78 = scmp.eq.s32.totalorder %s19, 1
      %p79 = scmp.ne.s32.totalorder %s74, %s76
      %p80 = scmp.eq.s32.totalorder %s19, 0
      %p81 = por %p79, %p80
      %p82 = scmp.ne.s32.totalorder %s74, %s76
      %p83 = scmp.eq.s32.totalorder %s24, 1
      %p84 = por %p82, %p83
      %p85 = scmp.ne.s32.totalorder %s76, %s77
      %p86 = scmp.eq.s32.totalorder %s24, 0
      %p87 = por %p85, %p86
      %p88 = scmp.ne.s32.totalorder %s76, %s77
      %p89 = scmp.eq.s32.totalorder %s25, 1
      %p90 = por %p88, %p89
      %p92 = scmp.ne.s32.totalorder %s77, %s91
      %p93 = scmp.eq.s32.totalorder %s25, 0
      %p94 = por %p92, %p93
      %s96 = sadd.s32 %s95, 1
      %p99 = scmp.eq.s32.totalorder %s19, 1
      %p100 = scmp.ne.s32.totalorder %s95, %s97
      %p101 = scmp.eq.s32.totalorder %s19, 0
      %p102 = por %p100, %p101
      %p103 = scmp.ne.s32.totalorder %s95, %s97
      %p104 = scmp.eq.s32.totalorder %s24, 1
      %p105 = por %p103, %p104
      %p106 = scmp.ne.s32.totalorder %s97, %s98
      %p107 = scmp.eq.s32.totalorder %s24, 0
      %p108 = por %p106, %p107
      %p109 = scmp.ne.s32.totalorder %s97, %s98
      %p110 = scmp.eq.s32.totalorder %s25, 1
      %p111 = por %p109, %p110
      %p113 = scmp.ne.s32.totalorder %s98, %s112
      %p114 = scmp.eq.s32.totalorder %s25, 0
      %p115 = por %p113, %p114
      %s117 = sadd.s32 %s116, 1
      %p120 = scmp.eq.s32.totalorder %s19, 1
      %p121 = scmp.ne.s32.totalorder %s116, %s118
      %p122 = scmp.eq.s32.totalorder %s19, 0
      %p123 = por %p121, %p122
      %p124 = scmp.ne.s32.totalorder %s116, %s118
      %p125 = scmp.eq.s32.totalorder %s24, 1
      %p126 = por %p124, %p125
      %p127 = scmp.ne.s32.totalorder %s118, %s119
      %p128 = scmp.eq.s32.totalorder %s24, 0
      %p129 = por %p127, %p128
      %p130 = scmp.ne.s32.totalorder %s118, %s119
      %p131 = scmp.eq.s32.totalorder %s25, 1
      %p132 = por %p130, %p131
      %p134 = scmp.ne.s32.totalorder %s119, %s133
      %p135 = scmp.eq.s32.totalorder %s25, 0
      %p136 = por %p134, %p135
      %s137 = ssub.s32 %s19, %s26
      %p138 = scmp.eq.s32.totalorder %s137, 0
      %s140 = sadd.s32 %s139, 1
      %s141 = scalar_select %p138, %s139, %s140
      %p144 = pneg %p138
      %p145 = scmp.eq.s32.totalorder %s19, 1
      %p146 = por %p144, %p145
      %p147 = scmp.ne.s32.totalorder %s139, %s142
      %p148 = scmp.eq.s32.totalorder %s19, 0
      %p149 = por %p147, %p148
      %p150 = scmp.ne.s32.totalorder %s139, %s142
      %p151 = scmp.eq.s32.totalorder %s24, 1
      %p152 = por %p150, %p151
      %p153 = scmp.ne.s32.totalorder %s142, %s143
      %p154 = scmp.eq.s32.totalorder %s24, 0
      %p155 = por %p153, %p154
      %p156 = scmp.ne.s32.totalorder %s142, %s143
      %p157 = scmp.eq.s32.totalorder %s25, 1
      %p158 = por %p156, %p157
      %p160 = scmp.ne.s32.totalorder %s143, %s159
      %p161 = scmp.eq.s32.totalorder %s25, 0
      %p162 = por %p160, %p161
      %p163 = scmp.le.s32.totalorder 1, %s19
      %p164 = scmp.lt.s32.totalorder %s19, 3
      %p165 = pnand %p163, %p164
      %p166 = pneg %p165
      // Predicated region
      $region9: #{tpu_custom_call.1} parent=5 // pred_check
        _
      $region10: #{tpu_custom_call.1} parent=5 // pred_check_branch
        %168 = sbr.rel (%p165) target = $region12
      $region11: #{tpu_custom_call.1} parent=5 // pred_region
        %s169 = ssub.s32 %s19, 1
        // Predicated region
        $region13: #{tpu_custom_call.1} parent=11 // pred_check
          %p170 = pneg %p66
        $region14: #{tpu_custom_call.1} parent=11 // pred_check_branch
          %172 = sbr.rel (%p170) target = $region16
        $region15: #{tpu_custom_call.1} parent=11 // pred_region
          %s174 = ssub.s32 1024, 1024
          %175 = vsyncadd [#allocation6], %s174
          %s176 = sshll.u32 [#allocation5], 4
          %s177 = int_to_ptr.vmem [resolvable:$true] %s176
          %182 = dma.hbm_to_vmem [thread:$0]  %s1, 1024, %s177, [#allocation6], 64, 64, 4
        $region16: #{tpu_custom_call.1} parent=11 // pred_fallthru
          _
        // Predicated region
        $region17: #{tpu_custom_call.1} parent=11 // pred_check
          %p183 = pneg %p87
        $region18: #{tpu_custom_call.1} parent=11 // pred_check_branch
          %185 = sbr.rel (%p183) target = $region20
        $region19: #{tpu_custom_call.1} parent=11 // pred_region
          %s187 = ssub.s32 1024, 1024
          %188 = vsyncadd [#allocation6], %s187
          %s189 = sshll.u32 [#allocation7], 4
          %s190 = int_to_ptr.vmem [resolvable:$true] %s189
          %195 = dma.hbm_to_vmem [thread:$0]  %s2, 1024, %s190, [#allocation6], 64, 64, 4
        $region20: #{tpu_custom_call.1} parent=11 // pred_fallthru
          _
        // Predicated region
        $region21: #{tpu_custom_call.1} parent=11 // pred_check
          %p196 = pneg %p108
        $region22: #{tpu_custom_call.1} parent=11 // pred_check_branch
          %198 = sbr.rel (%p196) target = $region24
        $region23: #{tpu_custom_call.1} parent=11 // pred_region
          %s200 = ssub.s32 1024, 1024
          %201 = vsyncadd [#allocation9], %s200
          %s202 = sshll.u32 [#allocation8], 4
          %s203 = int_to_ptr.vmem [resolvable:$true] %s202
          %208 = dma.hbm_to_vmem [thread:$0]  %s3, 1024, %s203, [#allocation9], 64, 64, 4
        $region24: #{tpu_custom_call.1} parent=11 // pred_fallthru
          _
        // Predicated region
        $region25: #{tpu_custom_call.1} parent=11 // pred_check
          %p209 = pneg %p129
        $region26: #{tpu_custom_call.1} parent=11 // pred_check_branch
          %211 = sbr.rel (%p209) target = $region28
        $region27: #{tpu_custom_call.1} parent=11 // pred_region
          _
        $region28: #{tpu_custom_call.1} parent=11 // pred_fallthru
          _
      $region12: #{tpu_custom_call.1} parent=5 // pred_fallthru
        _
      %p212 = scmp.lt.s32.totalorder %s19, 2
      // Predicated region
      $region29: #{tpu_custom_call.1} parent=5 // pred_check
        %p213 = pneg %p212
      $region30: #{tpu_custom_call.1} parent=5 // pred_check_branch
        %215 = sbr.rel (%p213) target = $region32
      $region31: #{tpu_custom_call.1} parent=5 // pred_region
        // Predicated region
        $region33: #{tpu_custom_call.1} parent=31 // pred_check
          %p216 = pneg %p39
        $region34: #{tpu_custom_call.1} parent=31 // pred_check_branch
          %218 = sbr.rel (%p216) target = $region36
        $region35: #{tpu_custom_call.1} parent=31 // pred_region
          %s219 = sand.u32 %s29, 1
          %s220 = scalar_lea.sflag [#allocation3], %s219
          %s221 = sand.u32 %s29, 1
          %s222 = smul.addr %s221, 256
          %s223 = scalar_lea.vmem [#allocation2], %s222
          %s224 = smul.u32 64, %s19
          %s226 = ssub.s32 4096, 4096
          %227 = vsyncadd %s220, %s226
          %s228 = smul.addr %s224, 64
          %s229 = scalar_lea.hbm %s0, %s228
          %s230 = sshll.u32 %s223, 4
          %s231 = int_to_ptr.vmem [resolvable:$true] %s230
          %236 = dma.hbm_to_vmem [thread:$0]  %s229, 4096, %s231, %s220, 64, 64, 4
        $region36: #{tpu_custom_call.1} parent=31 // pred_fallthru
          _
      $region32: #{tpu_custom_call.1} parent=5 // pred_fallthru
        _
      %p237 = scmp.le.s32.totalorder 1, %s19
      %p238 = scmp.lt.s32.totalorder %s19, 3
      %p239 = pnand %p237, %p238
      %p240 = pneg %p239
      // Predicated region
      $region37: #{tpu_custom_call.1} parent=5 // pred_check
        _
      $region38: #{tpu_custom_call.1} parent=5 // pred_check_branch
        %242 = sbr.rel (%p239) target = $region40
      $region39: #{tpu_custom_call.1} parent=5 // pred_region
        %s243 = ssub.s32 %s19, 1
        %s244 = sand.u32 %s32, 1
        %s245 = scalar_lea.sflag [#allocation3], %s244
        %s246 = sand.u32 %s32, 1
        %s247 = smul.addr %s246, 256
        %s248 = scalar_lea.vmem [#allocation2], %s247
        // Predicated region
        $region41: #{tpu_custom_call.1} parent=39 // pred_check
          %p249 = pneg %p45
        $region42: #{tpu_custom_call.1} parent=39 // pred_check_branch
          %251 = sbr.rel (%p249) target = $region44
        $region43: #{tpu_custom_call.1} parent=39 // pred_region
          %252 = dma.done %s245, 4096
        $region44: #{tpu_custom_call.1} parent=39 // pred_fallthru
          _
        // Predicated region
        $region45: #{tpu_custom_call.1} parent=39 // pred_check
          %p253 = pneg %p66
        $region46: #{tpu_custom_call.1} parent=39 // pred_check_branch
          %255 = sbr.rel (%p253) target = $region48
        $region47: #{tpu_custom_call.1} parent=39 // pred_region
          %256 = dma.done [#allocation6], 1024
        $region48: #{tpu_custom_call.1} parent=39 // pred_fallthru
          _
        // Predicated region
        $region49: #{tpu_custom_call.1} parent=39 // pred_check
          %p257 = pneg %p87
        $region50: #{tpu_custom_call.1} parent=39 // pred_check_branch
          %259 = sbr.rel (%p257) target = $region52
        $region51: #{tpu_custom_call.1} parent=39 // pred_region
          %260 = dma.done [#allocation6], 1024
        $region52: #{tpu_custom_call.1} parent=39 // pred_fallthru
          _
        // Predicated region
        $region53: #{tpu_custom_call.1} parent=39 // pred_check
          %p261 = pneg %p108
        $region54: #{tpu_custom_call.1} parent=39 // pred_check_branch
          %263 = sbr.rel (%p261) target = $region56
        $region55: #{tpu_custom_call.1} parent=39 // pred_region
          %264 = dma.done [#allocation9], 1024
        $region56: #{tpu_custom_call.1} parent=39 // pred_fallthru
          _
        %s265 = sand.u32 %s32, 1
        %s266 = scalar_lea.sflag [#allocation3], %s265
        %s267 = sand.u32 %s32, 1
        %s268 = smul.addr %s267, 256
        %s269 = scalar_lea.vmem [#allocation2], %s268
        %p270 = pneg %p45
        %p271 = pneg %p42
        %p272 = pneg %p66
        %p273 = pneg %p63
        %p274 = pneg %p87
        %p275 = pneg %p84
        %p276 = pneg %p108
        %p277 = pneg %p105
        %p278 = pneg %p129
        %p279 = pneg %p126
        %p280 = pneg %p155
        %p281 = pneg %p152
        %s282 = sand.u32 %s142, 1
        %s283 = scalar_lea.sflag [#allocation4], %s282
        %s284 = sand.u32 %s142, 1
        %s285 = smul.addr %s284, 256
        %s286 = scalar_lea.vmem [#allocation10], %s285
        %s287 = smul.u32 64, %s24
        %s288 = smul.u32 64, %s24
        %v290 = vld [vmem:[%s248] sm:$0xf]
        %v291 = vld [vmem:[%s248 + $0x4] sm:$0xf]
        %v292 = vld [vmem:[%s248 + $0x8] sm:$0xf]
        %v293 = vld [vmem:[%s248 + $0xc] sm:$0xf]
        %v294 = vld [vmem:[%s248 + $0x10] sm:$0xf]
        %v295 = vld [vmem:[%s248 + $0x14] sm:$0xf]
        %v296 = vld [vmem:[%s248 + $0x18] sm:$0xf]
        %v297 = vld [vmem:[%s248 + $0x1c] sm:$0xf]
        %v298 = vld [vmem:[%s248 + $0x20] sm:$0xf]
        %v299 = vld [vmem:[%s248 + $0x24] sm:$0xf]
        %v300 = vld [vmem:[%s248 + $0x28] sm:$0xf]
        %v301 = vld [vmem:[%s248 + $0x2c] sm:$0xf]
        %v302 = vld [vmem:[%s248 + $0x30] sm:$0xf]
        %v303 = vld [vmem:[%s248 + $0x34] sm:$0xf]
        %v304 = vld [vmem:[%s248 + $0x38] sm:$0xf]
        %v305 = vld [vmem:[%s248 + $0x3c] sm:$0xf]
        %v306 = vld [vmem:[%s248 + $0x40] sm:$0xf]
        %v307 = vld [vmem:[%s248 + $0x44] sm:$0xf]
        %v308 = vld [vmem:[%s248 + $0x48] sm:$0xf]
        %v309 = vld [vmem:[%s248 + $0x4c] sm:$0xf]
        %v310 = vld [vmem:[%s248 + $0x50] sm:$0xf]
        %v311 = vld [vmem:[%s248 + $0x54] sm:$0xf]
        %v312 = vld [vmem:[%s248 + $0x58] sm:$0xf]
        %v313 = vld [vmem:[%s248 + $0x5c] sm:$0xf]
        %v314 = vld [vmem:[%s248 + $0x60] sm:$0xf]
        %v315 = vld [vmem:[%s248 + $0x64] sm:$0xf]
        %v316 = vld [vmem:[%s248 + $0x68] sm:$0xf]
        %v317 = vld [vmem:[%s248 + $0x6c] sm:$0xf]
        %v318 = vld [vmem:[%s248 + $0x70] sm:$0xf]
        %v319 = vld [vmem:[%s248 + $0x74] sm:$0xf]
        %v320 = vld [vmem:[%s248 + $0x78] sm:$0xf]
        %v321 = vld [vmem:[%s248 + $0x7c] sm:$0xf]
        %v322 = vld [vmem:[%s248 + $0x80] sm:$0xf]
        %v323 = vld [vmem:[%s248 + $0x84] sm:$0xf]
        %v324 = vld [vmem:[%s248 + $0x88] sm:$0xf]
        %v325 = vld [vmem:[%s248 + $0x8c] sm:$0xf]
        %v326 = vld [vmem:[%s248 + $0x90] sm:$0xf]
        %v327 = vld [vmem:[%s248 + $0x94] sm:$0xf]
        %v328 = vld [vmem:[%s248 + $0x98] sm:$0xf]
        %v329 = vld [vmem:[%s248 + $0x9c] sm:$0xf]
        %v330 = vld [vmem:[%s248 + $0xa0] sm:$0xf]
        %v331 = vld [vmem:[%s248 + $0xa4] sm:$0xf]
        %v332 = vld [vmem:[%s248 + $0xa8] sm:$0xf]
        %v333 = vld [vmem:[%s248 + $0xac] sm:$0xf]
        %v334 = vld [vmem:[%s248 + $0xb0] sm:$0xf]
        %v335 = vld [vmem:[%s248 + $0xb4] sm:$0xf]
        %v336 = vld [vmem:[%s248 + $0xb8] sm:$0xf]
        %v337 = vld [vmem:[%s248 + $0xbc] sm:$0xf]
        %v338 = vld [vmem:[%s248 + $0xc0] sm:$0xf]
        %v339 = vld [vmem:[%s248 + $0xc4] sm:$0xf]
        %v340 = vld [vmem:[%s248 + $0xc8] sm:$0xf]
        %v341 = vld [vmem:[%s248 + $0xcc] sm:$0xf]
        %v342 = vld [vmem:[%s248 + $0xd0] sm:$0xf]
        %v343 = vld [vmem:[%s248 + $0xd4] sm:$0xf]
        %v344 = vld [vmem:[%s248 + $0xd8] sm:$0xf]
        %v345 = vld [vmem:[%s248 + $0xdc] sm:$0xf]
        %v346 = vld [vmem:[%s248 + $0xe0] sm:$0xf]
        %v347 = vld [vmem:[%s248 + $0xe4] sm:$0xf]
        %v348 = vld [vmem:[%s248 + $0xe8] sm:$0xf]
        %v349 = vld [vmem:[%s248 + $0xec] sm:$0xf]
        %v350 = vld [vmem:[%s248 + $0xf0] sm:$0xf]
        %v351 = vld [vmem:[%s248 + $0xf4] sm:$0xf]
        %v352 = vld [vmem:[%s248 + $0xf8] sm:$0xf]
        %v353 = vld [vmem:[%s248 + $0xfc] sm:$0xf]
        %v354 = vld [vmem:[#allocation5] sm:$0xf]
        %v355 = vld [vmem:[#allocation5 + $0x4] sm:$0xf]
        %v356 = vld [vmem:[#allocation5 + $0x8] sm:$0xf]
        %v357 = vld [vmem:[#allocation5 + $0xc] sm:$0xf]
        %v358 = vld [vmem:[#allocation5 + $0x10] sm:$0xf]
        %v359 = vld [vmem:[#allocation5 + $0x14] sm:$0xf]
        %v360 = vld [vmem:[#allocation5 + $0x18] sm:$0xf]
        %v361 = vld [vmem:[#allocation5 + $0x1c] sm:$0xf]
        %v362 = vld [vmem:[#allocation5 + $0x20] sm:$0xf]
        %v363 = vld [vmem:[#allocation5 + $0x24] sm:$0xf]
        %v364 = vld [vmem:[#allocation5 + $0x28] sm:$0xf]
        %v365 = vld [vmem:[#allocation5 + $0x2c] sm:$0xf]
        %v366 = vld [vmem:[#allocation5 + $0x30] sm:$0xf]
        %v367 = vld [vmem:[#allocation5 + $0x34] sm:$0xf]
        %v368 = vld [vmem:[#allocation5 + $0x38] sm:$0xf]
        %v369 = vld [vmem:[#allocation5 + $0x3c] sm:$0xf]
        %v370 = vld [vmem:[%s4] sm:$0x1]
        %v371 = vlaneseq
        %v372 = vshrl.u32 %v371, 7
        %v373 = vsub.s32 0, %v372
        %v374 = vrot.slane %v370, %v373
        %v439 = vunpack.c.l.b16 %v290
        %v440 = vunpack.c.l.b16 %v291
        %v441 = vunpack.c.l.b16 %v292
        %v442 = vunpack.c.l.b16 %v293
        %v443 = vunpack.c.l.b16 %v294
        %v444 = vunpack.c.l.b16 %v295
        %v445 = vunpack.c.l.b16 %v296
        %v446 = vunpack.c.l.b16 %v297
        %v447 = vunpack.c.l.b16 %v298
        %v448 = vunpack.c.l.b16 %v299
        %v449 = vunpack.c.l.b16 %v300
        %v450 = vunpack.c.l.b16 %v301
        %v451 = vunpack.c.l.b16 %v302
        %v452 = vunpack.c.l.b16 %v303
        %v453 = vunpack.c.l.b16 %v304
        %v454 = vunpack.c.l.b16 %v305
        %v455 = vunpack.c.l.b16 %v306
        %v456 = vunpack.c.l.b16 %v307
        %v457 = vunpack.c.l.b16 %v308
        %v458 = vunpack.c.l.b16 %v309
        %v459 = vunpack.c.l.b16 %v310
        %v460 = vunpack.c.l.b16 %v311
        %v461 = vunpack.c.l.b16 %v312
        %v462 = vunpack.c.l.b16 %v313
        %v463 = vunpack.c.l.b16 %v314
        %v464 = vunpack.c.l.b16 %v315
        %v465 = vunpack.c.l.b16 %v316
        %v466 = vunpack.c.l.b16 %v317
        %v467 = vunpack.c.l.b16 %v318
        %v468 = vunpack.c.l.b16 %v319
        %v469 = vunpack.c.l.b16 %v320
        %v470 = vunpack.c.l.b16 %v321
        %v471 = vunpack.c.l.b16 %v322
        %v472 = vunpack.c.l.b16 %v323
        %v473 = vunpack.c.l.b16 %v324
        %v474 = vunpack.c.l.b16 %v325
        %v475 = vunpack.c.l.b16 %v326
        %v476 = vunpack.c.l.b16 %v327
        %v477 = vunpack.c.l.b16 %v328
        %v478 = vunpack.c.l.b16 %v329
        %v479 = vunpack.c.l.b16 %v330
        %v480 = vunpack.c.l.b16 %v331
        %v481 = vunpack.c.l.b16 %v332
        %v482 = vunpack.c.l.b16 %v333
        %v483 = vunpack.c.l.b16 %v334
        %v484 = vunpack.c.l.b16 %v335
        %v485 = vunpack.c.l.b16 %v336
        %v486 = vunpack.c.l.b16 %v337
        %v487 = vunpack.c.l.b16 %v338
        %v488 = vunpack.c.l.b16 %v339
        %v489 = vunpack.c.l.b16 %v340
        %v490 = vunpack.c.l.b16 %v341
        %v491 = vunpack.c.l.b16 %v342
        %v492 = vunpack.c.l.b16 %v343
        %v493 = vunpack.c.l.b16 %v344
        %v494 = vunpack.c.l.b16 %v345
        %v495 = vunpack.c.l.b16 %v346
        %v496 = vunpack.c.l.b16 %v347
        %v497 = vunpack.c.l.b16 %v348
        %v498 = vunpack.c.l.b16 %v349
        %v499 = vunpack.c.l.b16 %v350
        %v500 = vunpack.c.l.b16 %v351
        %v501 = vunpack.c.l.b16 %v352
        %v502 = vunpack.c.l.b16 %v353
        %v503 = vpack.c.b16 %v440, %v439
        %v504 = vpack.c.b16 %v442, %v441
        %v505 = vpack.c.b16 %v444, %v443
        %v506 = vpack.c.b16 %v446, %v445
        %v507 = vpack.c.b16 %v448, %v447
        %v508 = vpack.c.b16 %v450, %v449
        %v509 = vpack.c.b16 %v452, %v451
        %v510 = vpack.c.b16 %v454, %v453
        %v511 = vpack.c.b16 %v456, %v455
        %v512 = vpack.c.b16 %v458, %v457
        %v513 = vpack.c.b16 %v460, %v459
        %v514 = vpack.c.b16 %v462, %v461
        %v515 = vpack.c.b16 %v464, %v463
        %v516 = vpack.c.b16 %v466, %v465
        %v517 = vpack.c.b16 %v468, %v467
        %v518 = vpack.c.b16 %v470, %v469
        %v519 = vpack.c.b16 %v472, %v471
        %v520 = vpack.c.b16 %v474, %v473
        %v521 = vpack.c.b16 %v476, %v475
        %v522 = vpack.c.b16 %v478, %v477
        %v523 = vpack.c.b16 %v480, %v479
        %v524 = vpack.c.b16 %v482, %v481
        %v525 = vpack.c.b16 %v484, %v483
        %v526 = vpack.c.b16 %v486, %v485
        %v527 = vpack.c.b16 %v488, %v487
        %v528 = vpack.c.b16 %v490, %v489
        %v529 = vpack.c.b16 %v492, %v491
        %v530 = vpack.c.b16 %v494, %v493
        %v531 = vpack.c.b16 %v496, %v495
        %v532 = vpack.c.b16 %v498, %v497
        %v533 = vpack.c.b16 %v500, %v499
        %v534 = vpack.c.b16 %v502, %v501
        %v583 = vunpack.c.l.b16 %v354
        %v584 = vunpack.c.l.b16 %v355
        %v585 = vunpack.c.l.b16 %v356
        %v586 = vunpack.c.l.b16 %v357
        %v587 = vunpack.c.l.b16 %v358
        %v588 = vunpack.c.l.b16 %v359
        %v589 = vunpack.c.l.b16 %v360
        %v590 = vunpack.c.l.b16 %v361
        %v591 = vunpack.c.l.b16 %v362
        %v592 = vunpack.c.l.b16 %v363
        %v593 = vunpack.c.l.b16 %v364
        %v594 = vunpack.c.l.b16 %v365
        %v595 = vunpack.c.l.b16 %v366
        %v596 = vunpack.c.l.b16 %v367
        %v597 = vunpack.c.l.b16 %v368
        %v598 = vunpack.c.l.b16 %v369
        %v599 = vpack.c.b16 %v584, %v583
        %v600 = vpack.c.b16 %v586, %v585
        %v601 = vpack.c.b16 %v588, %v587
        %v602 = vpack.c.b16 %v590, %v589
        %v603 = vpack.c.b16 %v592, %v591
        %v604 = vpack.c.b16 %v594, %v593
        %v605 = vpack.c.b16 %v596, %v595
        %v606 = vpack.c.b16 %v598, %v597
        %615 = vmatprep.subr.bf16.mxu0 0
        %616 = vmatpush1.bf16.msra.mxu0 %v599
        %617 = vmatprep.subr.bf16.mxu0 0
        %618 = vmatpush1.bf16.msra.mxu0 %v600
        %619 = vmatprep.subr.bf16.mxu0 0
        %620 = vmatpush1.bf16.msra.mxu0 %v601
        %621 = vmatprep.subr.bf16.mxu0 0
        %622 = vmatpush1.bf16.msra.mxu0 %v602
        %623 = vmatprep.subr.bf16.mxu0 0
        %624 = vmatpush1.bf16.msra.mxu0 %v603
        %625 = vmatprep.subr.bf16.mxu0 0
        %626 = vmatpush1.bf16.msra.mxu0 %v604
        %627 = vmatprep.subr.bf16.mxu0 0
        %628 = vmatpush1.bf16.msra.mxu0 %v605
        %629 = vmatprep.subr.bf16.mxu0 0
        %630 = vmatpush1.bf16.msra.mxu0 %v606
        %631 = vmatprep.subr.bf16.mxu0 0
        %632 = vmatpush1.bf16.msra.mxu0 0
        %633 = vmatprep.subr.bf16.mxu0 0
        %634 = vmatpush1.bf16.msra.mxu0 0
        %635 = vmatprep.subr.bf16.mxu0 0
        %636 = vmatpush1.bf16.msra.mxu0 0
        %637 = vmatprep.subr.bf16.mxu0 0
        %638 = vmatpush1.bf16.msra.mxu0 0
        %639 = vmatprep.subr.bf16.mxu0 0
        %640 = vmatpush1.bf16.msra.mxu0 0
        %641 = vmatprep.subr.bf16.mxu0 0
        %642 = vmatpush1.bf16.msra.mxu0 0
        %643 = vmatprep.subr.bf16.mxu0 0
        %644 = vmatpush1.bf16.msra.mxu0 0
        %645 = vmatprep.subr.bf16.mxu0 0
        %646 = vmatpush1.bf16.msra.mxu0 0
        %647 = vmatprep.mubr.bf16.mxu0 0
        %648 = vmatmul.mubr.bf16.gmra.mrb[0].mxu0 %v503
        %v649 = vpop.f32.mrb[0].mxu0
        %v650 = vadd.f32 %v374, %v649
        %v651 = vpop.f32.mrb[0].mxu0
        %v652 = vpop.f32.mrb[0].mxu0
        %v653 = vadd.f32 %v374, %v652
        %v654 = vpop.f32.mrb[0].mxu0
        %655 = vmatprep.mubr.bf16.mxu0 0
        %656 = vmatmul.mubr.bf16.gmra.mrb[0].mxu0 %v504
        %v657 = vpop.f32.mrb[0].mxu0
        %v658 = vadd.f32 %v374, %v657
        %v659 = vpop.f32.mrb[0].mxu0
        %v660 = vpop.f32.mrb[0].mxu0
        %v661 = vadd.f32 %v374, %v660
        %v662 = vpop.f32.mrb[0].mxu0
        %663 = vmatprep.mubr.bf16.mxu0 0
        %664 = vmatmul.mubr.bf16.gmra.mrb[0].mxu0 %v505
        %v665 = vpop.f32.mrb[0].mxu0
        %v666 = vadd.f32 %v374, %v665
        %v667 = vpop.f32.mrb[0].mxu0
        %v668 = vpop.f32.mrb[0].mxu0
        %v669 = vadd.f32 %v374, %v668
        %v670 = vpop.f32.mrb[0].mxu0
        %671 = vmatprep.mubr.bf16.mxu0 0
        %672 = vmatmul.mubr.bf16.gmra.mrb[0].mxu0 %v506
        %v673 = vpop.f32.mrb[0].mxu0
        %v674 = vadd.f32 %v374, %v673
        %v675 = vpop.f32.mrb[0].mxu0
        %v676 = vpop.f32.mrb[0].mxu0
        %v677 = vadd.f32 %v374, %v676
        %v678 = vpop.f32.mrb[0].mxu0
        %679 = vmatprep.mubr.bf16.mxu0 0
        %680 = vmatmul.mubr.bf16.gmra.mrb[0].mxu0 %v507
        %v681 = vpop.f32.mrb[0].mxu0
        %v682 = vadd.f32 %v374, %v681
        %v683 = vpop.f32.mrb[0].mxu0
        %v684 = vpop.f32.mrb[0].mxu0
        %v685 = vadd.f32 %v374, %v684
        %v686 = vpop.f32.mrb[0].mxu0
        %687 = vmatprep.mubr.bf16.mxu0 0
        %688 = vmatmul.mubr.bf16.gmra.mrb[0].mxu0 %v508
        %v689 = vpop.f32.mrb[0].mxu0
        %v690 = vadd.f32 %v374, %v689
        %v691 = vpop.f32.mrb[0].mxu0
        %v692 = vpop.f32.mrb[0].mxu0
        %v693 = vadd.f32 %v374, %v692
        %v694 = vpop.f32.mrb[0].mxu0
        %695 = vmatprep.mubr.bf16.mxu0 0
        %696 = vmatmul.mubr.bf16.gmra.mrb[0].mxu0 %v509
        %v697 = vpop.f32.mrb[0].mxu0
        %v698 = vadd.f32 %v374, %v697
        %v699 = vpop.f32.mrb[0].mxu0
        %v700 = vpop.f32.mrb[0].mxu0
        %v701 = vadd.f32 %v374, %v700
        %v702 = vpop.f32.mrb[0].mxu0
        %703 = vmatprep.mubr.bf16.mxu0 0
        %704 = vmatmul.mubr.bf16.gmra.mrb[0].mxu0 %v510
        %v705 = vpop.f32.mrb[0].mxu0
        %v706 = vadd.f32 %v374, %v705
        %v707 = vpop.f32.mrb[0].mxu0
        %v708 = vpop.f32.mrb[0].mxu0
        %v709 = vadd.f32 %v374, %v708
        %v710 = vpop.f32.mrb[0].mxu0
        %711 = vmatprep.mubr.bf16.mxu0 0
        %712 = vmatmul.mubr.bf16.gmra.mrb[0].mxu0 %v511
        %v713 = vpop.f32.mrb[0].mxu0
        %v714 = vadd.f32 %v374, %v713
        %v715 = vpop.f32.mrb[0].mxu0
        %v716 = vpop.f32.mrb[0].mxu0
        %v717 = vadd.f32 %v374, %v716
        %v718 = vpop.f32.mrb[0].mxu0
        %719 = vmatprep.mubr.bf16.mxu0 0
        %720 = vmatmul.mubr.bf16.gmra.mrb[0].mxu0 %v512
        %v721 = vpop.f32.mrb[0].mxu0
        %v722 = vadd.f32 %v374, %v721
        %v723 = vpop.f32.mrb[0].mxu0
        %v724 = vpop.f32.mrb[0].mxu0
        %v725 = vadd.f32 %v374, %v724
        %v726 = vpop.f32.mrb[0].mxu0
        %727 = vmatprep.mubr.bf16.mxu0 0
        %728 = vmatmul.mubr.bf16.gmra.mrb[0].mxu0 %v513
        %v729 = vpop.f32.mrb[0].mxu0
        %v730 = vadd.f32 %v374, %v729
        %v731 = vpop.f32.mrb[0].mxu0
        %v732 = vpop.f32.mrb[0].mxu0
        %v733 = vadd.f32 %v374, %v732
        %v734 = vpop.f32.mrb[0].mxu0
        %735 = vmatprep.mubr.bf16.mxu0 0
        %736 = vmatmul.mubr.bf16.gmra.mrb[0].mxu0 %v514
        %v737 = vpop.f32.mrb[0].mxu0
        %v738 = vadd.f32 %v374, %v737
        %v739 = vpop.f32.mrb[0].mxu0
        %v740 = vpop.f32.mrb[0].mxu0
        %v741 = vadd.f32 %v374, %v740
        %v742 = vpop.f32.mrb[0].mxu0
        %743 = vmatprep.mubr.bf16.mxu0 0
        %744 = vmatmul.mubr.bf16.gmra.mrb[0].mxu0 %v515
        %v745 = vpop.f32.mrb[0].mxu0
        %v746 = vadd.f32 %v374, %v745
        %v747 = vpop.f32.mrb[0].mxu0
        %v748 = vpop.f32.mrb[0].mxu0
        %v749 = vadd.f32 %v374, %v748
        %v750 = vpop.f32.mrb[0].mxu0
        %751 = vmatprep.mubr.bf16.mxu0 0
        %752 = vmatmul.mubr.bf16.gmra.mrb[0].mxu0 %v516
        %v753 = vpop.f32.mrb[0].mxu0
        %v754 = vadd.f32 %v374, %v753
        %v755 = vpop.f32.mrb[0].mxu0
        %v756 = vpop.f32.mrb[0].mxu0
        %v757 = vadd.f32 %v374, %v756
        %v758 = vpop.f32.mrb[0].mxu0
        %759 = vmatprep.mubr.bf16.mxu0 0
        %760 = vmatmul.mubr.bf16.gmra.mrb[0].mxu0 %v517
        %v761 = vpop.f32.mrb[0].mxu0
        %v762 = vadd.f32 %v374, %v761
        %v763 = vpop.f32.mrb[0].mxu0
        %v764 = vpop.f32.mrb[0].mxu0
        %v765 = vadd.f32 %v374, %v764
        %v766 = vpop.f32.mrb[0].mxu0
        %767 = vmatprep.mubr.bf16.mxu0 0
        %768 = vmatmul.mubr.bf16.gmra.mrb[0].mxu0 %v518
        %v769 = vpop.f32.mrb[0].mxu0
        %v770 = vadd.f32 %v374, %v769
        %v771 = vpop.f32.mrb[0].mxu0
        %v772 = vpop.f32.mrb[0].mxu0
        %v773 = vadd.f32 %v374, %v772
        %v774 = vpop.f32.mrb[0].mxu0
        %775 = vmatprep.mubr.bf16.mxu0 0
        %776 = vmatmul.mubr.bf16.gmra.mrb[0].mxu0 %v519
        %v777 = vpop.f32.mrb[0].mxu0
        %v778 = vadd.f32 %v374, %v777
        %v779 = vpop.f32.mrb[0].mxu0
        %v780 = vpop.f32.mrb[0].mxu0
        %v781 = vadd.f32 %v374, %v780
        %v782 = vpop.f32.mrb[0].mxu0
        %783 = vmatprep.mubr.bf16.mxu0 0
        %784 = vmatmul.mubr.bf16.gmra.mrb[0].mxu0 %v520
        %v785 = vpop.f32.mrb[0].mxu0
        %v786 = vadd.f32 %v374, %v785
        %v787 = vpop.f32.mrb[0].mxu0
        %v788 = vpop.f32.mrb[0].mxu0
        %v789 = vadd.f32 %v374, %v788
        %v790 = vpop.f32.mrb[0].mxu0
        %791 = vmatprep.mubr.bf16.mxu0 0
        %792 = vmatmul.mubr.bf16.gmra.mrb[0].mxu0 %v521
        %v793 = vpop.f32.mrb[0].mxu0
        %v794 = vadd.f32 %v374, %v793
        %v795 = vpop.f32.mrb[0].mxu0
        %v796 = vpop.f32.mrb[0].mxu0
        %v797 = vadd.f32 %v374, %v796
        %v798 = vpop.f32.mrb[0].mxu0
        %799 = vmatprep.mubr.bf16.mxu0 0
        %800 = vmatmul.mubr.bf16.gmra.mrb[0].mxu0 %v522
        %v801 = vpop.f32.mrb[0].mxu0
        %v802 = vadd.f32 %v374, %v801
        %v803 = vpop.f32.mrb[0].mxu0
        %v804 = vpop.f32.mrb[0].mxu0
        %v805 = vadd.f32 %v374, %v804
        %v806 = vpop.f32.mrb[0].mxu0
        %807 = vmatprep.mubr.bf16.mxu0 0
        %808 = vmatmul.mubr.bf16.gmra.mrb[0].mxu0 %v523
        %v809 = vpop.f32.mrb[0].mxu0
        %v810 = vadd.f32 %v374, %v809
        %v811 = vpop.f32.mrb[0].mxu0
        %v812 = vpop.f32.mrb[0].mxu0
        %v813 = vadd.f32 %v374, %v812
        %v814 = vpop.f32.mrb[0].mxu0
        %815 = vmatprep.mubr.bf16.mxu0 0
        %816 = vmatmul.mubr.bf16.gmra.mrb[0].mxu0 %v524
        %v817 = vpop.f32.mrb[0].mxu0
        %v818 = vadd.f32 %v374, %v817
        %v819 = vpop.f32.mrb[0].mxu0
        %v820 = vpop.f32.mrb[0].mxu0
        %v821 = vadd.f32 %v374, %v820
        %v822 = vpop.f32.mrb[0].mxu0
        %823 = vmatprep.mubr.bf16.mxu0 0
        %824 = vmatmul.mubr.bf16.gmra.mrb[0].mxu0 %v525
        %v825 = vpop.f32.mrb[0].mxu0
        %v826 = vadd.f32 %v374, %v825
        %v827 = vpop.f32.mrb[0].mxu0
        %v828 = vpop.f32.mrb[0].mxu0
        %v829 = vadd.f32 %v374, %v828
        %v830 = vpop.f32.mrb[0].mxu0
        %831 = vmatprep.mubr.bf16.mxu0 0
        %832 = vmatmul.mubr.bf16.gmra.mrb[0].mxu0 %v526
        %v833 = vpop.f32.mrb[0].mxu0
        %v834 = vadd.f32 %v374, %v833
        %v835 = vpop.f32.mrb[0].mxu0
        %v836 = vpop.f32.mrb[0].mxu0
        %v837 = vadd.f32 %v374, %v836
        %v838 = vpop.f32.mrb[0].mxu0
        %839 = vmatprep.mubr.bf16.mxu0 0
        %840 = vmatmul.mubr.bf16.gmra.mrb[0].mxu0 %v527
        %v841 = vpop.f32.mrb[0].mxu0
        %v842 = vadd.f32 %v374, %v841
        %v843 = vpop.f32.mrb[0].mxu0
        %v844 = vpop.f32.mrb[0].mxu0
        %v845 = vadd.f32 %v374, %v844
        %v846 = vpop.f32.mrb[0].mxu0
        %847 = vmatprep.mubr.bf16.mxu0 0
        %848 = vmatmul.mubr.bf16.gmra.mrb[0].mxu0 %v528
        %v849 = vpop.f32.mrb[0].mxu0
        %v850 = vadd.f32 %v374, %v849
        %v851 = vpop.f32.mrb[0].mxu0
        %v852 = vpop.f32.mrb[0].mxu0
        %v853 = vadd.f32 %v374, %v852
        %v854 = vpop.f32.mrb[0].mxu0
        %855 = vmatprep.mubr.bf16.mxu0 0
        %856 = vmatmul.mubr.bf16.gmra.mrb[0].mxu0 %v529
        %v857 = vpop.f32.mrb[0].mxu0
        %v858 = vadd.f32 %v374, %v857
        %v859 = vpop.f32.mrb[0].mxu0
        %v860 = vpop.f32.mrb[0].mxu0
        %v861 = vadd.f32 %v374, %v860
        %v862 = vpop.f32.mrb[0].mxu0
        %863 = vmatprep.mubr.bf16.mxu0 0
        %864 = vmatmul.mubr.bf16.gmra.mrb[0].mxu0 %v530
        %v865 = vpop.f32.mrb[0].mxu0
        %v866 = vadd.f32 %v374, %v865
        %v867 = vpop.f32.mrb[0].mxu0
        %v868 = vpop.f32.mrb[0].mxu0
        %v869 = vadd.f32 %v374, %v868
        %v870 = vpop.f32.mrb[0].mxu0
        %871 = vmatprep.mubr.bf16.mxu0 0
        %872 = vmatmul.mubr.bf16.gmra.mrb[0].mxu0 %v531
        %v873 = vpop.f32.mrb[0].mxu0
        %v874 = vadd.f32 %v374, %v873
        %v875 = vpop.f32.mrb[0].mxu0
        %v876 = vpop.f32.mrb[0].mxu0
        %v877 = vadd.f32 %v374, %v876
        %v878 = vpop.f32.mrb[0].mxu0
        %879 = vmatprep.mubr.bf16.mxu0 0
        %880 = vmatmul.mubr.bf16.gmra.mrb[0].mxu0 %v532
        %v881 = vpop.f32.mrb[0].mxu0
        %v882 = vadd.f32 %v374, %v881
        %v883 = vpop.f32.mrb[0].mxu0
        %v884 = vpop.f32.mrb[0].mxu0
        %v885 = vadd.f32 %v374, %v884
        %v886 = vpop.f32.mrb[0].mxu0
        %887 = vmatprep.mubr.bf16.mxu0 0
        %888 = vmatmul.mubr.bf16.gmra.mrb[0].mxu0 %v533
        %v889 = vpop.f32.mrb[0].mxu0
        %v890 = vadd.f32 %v374, %v889
        %v891 = vpop.f32.mrb[0].mxu0
        %v892 = vpop.f32.mrb[0].mxu0
        %v893 = vadd.f32 %v374, %v892
        %v894 = vpop.f32.mrb[0].mxu0
        %895 = vmatprep.mubr.bf16.mxu0 0
        %896 = vmatmul.mubr.bf16.gmra.mrb[0].mxu0 %v534
        %v897 = vpop.f32.mrb[0].mxu0
        %v898 = vadd.f32 %v374, %v897
        %v899 = vpop.f32.mrb[0].mxu0
        %v900 = vpop.f32.mrb[0].mxu0
        %v901 = vadd.f32 %v374, %v900
        %v902 = vpop.f32.mrb[0].mxu0
        %903 = vdwg.mxu0
        %v904 = vmax.f32 %v650, 0.0
        %v905 = vmax.f32 %v653, 0.0
        %v906 = vmax.f32 %v658, 0.0
        %v907 = vmax.f32 %v661, 0.0
        %v908 = vmax.f32 %v666, 0.0
        %v909 = vmax.f32 %v669, 0.0
        %v910 = vmax.f32 %v674, 0.0
        %v911 = vmax.f32 %v677, 0.0
        %v912 = vmax.f32 %v682, 0.0
        %v913 = vmax.f32 %v685, 0.0
        %v914 = vmax.f32 %v690, 0.0
        %v915 = vmax.f32 %v693, 0.0
        %v916 = vmax.f32 %v698, 0.0
        %v917 = vmax.f32 %v701, 0.0
        %v918 = vmax.f32 %v706, 0.0
        %v919 = vmax.f32 %v709, 0.0
        %v920 = vmax.f32 %v714, 0.0
        %v921 = vmax.f32 %v717, 0.0
        %v922 = vmax.f32 %v722, 0.0
        %v923 = vmax.f32 %v725, 0.0
        %v924 = vmax.f32 %v730, 0.0
        %v925 = vmax.f32 %v733, 0.0
        %v926 = vmax.f32 %v738, 0.0
        %v927 = vmax.f32 %v741, 0.0
        %v928 = vmax.f32 %v746, 0.0
        %v929 = vmax.f32 %v749, 0.0
        %v930 = vmax.f32 %v754, 0.0
        %v931 = vmax.f32 %v757, 0.0
        %v932 = vmax.f32 %v762, 0.0
        %v933 = vmax.f32 %v765, 0.0
        %v934 = vmax.f32 %v770, 0.0
        %v935 = vmax.f32 %v773, 0.0
        %v936 = vmax.f32 %v778, 0.0
        %v937 = vmax.f32 %v781, 0.0
        %v938 = vmax.f32 %v786, 0.0
        %v939 = vmax.f32 %v789, 0.0
        %v940 = vmax.f32 %v794, 0.0
        %v941 = vmax.f32 %v797, 0.0
        %v942 = vmax.f32 %v802, 0.0
        %v943 = vmax.f32 %v805, 0.0
        %v944 = vmax.f32 %v810, 0.0
        %v945 = vmax.f32 %v813, 0.0
        %v946 = vmax.f32 %v818, 0.0
        %v947 = vmax.f32 %v821, 0.0
        %v948 = vmax.f32 %v826, 0.0
        %v949 = vmax.f32 %v829, 0.0
        %v950 = vmax.f32 %v834, 0.0
        %v951 = vmax.f32 %v837, 0.0
        %v952 = vmax.f32 %v842, 0.0
        %v953 = vmax.f32 %v845, 0.0
        %v954 = vmax.f32 %v850, 0.0
        %v955 = vmax.f32 %v853, 0.0
        %v956 = vmax.f32 %v858, 0.0
        %v957 = vmax.f32 %v861, 0.0
        %v958 = vmax.f32 %v866, 0.0
        %v959 = vmax.f32 %v869, 0.0
        %v960 = vmax.f32 %v874, 0.0
        %v961 = vmax.f32 %v877, 0.0
        %v962 = vmax.f32 %v882, 0.0
        %v963 = vmax.f32 %v885, 0.0
        %v964 = vmax.f32 %v890, 0.0
        %v965 = vmax.f32 %v893, 0.0
        %v966 = vmax.f32 %v898, 0.0
        %v967 = vmax.f32 %v901, 0.0
        %v968 = vld [vmem:[%s4 + $0x1] sm:$0x1]
        %v969 = vld [vmem:[%s4 + $0x2] sm:$0x1]
        %970 = vadd.xlane.f32.xlu0 %v904
        %v971 = vpop.xlane.xlu0 %970
        %972 = vadd.xlane.f32.xlu0 %v905
        %v973 = vpop.xlane.xlu0 %972
        %974 = vadd.xlane.f32.xlu0 %v906
        %v975 = vpop.xlane.xlu0 %974
        %976 = vadd.xlane.f32.xlu0 %v907
        %v977 = vpop.xlane.xlu0 %976
        %978 = vadd.xlane.f32.xlu0 %v908
        %v979 = vpop.xlane.xlu0 %978
        %980 = vadd.xlane.f32.xlu0 %v909
        %v981 = vpop.xlane.xlu0 %980
        %982 = vadd.xlane.f32.xlu0 %v910
        %v983 = vpop.xlane.xlu0 %982
        %984 = vadd.xlane.f32.xlu0 %v911
        %v985 = vpop.xlane.xlu0 %984
        %986 = vadd.xlane.f32.xlu0 %v912
        %v987 = vpop.xlane.xlu0 %986
        %988 = vadd.xlane.f32.xlu0 %v913
        %v989 = vpop.xlane.xlu0 %988
        %990 = vadd.xlane.f32.xlu0 %v914
        %v991 = vpop.xlane.xlu0 %990
        %992 = vadd.xlane.f32.xlu0 %v915
        %v993 = vpop.xlane.xlu0 %992
        %994 = vadd.xlane.f32.xlu0 %v916
        %v995 = vpop.xlane.xlu0 %994
        %996 = vadd.xlane.f32.xlu0 %v917
        %v997 = vpop.xlane.xlu0 %996
        %998 = vadd.xlane.f32.xlu0 %v918
        %v999 = vpop.xlane.xlu0 %998
        %1000 = vadd.xlane.f32.xlu0 %v919
        %v1001 = vpop.xlane.xlu0 %1000
        %1002 = vadd.xlane.f32.xlu0 %v920
        %v1003 = vpop.xlane.xlu0 %1002
        %1004 = vadd.xlane.f32.xlu0 %v921
        %v1005 = vpop.xlane.xlu0 %1004
        %1006 = vadd.xlane.f32.xlu0 %v922
        %v1007 = vpop.xlane.xlu0 %1006
        %1008 = vadd.xlane.f32.xlu0 %v923
        %v1009 = vpop.xlane.xlu0 %1008
        %1010 = vadd.xlane.f32.xlu0 %v924
        %v1011 = vpop.xlane.xlu0 %1010
        %1012 = vadd.xlane.f32.xlu0 %v925
        %v1013 = vpop.xlane.xlu0 %1012
        %1014 = vadd.xlane.f32.xlu0 %v926
        %v1015 = vpop.xlane.xlu0 %1014
        %1016 = vadd.xlane.f32.xlu0 %v927
        %v1017 = vpop.xlane.xlu0 %1016
        %1018 = vadd.xlane.f32.xlu0 %v928
        %v1019 = vpop.xlane.xlu0 %1018
        %1020 = vadd.xlane.f32.xlu0 %v929
        %v1021 = vpop.xlane.xlu0 %1020
        %1022 = vadd.xlane.f32.xlu0 %v930
        %v1023 = vpop.xlane.xlu0 %1022
        %1024 = vadd.xlane.f32.xlu0 %v931
        %v1025 = vpop.xlane.xlu0 %1024
        %1026 = vadd.xlane.f32.xlu0 %v932
        %v1027 = vpop.xlane.xlu0 %1026
        %1028 = vadd.xlane.f32.xlu0 %v933
        %v1029 = vpop.xlane.xlu0 %1028
        %1030 = vadd.xlane.f32.xlu0 %v934
        %v1031 = vpop.xlane.xlu0 %1030
        %1032 = vadd.xlane.f32.xlu0 %v935
        %v1033 = vpop.xlane.xlu0 %1032
        %1034 = vadd.xlane.f32.xlu0 %v936
        %v1035 = vpop.xlane.xlu0 %1034
        %1036 = vadd.xlane.f32.xlu0 %v937
        %v1037 = vpop.xlane.xlu0 %1036
        %1038 = vadd.xlane.f32.xlu0 %v938
        %v1039 = vpop.xlane.xlu0 %1038
        %1040 = vadd.xlane.f32.xlu0 %v939
        %v1041 = vpop.xlane.xlu0 %1040
        %1042 = vadd.xlane.f32.xlu0 %v940
        %v1043 = vpop.xlane.xlu0 %1042
        %1044 = vadd.xlane.f32.xlu0 %v941
        %v1045 = vpop.xlane.xlu0 %1044
        %1046 = vadd.xlane.f32.xlu0 %v942
        %v1047 = vpop.xlane.xlu0 %1046
        %1048 = vadd.xlane.f32.xlu0 %v943
        %v1049 = vpop.xlane.xlu0 %1048
        %1050 = vadd.xlane.f32.xlu0 %v944
        %v1051 = vpop.xlane.xlu0 %1050
        %1052 = vadd.xlane.f32.xlu0 %v945
        %v1053 = vpop.xlane.xlu0 %1052
        %1054 = vadd.xlane.f32.xlu0 %v946
        %v1055 = vpop.xlane.xlu0 %1054
        %1056 = vadd.xlane.f32.xlu0 %v947
        %v1057 = vpop.xlane.xlu0 %1056
        %1058 = vadd.xlane.f32.xlu0 %v948
        %v1059 = vpop.xlane.xlu0 %1058
        %1060 = vadd.xlane.f32.xlu0 %v949
        %v1061 = vpop.xlane.xlu0 %1060
        %1062 = vadd.xlane.f32.xlu0 %v950
        %v1063 = vpop.xlane.xlu0 %1062
        %1064 = vadd.xlane.f32.xlu0 %v951
        %v1065 = vpop.xlane.xlu0 %1064
        %1066 = vadd.xlane.f32.xlu0 %v952
        %v1067 = vpop.xlane.xlu0 %1066
        %1068 = vadd.xlane.f32.xlu0 %v953
        %v1069 = vpop.xlane.xlu0 %1068
        %1070 = vadd.xlane.f32.xlu0 %v954
        %v1071 = vpop.xlane.xlu0 %1070
        %1072 = vadd.xlane.f32.xlu0 %v955
        %v1073 = vpop.xlane.xlu0 %1072
        %1074 = vadd.xlane.f32.xlu0 %v956
        %v1075 = vpop.xlane.xlu0 %1074
        %1076 = vadd.xlane.f32.xlu0 %v957
        %v1077 = vpop.xlane.xlu0 %1076
        %1078 = vadd.xlane.f32.xlu0 %v958
        %v1079 = vpop.xlane.xlu0 %1078
        %1080 = vadd.xlane.f32.xlu0 %v959
        %v1081 = vpop.xlane.xlu0 %1080
        %1082 = vadd.xlane.f32.xlu0 %v960
        %v1083 = vpop.xlane.xlu0 %1082
        %1084 = vadd.xlane.f32.xlu0 %v961
        %v1085 = vpop.xlane.xlu0 %1084
        %1086 = vadd.xlane.f32.xlu0 %v962
        %v1087 = vpop.xlane.xlu0 %1086
        %1088 = vadd.xlane.f32.xlu0 %v963
        %v1089 = vpop.xlane.xlu0 %1088
        %1090 = vadd.xlane.f32.xlu0 %v964
        %v1091 = vpop.xlane.xlu0 %1090
        %1092 = vadd.xlane.f32.xlu0 %v965
        %v1093 = vpop.xlane.xlu0 %1092
        %1094 = vadd.xlane.f32.xlu0 %v966
        %v1095 = vpop.xlane.xlu0 %1094
        %1096 = vadd.xlane.f32.xlu0 %v967
        %v1097 = vpop.xlane.xlu0 %1096
        %v1098 = vmul.f32 %v904, %v904
        %v1099 = vmul.f32 %v905, %v905
        %v1100 = vmul.f32 %v906, %v906
        %v1101 = vmul.f32 %v907, %v907
        %v1102 = vmul.f32 %v908, %v908
        %v1103 = vmul.f32 %v909, %v909
        %v1104 = vmul.f32 %v910, %v910
        %v1105 = vmul.f32 %v911, %v911
        %v1106 = vmul.f32 %v912, %v912
        %v1107 = vmul.f32 %v913, %v913
        %v1108 = vmul.f32 %v914, %v914
        %v1109 = vmul.f32 %v915, %v915
        %v1110 = vmul.f32 %v916, %v916
        %v1111 = vmul.f32 %v917, %v917
        %v1112 = vmul.f32 %v918, %v918
        %v1113 = vmul.f32 %v919, %v919
        %v1114 = vmul.f32 %v920, %v920
        %v1115 = vmul.f32 %v921, %v921
        %v1116 = vmul.f32 %v922, %v922
        %v1117 = vmul.f32 %v923, %v923
        %v1118 = vmul.f32 %v924, %v924
        %v1119 = vmul.f32 %v925, %v925
        %v1120 = vmul.f32 %v926, %v926
        %v1121 = vmul.f32 %v927, %v927
        %v1122 = vmul.f32 %v928, %v928
        %v1123 = vmul.f32 %v929, %v929
        %v1124 = vmul.f32 %v930, %v930
        %v1125 = vmul.f32 %v931, %v931
        %v1126 = vmul.f32 %v932, %v932
        %v1127 = vmul.f32 %v933, %v933
        %v1128 = vmul.f32 %v934, %v934
        %v1129 = vmul.f32 %v935, %v935
        %v1130 = vmul.f32 %v936, %v936
        %v1131 = vmul.f32 %v937, %v937
        %v1132 = vmul.f32 %v938, %v938
        %v1133 = vmul.f32 %v939, %v939
        %v1134 = vmul.f32 %v940, %v940
        %v1135 = vmul.f32 %v941, %v941
        %v1136 = vmul.f32 %v942, %v942
        %v1137 = vmul.f32 %v943, %v943
        %v1138 = vmul.f32 %v944, %v944
        %v1139 = vmul.f32 %v945, %v945
        %v1140 = vmul.f32 %v946, %v946
        %v1141 = vmul.f32 %v947, %v947
        %v1142 = vmul.f32 %v948, %v948
        %v1143 = vmul.f32 %v949, %v949
        %v1144 = vmul.f32 %v950, %v950
        %v1145 = vmul.f32 %v951, %v951
        %v1146 = vmul.f32 %v952, %v952
        %v1147 = vmul.f32 %v953, %v953
        %v1148 = vmul.f32 %v954, %v954
        %v1149 = vmul.f32 %v955, %v955
        %v1150 = vmul.f32 %v956, %v956
        %v1151 = vmul.f32 %v957, %v957
        %v1152 = vmul.f32 %v958, %v958
        %v1153 = vmul.f32 %v959, %v959
        %v1154 = vmul.f32 %v960, %v960
        %v1155 = vmul.f32 %v961, %v961
        %v1156 = vmul.f32 %v962, %v962
        %v1157 = vmul.f32 %v963, %v963
        %v1158 = vmul.f32 %v964, %v964
        %v1159 = vmul.f32 %v965, %v965
        %v1160 = vmul.f32 %v966, %v966
        %v1161 = vmul.f32 %v967, %v967
        %1162 = vadd.xlane.f32.xlu0 %v1098
        %v1163 = vpop.xlane.xlu0 %1162
        %1164 = vadd.xlane.f32.xlu0 %v1099
        %v1165 = vpop.xlane.xlu0 %1164
        %1166 = vadd.xlane.f32.xlu0 %v1100
        %v1167 = vpop.xlane.xlu0 %1166
        %1168 = vadd.xlane.f32.xlu0 %v1101
        %v1169 = vpop.xlane.xlu0 %1168
        %1170 = vadd.xlane.f32.xlu0 %v1102
        %v1171 = vpop.xlane.xlu0 %1170
        %1172 = vadd.xlane.f32.xlu0 %v1103
        %v1173 = vpop.xlane.xlu0 %1172
        %1174 = vadd.xlane.f32.xlu0 %v1104
        %v1175 = vpop.xlane.xlu0 %1174
        %1176 = vadd.xlane.f32.xlu0 %v1105
        %v1177 = vpop.xlane.xlu0 %1176
        %1178 = vadd.xlane.f32.xlu0 %v1106
        %v1179 = vpop.xlane.xlu0 %1178
        %1180 = vadd.xlane.f32.xlu0 %v1107
        %v1181 = vpop.xlane.xlu0 %1180
        %1182 = vadd.xlane.f32.xlu0 %v1108
        %v1183 = vpop.xlane.xlu0 %1182
        %1184 = vadd.xlane.f32.xlu0 %v1109
        %v1185 = vpop.xlane.xlu0 %1184
        %1186 = vadd.xlane.f32.xlu0 %v1110
        %v1187 = vpop.xlane.xlu0 %1186
        %1188 = vadd.xlane.f32.xlu0 %v1111
        %v1189 = vpop.xlane.xlu0 %1188
        %1190 = vadd.xlane.f32.xlu0 %v1112
        %v1191 = vpop.xlane.xlu0 %1190
        %1192 = vadd.xlane.f32.xlu0 %v1113
        %v1193 = vpop.xlane.xlu0 %1192
        %1194 = vadd.xlane.f32.xlu0 %v1114
        %v1195 = vpop.xlane.xlu0 %1194
        %1196 = vadd.xlane.f32.xlu0 %v1115
        %v1197 = vpop.xlane.xlu0 %1196
        %1198 = vadd.xlane.f32.xlu0 %v1116
        %v1199 = vpop.xlane.xlu0 %1198
        %1200 = vadd.xlane.f32.xlu0 %v1117
        %v1201 = vpop.xlane.xlu0 %1200
        %1202 = vadd.xlane.f32.xlu0 %v1118
        %v1203 = vpop.xlane.xlu0 %1202
        %1204 = vadd.xlane.f32.xlu0 %v1119
        %v1205 = vpop.xlane.xlu0 %1204
        %1206 = vadd.xlane.f32.xlu0 %v1120
        %v1207 = vpop.xlane.xlu0 %1206
        %1208 = vadd.xlane.f32.xlu0 %v1121
        %v1209 = vpop.xlane.xlu0 %1208
        %1210 = vadd.xlane.f32.xlu0 %v1122
        %v1211 = vpop.xlane.xlu0 %1210
        %1212 = vadd.xlane.f32.xlu0 %v1123
        %v1213 = vpop.xlane.xlu0 %1212
        %1214 = vadd.xlane.f32.xlu0 %v1124
        %v1215 = vpop.xlane.xlu0 %1214
        %1216 = vadd.xlane.f32.xlu0 %v1125
        %v1217 = vpop.xlane.xlu0 %1216
        %1218 = vadd.xlane.f32.xlu0 %v1126
        %v1219 = vpop.xlane.xlu0 %1218
        %1220 = vadd.xlane.f32.xlu0 %v1127
        %v1221 = vpop.xlane.xlu0 %1220
        %1222 = vadd.xlane.f32.xlu0 %v1128
        %v1223 = vpop.xlane.xlu0 %1222
        %1224 = vadd.xlane.f32.xlu0 %v1129
        %v1225 = vpop.xlane.xlu0 %1224
        %1226 = vadd.xlane.f32.xlu0 %v1130
        %v1227 = vpop.xlane.xlu0 %1226
        %1228 = vadd.xlane.f32.xlu0 %v1131
        %v1229 = vpop.xlane.xlu0 %1228
        %1230 = vadd.xlane.f32.xlu0 %v1132
        %v1231 = vpop.xlane.xlu0 %1230
        %1232 = vadd.xlane.f32.xlu0 %v1133
        %v1233 = vpop.xlane.xlu0 %1232
        %1234 = vadd.xlane.f32.xlu0 %v1134
        %v1235 = vpop.xlane.xlu0 %1234
        %1236 = vadd.xlane.f32.xlu0 %v1135
        %v1237 = vpop.xlane.xlu0 %1236
        %1238 = vadd.xlane.f32.xlu0 %v1136
        %v1239 = vpop.xlane.xlu0 %1238
        %1240 = vadd.xlane.f32.xlu0 %v1137
        %v1241 = vpop.xlane.xlu0 %1240
        %1242 = vadd.xlane.f32.xlu0 %v1138
        %v1243 = vpop.xlane.xlu0 %1242
        %1244 = vadd.xlane.f32.xlu0 %v1139
        %v1245 = vpop.xlane.xlu0 %1244
        %1246 = vadd.xlane.f32.xlu0 %v1140
        %v1247 = vpop.xlane.xlu0 %1246
        %1248 = vadd.xlane.f32.xlu0 %v1141
        %v1249 = vpop.xlane.xlu0 %1248
        %1250 = vadd.xlane.f32.xlu0 %v1142
        %v1251 = vpop.xlane.xlu0 %1250
        %1252 = vadd.xlane.f32.xlu0 %v1143
        %v1253 = vpop.xlane.xlu0 %1252
        %1254 = vadd.xlane.f32.xlu0 %v1144
        %v1255 = vpop.xlane.xlu0 %1254
        %1256 = vadd.xlane.f32.xlu0 %v1145
        %v1257 = vpop.xlane.xlu0 %1256
        %1258 = vadd.xlane.f32.xlu0 %v1146
        %v1259 = vpop.xlane.xlu0 %1258
        %1260 = vadd.xlane.f32.xlu0 %v1147
        %v1261 = vpop.xlane.xlu0 %1260
        %1262 = vadd.xlane.f32.xlu0 %v1148
        %v1263 = vpop.xlane.xlu0 %1262
        %1264 = vadd.xlane.f32.xlu0 %v1149
        %v1265 = vpop.xlane.xlu0 %1264
        %1266 = vadd.xlane.f32.xlu0 %v1150
        %v1267 = vpop.xlane.xlu0 %1266
        %1268 = vadd.xlane.f32.xlu0 %v1151
        %v1269 = vpop.xlane.xlu0 %1268
        %1270 = vadd.xlane.f32.xlu0 %v1152
        %v1271 = vpop.xlane.xlu0 %1270
        %1272 = vadd.xlane.f32.xlu0 %v1153
        %v1273 = vpop.xlane.xlu0 %1272
        %1274 = vadd.xlane.f32.xlu0 %v1154
        %v1275 = vpop.xlane.xlu0 %1274
        %1276 = vadd.xlane.f32.xlu0 %v1155
        %v1277 = vpop.xlane.xlu0 %1276
        %1278 = vadd.xlane.f32.xlu0 %v1156
        %v1279 = vpop.xlane.xlu0 %1278
        %1280 = vadd.xlane.f32.xlu0 %v1157
        %v1281 = vpop.xlane.xlu0 %1280
        %1282 = vadd.xlane.f32.xlu0 %v1158
        %v1283 = vpop.xlane.xlu0 %1282
        %1284 = vadd.xlane.f32.xlu0 %v1159
        %v1285 = vpop.xlane.xlu0 %1284
        %1286 = vadd.xlane.f32.xlu0 %v1160
        %v1287 = vpop.xlane.xlu0 %1286
        %1288 = vadd.xlane.f32.xlu0 %v1161
        %v1289 = vpop.xlane.xlu0 %1288
        %v1290 = vmul.f32 %v971, 0.015625
        %v1291 = vmul.f32 %v973, 0.015625
        %v1292 = vmul.f32 %v975, 0.015625
        %v1293 = vmul.f32 %v977, 0.015625
        %v1294 = vmul.f32 %v979, 0.015625
        %v1295 = vmul.f32 %v981, 0.015625
        %v1296 = vmul.f32 %v983, 0.015625
        %v1297 = vmul.f32 %v985, 0.015625
        %v1298 = vmul.f32 %v987, 0.015625
        %v1299 = vmul.f32 %v989, 0.015625
        %v1300 = vmul.f32 %v991, 0.015625
        %v1301 = vmul.f32 %v993, 0.015625
        %v1302 = vmul.f32 %v995, 0.015625
        %v1303 = vmul.f32 %v997, 0.015625
        %v1304 = vmul.f32 %v999, 0.015625
        %v1305 = vmul.f32 %v1001, 0.015625
        %v1306 = vmul.f32 %v1003, 0.015625
        %v1307 = vmul.f32 %v1005, 0.015625
        %v1308 = vmul.f32 %v1007, 0.015625
        %v1309 = vmul.f32 %v1009, 0.015625
        %v1310 = vmul.f32 %v1011, 0.015625
        %v1311 = vmul.f32 %v1013, 0.015625
        %v1312 = vmul.f32 %v1015, 0.015625
        %v1313 = vmul.f32 %v1017, 0.015625
        %v1314 = vmul.f32 %v1019, 0.015625
        %v1315 = vmul.f32 %v1021, 0.015625
        %v1316 = vmul.f32 %v1023, 0.015625
        %v1317 = vmul.f32 %v1025, 0.015625
        %v1318 = vmul.f32 %v1027, 0.015625
        %v1319 = vmul.f32 %v1029, 0.015625
        %v1320 = vmul.f32 %v1031, 0.015625
        %v1321 = vmul.f32 %v1033, 0.015625
        %v1322 = vmul.f32 %v1035, 0.015625
        %v1323 = vmul.f32 %v1037, 0.015625
        %v1324 = vmul.f32 %v1039, 0.015625
        %v1325 = vmul.f32 %v1041, 0.015625
        %v1326 = vmul.f32 %v1043, 0.015625
        %v1327 = vmul.f32 %v1045, 0.015625
        %v1328 = vmul.f32 %v1047, 0.015625
        %v1329 = vmul.f32 %v1049, 0.015625
        %v1330 = vmul.f32 %v1051, 0.015625
        %v1331 = vmul.f32 %v1053, 0.015625
        %v1332 = vmul.f32 %v1055, 0.015625
        %v1333 = vmul.f32 %v1057, 0.015625
        %v1334 = vmul.f32 %v1059, 0.015625
        %v1335 = vmul.f32 %v1061, 0.015625
        %v1336 = vmul.f32 %v1063, 0.015625
        %v1337 = vmul.f32 %v1065, 0.015625
        %v1338 = vmul.f32 %v1067, 0.015625
        %v1339 = vmul.f32 %v1069, 0.015625
        %v1340 = vmul.f32 %v1071, 0.015625
        %v1341 = vmul.f32 %v1073, 0.015625
        %v1342 = vmul.f32 %v1075, 0.015625
        %v1343 = vmul.f32 %v1077, 0.015625
        %v1344 = vmul.f32 %v1079, 0.015625
        %v1345 = vmul.f32 %v1081, 0.015625
        %v1346 = vmul.f32 %v1083, 0.015625
        %v1347 = vmul.f32 %v1085, 0.015625
        %v1348 = vmul.f32 %v1087, 0.015625
        %v1349 = vmul.f32 %v1089, 0.015625
        %v1350 = vmul.f32 %v1091, 0.015625
        %v1351 = vmul.f32 %v1093, 0.015625
        %v1352 = vmul.f32 %v1095, 0.015625
        %v1353 = vmul.f32 %v1097, 0.015625
        %v1354 = vmul.f32 %v1163, 0.015625
        %v1355 = vmul.f32 %v1165, 0.015625
        %v1356 = vmul.f32 %v1167, 0.015625
        %v1357 = vmul.f32 %v1169, 0.015625
        %v1358 = vmul.f32 %v1171, 0.015625
        %v1359 = vmul.f32 %v1173, 0.015625
        %v1360 = vmul.f32 %v1175, 0.015625
        %v1361 = vmul.f32 %v1177, 0.015625
        %v1362 = vmul.f32 %v1179, 0.015625
        %v1363 = vmul.f32 %v1181, 0.015625
        %v1364 = vmul.f32 %v1183, 0.015625
        %v1365 = vmul.f32 %v1185, 0.015625
        %v1366 = vmul.f32 %v1187, 0.015625
        %v1367 = vmul.f32 %v1189, 0.015625
        %v1368 = vmul.f32 %v1191, 0.015625
        %v1369 = vmul.f32 %v1193, 0.015625
        %v1370 = vmul.f32 %v1195, 0.015625
        %v1371 = vmul.f32 %v1197, 0.015625
        %v1372 = vmul.f32 %v1199, 0.015625
        %v1373 = vmul.f32 %v1201, 0.015625
        %v1374 = vmul.f32 %v1203, 0.015625
        %v1375 = vmul.f32 %v1205, 0.015625
        %v1376 = vmul.f32 %v1207, 0.015625
        %v1377 = vmul.f32 %v1209, 0.015625
        %v1378 = vmul.f32 %v1211, 0.015625
        %v1379 = vmul.f32 %v1213, 0.015625
        %v1380 = vmul.f32 %v1215, 0.015625
        %v1381 = vmul.f32 %v1217, 0.015625
        %v1382 = vmul.f32 %v1219, 0.015625
        %v1383 = vmul.f32 %v1221, 0.015625
        %v1384 = vmul.f32 %v1223, 0.015625
        %v1385 = vmul.f32 %v1225, 0.015625
        %v1386 = vmul.f32 %v1227, 0.015625
        %v1387 = vmul.f32 %v1229, 0.015625
        %v1388 = vmul.f32 %v1231, 0.015625
        %v1389 = vmul.f32 %v1233, 0.015625
        %v1390 = vmul.f32 %v1235, 0.015625
        %v1391 = vmul.f32 %v1237, 0.015625
        %v1392 = vmul.f32 %v1239, 0.015625
        %v1393 = vmul.f32 %v1241, 0.015625
        %v1394 = vmul.f32 %v1243, 0.015625
        %v1395 = vmul.f32 %v1245, 0.015625
        %v1396 = vmul.f32 %v1247, 0.015625
        %v1397 = vmul.f32 %v1249, 0.015625
        %v1398 = vmul.f32 %v1251, 0.015625
        %v1399 = vmul.f32 %v1253, 0.015625
        %v1400 = vmul.f32 %v1255, 0.015625
        %v1401 = vmul.f32 %v1257, 0.015625
        %v1402 = vmul.f32 %v1259, 0.015625
        %v1403 = vmul.f32 %v1261, 0.015625
        %v1404 = vmul.f32 %v1263, 0.015625
        %v1405 = vmul.f32 %v1265, 0.015625
        %v1406 = vmul.f32 %v1267, 0.015625
        %v1407 = vmul.f32 %v1269, 0.015625
        %v1408 = vmul.f32 %v1271, 0.015625
        %v1409 = vmul.f32 %v1273, 0.015625
        %v1410 = vmul.f32 %v1275, 0.015625
        %v1411 = vmul.f32 %v1277, 0.015625
        %v1412 = vmul.f32 %v1279, 0.015625
        %v1413 = vmul.f32 %v1281, 0.015625
        %v1414 = vmul.f32 %v1283, 0.015625
        %v1415 = vmul.f32 %v1285, 0.015625
        %v1416 = vmul.f32 %v1287, 0.015625
        %v1417 = vmul.f32 %v1289, 0.015625
        %v1418 = vmul.f32 %v1290, %v1290
        %v1419 = vmul.f32 %v1291, %v1291
        %v1420 = vmul.f32 %v1292, %v1292
        %v1421 = vmul.f32 %v1293, %v1293
        %v1422 = vmul.f32 %v1294, %v1294
        %v1423 = vmul.f32 %v1295, %v1295
        %v1424 = vmul.f32 %v1296, %v1296
        %v1425 = vmul.f32 %v1297, %v1297
        %v1426 = vmul.f32 %v1298, %v1298
        %v1427 = vmul.f32 %v1299, %v1299
        %v1428 = vmul.f32 %v1300, %v1300
        %v1429 = vmul.f32 %v1301, %v1301
        %v1430 = vmul.f32 %v1302, %v1302
        %v1431 = vmul.f32 %v1303, %v1303
        %v1432 = vmul.f32 %v1304, %v1304
        %v1433 = vmul.f32 %v1305, %v1305
        %v1434 = vmul.f32 %v1306, %v1306
        %v1435 = vmul.f32 %v1307, %v1307
        %v1436 = vmul.f32 %v1308, %v1308
        %v1437 = vmul.f32 %v1309, %v1309
        %v1438 = vmul.f32 %v1310, %v1310
        %v1439 = vmul.f32 %v1311, %v1311
        %v1440 = vmul.f32 %v1312, %v1312
        %v1441 = vmul.f32 %v1313, %v1313
        %v1442 = vmul.f32 %v1314, %v1314
        %v1443 = vmul.f32 %v1315, %v1315
        %v1444 = vmul.f32 %v1316, %v1316
        %v1445 = vmul.f32 %v1317, %v1317
        %v1446 = vmul.f32 %v1318, %v1318
        %v1447 = vmul.f32 %v1319, %v1319
        %v1448 = vmul.f32 %v1320, %v1320
        %v1449 = vmul.f32 %v1321, %v1321
        %v1450 = vmul.f32 %v1322, %v1322
        %v1451 = vmul.f32 %v1323, %v1323
        %v1452 = vmul.f32 %v1324, %v1324
        %v1453 = vmul.f32 %v1325, %v1325
        %v1454 = vmul.f32 %v1326, %v1326
        %v1455 = vmul.f32 %v1327, %v1327
        %v1456 = vmul.f32 %v1328, %v1328
        %v1457 = vmul.f32 %v1329, %v1329
        %v1458 = vmul.f32 %v1330, %v1330
        %v1459 = vmul.f32 %v1331, %v1331
        %v1460 = vmul.f32 %v1332, %v1332
        %v1461 = vmul.f32 %v1333, %v1333
        %v1462 = vmul.f32 %v1334, %v1334
        %v1463 = vmul.f32 %v1335, %v1335
        %v1464 = vmul.f32 %v1336, %v1336
        %v1465 = vmul.f32 %v1337, %v1337
        %v1466 = vmul.f32 %v1338, %v1338
        %v1467 = vmul.f32 %v1339, %v1339
        %v1468 = vmul.f32 %v1340, %v1340
        %v1469 = vmul.f32 %v1341, %v1341
        %v1470 = vmul.f32 %v1342, %v1342
        %v1471 = vmul.f32 %v1343, %v1343
        %v1472 = vmul.f32 %v1344, %v1344
        %v1473 = vmul.f32 %v1345, %v1345
        %v1474 = vmul.f32 %v1346, %v1346
        %v1475 = vmul.f32 %v1347, %v1347
        %v1476 = vmul.f32 %v1348, %v1348
        %v1477 = vmul.f32 %v1349, %v1349
        %v1478 = vmul.f32 %v1350, %v1350
        %v1479 = vmul.f32 %v1351, %v1351
        %v1480 = vmul.f32 %v1352, %v1352
        %v1481 = vmul.f32 %v1353, %v1353
        %v1482 = vsub.f32 %v1354, %v1418
        %v1483 = vsub.f32 %v1355, %v1419
        %v1484 = vsub.f32 %v1356, %v1420
        %v1485 = vsub.f32 %v1357, %v1421
        %v1486 = vsub.f32 %v1358, %v1422
        %v1487 = vsub.f32 %v1359, %v1423
        %v1488 = vsub.f32 %v1360, %v1424
        %v1489 = vsub.f32 %v1361, %v1425
        %v1490 = vsub.f32 %v1362, %v1426
        %v1491 = vsub.f32 %v1363, %v1427
        %v1492 = vsub.f32 %v1364, %v1428
        %v1493 = vsub.f32 %v1365, %v1429
        %v1494 = vsub.f32 %v1366, %v1430
        %v1495 = vsub.f32 %v1367, %v1431
        %v1496 = vsub.f32 %v1368, %v1432
        %v1497 = vsub.f32 %v1369, %v1433
        %v1498 = vsub.f32 %v1370, %v1434
        %v1499 = vsub.f32 %v1371, %v1435
        %v1500 = vsub.f32 %v1372, %v1436
        %v1501 = vsub.f32 %v1373, %v1437
        %v1502 = vsub.f32 %v1374, %v1438
        %v1503 = vsub.f32 %v1375, %v1439
        %v1504 = vsub.f32 %v1376, %v1440
        %v1505 = vsub.f32 %v1377, %v1441
        %v1506 = vsub.f32 %v1378, %v1442
        %v1507 = vsub.f32 %v1379, %v1443
        %v1508 = vsub.f32 %v1380, %v1444
        %v1509 = vsub.f32 %v1381, %v1445
        %v1510 = vsub.f32 %v1382, %v1446
        %v1511 = vsub.f32 %v1383, %v1447
        %v1512 = vsub.f32 %v1384, %v1448
        %v1513 = vsub.f32 %v1385, %v1449
        %v1514 = vsub.f32 %v1386, %v1450
        %v1515 = vsub.f32 %v1387, %v1451
        %v1516 = vsub.f32 %v1388, %v1452
        %v1517 = vsub.f32 %v1389, %v1453
        %v1518 = vsub.f32 %v1390, %v1454
        %v1519 = vsub.f32 %v1391, %v1455
        %v1520 = vsub.f32 %v1392, %v1456
        %v1521 = vsub.f32 %v1393, %v1457
        %v1522 = vsub.f32 %v1394, %v1458
        %v1523 = vsub.f32 %v1395, %v1459
        %v1524 = vsub.f32 %v1396, %v1460
        %v1525 = vsub.f32 %v1397, %v1461
        %v1526 = vsub.f32 %v1398, %v1462
        %v1527 = vsub.f32 %v1399, %v1463
        %v1528 = vsub.f32 %v1400, %v1464
        %v1529 = vsub.f32 %v1401, %v1465
        %v1530 = vsub.f32 %v1402, %v1466
        %v1531 = vsub.f32 %v1403, %v1467
        %v1532 = vsub.f32 %v1404, %v1468
        %v1533 = vsub.f32 %v1405, %v1469
        %v1534 = vsub.f32 %v1406, %v1470
        %v1535 = vsub.f32 %v1407, %v1471
        %v1536 = vsub.f32 %v1408, %v1472
        %v1537 = vsub.f32 %v1409, %v1473
        %v1538 = vsub.f32 %v1410, %v1474
        %v1539 = vsub.f32 %v1411, %v1475
        %v1540 = vsub.f32 %v1412, %v1476
        %v1541 = vsub.f32 %v1413, %v1477
        %v1542 = vsub.f32 %v1414, %v1478
        %v1543 = vsub.f32 %v1415, %v1479
        %v1544 = vsub.f32 %v1416, %v1480
        %v1545 = vsub.f32 %v1417, %v1481
        %v1546 = vmax.f32 %v1482, 0.0
        %v1547 = vmax.f32 %v1483, 0.0
        %v1548 = vmax.f32 %v1484, 0.0
        %v1549 = vmax.f32 %v1485, 0.0
        %v1550 = vmax.f32 %v1486, 0.0
        %v1551 = vmax.f32 %v1487, 0.0
        %v1552 = vmax.f32 %v1488, 0.0
        %v1553 = vmax.f32 %v1489, 0.0
        %v1554 = vmax.f32 %v1490, 0.0
        %v1555 = vmax.f32 %v1491, 0.0
        %v1556 = vmax.f32 %v1492, 0.0
        %v1557 = vmax.f32 %v1493, 0.0
        %v1558 = vmax.f32 %v1494, 0.0
        %v1559 = vmax.f32 %v1495, 0.0
        %v1560 = vmax.f32 %v1496, 0.0
        %v1561 = vmax.f32 %v1497, 0.0
        %v1562 = vmax.f32 %v1498, 0.0
        %v1563 = vmax.f32 %v1499, 0.0
        %v1564 = vmax.f32 %v1500, 0.0
        %v1565 = vmax.f32 %v1501, 0.0
        %v1566 = vmax.f32 %v1502, 0.0
        %v1567 = vmax.f32 %v1503, 0.0
        %v1568 = vmax.f32 %v1504, 0.0
        %v1569 = vmax.f32 %v1505, 0.0
        %v1570 = vmax.f32 %v1506, 0.0
        %v1571 = vmax.f32 %v1507, 0.0
        %v1572 = vmax.f32 %v1508, 0.0
        %v1573 = vmax.f32 %v1509, 0.0
        %v1574 = vmax.f32 %v1510, 0.0
        %v1575 = vmax.f32 %v1511, 0.0
        %v1576 = vmax.f32 %v1512, 0.0
        %v1577 = vmax.f32 %v1513, 0.0
        %v1578 = vmax.f32 %v1514, 0.0
        %v1579 = vmax.f32 %v1515, 0.0
        %v1580 = vmax.f32 %v1516, 0.0
        %v1581 = vmax.f32 %v1517, 0.0
        %v1582 = vmax.f32 %v1518, 0.0
        %v1583 = vmax.f32 %v1519, 0.0
        %v1584 = vmax.f32 %v1520, 0.0
        %v1585 = vmax.f32 %v1521, 0.0
        %v1586 = vmax.f32 %v1522, 0.0
        %v1587 = vmax.f32 %v1523, 0.0
        %v1588 = vmax.f32 %v1524, 0.0
        %v1589 = vmax.f32 %v1525, 0.0
        %v1590 = vmax.f32 %v1526, 0.0
        %v1591 = vmax.f32 %v1527, 0.0
        %v1592 = vmax.f32 %v1528, 0.0
        %v1593 = vmax.f32 %v1529, 0.0
        %v1594 = vmax.f32 %v1530, 0.0
        %v1595 = vmax.f32 %v1531, 0.0
        %v1596 = vmax.f32 %v1532, 0.0
        %v1597 = vmax.f32 %v1533, 0.0
        %v1598 = vmax.f32 %v1534, 0.0
        %v1599 = vmax.f32 %v1535, 0.0
        %v1600 = vmax.f32 %v1536, 0.0
        %v1601 = vmax.f32 %v1537, 0.0
        %v1602 = vmax.f32 %v1538, 0.0
        %v1603 = vmax.f32 %v1539, 0.0
        %v1604 = vmax.f32 %v1540, 0.0
        %v1605 = vmax.f32 %v1541, 0.0
        %v1606 = vmax.f32 %v1542, 0.0
        %v1607 = vmax.f32 %v1543, 0.0
        %v1608 = vmax.f32 %v1544, 0.0
        %v1609 = vmax.f32 %v1545, 0.0
        %v1610 = vadd.f32 %v1546, 1e-05
        %v1611 = vadd.f32 %v1547, 1e-05
        %v1612 = vadd.f32 %v1548, 1e-05
        %v1613 = vadd.f32 %v1549, 1e-05
        %v1614 = vadd.f32 %v1550, 1e-05
        %v1615 = vadd.f32 %v1551, 1e-05
        %v1616 = vadd.f32 %v1552, 1e-05
        %v1617 = vadd.f32 %v1553, 1e-05
        %v1618 = vadd.f32 %v1554, 1e-05
        %v1619 = vadd.f32 %v1555, 1e-05
        %v1620 = vadd.f32 %v1556, 1e-05
        %v1621 = vadd.f32 %v1557, 1e-05
        %v1622 = vadd.f32 %v1558, 1e-05
        %v1623 = vadd.f32 %v1559, 1e-05
        %v1624 = vadd.f32 %v1560, 1e-05
        %v1625 = vadd.f32 %v1561, 1e-05
        %v1626 = vadd.f32 %v1562, 1e-05
        %v1627 = vadd.f32 %v1563, 1e-05
        %v1628 = vadd.f32 %v1564, 1e-05
        %v1629 = vadd.f32 %v1565, 1e-05
        %v1630 = vadd.f32 %v1566, 1e-05
        %v1631 = vadd.f32 %v1567, 1e-05
        %v1632 = vadd.f32 %v1568, 1e-05
        %v1633 = vadd.f32 %v1569, 1e-05
        %v1634 = vadd.f32 %v1570, 1e-05
        %v1635 = vadd.f32 %v1571, 1e-05
        %v1636 = vadd.f32 %v1572, 1e-05
        %v1637 = vadd.f32 %v1573, 1e-05
        %v1638 = vadd.f32 %v1574, 1e-05
        %v1639 = vadd.f32 %v1575, 1e-05
        %v1640 = vadd.f32 %v1576, 1e-05
        %v1641 = vadd.f32 %v1577, 1e-05
        %v1642 = vadd.f32 %v1578, 1e-05
        %v1643 = vadd.f32 %v1579, 1e-05
        %v1644 = vadd.f32 %v1580, 1e-05
        %v1645 = vadd.f32 %v1581, 1e-05
        %v1646 = vadd.f32 %v1582, 1e-05
        %v1647 = vadd.f32 %v1583, 1e-05
        %v1648 = vadd.f32 %v1584, 1e-05
        %v1649 = vadd.f32 %v1585, 1e-05
        %v1650 = vadd.f32 %v1586, 1e-05
        %v1651 = vadd.f32 %v1587, 1e-05
        %v1652 = vadd.f32 %v1588, 1e-05
        %v1653 = vadd.f32 %v1589, 1e-05
        %v1654 = vadd.f32 %v1590, 1e-05
        %v1655 = vadd.f32 %v1591, 1e-05
        %v1656 = vadd.f32 %v1592, 1e-05
        %v1657 = vadd.f32 %v1593, 1e-05
        %v1658 = vadd.f32 %v1594, 1e-05
        %v1659 = vadd.f32 %v1595, 1e-05
        %v1660 = vadd.f32 %v1596, 1e-05
        %v1661 = vadd.f32 %v1597, 1e-05
        %v1662 = vadd.f32 %v1598, 1e-05
        %v1663 = vadd.f32 %v1599, 1e-05
        %v1664 = vadd.f32 %v1600, 1e-05
        %v1665 = vadd.f32 %v1601, 1e-05
        %v1666 = vadd.f32 %v1602, 1e-05
        %v1667 = vadd.f32 %v1603, 1e-05
        %v1668 = vadd.f32 %v1604, 1e-05
        %v1669 = vadd.f32 %v1605, 1e-05
        %v1670 = vadd.f32 %v1606, 1e-05
        %v1671 = vadd.f32 %v1607, 1e-05
        %v1672 = vadd.f32 %v1608, 1e-05
        %v1673 = vadd.f32 %v1609, 1e-05
        %v1674 = vrsqrt.pop %v1610
        %v1675 = vrsqrt.pop %v1611
        %v1676 = vrsqrt.pop %v1612
        %v1677 = vrsqrt.pop %v1613
        %v1678 = vrsqrt.pop %v1614
        %v1679 = vrsqrt.pop %v1615
        %v1680 = vrsqrt.pop %v1616
        %v1681 = vrsqrt.pop %v1617
        %v1682 = vrsqrt.pop %v1618
        %v1683 = vrsqrt.pop %v1619
        %v1684 = vrsqrt.pop %v1620
        %v1685 = vrsqrt.pop %v1621
        %v1686 = vrsqrt.pop %v1622
        %v1687 = vrsqrt.pop %v1623
        %v1688 = vrsqrt.pop %v1624
        %v1689 = vrsqrt.pop %v1625
        %v1690 = vrsqrt.pop %v1626
        %v1691 = vrsqrt.pop %v1627
        %v1692 = vrsqrt.pop %v1628
        %v1693 = vrsqrt.pop %v1629
        %v1694 = vrsqrt.pop %v1630
        %v1695 = vrsqrt.pop %v1631
        %v1696 = vrsqrt.pop %v1632
        %v1697 = vrsqrt.pop %v1633
        %v1698 = vrsqrt.pop %v1634
        %v1699 = vrsqrt.pop %v1635
        %v1700 = vrsqrt.pop %v1636
        %v1701 = vrsqrt.pop %v1637
        %v1702 = vrsqrt.pop %v1638
        %v1703 = vrsqrt.pop %v1639
        %v1704 = vrsqrt.pop %v1640
        %v1705 = vrsqrt.pop %v1641
        %v1706 = vrsqrt.pop %v1642
        %v1707 = vrsqrt.pop %v1643
        %v1708 = vrsqrt.pop %v1644
        %v1709 = vrsqrt.pop %v1645
        %v1710 = vrsqrt.pop %v1646
        %v1711 = vrsqrt.pop %v1647
        %v1712 = vrsqrt.pop %v1648
        %v1713 = vrsqrt.pop %v1649
        %v1714 = vrsqrt.pop %v1650
        %v1715 = vrsqrt.pop %v1651
        %v1716 = vrsqrt.pop %v1652
        %v1717 = vrsqrt.pop %v1653
        %v1718 = vrsqrt.pop %v1654
        %v1719 = vrsqrt.pop %v1655
        %v1720 = vrsqrt.pop %v1656
        %v1721 = vrsqrt.pop %v1657
        %v1722 = vrsqrt.pop %v1658
        %v1723 = vrsqrt.pop %v1659
        %v1724 = vrsqrt.pop %v1660
        %v1725 = vrsqrt.pop %v1661
        %v1726 = vrsqrt.pop %v1662
        %v1727 = vrsqrt.pop %v1663
        %v1728 = vrsqrt.pop %v1664
        %v1729 = vrsqrt.pop %v1665
        %v1730 = vrsqrt.pop %v1666
        %v1731 = vrsqrt.pop %v1667
        %v1732 = vrsqrt.pop %v1668
        %v1733 = vrsqrt.pop %v1669
        %v1734 = vrsqrt.pop %v1670
        %v1735 = vrsqrt.pop %v1671
        %v1736 = vrsqrt.pop %v1672
        %v1737 = vrsqrt.pop %v1673
        %v1738 = vlaneseq
        %v1739 = vshrl.u32 %v1738, 7
        %v1740 = vsub.s32 0, %v1739
        %v1741 = vrot.slane %v968, %v1740
        %v1742 = vmul.f32 %v1741, %v1674
        %v1743 = vmul.f32 %v1741, %v1675
        %v1744 = vmul.f32 %v1741, %v1676
        %v1745 = vmul.f32 %v1741, %v1677
        %v1746 = vmul.f32 %v1741, %v1678
        %v1747 = vmul.f32 %v1741, %v1679
        %v1748 = vmul.f32 %v1741, %v1680
        %v1749 = vmul.f32 %v1741, %v1681
        %v1750 = vmul.f32 %v1741, %v1682
        %v1751 = vmul.f32 %v1741, %v1683
        %v1752 = vmul.f32 %v1741, %v1684
        %v1753 = vmul.f32 %v1741, %v1685
        %v1754 = vmul.f32 %v1741, %v1686
        %v1755 = vmul.f32 %v1741, %v1687
        %v1756 = vmul.f32 %v1741, %v1688
        %v1757 = vmul.f32 %v1741, %v1689
        %v1758 = vmul.f32 %v1741, %v1690
        %v1759 = vmul.f32 %v1741, %v1691
        %v1760 = vmul.f32 %v1741, %v1692
        %v1761 = vmul.f32 %v1741, %v1693
        %v1762 = vmul.f32 %v1741, %v1694
        %v1763 = vmul.f32 %v1741, %v1695
        %v1764 = vmul.f32 %v1741, %v1696
        %v1765 = vmul.f32 %v1741, %v1697
        %v1766 = vmul.f32 %v1741, %v1698
        %v1767 = vmul.f32 %v1741, %v1699
        %v1768 = vmul.f32 %v1741, %v1700
        %v1769 = vmul.f32 %v1741, %v1701
        %v1770 = vmul.f32 %v1741, %v1702
        %v1771 = vmul.f32 %v1741, %v1703
        %v1772 = vmul.f32 %v1741, %v1704
        %v1773 = vmul.f32 %v1741, %v1705
        %v1774 = vmul.f32 %v1741, %v1706
        %v1775 = vmul.f32 %v1741, %v1707
        %v1776 = vmul.f32 %v1741, %v1708
        %v1777 = vmul.f32 %v1741, %v1709
        %v1778 = vmul.f32 %v1741, %v1710
        %v1779 = vmul.f32 %v1741, %v1711
        %v1780 = vmul.f32 %v1741, %v1712
        %v1781 = vmul.f32 %v1741, %v1713
        %v1782 = vmul.f32 %v1741, %v1714
        %v1783 = vmul.f32 %v1741, %v1715
        %v1784 = vmul.f32 %v1741, %v1716
        %v1785 = vmul.f32 %v1741, %v1717
        %v1786 = vmul.f32 %v1741, %v1718
        %v1787 = vmul.f32 %v1741, %v1719
        %v1788 = vmul.f32 %v1741, %v1720
        %v1789 = vmul.f32 %v1741, %v1721
        %v1790 = vmul.f32 %v1741, %v1722
        %v1791 = vmul.f32 %v1741, %v1723
        %v1792 = vmul.f32 %v1741, %v1724
        %v1793 = vmul.f32 %v1741, %v1725
        %v1794 = vmul.f32 %v1741, %v1726
        %v1795 = vmul.f32 %v1741, %v1727
        %v1796 = vmul.f32 %v1741, %v1728
        %v1797 = vmul.f32 %v1741, %v1729
        %v1798 = vmul.f32 %v1741, %v1730
        %v1799 = vmul.f32 %v1741, %v1731
        %v1800 = vmul.f32 %v1741, %v1732
        %v1801 = vmul.f32 %v1741, %v1733
        %v1802 = vmul.f32 %v1741, %v1734
        %v1803 = vmul.f32 %v1741, %v1735
        %v1804 = vmul.f32 %v1741, %v1736
        %v1805 = vmul.f32 %v1741, %v1737
        %v1806 = vsub.f32 %v904, %v1290
        %v1807 = vsub.f32 %v905, %v1291
        %v1808 = vsub.f32 %v906, %v1292
        %v1809 = vsub.f32 %v907, %v1293
        %v1810 = vsub.f32 %v908, %v1294
        %v1811 = vsub.f32 %v909, %v1295
        %v1812 = vsub.f32 %v910, %v1296
        %v1813 = vsub.f32 %v911, %v1297
        %v1814 = vsub.f32 %v912, %v1298
        %v1815 = vsub.f32 %v913, %v1299
        %v1816 = vsub.f32 %v914, %v1300
        %v1817 = vsub.f32 %v915, %v1301
        %v1818 = vsub.f32 %v916, %v1302
        %v1819 = vsub.f32 %v917, %v1303
        %v1820 = vsub.f32 %v918, %v1304
        %v1821 = vsub.f32 %v919, %v1305
        %v1822 = vsub.f32 %v920, %v1306
        %v1823 = vsub.f32 %v921, %v1307
        %v1824 = vsub.f32 %v922, %v1308
        %v1825 = vsub.f32 %v923, %v1309
        %v1826 = vsub.f32 %v924, %v1310
        %v1827 = vsub.f32 %v925, %v1311
        %v1828 = vsub.f32 %v926, %v1312
        %v1829 = vsub.f32 %v927, %v1313
        %v1830 = vsub.f32 %v928, %v1314
        %v1831 = vsub.f32 %v929, %v1315
        %v1832 = vsub.f32 %v930, %v1316
        %v1833 = vsub.f32 %v931, %v1317
        %v1834 = vsub.f32 %v932, %v1318
        %v1835 = vsub.f32 %v933, %v1319
        %v1836 = vsub.f32 %v934, %v1320
        %v1837 = vsub.f32 %v935, %v1321
        %v1838 = vsub.f32 %v936, %v1322
        %v1839 = vsub.f32 %v937, %v1323
        %v1840 = vsub.f32 %v938, %v1324
        %v1841 = vsub.f32 %v939, %v1325
        %v1842 = vsub.f32 %v940, %v1326
        %v1843 = vsub.f32 %v941, %v1327
        %v1844 = vsub.f32 %v942, %v1328
        %v1845 = vsub.f32 %v943, %v1329
        %v1846 = vsub.f32 %v944, %v1330
        %v1847 = vsub.f32 %v945, %v1331
        %v1848 = vsub.f32 %v946, %v1332
        %v1849 = vsub.f32 %v947, %v1333
        %v1850 = vsub.f32 %v948, %v1334
        %v1851 = vsub.f32 %v949, %v1335
        %v1852 = vsub.f32 %v950, %v1336
        %v1853 = vsub.f32 %v951, %v1337
        %v1854 = vsub.f32 %v952, %v1338
        %v1855 = vsub.f32 %v953, %v1339
        %v1856 = vsub.f32 %v954, %v1340
        %v1857 = vsub.f32 %v955, %v1341
        %v1858 = vsub.f32 %v956, %v1342
        %v1859 = vsub.f32 %v957, %v1343
        %v1860 = vsub.f32 %v958, %v1344
        %v1861 = vsub.f32 %v959, %v1345
        %v1862 = vsub.f32 %v960, %v1346
        %v1863 = vsub.f32 %v961, %v1347
        %v1864 = vsub.f32 %v962, %v1348
        %v1865 = vsub.f32 %v963, %v1349
        %v1866 = vsub.f32 %v964, %v1350
        %v1867 = vsub.f32 %v965, %v1351
        %v1868 = vsub.f32 %v966, %v1352
        %v1869 = vsub.f32 %v967, %v1353
        %v1870 = vmul.f32 %v1806, %v1742
        %v1871 = vmul.f32 %v1807, %v1743
        %v1872 = vmul.f32 %v1808, %v1744
        %v1873 = vmul.f32 %v1809, %v1745
        %v1874 = vmul.f32 %v1810, %v1746
        %v1875 = vmul.f32 %v1811, %v1747
        %v1876 = vmul.f32 %v1812, %v1748
        %v1877 = vmul.f32 %v1813, %v1749
        %v1878 = vmul.f32 %v1814, %v1750
        %v1879 = vmul.f32 %v1815, %v1751
        %v1880 = vmul.f32 %v1816, %v1752
        %v1881 = vmul.f32 %v1817, %v1753
        %v1882 = vmul.f32 %v1818, %v1754
        %v1883 = vmul.f32 %v1819, %v1755
        %v1884 = vmul.f32 %v1820, %v1756
        %v1885 = vmul.f32 %v1821, %v1757
        %v1886 = vmul.f32 %v1822, %v1758
        %v1887 = vmul.f32 %v1823, %v1759
        %v1888 = vmul.f32 %v1824, %v1760
        %v1889 = vmul.f32 %v1825, %v1761
        %v1890 = vmul.f32 %v1826, %v1762
        %v1891 = vmul.f32 %v1827, %v1763
        %v1892 = vmul.f32 %v1828, %v1764
        %v1893 = vmul.f32 %v1829, %v1765
        %v1894 = vmul.f32 %v1830, %v1766
        %v1895 = vmul.f32 %v1831, %v1767
        %v1896 = vmul.f32 %v1832, %v1768
        %v1897 = vmul.f32 %v1833, %v1769
        %v1898 = vmul.f32 %v1834, %v1770
        %v1899 = vmul.f32 %v1835, %v1771
        %v1900 = vmul.f32 %v1836, %v1772
        %v1901 = vmul.f32 %v1837, %v1773
        %v1902 = vmul.f32 %v1838, %v1774
        %v1903 = vmul.f32 %v1839, %v1775
        %v1904 = vmul.f32 %v1840, %v1776
        %v1905 = vmul.f32 %v1841, %v1777
        %v1906 = vmul.f32 %v1842, %v1778
        %v1907 = vmul.f32 %v1843, %v1779
        %v1908 = vmul.f32 %v1844, %v1780
        %v1909 = vmul.f32 %v1845, %v1781
        %v1910 = vmul.f32 %v1846, %v1782
        %v1911 = vmul.f32 %v1847, %v1783
        %v1912 = vmul.f32 %v1848, %v1784
        %v1913 = vmul.f32 %v1849, %v1785
        %v1914 = vmul.f32 %v1850, %v1786
        %v1915 = vmul.f32 %v1851, %v1787
        %v1916 = vmul.f32 %v1852, %v1788
        %v1917 = vmul.f32 %v1853, %v1789
        %v1918 = vmul.f32 %v1854, %v1790
        %v1919 = vmul.f32 %v1855, %v1791
        %v1920 = vmul.f32 %v1856, %v1792
        %v1921 = vmul.f32 %v1857, %v1793
        %v1922 = vmul.f32 %v1858, %v1794
        %v1923 = vmul.f32 %v1859, %v1795
        %v1924 = vmul.f32 %v1860, %v1796
        %v1925 = vmul.f32 %v1861, %v1797
        %v1926 = vmul.f32 %v1862, %v1798
        %v1927 = vmul.f32 %v1863, %v1799
        %v1928 = vmul.f32 %v1864, %v1800
        %v1929 = vmul.f32 %v1865, %v1801
        %v1930 = vmul.f32 %v1866, %v1802
        %v1931 = vmul.f32 %v1867, %v1803
        %v1932 = vmul.f32 %v1868, %v1804
        %v1933 = vmul.f32 %v1869, %v1805
        %v1934 = vlaneseq
        %v1935 = vshrl.u32 %v1934, 7
        %v1936 = vsub.s32 0, %v1935
        %v1937 = vrot.slane %v969, %v1936
        %v1938 = vadd.f32 %v1870, %v1937
        %v1939 = vadd.f32 %v1871, %v1937
        %v1940 = vadd.f32 %v1872, %v1937
        %v1941 = vadd.f32 %v1873, %v1937
        %v1942 = vadd.f32 %v1874, %v1937
        %v1943 = vadd.f32 %v1875, %v1937
        %v1944 = vadd.f32 %v1876, %v1937
        %v1945 = vadd.f32 %v1877, %v1937
        %v1946 = vadd.f32 %v1878, %v1937
        %v1947 = vadd.f32 %v1879, %v1937
        %v1948 = vadd.f32 %v1880, %v1937
        %v1949 = vadd.f32 %v1881, %v1937
        %v1950 = vadd.f32 %v1882, %v1937
        %v1951 = vadd.f32 %v1883, %v1937
        %v1952 = vadd.f32 %v1884, %v1937
        %v1953 = vadd.f32 %v1885, %v1937
        %v1954 = vadd.f32 %v1886, %v1937
        %v1955 = vadd.f32 %v1887, %v1937
        %v1956 = vadd.f32 %v1888, %v1937
        %v1957 = vadd.f32 %v1889, %v1937
        %v1958 = vadd.f32 %v1890, %v1937
        %v1959 = vadd.f32 %v1891, %v1937
        %v1960 = vadd.f32 %v1892, %v1937
        %v1961 = vadd.f32 %v1893, %v1937
        %v1962 = vadd.f32 %v1894, %v1937
        %v1963 = vadd.f32 %v1895, %v1937
        %v1964 = vadd.f32 %v1896, %v1937
        %v1965 = vadd.f32 %v1897, %v1937
        %v1966 = vadd.f32 %v1898, %v1937
        %v1967 = vadd.f32 %v1899, %v1937
        %v1968 = vadd.f32 %v1900, %v1937
        %v1969 = vadd.f32 %v1901, %v1937
        %v1970 = vadd.f32 %v1902, %v1937
        %v1971 = vadd.f32 %v1903, %v1937
        %v1972 = vadd.f32 %v1904, %v1937
        %v1973 = vadd.f32 %v1905, %v1937
        %v1974 = vadd.f32 %v1906, %v1937
        %v1975 = vadd.f32 %v1907, %v1937
        %v1976 = vadd.f32 %v1908, %v1937
        %v1977 = vadd.f32 %v1909, %v1937
        %v1978 = vadd.f32 %v1910, %v1937
        %v1979 = vadd.f32 %v1911, %v1937
        %v1980 = vadd.f32 %v1912, %v1937
        %v1981 = vadd.f32 %v1913, %v1937
        %v1982 = vadd.f32 %v1914, %v1937
        %v1983 = vadd.f32 %v1915, %v1937
        %v1984 = vadd.f32 %v1916, %v1937
        %v1985 = vadd.f32 %v1917, %v1937
        %v1986 = vadd.f32 %v1918, %v1937
        %v1987 = vadd.f32 %v1919, %v1937
        %v1988 = vadd.f32 %v1920, %v1937
        %v1989 = vadd.f32 %v1921, %v1937
        %v1990 = vadd.f32 %v1922, %v1937
        %v1991 = vadd.f32 %v1923, %v1937
        %v1992 = vadd.f32 %v1924, %v1937
        %v1993 = vadd.f32 %v1925, %v1937
        %v1994 = vadd.f32 %v1926, %v1937
        %v1995 = vadd.f32 %v1927, %v1937
        %v1996 = vadd.f32 %v1928, %v1937
        %v1997 = vadd.f32 %v1929, %v1937
        %v1998 = vadd.f32 %v1930, %v1937
        %v1999 = vadd.f32 %v1931, %v1937
        %v2000 = vadd.f32 %v1932, %v1937
        %v2001 = vadd.f32 %v1933, %v1937
        %v2002 = vpack.c.bf16 %v1939, %v1938
        %v2003 = vpack.c.bf16 %v1941, %v1940
        %v2004 = vpack.c.bf16 %v1943, %v1942
        %v2005 = vpack.c.bf16 %v1945, %v1944
        %v2006 = vpack.c.bf16 %v1947, %v1946
        %v2007 = vpack.c.bf16 %v1949, %v1948
        %v2008 = vpack.c.bf16 %v1951, %v1950
        %v2009 = vpack.c.bf16 %v1953, %v1952
        %v2010 = vpack.c.bf16 %v1955, %v1954
        %v2011 = vpack.c.bf16 %v1957, %v1956
        %v2012 = vpack.c.bf16 %v1959, %v1958
        %v2013 = vpack.c.bf16 %v1961, %v1960
        %v2014 = vpack.c.bf16 %v1963, %v1962
        %v2015 = vpack.c.bf16 %v1965, %v1964
        %v2016 = vpack.c.bf16 %v1967, %v1966
        %v2017 = vpack.c.bf16 %v1969, %v1968
        %v2018 = vpack.c.bf16 %v1971, %v1970
        %v2019 = vpack.c.bf16 %v1973, %v1972
        %v2020 = vpack.c.bf16 %v1975, %v1974
        %v2021 = vpack.c.bf16 %v1977, %v1976
        %v2022 = vpack.c.bf16 %v1979, %v1978
        %v2023 = vpack.c.bf16 %v1981, %v1980
        %v2024 = vpack.c.bf16 %v1983, %v1982
        %v2025 = vpack.c.bf16 %v1985, %v1984
        %v2026 = vpack.c.bf16 %v1987, %v1986
        %v2027 = vpack.c.bf16 %v1989, %v1988
        %v2028 = vpack.c.bf16 %v1991, %v1990
        %v2029 = vpack.c.bf16 %v1993, %v1992
        %v2030 = vpack.c.bf16 %v1995, %v1994
        %v2031 = vpack.c.bf16 %v1997, %v1996
        %v2032 = vpack.c.bf16 %v1999, %v1998
        %v2033 = vpack.c.bf16 %v2001, %v2000
        %v2034 = vld [vmem:[#allocation7] sm:$0xf]
        %v2035 = vld [vmem:[#allocation7 + $0x4] sm:$0xf]
        %v2036 = vld [vmem:[#allocation7 + $0x8] sm:$0xf]
        %v2037 = vld [vmem:[#allocation7 + $0xc] sm:$0xf]
        %v2038 = vld [vmem:[#allocation7 + $0x10] sm:$0xf]
        %v2039 = vld [vmem:[#allocation7 + $0x14] sm:$0xf]
        %v2040 = vld [vmem:[#allocation7 + $0x18] sm:$0xf]
        %v2041 = vld [vmem:[#allocation7 + $0x1c] sm:$0xf]
        %v2042 = vld [vmem:[#allocation7 + $0x20] sm:$0xf]
        %v2043 = vld [vmem:[#allocation7 + $0x24] sm:$0xf]
        %v2044 = vld [vmem:[#allocation7 + $0x28] sm:$0xf]
        %v2045 = vld [vmem:[#allocation7 + $0x2c] sm:$0xf]
        %v2046 = vld [vmem:[#allocation7 + $0x30] sm:$0xf]
        %v2047 = vld [vmem:[#allocation7 + $0x34] sm:$0xf]
        %v2048 = vld [vmem:[#allocation7 + $0x38] sm:$0xf]
        %v2049 = vld [vmem:[#allocation7 + $0x3c] sm:$0xf]
        %v2050 = vld [vmem:[%s4 + $0x3] sm:$0x1]
        %v2051 = vlaneseq
        %v2052 = vshrl.u32 %v2051, 7
        %v2053 = vsub.s32 0, %v2052
        %v2054 = vrot.slane %v2050, %v2053
        %v2071 = vunpack.c.l.b16 %v2034
        %v2072 = vunpack.c.l.b16 %v2035
        %v2073 = vunpack.c.l.b16 %v2036
        %v2074 = vunpack.c.l.b16 %v2037
        %v2075 = vunpack.c.l.b16 %v2038
        %v2076 = vunpack.c.l.b16 %v2039
        %v2077 = vunpack.c.l.b16 %v2040
        %v2078 = vunpack.c.l.b16 %v2041
        %v2079 = vunpack.c.l.b16 %v2042
        %v2080 = vunpack.c.l.b16 %v2043
        %v2081 = vunpack.c.l.b16 %v2044
        %v2082 = vunpack.c.l.b16 %v2045
        %v2083 = vunpack.c.l.b16 %v2046
        %v2084 = vunpack.c.l.b16 %v2047
        %v2085 = vunpack.c.l.b16 %v2048
        %v2086 = vunpack.c.l.b16 %v2049
        %v2087 = vpack.c.b16 %v2072, %v2071
        %v2088 = vpack.c.b16 %v2074, %v2073
        %v2089 = vpack.c.b16 %v2076, %v2075
        %v2090 = vpack.c.b16 %v2078, %v2077
        %v2091 = vpack.c.b16 %v2080, %v2079
        %v2092 = vpack.c.b16 %v2082, %v2081
        %v2093 = vpack.c.b16 %v2084, %v2083
        %v2094 = vpack.c.b16 %v2086, %v2085
        %2103 = vmatprep.subr.bf16.mxu0 0
        %2104 = vmatpush1.bf16.msra.mxu0 %v2087
        %2105 = vmatprep.subr.bf16.mxu0 0
        %2106 = vmatpush1.bf16.msra.mxu0 %v2088
        %2107 = vmatprep.subr.bf16.mxu0 0
        %2108 = vmatpush1.bf16.msra.mxu0 %v2089
        %2109 = vmatprep.subr.bf16.mxu0 0
        %2110 = vmatpush1.bf16.msra.mxu0 %v2090
        %2111 = vmatprep.subr.bf16.mxu0 0
        %2112 = vmatpush1.bf16.msra.mxu0 %v2091
        %2113 = vmatprep.subr.bf16.mxu0 0
        %2114 = vmatpush1.bf16.msra.mxu0 %v2092
        %2115 = vmatprep.subr.bf16.mxu0 0
        %2116 = vmatpush1.bf16.msra.mxu0 %v2093
        %2117 = vmatprep.subr.bf16.mxu0 0
        %2118 = vmatpush1.bf16.msra.mxu0 %v2094
        %2119 = vmatprep.subr.bf16.mxu0 0
        %2120 = vmatpush1.bf16.msra.mxu0 0
        %2121 = vmatprep.subr.bf16.mxu0 0
        %2122 = vmatpush1.bf16.msra.mxu0 0
        %2123 = vmatprep.subr.bf16.mxu0 0
        %2124 = vmatpush1.bf16.msra.mxu0 0
        %2125 = vmatprep.subr.bf16.mxu0 0
        %2126 = vmatpush1.bf16.msra.mxu0 0
        %2127 = vmatprep.subr.bf16.mxu0 0
        %2128 = vmatpush1.bf16.msra.mxu0 0
        %2129 = vmatprep.subr.bf16.mxu0 0
        %2130 = vmatpush1.bf16.msra.mxu0 0
        %2131 = vmatprep.subr.bf16.mxu0 0
        %2132 = vmatpush1.bf16.msra.mxu0 0
        %2133 = vmatprep.subr.bf16.mxu0 0
        %2134 = vmatpush1.bf16.msra.mxu0 0
        %2135 = vmatprep.mubr.bf16.mxu0 0
        %2136 = vmatmul.mubr.bf16.gmra.mrb[0].mxu0 %v2002
        %v2137 = vpop.f32.mrb[0].mxu0
        %v2138 = vadd.f32 %v2054, %v2137
        %v2139 = vpop.f32.mrb[0].mxu0
        %v2140 = vpop.f32.mrb[0].mxu0
        %v2141 = vadd.f32 %v2054, %v2140
        %v2142 = vpop.f32.mrb[0].mxu0
        %2143 = vmatprep.mubr.bf16.mxu0 0
        %2144 = vmatmul.mubr.bf16.gmra.mrb[0].mxu0 %v2003
        %v2145 = vpop.f32.mrb[0].mxu0
        %v2146 = vadd.f32 %v2054, %v2145
        %v2147 = vpop.f32.mrb[0].mxu0
        %v2148 = vpop.f32.mrb[0].mxu0
        %v2149 = vadd.f32 %v2054, %v2148
        %v2150 = vpop.f32.mrb[0].mxu0
        %2151 = vmatprep.mubr.bf16.mxu0 0
        %2152 = vmatmul.mubr.bf16.gmra.mrb[0].mxu0 %v2004
        %v2153 = vpop.f32.mrb[0].mxu0
        %v2154 = vadd.f32 %v2054, %v2153
        %v2155 = vpop.f32.mrb[0].mxu0
        %v2156 = vpop.f32.mrb[0].mxu0
        %v2157 = vadd.f32 %v2054, %v2156
        %v2158 = vpop.f32.mrb[0].mxu0
        %2159 = vmatprep.mubr.bf16.mxu0 0
        %2160 = vmatmul.mubr.bf16.gmra.mrb[0].mxu0 %v2005
        %v2161 = vpop.f32.mrb[0].mxu0
        %v2162 = vadd.f32 %v2054, %v2161
        %v2163 = vpop.f32.mrb[0].mxu0
        %v2164 = vpop.f32.mrb[0].mxu0
        %v2165 = vadd.f32 %v2054, %v2164
        %v2166 = vpop.f32.mrb[0].mxu0
        %2167 = vmatprep.mubr.bf16.mxu0 0
        %2168 = vmatmul.mubr.bf16.gmra.mrb[0].mxu0 %v2006
        %v2169 = vpop.f32.mrb[0].mxu0
        %v2170 = vadd.f32 %v2054, %v2169
        %v2171 = vpop.f32.mrb[0].mxu0
        %v2172 = vpop.f32.mrb[0].mxu0
        %v2173 = vadd.f32 %v2054, %v2172
        %v2174 = vpop.f32.mrb[0].mxu0
        %2175 = vmatprep.mubr.bf16.mxu0 0
        %2176 = vmatmul.mubr.bf16.gmra.mrb[0].mxu0 %v2007
        %v2177 = vpop.f32.mrb[0].mxu0
        %v2178 = vadd.f32 %v2054, %v2177
        %v2179 = vpop.f32.mrb[0].mxu0
        %v2180 = vpop.f32.mrb[0].mxu0
        %v2181 = vadd.f32 %v2054, %v2180
        %v2182 = vpop.f32.mrb[0].mxu0
        %2183 = vmatprep.mubr.bf16.mxu0 0
        %2184 = vmatmul.mubr.bf16.gmra.mrb[0].mxu0 %v2008
        %v2185 = vpop.f32.mrb[0].mxu0
        %v2186 = vadd.f32 %v2054, %v2185
        %v2187 = vpop.f32.mrb[0].mxu0
        %v2188 = vpop.f32.mrb[0].mxu0
        %v2189 = vadd.f32 %v2054, %v2188
        %v2190 = vpop.f32.mrb[0].mxu0
        %2191 = vmatprep.mubr.bf16.mxu0 0
        %2192 = vmatmul.mubr.bf16.gmra.mrb[0].mxu0 %v2009
        %v2193 = vpop.f32.mrb[0].mxu0
        %v2194 = vadd.f32 %v2054, %v2193
        %v2195 = vpop.f32.mrb[0].mxu0
        %v2196 = vpop.f32.mrb[0].mxu0
        %v2197 = vadd.f32 %v2054, %v2196
        %v2198 = vpop.f32.mrb[0].mxu0
        %2199 = vmatprep.mubr.bf16.mxu0 0
        %2200 = vmatmul.mubr.bf16.gmra.mrb[0].mxu0 %v2010
        %v2201 = vpop.f32.mrb[0].mxu0
        %v2202 = vadd.f32 %v2054, %v2201
        %v2203 = vpop.f32.mrb[0].mxu0
        %v2204 = vpop.f32.mrb[0].mxu0
        %v2205 = vadd.f32 %v2054, %v2204
        %v2206 = vpop.f32.mrb[0].mxu0
        %2207 = vmatprep.mubr.bf16.mxu0 0
        %2208 = vmatmul.mubr.bf16.gmra.mrb[0].mxu0 %v2011
        %v2209 = vpop.f32.mrb[0].mxu0
        %v2210 = vadd.f32 %v2054, %v2209
        %v2211 = vpop.f32.mrb[0].mxu0
        %v2212 = vpop.f32.mrb[0].mxu0
        %v2213 = vadd.f32 %v2054, %v2212
        %v2214 = vpop.f32.mrb[0].mxu0
        %2215 = vmatprep.mubr.bf16.mxu0 0
        %2216 = vmatmul.mubr.bf16.gmra.mrb[0].mxu0 %v2012
        %v2217 = vpop.f32.mrb[0].mxu0
        %v2218 = vadd.f32 %v2054, %v2217
        %v2219 = vpop.f32.mrb[0].mxu0
        %v2220 = vpop.f32.mrb[0].mxu0
        %v2221 = vadd.f32 %v2054, %v2220
        %v2222 = vpop.f32.mrb[0].mxu0
        %2223 = vmatprep.mubr.bf16.mxu0 0
        %2224 = vmatmul.mubr.bf16.gmra.mrb[0].mxu0 %v2013
        %v2225 = vpop.f32.mrb[0].mxu0
        %v2226 = vadd.f32 %v2054, %v2225
        %v2227 = vpop.f32.mrb[0].mxu0
        %v2228 = vpop.f32.mrb[0].mxu0
        %v2229 = vadd.f32 %v2054, %v2228
        %v2230 = vpop.f32.mrb[0].mxu0
        %2231 = vmatprep.mubr.bf16.mxu0 0
        %2232 = vmatmul.mubr.bf16.gmra.mrb[0].mxu0 %v2014
        %v2233 = vpop.f32.mrb[0].mxu0
        %v2234 = vadd.f32 %v2054, %v2233
        %v2235 = vpop.f32.mrb[0].mxu0
        %v2236 = vpop.f32.mrb[0].mxu0
        %v2237 = vadd.f32 %v2054, %v2236
        %v2238 = vpop.f32.mrb[0].mxu0
        %2239 = vmatprep.mubr.bf16.mxu0 0
        %2240 = vmatmul.mubr.bf16.gmra.mrb[0].mxu0 %v2015
        %v2241 = vpop.f32.mrb[0].mxu0
        %v2242 = vadd.f32 %v2054, %v2241
        %v2243 = vpop.f32.mrb[0].mxu0
        %v2244 = vpop.f32.mrb[0].mxu0
        %v2245 = vadd.f32 %v2054, %v2244
        %v2246 = vpop.f32.mrb[0].mxu0
        %2247 = vmatprep.mubr.bf16.mxu0 0
        %2248 = vmatmul.mubr.bf16.gmra.mrb[0].mxu0 %v2016
        %v2249 = vpop.f32.mrb[0].mxu0
        %v2250 = vadd.f32 %v2054, %v2249
        %v2251 = vpop.f32.mrb[0].mxu0
        %v2252 = vpop.f32.mrb[0].mxu0
        %v2253 = vadd.f32 %v2054, %v2252
        %v2254 = vpop.f32.mrb[0].mxu0
        %2255 = vmatprep.mubr.bf16.mxu0 0
        %2256 = vmatmul.mubr.bf16.gmra.mrb[0].mxu0 %v2017
        %v2257 = vpop.f32.mrb[0].mxu0
        %v2258 = vadd.f32 %v2054, %v2257
        %v2259 = vpop.f32.mrb[0].mxu0
        %v2260 = vpop.f32.mrb[0].mxu0
        %v2261 = vadd.f32 %v2054, %v2260
        %v2262 = vpop.f32.mrb[0].mxu0
        %2263 = vmatprep.mubr.bf16.mxu0 0
        %2264 = vmatmul.mubr.bf16.gmra.mrb[0].mxu0 %v2018
        %v2265 = vpop.f32.mrb[0].mxu0
        %v2266 = vadd.f32 %v2054, %v2265
        %v2267 = vpop.f32.mrb[0].mxu0
        %v2268 = vpop.f32.mrb[0].mxu0
        %v2269 = vadd.f32 %v2054, %v2268
        %v2270 = vpop.f32.mrb[0].mxu0
        %2271 = vmatprep.mubr.bf16.mxu0 0
        %2272 = vmatmul.mubr.bf16.gmra.mrb[0].mxu0 %v2019
        %v2273 = vpop.f32.mrb[0].mxu0
        %v2274 = vadd.f32 %v2054, %v2273
        %v2275 = vpop.f32.mrb[0].mxu0
        %v2276 = vpop.f32.mrb[0].mxu0
        %v2277 = vadd.f32 %v2054, %v2276
        %v2278 = vpop.f32.mrb[0].mxu0
        %2279 = vmatprep.mubr.bf16.mxu0 0
        %2280 = vmatmul.mubr.bf16.gmra.mrb[0].mxu0 %v2020
        %v2281 = vpop.f32.mrb[0].mxu0
        %v2282 = vadd.f32 %v2054, %v2281
        %v2283 = vpop.f32.mrb[0].mxu0
        %v2284 = vpop.f32.mrb[0].mxu0
        %v2285 = vadd.f32 %v2054, %v2284
        %v2286 = vpop.f32.mrb[0].mxu0
        %2287 = vmatprep.mubr.bf16.mxu0 0
        %2288 = vmatmul.mubr.bf16.gmra.mrb[0].mxu0 %v2021
        %v2289 = vpop.f32.mrb[0].mxu0
        %v2290 = vadd.f32 %v2054, %v2289
        %v2291 = vpop.f32.mrb[0].mxu0
        %v2292 = vpop.f32.mrb[0].mxu0
        %v2293 = vadd.f32 %v2054, %v2292
        %v2294 = vpop.f32.mrb[0].mxu0
        %2295 = vmatprep.mubr.bf16.mxu0 0
        %2296 = vmatmul.mubr.bf16.gmra.mrb[0].mxu0 %v2022
        %v2297 = vpop.f32.mrb[0].mxu0
        %v2298 = vadd.f32 %v2054, %v2297
        %v2299 = vpop.f32.mrb[0].mxu0
        %v2300 = vpop.f32.mrb[0].mxu0
        %v2301 = vadd.f32 %v2054, %v2300
        %v2302 = vpop.f32.mrb[0].mxu0
        %2303 = vmatprep.mubr.bf16.mxu0 0
        %2304 = vmatmul.mubr.bf16.gmra.mrb[0].mxu0 %v2023
        %v2305 = vpop.f32.mrb[0].mxu0
        %v2306 = vadd.f32 %v2054, %v2305
        %v2307 = vpop.f32.mrb[0].mxu0
        %v2308 = vpop.f32.mrb[0].mxu0
        %v2309 = vadd.f32 %v2054, %v2308
        %v2310 = vpop.f32.mrb[0].mxu0
        %2311 = vmatprep.mubr.bf16.mxu0 0
        %2312 = vmatmul.mubr.bf16.gmra.mrb[0].mxu0 %v2024
        %v2313 = vpop.f32.mrb[0].mxu0
        %v2314 = vadd.f32 %v2054, %v2313
        %v2315 = vpop.f32.mrb[0].mxu0
        %v2316 = vpop.f32.mrb[0].mxu0
        %v2317 = vadd.f32 %v2054, %v2316
        %v2318 = vpop.f32.mrb[0].mxu0
        %2319 = vmatprep.mubr.bf16.mxu0 0
        %2320 = vmatmul.mubr.bf16.gmra.mrb[0].mxu0 %v2025
        %v2321 = vpop.f32.mrb[0].mxu0
        %v2322 = vadd.f32 %v2054, %v2321
        %v2323 = vpop.f32.mrb[0].mxu0
        %v2324 = vpop.f32.mrb[0].mxu0
        %v2325 = vadd.f32 %v2054, %v2324
        %v2326 = vpop.f32.mrb[0].mxu0
        %2327 = vmatprep.mubr.bf16.mxu0 0
        %2328 = vmatmul.mubr.bf16.gmra.mrb[0].mxu0 %v2026
        %v2329 = vpop.f32.mrb[0].mxu0
        %v2330 = vadd.f32 %v2054, %v2329
        %v2331 = vpop.f32.mrb[0].mxu0
        %v2332 = vpop.f32.mrb[0].mxu0
        %v2333 = vadd.f32 %v2054, %v2332
        %v2334 = vpop.f32.mrb[0].mxu0
        %2335 = vmatprep.mubr.bf16.mxu0 0
        %2336 = vmatmul.mubr.bf16.gmra.mrb[0].mxu0 %v2027
        %v2337 = vpop.f32.mrb[0].mxu0
        %v2338 = vadd.f32 %v2054, %v2337
        %v2339 = vpop.f32.mrb[0].mxu0
        %v2340 = vpop.f32.mrb[0].mxu0
        %v2341 = vadd.f32 %v2054, %v2340
        %v2342 = vpop.f32.mrb[0].mxu0
        %2343 = vmatprep.mubr.bf16.mxu0 0
        %2344 = vmatmul.mubr.bf16.gmra.mrb[0].mxu0 %v2028
        %v2345 = vpop.f32.mrb[0].mxu0
        %v2346 = vadd.f32 %v2054, %v2345
        %v2347 = vpop.f32.mrb[0].mxu0
        %v2348 = vpop.f32.mrb[0].mxu0
        %v2349 = vadd.f32 %v2054, %v2348
        %v2350 = vpop.f32.mrb[0].mxu0
        %2351 = vmatprep.mubr.bf16.mxu0 0
        %2352 = vmatmul.mubr.bf16.gmra.mrb[0].mxu0 %v2029
        %v2353 = vpop.f32.mrb[0].mxu0
        %v2354 = vadd.f32 %v2054, %v2353
        %v2355 = vpop.f32.mrb[0].mxu0
        %v2356 = vpop.f32.mrb[0].mxu0
        %v2357 = vadd.f32 %v2054, %v2356
        %v2358 = vpop.f32.mrb[0].mxu0
        %2359 = vmatprep.mubr.bf16.mxu0 0
        %2360 = vmatmul.mubr.bf16.gmra.mrb[0].mxu0 %v2030
        %v2361 = vpop.f32.mrb[0].mxu0
        %v2362 = vadd.f32 %v2054, %v2361
        %v2363 = vpop.f32.mrb[0].mxu0
        %v2364 = vpop.f32.mrb[0].mxu0
        %v2365 = vadd.f32 %v2054, %v2364
        %v2366 = vpop.f32.mrb[0].mxu0
        %2367 = vmatprep.mubr.bf16.mxu0 0
        %2368 = vmatmul.mubr.bf16.gmra.mrb[0].mxu0 %v2031
        %v2369 = vpop.f32.mrb[0].mxu0
        %v2370 = vadd.f32 %v2054, %v2369
        %v2371 = vpop.f32.mrb[0].mxu0
        %v2372 = vpop.f32.mrb[0].mxu0
        %v2373 = vadd.f32 %v2054, %v2372
        %v2374 = vpop.f32.mrb[0].mxu0
        %2375 = vmatprep.mubr.bf16.mxu0 0
        %2376 = vmatmul.mubr.bf16.gmra.mrb[0].mxu0 %v2032
        %v2377 = vpop.f32.mrb[0].mxu0
        %v2378 = vadd.f32 %v2054, %v2377
        %v2379 = vpop.f32.mrb[0].mxu0
        %v2380 = vpop.f32.mrb[0].mxu0
        %v2381 = vadd.f32 %v2054, %v2380
        %v2382 = vpop.f32.mrb[0].mxu0
        %2383 = vmatprep.mubr.bf16.mxu0 0
        %2384 = vmatmul.mubr.bf16.gmra.mrb[0].mxu0 %v2033
        %v2385 = vpop.f32.mrb[0].mxu0
        %v2386 = vadd.f32 %v2054, %v2385
        %v2387 = vpop.f32.mrb[0].mxu0
        %v2388 = vpop.f32.mrb[0].mxu0
        %v2389 = vadd.f32 %v2054, %v2388
        %v2390 = vpop.f32.mrb[0].mxu0
        %2391 = vdwg.mxu0
        %v2392 = vmax.f32 %v2138, 0.0
        %v2393 = vmax.f32 %v2141, 0.0
        %v2394 = vmax.f32 %v2146, 0.0
        %v2395 = vmax.f32 %v2149, 0.0
        %v2396 = vmax.f32 %v2154, 0.0
        %v2397 = vmax.f32 %v2157, 0.0
        %v2398 = vmax.f32 %v2162, 0.0
        %v2399 = vmax.f32 %v2165, 0.0
        %v2400 = vmax.f32 %v2170, 0.0
        %v2401 = vmax.f32 %v2173, 0.0
        %v2402 = vmax.f32 %v2178, 0.0
        %v2403 = vmax.f32 %v2181, 0.0
        %v2404 = vmax.f32 %v2186, 0.0
        %v2405 = vmax.f32 %v2189, 0.0
        %v2406 = vmax.f32 %v2194, 0.0
        %v2407 = vmax.f32 %v2197, 0.0
        %v2408 = vmax.f32 %v2202, 0.0
        %v2409 = vmax.f32 %v2205, 0.0
        %v2410 = vmax.f32 %v2210, 0.0
        %v2411 = vmax.f32 %v2213, 0.0
        %v2412 = vmax.f32 %v2218, 0.0
        %v2413 = vmax.f32 %v2221, 0.0
        %v2414 = vmax.f32 %v2226, 0.0
        %v2415 = vmax.f32 %v2229, 0.0
        %v2416 = vmax.f32 %v2234, 0.0
        %v2417 = vmax.f32 %v2237, 0.0
        %v2418 = vmax.f32 %v2242, 0.0
        %v2419 = vmax.f32 %v2245, 0.0
        %v2420 = vmax.f32 %v2250, 0.0
        %v2421 = vmax.f32 %v2253, 0.0
        %v2422 = vmax.f32 %v2258, 0.0
        %v2423 = vmax.f32 %v2261, 0.0
        %v2424 = vmax.f32 %v2266, 0.0
        %v2425 = vmax.f32 %v2269, 0.0
        %v2426 = vmax.f32 %v2274, 0.0
        %v2427 = vmax.f32 %v2277, 0.0
        %v2428 = vmax.f32 %v2282, 0.0
        %v2429 = vmax.f32 %v2285, 0.0
        %v2430 = vmax.f32 %v2290, 0.0
        %v2431 = vmax.f32 %v2293, 0.0
        %v2432 = vmax.f32 %v2298, 0.0
        %v2433 = vmax.f32 %v2301, 0.0
        %v2434 = vmax.f32 %v2306, 0.0
        %v2435 = vmax.f32 %v2309, 0.0
        %v2436 = vmax.f32 %v2314, 0.0
        %v2437 = vmax.f32 %v2317, 0.0
        %v2438 = vmax.f32 %v2322, 0.0
        %v2439 = vmax.f32 %v2325, 0.0
        %v2440 = vmax.f32 %v2330, 0.0
        %v2441 = vmax.f32 %v2333, 0.0
        %v2442 = vmax.f32 %v2338, 0.0
        %v2443 = vmax.f32 %v2341, 0.0
        %v2444 = vmax.f32 %v2346, 0.0
        %v2445 = vmax.f32 %v2349, 0.0
        %v2446 = vmax.f32 %v2354, 0.0
        %v2447 = vmax.f32 %v2357, 0.0
        %v2448 = vmax.f32 %v2362, 0.0
        %v2449 = vmax.f32 %v2365, 0.0
        %v2450 = vmax.f32 %v2370, 0.0
        %v2451 = vmax.f32 %v2373, 0.0
        %v2452 = vmax.f32 %v2378, 0.0
        %v2453 = vmax.f32 %v2381, 0.0
        %v2454 = vmax.f32 %v2386, 0.0
        %v2455 = vmax.f32 %v2389, 0.0
        %v2456 = vld [vmem:[%s4 + $0x4] sm:$0x1]
        %v2457 = vld [vmem:[%s4 + $0x5] sm:$0x1]
        %2458 = vadd.xlane.f32.xlu0 %v2392
        %v2459 = vpop.xlane.xlu0 %2458
        %2460 = vadd.xlane.f32.xlu0 %v2393
        %v2461 = vpop.xlane.xlu0 %2460
        %2462 = vadd.xlane.f32.xlu0 %v2394
        %v2463 = vpop.xlane.xlu0 %2462
        %2464 = vadd.xlane.f32.xlu0 %v2395
        %v2465 = vpop.xlane.xlu0 %2464
        %2466 = vadd.xlane.f32.xlu0 %v2396
        %v2467 = vpop.xlane.xlu0 %2466
        %2468 = vadd.xlane.f32.xlu0 %v2397
        %v2469 = vpop.xlane.xlu0 %2468
        %2470 = vadd.xlane.f32.xlu0 %v2398
        %v2471 = vpop.xlane.xlu0 %2470
        %2472 = vadd.xlane.f32.xlu0 %v2399
        %v2473 = vpop.xlane.xlu0 %2472
        %2474 = vadd.xlane.f32.xlu0 %v2400
        %v2475 = vpop.xlane.xlu0 %2474
        %2476 = vadd.xlane.f32.xlu0 %v2401
        %v2477 = vpop.xlane.xlu0 %2476
        %2478 = vadd.xlane.f32.xlu0 %v2402
        %v2479 = vpop.xlane.xlu0 %2478
        %2480 = vadd.xlane.f32.xlu0 %v2403
        %v2481 = vpop.xlane.xlu0 %2480
        %2482 = vadd.xlane.f32.xlu0 %v2404
        %v2483 = vpop.xlane.xlu0 %2482
        %2484 = vadd.xlane.f32.xlu0 %v2405
        %v2485 = vpop.xlane.xlu0 %2484
        %2486 = vadd.xlane.f32.xlu0 %v2406
        %v2487 = vpop.xlane.xlu0 %2486
        %2488 = vadd.xlane.f32.xlu0 %v2407
        %v2489 = vpop.xlane.xlu0 %2488
        %2490 = vadd.xlane.f32.xlu0 %v2408
        %v2491 = vpop.xlane.xlu0 %2490
        %2492 = vadd.xlane.f32.xlu0 %v2409
        %v2493 = vpop.xlane.xlu0 %2492
        %2494 = vadd.xlane.f32.xlu0 %v2410
        %v2495 = vpop.xlane.xlu0 %2494
        %2496 = vadd.xlane.f32.xlu0 %v2411
        %v2497 = vpop.xlane.xlu0 %2496
        %2498 = vadd.xlane.f32.xlu0 %v2412
        %v2499 = vpop.xlane.xlu0 %2498
        %2500 = vadd.xlane.f32.xlu0 %v2413
        %v2501 = vpop.xlane.xlu0 %2500
        %2502 = vadd.xlane.f32.xlu0 %v2414
        %v2503 = vpop.xlane.xlu0 %2502
        %2504 = vadd.xlane.f32.xlu0 %v2415
        %v2505 = vpop.xlane.xlu0 %2504
        %2506 = vadd.xlane.f32.xlu0 %v2416
        %v2507 = vpop.xlane.xlu0 %2506
        %2508 = vadd.xlane.f32.xlu0 %v2417
        %v2509 = vpop.xlane.xlu0 %2508
        %2510 = vadd.xlane.f32.xlu0 %v2418
        %v2511 = vpop.xlane.xlu0 %2510
        %2512 = vadd.xlane.f32.xlu0 %v2419
        %v2513 = vpop.xlane.xlu0 %2512
        %2514 = vadd.xlane.f32.xlu0 %v2420
        %v2515 = vpop.xlane.xlu0 %2514
        %2516 = vadd.xlane.f32.xlu0 %v2421
        %v2517 = vpop.xlane.xlu0 %2516
        %2518 = vadd.xlane.f32.xlu0 %v2422
        %v2519 = vpop.xlane.xlu0 %2518
        %2520 = vadd.xlane.f32.xlu0 %v2423
        %v2521 = vpop.xlane.xlu0 %2520
        %2522 = vadd.xlane.f32.xlu0 %v2424
        %v2523 = vpop.xlane.xlu0 %2522
        %2524 = vadd.xlane.f32.xlu0 %v2425
        %v2525 = vpop.xlane.xlu0 %2524
        %2526 = vadd.xlane.f32.xlu0 %v2426
        %v2527 = vpop.xlane.xlu0 %2526
        %2528 = vadd.xlane.f32.xlu0 %v2427
        %v2529 = vpop.xlane.xlu0 %2528
        %2530 = vadd.xlane.f32.xlu0 %v2428
        %v2531 = vpop.xlane.xlu0 %2530
        %2532 = vadd.xlane.f32.xlu0 %v2429
        %v2533 = vpop.xlane.xlu0 %2532
        %2534 = vadd.xlane.f32.xlu0 %v2430
        %v2535 = vpop.xlane.xlu0 %2534
        %2536 = vadd.xlane.f32.xlu0 %v2431
        %v2537 = vpop.xlane.xlu0 %2536
        %2538 = vadd.xlane.f32.xlu0 %v2432
        %v2539 = vpop.xlane.xlu0 %2538
        %2540 = vadd.xlane.f32.xlu0 %v2433
        %v2541 = vpop.xlane.xlu0 %2540
        %2542 = vadd.xlane.f32.xlu0 %v2434
        %v2543 = vpop.xlane.xlu0 %2542
        %2544 = vadd.xlane.f32.xlu0 %v2435
        %v2545 = vpop.xlane.xlu0 %2544
        %2546 = vadd.xlane.f32.xlu0 %v2436
        %v2547 = vpop.xlane.xlu0 %2546
        %2548 = vadd.xlane.f32.xlu0 %v2437
        %v2549 = vpop.xlane.xlu0 %2548
        %2550 = vadd.xlane.f32.xlu0 %v2438
        %v2551 = vpop.xlane.xlu0 %2550
        %2552 = vadd.xlane.f32.xlu0 %v2439
        %v2553 = vpop.xlane.xlu0 %2552
        %2554 = vadd.xlane.f32.xlu0 %v2440
        %v2555 = vpop.xlane.xlu0 %2554
        %2556 = vadd.xlane.f32.xlu0 %v2441
        %v2557 = vpop.xlane.xlu0 %2556
        %2558 = vadd.xlane.f32.xlu0 %v2442
        %v2559 = vpop.xlane.xlu0 %2558
        %2560 = vadd.xlane.f32.xlu0 %v2443
        %v2561 = vpop.xlane.xlu0 %2560
        %2562 = vadd.xlane.f32.xlu0 %v2444
        %v2563 = vpop.xlane.xlu0 %2562
        %2564 = vadd.xlane.f32.xlu0 %v2445
        %v2565 = vpop.xlane.xlu0 %2564
        %2566 = vadd.xlane.f32.xlu0 %v2446
        %v2567 = vpop.xlane.xlu0 %2566
        %2568 = vadd.xlane.f32.xlu0 %v2447
        %v2569 = vpop.xlane.xlu0 %2568
        %2570 = vadd.xlane.f32.xlu0 %v2448
        %v2571 = vpop.xlane.xlu0 %2570
        %2572 = vadd.xlane.f32.xlu0 %v2449
        %v2573 = vpop.xlane.xlu0 %2572
        %2574 = vadd.xlane.f32.xlu0 %v2450
        %v2575 = vpop.xlane.xlu0 %2574
        %2576 = vadd.xlane.f32.xlu0 %v2451
        %v2577 = vpop.xlane.xlu0 %2576
        %2578 = vadd.xlane.f32.xlu0 %v2452
        %v2579 = vpop.xlane.xlu0 %2578
        %2580 = vadd.xlane.f32.xlu0 %v2453
        %v2581 = vpop.xlane.xlu0 %2580
        %2582 = vadd.xlane.f32.xlu0 %v2454
        %v2583 = vpop.xlane.xlu0 %2582
        %2584 = vadd.xlane.f32.xlu0 %v2455
        %v2585 = vpop.xlane.xlu0 %2584
        %v2586 = vmul.f32 %v2392, %v2392
        %v2587 = vmul.f32 %v2393, %v2393
        %v2588 = vmul.f32 %v2394, %v2394
        %v2589 = vmul.f32 %v2395, %v2395
        %v2590 = vmul.f32 %v2396, %v2396
        %v2591 = vmul.f32 %v2397, %v2397
        %v2592 = vmul.f32 %v2398, %v2398
        %v2593 = vmul.f32 %v2399, %v2399
        %v2594 = vmul.f32 %v2400, %v2400
        %v2595 = vmul.f32 %v2401, %v2401
        %v2596 = vmul.f32 %v2402, %v2402
        %v2597 = vmul.f32 %v2403, %v2403
        %v2598 = vmul.f32 %v2404, %v2404
        %v2599 = vmul.f32 %v2405, %v2405
        %v2600 = vmul.f32 %v2406, %v2406
        %v2601 = vmul.f32 %v2407, %v2407
        %v2602 = vmul.f32 %v2408, %v2408
        %v2603 = vmul.f32 %v2409, %v2409
        %v2604 = vmul.f32 %v2410, %v2410
        %v2605 = vmul.f32 %v2411, %v2411
        %v2606 = vmul.f32 %v2412, %v2412
        %v2607 = vmul.f32 %v2413, %v2413
        %v2608 = vmul.f32 %v2414, %v2414
        %v2609 = vmul.f32 %v2415, %v2415
        %v2610 = vmul.f32 %v2416, %v2416
        %v2611 = vmul.f32 %v2417, %v2417
        %v2612 = vmul.f32 %v2418, %v2418
        %v2613 = vmul.f32 %v2419, %v2419
        %v2614 = vmul.f32 %v2420, %v2420
        %v2615 = vmul.f32 %v2421, %v2421
        %v2616 = vmul.f32 %v2422, %v2422
        %v2617 = vmul.f32 %v2423, %v2423
        %v2618 = vmul.f32 %v2424, %v2424
        %v2619 = vmul.f32 %v2425, %v2425
        %v2620 = vmul.f32 %v2426, %v2426
        %v2621 = vmul.f32 %v2427, %v2427
        %v2622 = vmul.f32 %v2428, %v2428
        %v2623 = vmul.f32 %v2429, %v2429
        %v2624 = vmul.f32 %v2430, %v2430
        %v2625 = vmul.f32 %v2431, %v2431
        %v2626 = vmul.f32 %v2432, %v2432
        %v2627 = vmul.f32 %v2433, %v2433
        %v2628 = vmul.f32 %v2434, %v2434
        %v2629 = vmul.f32 %v2435, %v2435
        %v2630 = vmul.f32 %v2436, %v2436
        %v2631 = vmul.f32 %v2437, %v2437
        %v2632 = vmul.f32 %v2438, %v2438
        %v2633 = vmul.f32 %v2439, %v2439
        %v2634 = vmul.f32 %v2440, %v2440
        %v2635 = vmul.f32 %v2441, %v2441
        %v2636 = vmul.f32 %v2442, %v2442
        %v2637 = vmul.f32 %v2443, %v2443
        %v2638 = vmul.f32 %v2444, %v2444
        %v2639 = vmul.f32 %v2445, %v2445
        %v2640 = vmul.f32 %v2446, %v2446
        %v2641 = vmul.f32 %v2447, %v2447
        %v2642 = vmul.f32 %v2448, %v2448
        %v2643 = vmul.f32 %v2449, %v2449
        %v2644 = vmul.f32 %v2450, %v2450
        %v2645 = vmul.f32 %v2451, %v2451
        %v2646 = vmul.f32 %v2452, %v2452
        %v2647 = vmul.f32 %v2453, %v2453
        %v2648 = vmul.f32 %v2454, %v2454
        %v2649 = vmul.f32 %v2455, %v2455
        %2650 = vadd.xlane.f32.xlu0 %v2586
        %v2651 = vpop.xlane.xlu0 %2650
        %2652 = vadd.xlane.f32.xlu0 %v2587
        %v2653 = vpop.xlane.xlu0 %2652
        %2654 = vadd.xlane.f32.xlu0 %v2588
        %v2655 = vpop.xlane.xlu0 %2654
        %2656 = vadd.xlane.f32.xlu0 %v2589
        %v2657 = vpop.xlane.xlu0 %2656
        %2658 = vadd.xlane.f32.xlu0 %v2590
        %v2659 = vpop.xlane.xlu0 %2658
        %2660 = vadd.xlane.f32.xlu0 %v2591
        %v2661 = vpop.xlane.xlu0 %2660
        %2662 = vadd.xlane.f32.xlu0 %v2592
        %v2663 = vpop.xlane.xlu0 %2662
        %2664 = vadd.xlane.f32.xlu0 %v2593
        %v2665 = vpop.xlane.xlu0 %2664
        %2666 = vadd.xlane.f32.xlu0 %v2594
        %v2667 = vpop.xlane.xlu0 %2666
        %2668 = vadd.xlane.f32.xlu0 %v2595
        %v2669 = vpop.xlane.xlu0 %2668
        %2670 = vadd.xlane.f32.xlu0 %v2596
        %v2671 = vpop.xlane.xlu0 %2670
        %2672 = vadd.xlane.f32.xlu0 %v2597
        %v2673 = vpop.xlane.xlu0 %2672
        %2674 = vadd.xlane.f32.xlu0 %v2598
        %v2675 = vpop.xlane.xlu0 %2674
        %2676 = vadd.xlane.f32.xlu0 %v2599
        %v2677 = vpop.xlane.xlu0 %2676
        %2678 = vadd.xlane.f32.xlu0 %v2600
        %v2679 = vpop.xlane.xlu0 %2678
        %2680 = vadd.xlane.f32.xlu0 %v2601
        %v2681 = vpop.xlane.xlu0 %2680
        %2682 = vadd.xlane.f32.xlu0 %v2602
        %v2683 = vpop.xlane.xlu0 %2682
        %2684 = vadd.xlane.f32.xlu0 %v2603
        %v2685 = vpop.xlane.xlu0 %2684
        %2686 = vadd.xlane.f32.xlu0 %v2604
        %v2687 = vpop.xlane.xlu0 %2686
        %2688 = vadd.xlane.f32.xlu0 %v2605
        %v2689 = vpop.xlane.xlu0 %2688
        %2690 = vadd.xlane.f32.xlu0 %v2606
        %v2691 = vpop.xlane.xlu0 %2690
        %2692 = vadd.xlane.f32.xlu0 %v2607
        %v2693 = vpop.xlane.xlu0 %2692
        %2694 = vadd.xlane.f32.xlu0 %v2608
        %v2695 = vpop.xlane.xlu0 %2694
        %2696 = vadd.xlane.f32.xlu0 %v2609
        %v2697 = vpop.xlane.xlu0 %2696
        %2698 = vadd.xlane.f32.xlu0 %v2610
        %v2699 = vpop.xlane.xlu0 %2698
        %2700 = vadd.xlane.f32.xlu0 %v2611
        %v2701 = vpop.xlane.xlu0 %2700
        %2702 = vadd.xlane.f32.xlu0 %v2612
        %v2703 = vpop.xlane.xlu0 %2702
        %2704 = vadd.xlane.f32.xlu0 %v2613
        %v2705 = vpop.xlane.xlu0 %2704
        %2706 = vadd.xlane.f32.xlu0 %v2614
        %v2707 = vpop.xlane.xlu0 %2706
        %2708 = vadd.xlane.f32.xlu0 %v2615
        %v2709 = vpop.xlane.xlu0 %2708
        %2710 = vadd.xlane.f32.xlu0 %v2616
        %v2711 = vpop.xlane.xlu0 %2710
        %2712 = vadd.xlane.f32.xlu0 %v2617
        %v2713 = vpop.xlane.xlu0 %2712
        %2714 = vadd.xlane.f32.xlu0 %v2618
        %v2715 = vpop.xlane.xlu0 %2714
        %2716 = vadd.xlane.f32.xlu0 %v2619
        %v2717 = vpop.xlane.xlu0 %2716
        %2718 = vadd.xlane.f32.xlu0 %v2620
        %v2719 = vpop.xlane.xlu0 %2718
        %2720 = vadd.xlane.f32.xlu0 %v2621
        %v2721 = vpop.xlane.xlu0 %2720
        %2722 = vadd.xlane.f32.xlu0 %v2622
        %v2723 = vpop.xlane.xlu0 %2722
        %2724 = vadd.xlane.f32.xlu0 %v2623
        %v2725 = vpop.xlane.xlu0 %2724
        %2726 = vadd.xlane.f32.xlu0 %v2624
        %v2727 = vpop.xlane.xlu0 %2726
        %2728 = vadd.xlane.f32.xlu0 %v2625
        %v2729 = vpop.xlane.xlu0 %2728
        %2730 = vadd.xlane.f32.xlu0 %v2626
        %v2731 = vpop.xlane.xlu0 %2730
        %2732 = vadd.xlane.f32.xlu0 %v2627
        %v2733 = vpop.xlane.xlu0 %2732
        %2734 = vadd.xlane.f32.xlu0 %v2628
        %v2735 = vpop.xlane.xlu0 %2734
        %2736 = vadd.xlane.f32.xlu0 %v2629
        %v2737 = vpop.xlane.xlu0 %2736
        %2738 = vadd.xlane.f32.xlu0 %v2630
        %v2739 = vpop.xlane.xlu0 %2738
        %2740 = vadd.xlane.f32.xlu0 %v2631
        %v2741 = vpop.xlane.xlu0 %2740
        %2742 = vadd.xlane.f32.xlu0 %v2632
        %v2743 = vpop.xlane.xlu0 %2742
        %2744 = vadd.xlane.f32.xlu0 %v2633
        %v2745 = vpop.xlane.xlu0 %2744
        %2746 = vadd.xlane.f32.xlu0 %v2634
        %v2747 = vpop.xlane.xlu0 %2746
        %2748 = vadd.xlane.f32.xlu0 %v2635
        %v2749 = vpop.xlane.xlu0 %2748
        %2750 = vadd.xlane.f32.xlu0 %v2636
        %v2751 = vpop.xlane.xlu0 %2750
        %2752 = vadd.xlane.f32.xlu0 %v2637
        %v2753 = vpop.xlane.xlu0 %2752
        %2754 = vadd.xlane.f32.xlu0 %v2638
        %v2755 = vpop.xlane.xlu0 %2754
        %2756 = vadd.xlane.f32.xlu0 %v2639
        %v2757 = vpop.xlane.xlu0 %2756
        %2758 = vadd.xlane.f32.xlu0 %v2640
        %v2759 = vpop.xlane.xlu0 %2758
        %2760 = vadd.xlane.f32.xlu0 %v2641
        %v2761 = vpop.xlane.xlu0 %2760
        %2762 = vadd.xlane.f32.xlu0 %v2642
        %v2763 = vpop.xlane.xlu0 %2762
        %2764 = vadd.xlane.f32.xlu0 %v2643
        %v2765 = vpop.xlane.xlu0 %2764
        %2766 = vadd.xlane.f32.xlu0 %v2644
        %v2767 = vpop.xlane.xlu0 %2766
        %2768 = vadd.xlane.f32.xlu0 %v2645
        %v2769 = vpop.xlane.xlu0 %2768
        %2770 = vadd.xlane.f32.xlu0 %v2646
        %v2771 = vpop.xlane.xlu0 %2770
        %2772 = vadd.xlane.f32.xlu0 %v2647
        %v2773 = vpop.xlane.xlu0 %2772
        %2774 = vadd.xlane.f32.xlu0 %v2648
        %v2775 = vpop.xlane.xlu0 %2774
        %2776 = vadd.xlane.f32.xlu0 %v2649
        %v2777 = vpop.xlane.xlu0 %2776
        %v2778 = vmul.f32 %v2459, 0.015625
        %v2779 = vmul.f32 %v2461, 0.015625
        %v2780 = vmul.f32 %v2463, 0.015625
        %v2781 = vmul.f32 %v2465, 0.015625
        %v2782 = vmul.f32 %v2467, 0.015625
        %v2783 = vmul.f32 %v2469, 0.015625
        %v2784 = vmul.f32 %v2471, 0.015625
        %v2785 = vmul.f32 %v2473, 0.015625
        %v2786 = vmul.f32 %v2475, 0.015625
        %v2787 = vmul.f32 %v2477, 0.015625
        %v2788 = vmul.f32 %v2479, 0.015625
        %v2789 = vmul.f32 %v2481, 0.015625
        %v2790 = vmul.f32 %v2483, 0.015625
        %v2791 = vmul.f32 %v2485, 0.015625
        %v2792 = vmul.f32 %v2487, 0.015625
        %v2793 = vmul.f32 %v2489, 0.015625
        %v2794 = vmul.f32 %v2491, 0.015625
        %v2795 = vmul.f32 %v2493, 0.015625
        %v2796 = vmul.f32 %v2495, 0.015625
        %v2797 = vmul.f32 %v2497, 0.015625
        %v2798 = vmul.f32 %v2499, 0.015625
        %v2799 = vmul.f32 %v2501, 0.015625
        %v2800 = vmul.f32 %v2503, 0.015625
        %v2801 = vmul.f32 %v2505, 0.015625
        %v2802 = vmul.f32 %v2507, 0.015625
        %v2803 = vmul.f32 %v2509, 0.015625
        %v2804 = vmul.f32 %v2511, 0.015625
        %v2805 = vmul.f32 %v2513, 0.015625
        %v2806 = vmul.f32 %v2515, 0.015625
        %v2807 = vmul.f32 %v2517, 0.015625
        %v2808 = vmul.f32 %v2519, 0.015625
        %v2809 = vmul.f32 %v2521, 0.015625
        %v2810 = vmul.f32 %v2523, 0.015625
        %v2811 = vmul.f32 %v2525, 0.015625
        %v2812 = vmul.f32 %v2527, 0.015625
        %v2813 = vmul.f32 %v2529, 0.015625
        %v2814 = vmul.f32 %v2531, 0.015625
        %v2815 = vmul.f32 %v2533, 0.015625
        %v2816 = vmul.f32 %v2535, 0.015625
        %v2817 = vmul.f32 %v2537, 0.015625
        %v2818 = vmul.f32 %v2539, 0.015625
        %v2819 = vmul.f32 %v2541, 0.015625
        %v2820 = vmul.f32 %v2543, 0.015625
        %v2821 = vmul.f32 %v2545, 0.015625
        %v2822 = vmul.f32 %v2547, 0.015625
        %v2823 = vmul.f32 %v2549, 0.015625
        %v2824 = vmul.f32 %v2551, 0.015625
        %v2825 = vmul.f32 %v2553, 0.015625
        %v2826 = vmul.f32 %v2555, 0.015625
        %v2827 = vmul.f32 %v2557, 0.015625
        %v2828 = vmul.f32 %v2559, 0.015625
        %v2829 = vmul.f32 %v2561, 0.015625
        %v2830 = vmul.f32 %v2563, 0.015625
        %v2831 = vmul.f32 %v2565, 0.015625
        %v2832 = vmul.f32 %v2567, 0.015625
        %v2833 = vmul.f32 %v2569, 0.015625
        %v2834 = vmul.f32 %v2571, 0.015625
        %v2835 = vmul.f32 %v2573, 0.015625
        %v2836 = vmul.f32 %v2575, 0.015625
        %v2837 = vmul.f32 %v2577, 0.015625
        %v2838 = vmul.f32 %v2579, 0.015625
        %v2839 = vmul.f32 %v2581, 0.015625
        %v2840 = vmul.f32 %v2583, 0.015625
        %v2841 = vmul.f32 %v2585, 0.015625
        %v2842 = vmul.f32 %v2651, 0.015625
        %v2843 = vmul.f32 %v2653, 0.015625
        %v2844 = vmul.f32 %v2655, 0.015625
        %v2845 = vmul.f32 %v2657, 0.015625
        %v2846 = vmul.f32 %v2659, 0.015625
        %v2847 = vmul.f32 %v2661, 0.015625
        %v2848 = vmul.f32 %v2663, 0.015625
        %v2849 = vmul.f32 %v2665, 0.015625
        %v2850 = vmul.f32 %v2667, 0.015625
        %v2851 = vmul.f32 %v2669, 0.015625
        %v2852 = vmul.f32 %v2671, 0.015625
        %v2853 = vmul.f32 %v2673, 0.015625
        %v2854 = vmul.f32 %v2675, 0.015625
        %v2855 = vmul.f32 %v2677, 0.015625
        %v2856 = vmul.f32 %v2679, 0.015625
        %v2857 = vmul.f32 %v2681, 0.015625
        %v2858 = vmul.f32 %v2683, 0.015625
        %v2859 = vmul.f32 %v2685, 0.015625
        %v2860 = vmul.f32 %v2687, 0.015625
        %v2861 = vmul.f32 %v2689, 0.015625
        %v2862 = vmul.f32 %v2691, 0.015625
        %v2863 = vmul.f32 %v2693, 0.015625
        %v2864 = vmul.f32 %v2695, 0.015625
        %v2865 = vmul.f32 %v2697, 0.015625
        %v2866 = vmul.f32 %v2699, 0.015625
        %v2867 = vmul.f32 %v2701, 0.015625
        %v2868 = vmul.f32 %v2703, 0.015625
        %v2869 = vmul.f32 %v2705, 0.015625
        %v2870 = vmul.f32 %v2707, 0.015625
        %v2871 = vmul.f32 %v2709, 0.015625
        %v2872 = vmul.f32 %v2711, 0.015625
        %v2873 = vmul.f32 %v2713, 0.015625
        %v2874 = vmul.f32 %v2715, 0.015625
        %v2875 = vmul.f32 %v2717, 0.015625
        %v2876 = vmul.f32 %v2719, 0.015625
        %v2877 = vmul.f32 %v2721, 0.015625
        %v2878 = vmul.f32 %v2723, 0.015625
        %v2879 = vmul.f32 %v2725, 0.015625
        %v2880 = vmul.f32 %v2727, 0.015625
        %v2881 = vmul.f32 %v2729, 0.015625
        %v2882 = vmul.f32 %v2731, 0.015625
        %v2883 = vmul.f32 %v2733, 0.015625
        %v2884 = vmul.f32 %v2735, 0.015625
        %v2885 = vmul.f32 %v2737, 0.015625
        %v2886 = vmul.f32 %v2739, 0.015625
        %v2887 = vmul.f32 %v2741, 0.015625
        %v2888 = vmul.f32 %v2743, 0.015625
        %v2889 = vmul.f32 %v2745, 0.015625
        %v2890 = vmul.f32 %v2747, 0.015625
        %v2891 = vmul.f32 %v2749, 0.015625
        %v2892 = vmul.f32 %v2751, 0.015625
        %v2893 = vmul.f32 %v2753, 0.015625
        %v2894 = vmul.f32 %v2755, 0.015625
        %v2895 = vmul.f32 %v2757, 0.015625
        %v2896 = vmul.f32 %v2759, 0.015625
        %v2897 = vmul.f32 %v2761, 0.015625
        %v2898 = vmul.f32 %v2763, 0.015625
        %v2899 = vmul.f32 %v2765, 0.015625
        %v2900 = vmul.f32 %v2767, 0.015625
        %v2901 = vmul.f32 %v2769, 0.015625
        %v2902 = vmul.f32 %v2771, 0.015625
        %v2903 = vmul.f32 %v2773, 0.015625
        %v2904 = vmul.f32 %v2775, 0.015625
        %v2905 = vmul.f32 %v2777, 0.015625
        %v2906 = vmul.f32 %v2778, %v2778
        %v2907 = vmul.f32 %v2779, %v2779
        %v2908 = vmul.f32 %v2780, %v2780
        %v2909 = vmul.f32 %v2781, %v2781
        %v2910 = vmul.f32 %v2782, %v2782
        %v2911 = vmul.f32 %v2783, %v2783
        %v2912 = vmul.f32 %v2784, %v2784
        %v2913 = vmul.f32 %v2785, %v2785
        %v2914 = vmul.f32 %v2786, %v2786
        %v2915 = vmul.f32 %v2787, %v2787
        %v2916 = vmul.f32 %v2788, %v2788
        %v2917 = vmul.f32 %v2789, %v2789
        %v2918 = vmul.f32 %v2790, %v2790
        %v2919 = vmul.f32 %v2791, %v2791
        %v2920 = vmul.f32 %v2792, %v2792
        %v2921 = vmul.f32 %v2793, %v2793
        %v2922 = vmul.f32 %v2794, %v2794
        %v2923 = vmul.f32 %v2795, %v2795
        %v2924 = vmul.f32 %v2796, %v2796
        %v2925 = vmul.f32 %v2797, %v2797
        %v2926 = vmul.f32 %v2798, %v2798
        %v2927 = vmul.f32 %v2799, %v2799
        %v2928 = vmul.f32 %v2800, %v2800
        %v2929 = vmul.f32 %v2801, %v2801
        %v2930 = vmul.f32 %v2802, %v2802
        %v2931 = vmul.f32 %v2803, %v2803
        %v2932 = vmul.f32 %v2804, %v2804
        %v2933 = vmul.f32 %v2805, %v2805
        %v2934 = vmul.f32 %v2806, %v2806
        %v2935 = vmul.f32 %v2807, %v2807
        %v2936 = vmul.f32 %v2808, %v2808
        %v2937 = vmul.f32 %v2809, %v2809
        %v2938 = vmul.f32 %v2810, %v2810
        %v2939 = vmul.f32 %v2811, %v2811
        %v2940 = vmul.f32 %v2812, %v2812
        %v2941 = vmul.f32 %v2813, %v2813
        %v2942 = vmul.f32 %v2814, %v2814
        %v2943 = vmul.f32 %v2815, %v2815
        %v2944 = vmul.f32 %v2816, %v2816
        %v2945 = vmul.f32 %v2817, %v2817
        %v2946 = vmul.f32 %v2818, %v2818
        %v2947 = vmul.f32 %v2819, %v2819
        %v2948 = vmul.f32 %v2820, %v2820
        %v2949 = vmul.f32 %v2821, %v2821
        %v2950 = vmul.f32 %v2822, %v2822
        %v2951 = vmul.f32 %v2823, %v2823
        %v2952 = vmul.f32 %v2824, %v2824
        %v2953 = vmul.f32 %v2825, %v2825
        %v2954 = vmul.f32 %v2826, %v2826
        %v2955 = vmul.f32 %v2827, %v2827
        %v2956 = vmul.f32 %v2828, %v2828
        %v2957 = vmul.f32 %v2829, %v2829
        %v2958 = vmul.f32 %v2830, %v2830
        %v2959 = vmul.f32 %v2831, %v2831
        %v2960 = vmul.f32 %v2832, %v2832
        %v2961 = vmul.f32 %v2833, %v2833
        %v2962 = vmul.f32 %v2834, %v2834
        %v2963 = vmul.f32 %v2835, %v2835
        %v2964 = vmul.f32 %v2836, %v2836
        %v2965 = vmul.f32 %v2837, %v2837
        %v2966 = vmul.f32 %v2838, %v2838
        %v2967 = vmul.f32 %v2839, %v2839
        %v2968 = vmul.f32 %v2840, %v2840
        %v2969 = vmul.f32 %v2841, %v2841
        %v2970 = vsub.f32 %v2842, %v2906
        %v2971 = vsub.f32 %v2843, %v2907
        %v2972 = vsub.f32 %v2844, %v2908
        %v2973 = vsub.f32 %v2845, %v2909
        %v2974 = vsub.f32 %v2846, %v2910
        %v2975 = vsub.f32 %v2847, %v2911
        %v2976 = vsub.f32 %v2848, %v2912
        %v2977 = vsub.f32 %v2849, %v2913
        %v2978 = vsub.f32 %v2850, %v2914
        %v2979 = vsub.f32 %v2851, %v2915
        %v2980 = vsub.f32 %v2852, %v2916
        %v2981 = vsub.f32 %v2853, %v2917
        %v2982 = vsub.f32 %v2854, %v2918
        %v2983 = vsub.f32 %v2855, %v2919
        %v2984 = vsub.f32 %v2856, %v2920
        %v2985 = vsub.f32 %v2857, %v2921
        %v2986 = vsub.f32 %v2858, %v2922
        %v2987 = vsub.f32 %v2859, %v2923
        %v2988 = vsub.f32 %v2860, %v2924
        %v2989 = vsub.f32 %v2861, %v2925
        %v2990 = vsub.f32 %v2862, %v2926
        %v2991 = vsub.f32 %v2863, %v2927
        %v2992 = vsub.f32 %v2864, %v2928
        %v2993 = vsub.f32 %v2865, %v2929
        %v2994 = vsub.f32 %v2866, %v2930
        %v2995 = vsub.f32 %v2867, %v2931
        %v2996 = vsub.f32 %v2868, %v2932
        %v2997 = vsub.f32 %v2869, %v2933
        %v2998 = vsub.f32 %v2870, %v2934
        %v2999 = vsub.f32 %v2871, %v2935
        %v3000 = vsub.f32 %v2872, %v2936
        %v3001 = vsub.f32 %v2873, %v2937
        %v3002 = vsub.f32 %v2874, %v2938
        %v3003 = vsub.f32 %v2875, %v2939
        %v3004 = vsub.f32 %v2876, %v2940
        %v3005 = vsub.f32 %v2877, %v2941
        %v3006 = vsub.f32 %v2878, %v2942
        %v3007 = vsub.f32 %v2879, %v2943
        %v3008 = vsub.f32 %v2880, %v2944
        %v3009 = vsub.f32 %v2881, %v2945
        %v3010 = vsub.f32 %v2882, %v2946
        %v3011 = vsub.f32 %v2883, %v2947
        %v3012 = vsub.f32 %v2884, %v2948
        %v3013 = vsub.f32 %v2885, %v2949
        %v3014 = vsub.f32 %v2886, %v2950
        %v3015 = vsub.f32 %v2887, %v2951
        %v3016 = vsub.f32 %v2888, %v2952
        %v3017 = vsub.f32 %v2889, %v2953
        %v3018 = vsub.f32 %v2890, %v2954
        %v3019 = vsub.f32 %v2891, %v2955
        %v3020 = vsub.f32 %v2892, %v2956
        %v3021 = vsub.f32 %v2893, %v2957
        %v3022 = vsub.f32 %v2894, %v2958
        %v3023 = vsub.f32 %v2895, %v2959
        %v3024 = vsub.f32 %v2896, %v2960
        %v3025 = vsub.f32 %v2897, %v2961
        %v3026 = vsub.f32 %v2898, %v2962
        %v3027 = vsub.f32 %v2899, %v2963
        %v3028 = vsub.f32 %v2900, %v2964
        %v3029 = vsub.f32 %v2901, %v2965
        %v3030 = vsub.f32 %v2902, %v2966
        %v3031 = vsub.f32 %v2903, %v2967
        %v3032 = vsub.f32 %v2904, %v2968
        %v3033 = vsub.f32 %v2905, %v2969
        %v3034 = vmax.f32 %v2970, 0.0
        %v3035 = vmax.f32 %v2971, 0.0
        %v3036 = vmax.f32 %v2972, 0.0
        %v3037 = vmax.f32 %v2973, 0.0
        %v3038 = vmax.f32 %v2974, 0.0
        %v3039 = vmax.f32 %v2975, 0.0
        %v3040 = vmax.f32 %v2976, 0.0
        %v3041 = vmax.f32 %v2977, 0.0
        %v3042 = vmax.f32 %v2978, 0.0
        %v3043 = vmax.f32 %v2979, 0.0
        %v3044 = vmax.f32 %v2980, 0.0
        %v3045 = vmax.f32 %v2981, 0.0
        %v3046 = vmax.f32 %v2982, 0.0
        %v3047 = vmax.f32 %v2983, 0.0
        %v3048 = vmax.f32 %v2984, 0.0
        %v3049 = vmax.f32 %v2985, 0.0
        %v3050 = vmax.f32 %v2986, 0.0
        %v3051 = vmax.f32 %v2987, 0.0
        %v3052 = vmax.f32 %v2988, 0.0
        %v3053 = vmax.f32 %v2989, 0.0
        %v3054 = vmax.f32 %v2990, 0.0
        %v3055 = vmax.f32 %v2991, 0.0
        %v3056 = vmax.f32 %v2992, 0.0
        %v3057 = vmax.f32 %v2993, 0.0
        %v3058 = vmax.f32 %v2994, 0.0
        %v3059 = vmax.f32 %v2995, 0.0
        %v3060 = vmax.f32 %v2996, 0.0
        %v3061 = vmax.f32 %v2997, 0.0
        %v3062 = vmax.f32 %v2998, 0.0
        %v3063 = vmax.f32 %v2999, 0.0
        %v3064 = vmax.f32 %v3000, 0.0
        %v3065 = vmax.f32 %v3001, 0.0
        %v3066 = vmax.f32 %v3002, 0.0
        %v3067 = vmax.f32 %v3003, 0.0
        %v3068 = vmax.f32 %v3004, 0.0
        %v3069 = vmax.f32 %v3005, 0.0
        %v3070 = vmax.f32 %v3006, 0.0
        %v3071 = vmax.f32 %v3007, 0.0
        %v3072 = vmax.f32 %v3008, 0.0
        %v3073 = vmax.f32 %v3009, 0.0
        %v3074 = vmax.f32 %v3010, 0.0
        %v3075 = vmax.f32 %v3011, 0.0
        %v3076 = vmax.f32 %v3012, 0.0
        %v3077 = vmax.f32 %v3013, 0.0
        %v3078 = vmax.f32 %v3014, 0.0
        %v3079 = vmax.f32 %v3015, 0.0
        %v3080 = vmax.f32 %v3016, 0.0
        %v3081 = vmax.f32 %v3017, 0.0
        %v3082 = vmax.f32 %v3018, 0.0
        %v3083 = vmax.f32 %v3019, 0.0
        %v3084 = vmax.f32 %v3020, 0.0
        %v3085 = vmax.f32 %v3021, 0.0
        %v3086 = vmax.f32 %v3022, 0.0
        %v3087 = vmax.f32 %v3023, 0.0
        %v3088 = vmax.f32 %v3024, 0.0
        %v3089 = vmax.f32 %v3025, 0.0
        %v3090 = vmax.f32 %v3026, 0.0
        %v3091 = vmax.f32 %v3027, 0.0
        %v3092 = vmax.f32 %v3028, 0.0
        %v3093 = vmax.f32 %v3029, 0.0
        %v3094 = vmax.f32 %v3030, 0.0
        %v3095 = vmax.f32 %v3031, 0.0
        %v3096 = vmax.f32 %v3032, 0.0
        %v3097 = vmax.f32 %v3033, 0.0
        %v3098 = vadd.f32 %v3034, 1e-05
        %v3099 = vadd.f32 %v3035, 1e-05
        %v3100 = vadd.f32 %v3036, 1e-05
        %v3101 = vadd.f32 %v3037, 1e-05
        %v3102 = vadd.f32 %v3038, 1e-05
        %v3103 = vadd.f32 %v3039, 1e-05
        %v3104 = vadd.f32 %v3040, 1e-05
        %v3105 = vadd.f32 %v3041, 1e-05
        %v3106 = vadd.f32 %v3042, 1e-05
        %v3107 = vadd.f32 %v3043, 1e-05
        %v3108 = vadd.f32 %v3044, 1e-05
        %v3109 = vadd.f32 %v3045, 1e-05
        %v3110 = vadd.f32 %v3046, 1e-05
        %v3111 = vadd.f32 %v3047, 1e-05
        %v3112 = vadd.f32 %v3048, 1e-05
        %v3113 = vadd.f32 %v3049, 1e-05
        %v3114 = vadd.f32 %v3050, 1e-05
        %v3115 = vadd.f32 %v3051, 1e-05
        %v3116 = vadd.f32 %v3052, 1e-05
        %v3117 = vadd.f32 %v3053, 1e-05
        %v3118 = vadd.f32 %v3054, 1e-05
        %v3119 = vadd.f32 %v3055, 1e-05
        %v3120 = vadd.f32 %v3056, 1e-05
        %v3121 = vadd.f32 %v3057, 1e-05
        %v3122 = vadd.f32 %v3058, 1e-05
        %v3123 = vadd.f32 %v3059, 1e-05
        %v3124 = vadd.f32 %v3060, 1e-05
        %v3125 = vadd.f32 %v3061, 1e-05
        %v3126 = vadd.f32 %v3062, 1e-05
        %v3127 = vadd.f32 %v3063, 1e-05
        %v3128 = vadd.f32 %v3064, 1e-05
        %v3129 = vadd.f32 %v3065, 1e-05
        %v3130 = vadd.f32 %v3066, 1e-05
        %v3131 = vadd.f32 %v3067, 1e-05
        %v3132 = vadd.f32 %v3068, 1e-05
        %v3133 = vadd.f32 %v3069, 1e-05
        %v3134 = vadd.f32 %v3070, 1e-05
        %v3135 = vadd.f32 %v3071, 1e-05
        %v3136 = vadd.f32 %v3072, 1e-05
        %v3137 = vadd.f32 %v3073, 1e-05
        %v3138 = vadd.f32 %v3074, 1e-05
        %v3139 = vadd.f32 %v3075, 1e-05
        %v3140 = vadd.f32 %v3076, 1e-05
        %v3141 = vadd.f32 %v3077, 1e-05
        %v3142 = vadd.f32 %v3078, 1e-05
        %v3143 = vadd.f32 %v3079, 1e-05
        %v3144 = vadd.f32 %v3080, 1e-05
        %v3145 = vadd.f32 %v3081, 1e-05
        %v3146 = vadd.f32 %v3082, 1e-05
        %v3147 = vadd.f32 %v3083, 1e-05
        %v3148 = vadd.f32 %v3084, 1e-05
        %v3149 = vadd.f32 %v3085, 1e-05
        %v3150 = vadd.f32 %v3086, 1e-05
        %v3151 = vadd.f32 %v3087, 1e-05
        %v3152 = vadd.f32 %v3088, 1e-05
        %v3153 = vadd.f32 %v3089, 1e-05
        %v3154 = vadd.f32 %v3090, 1e-05
        %v3155 = vadd.f32 %v3091, 1e-05
        %v3156 = vadd.f32 %v3092, 1e-05
        %v3157 = vadd.f32 %v3093, 1e-05
        %v3158 = vadd.f32 %v3094, 1e-05
        %v3159 = vadd.f32 %v3095, 1e-05
        %v3160 = vadd.f32 %v3096, 1e-05
        %v3161 = vadd.f32 %v3097, 1e-05
        %v3162 = vrsqrt.pop %v3098
        %v3163 = vrsqrt.pop %v3099
        %v3164 = vrsqrt.pop %v3100
        %v3165 = vrsqrt.pop %v3101
        %v3166 = vrsqrt.pop %v3102
        %v3167 = vrsqrt.pop %v3103
        %v3168 = vrsqrt.pop %v3104
        %v3169 = vrsqrt.pop %v3105
        %v3170 = vrsqrt.pop %v3106
        %v3171 = vrsqrt.pop %v3107
        %v3172 = vrsqrt.pop %v3108
        %v3173 = vrsqrt.pop %v3109
        %v3174 = vrsqrt.pop %v3110
        %v3175 = vrsqrt.pop %v3111
        %v3176 = vrsqrt.pop %v3112
        %v3177 = vrsqrt.pop %v3113
        %v3178 = vrsqrt.pop %v3114
        %v3179 = vrsqrt.pop %v3115
        %v3180 = vrsqrt.pop %v3116
        %v3181 = vrsqrt.pop %v3117
        %v3182 = vrsqrt.pop %v3118
        %v3183 = vrsqrt.pop %v3119
        %v3184 = vrsqrt.pop %v3120
        %v3185 = vrsqrt.pop %v3121
        %v3186 = vrsqrt.pop %v3122
        %v3187 = vrsqrt.pop %v3123
        %v3188 = vrsqrt.pop %v3124
        %v3189 = vrsqrt.pop %v3125
        %v3190 = vrsqrt.pop %v3126
        %v3191 = vrsqrt.pop %v3127
        %v3192 = vrsqrt.pop %v3128
        %v3193 = vrsqrt.pop %v3129
        %v3194 = vrsqrt.pop %v3130
        %v3195 = vrsqrt.pop %v3131
        %v3196 = vrsqrt.pop %v3132
        %v3197 = vrsqrt.pop %v3133
        %v3198 = vrsqrt.pop %v3134
        %v3199 = vrsqrt.pop %v3135
        %v3200 = vrsqrt.pop %v3136
        %v3201 = vrsqrt.pop %v3137
        %v3202 = vrsqrt.pop %v3138
        %v3203 = vrsqrt.pop %v3139
        %v3204 = vrsqrt.pop %v3140
        %v3205 = vrsqrt.pop %v3141
        %v3206 = vrsqrt.pop %v3142
        %v3207 = vrsqrt.pop %v3143
        %v3208 = vrsqrt.pop %v3144
        %v3209 = vrsqrt.pop %v3145
        %v3210 = vrsqrt.pop %v3146
        %v3211 = vrsqrt.pop %v3147
        %v3212 = vrsqrt.pop %v3148
        %v3213 = vrsqrt.pop %v3149
        %v3214 = vrsqrt.pop %v3150
        %v3215 = vrsqrt.pop %v3151
        %v3216 = vrsqrt.pop %v3152
        %v3217 = vrsqrt.pop %v3153
        %v3218 = vrsqrt.pop %v3154
        %v3219 = vrsqrt.pop %v3155
        %v3220 = vrsqrt.pop %v3156
        %v3221 = vrsqrt.pop %v3157
        %v3222 = vrsqrt.pop %v3158
        %v3223 = vrsqrt.pop %v3159
        %v3224 = vrsqrt.pop %v3160
        %v3225 = vrsqrt.pop %v3161
        %v3226 = vlaneseq
        %v3227 = vshrl.u32 %v3226, 7
        %v3228 = vsub.s32 0, %v3227
        %v3229 = vrot.slane %v2456, %v3228
        %v3230 = vmul.f32 %v3229, %v3162
        %v3231 = vmul.f32 %v3229, %v3163
        %v3232 = vmul.f32 %v3229, %v3164
        %v3233 = vmul.f32 %v3229, %v3165
        %v3234 = vmul.f32 %v3229, %v3166
        %v3235 = vmul.f32 %v3229, %v3167
        %v3236 = vmul.f32 %v3229, %v3168
        %v3237 = vmul.f32 %v3229, %v3169
        %v3238 = vmul.f32 %v3229, %v3170
        %v3239 = vmul.f32 %v3229, %v3171
        %v3240 = vmul.f32 %v3229, %v3172
        %v3241 = vmul.f32 %v3229, %v3173
        %v3242 = vmul.f32 %v3229, %v3174
        %v3243 = vmul.f32 %v3229, %v3175
        %v3244 = vmul.f32 %v3229, %v3176
        %v3245 = vmul.f32 %v3229, %v3177
        %v3246 = vmul.f32 %v3229, %v3178
        %v3247 = vmul.f32 %v3229, %v3179
        %v3248 = vmul.f32 %v3229, %v3180
        %v3249 = vmul.f32 %v3229, %v3181
        %v3250 = vmul.f32 %v3229, %v3182
        %v3251 = vmul.f32 %v3229, %v3183
        %v3252 = vmul.f32 %v3229, %v3184
        %v3253 = vmul.f32 %v3229, %v3185
        %v3254 = vmul.f32 %v3229, %v3186
        %v3255 = vmul.f32 %v3229, %v3187
        %v3256 = vmul.f32 %v3229, %v3188
        %v3257 = vmul.f32 %v3229, %v3189
        %v3258 = vmul.f32 %v3229, %v3190
        %v3259 = vmul.f32 %v3229, %v3191
        %v3260 = vmul.f32 %v3229, %v3192
        %v3261 = vmul.f32 %v3229, %v3193
        %v3262 = vmul.f32 %v3229, %v3194
        %v3263 = vmul.f32 %v3229, %v3195
        %v3264 = vmul.f32 %v3229, %v3196
        %v3265 = vmul.f32 %v3229, %v3197
        %v3266 = vmul.f32 %v3229, %v3198
        %v3267 = vmul.f32 %v3229, %v3199
        %v3268 = vmul.f32 %v3229, %v3200
        %v3269 = vmul.f32 %v3229, %v3201
        %v3270 = vmul.f32 %v3229, %v3202
        %v3271 = vmul.f32 %v3229, %v3203
        %v3272 = vmul.f32 %v3229, %v3204
        %v3273 = vmul.f32 %v3229, %v3205
        %v3274 = vmul.f32 %v3229, %v3206
        %v3275 = vmul.f32 %v3229, %v3207
        %v3276 = vmul.f32 %v3229, %v3208
        %v3277 = vmul.f32 %v3229, %v3209
        %v3278 = vmul.f32 %v3229, %v3210
        %v3279 = vmul.f32 %v3229, %v3211
        %v3280 = vmul.f32 %v3229, %v3212
        %v3281 = vmul.f32 %v3229, %v3213
        %v3282 = vmul.f32 %v3229, %v3214
        %v3283 = vmul.f32 %v3229, %v3215
        %v3284 = vmul.f32 %v3229, %v3216
        %v3285 = vmul.f32 %v3229, %v3217
        %v3286 = vmul.f32 %v3229, %v3218
        %v3287 = vmul.f32 %v3229, %v3219
        %v3288 = vmul.f32 %v3229, %v3220
        %v3289 = vmul.f32 %v3229, %v3221
        %v3290 = vmul.f32 %v3229, %v3222
        %v3291 = vmul.f32 %v3229, %v3223
        %v3292 = vmul.f32 %v3229, %v3224
        %v3293 = vmul.f32 %v3229, %v3225
        %v3294 = vsub.f32 %v2392, %v2778
        %v3295 = vsub.f32 %v2393, %v2779
        %v3296 = vsub.f32 %v2394, %v2780
        %v3297 = vsub.f32 %v2395, %v2781
        %v3298 = vsub.f32 %v2396, %v2782
        %v3299 = vsub.f32 %v2397, %v2783
        %v3300 = vsub.f32 %v2398, %v2784
        %v3301 = vsub.f32 %v2399, %v2785
        %v3302 = vsub.f32 %v2400, %v2786
        %v3303 = vsub.f32 %v2401, %v2787
        %v3304 = vsub.f32 %v2402, %v2788
        %v3305 = vsub.f32 %v2403, %v2789
        %v3306 = vsub.f32 %v2404, %v2790
        %v3307 = vsub.f32 %v2405, %v2791
        %v3308 = vsub.f32 %v2406, %v2792
        %v3309 = vsub.f32 %v2407, %v2793
        %v3310 = vsub.f32 %v2408, %v2794
        %v3311 = vsub.f32 %v2409, %v2795
        %v3312 = vsub.f32 %v2410, %v2796
        %v3313 = vsub.f32 %v2411, %v2797
        %v3314 = vsub.f32 %v2412, %v2798
        %v3315 = vsub.f32 %v2413, %v2799
        %v3316 = vsub.f32 %v2414, %v2800
        %v3317 = vsub.f32 %v2415, %v2801
        %v3318 = vsub.f32 %v2416, %v2802
        %v3319 = vsub.f32 %v2417, %v2803
        %v3320 = vsub.f32 %v2418, %v2804
        %v3321 = vsub.f32 %v2419, %v2805
        %v3322 = vsub.f32 %v2420, %v2806
        %v3323 = vsub.f32 %v2421, %v2807
        %v3324 = vsub.f32 %v2422, %v2808
        %v3325 = vsub.f32 %v2423, %v2809
        %v3326 = vsub.f32 %v2424, %v2810
        %v3327 = vsub.f32 %v2425, %v2811
        %v3328 = vsub.f32 %v2426, %v2812
        %v3329 = vsub.f32 %v2427, %v2813
        %v3330 = vsub.f32 %v2428, %v2814
        %v3331 = vsub.f32 %v2429, %v2815
        %v3332 = vsub.f32 %v2430, %v2816
        %v3333 = vsub.f32 %v2431, %v2817
        %v3334 = vsub.f32 %v2432, %v2818
        %v3335 = vsub.f32 %v2433, %v2819
        %v3336 = vsub.f32 %v2434, %v2820
        %v3337 = vsub.f32 %v2435, %v2821
        %v3338 = vsub.f32 %v2436, %v2822
        %v3339 = vsub.f32 %v2437, %v2823
        %v3340 = vsub.f32 %v2438, %v2824
        %v3341 = vsub.f32 %v2439, %v2825
        %v3342 = vsub.f32 %v2440, %v2826
        %v3343 = vsub.f32 %v2441, %v2827
        %v3344 = vsub.f32 %v2442, %v2828
        %v3345 = vsub.f32 %v2443, %v2829
        %v3346 = vsub.f32 %v2444, %v2830
        %v3347 = vsub.f32 %v2445, %v2831
        %v3348 = vsub.f32 %v2446, %v2832
        %v3349 = vsub.f32 %v2447, %v2833
        %v3350 = vsub.f32 %v2448, %v2834
        %v3351 = vsub.f32 %v2449, %v2835
        %v3352 = vsub.f32 %v2450, %v2836
        %v3353 = vsub.f32 %v2451, %v2837
        %v3354 = vsub.f32 %v2452, %v2838
        %v3355 = vsub.f32 %v2453, %v2839
        %v3356 = vsub.f32 %v2454, %v2840
        %v3357 = vsub.f32 %v2455, %v2841
        %v3358 = vmul.f32 %v3294, %v3230
        %v3359 = vmul.f32 %v3295, %v3231
        %v3360 = vmul.f32 %v3296, %v3232
        %v3361 = vmul.f32 %v3297, %v3233
        %v3362 = vmul.f32 %v3298, %v3234
        %v3363 = vmul.f32 %v3299, %v3235
        %v3364 = vmul.f32 %v3300, %v3236
        %v3365 = vmul.f32 %v3301, %v3237
        %v3366 = vmul.f32 %v3302, %v3238
        %v3367 = vmul.f32 %v3303, %v3239
        %v3368 = vmul.f32 %v3304, %v3240
        %v3369 = vmul.f32 %v3305, %v3241
        %v3370 = vmul.f32 %v3306, %v3242
        %v3371 = vmul.f32 %v3307, %v3243
        %v3372 = vmul.f32 %v3308, %v3244
        %v3373 = vmul.f32 %v3309, %v3245
        %v3374 = vmul.f32 %v3310, %v3246
        %v3375 = vmul.f32 %v3311, %v3247
        %v3376 = vmul.f32 %v3312, %v3248
        %v3377 = vmul.f32 %v3313, %v3249
        %v3378 = vmul.f32 %v3314, %v3250
        %v3379 = vmul.f32 %v3315, %v3251
        %v3380 = vmul.f32 %v3316, %v3252
        %v3381 = vmul.f32 %v3317, %v3253
        %v3382 = vmul.f32 %v3318, %v3254
        %v3383 = vmul.f32 %v3319, %v3255
        %v3384 = vmul.f32 %v3320, %v3256
        %v3385 = vmul.f32 %v3321, %v3257
        %v3386 = vmul.f32 %v3322, %v3258
        %v3387 = vmul.f32 %v3323, %v3259
        %v3388 = vmul.f32 %v3324, %v3260
        %v3389 = vmul.f32 %v3325, %v3261
        %v3390 = vmul.f32 %v3326, %v3262
        %v3391 = vmul.f32 %v3327, %v3263
        %v3392 = vmul.f32 %v3328, %v3264
        %v3393 = vmul.f32 %v3329, %v3265
        %v3394 = vmul.f32 %v3330, %v3266
        %v3395 = vmul.f32 %v3331, %v3267
        %v3396 = vmul.f32 %v3332, %v3268
        %v3397 = vmul.f32 %v3333, %v3269
        %v3398 = vmul.f32 %v3334, %v3270
        %v3399 = vmul.f32 %v3335, %v3271
        %v3400 = vmul.f32 %v3336, %v3272
        %v3401 = vmul.f32 %v3337, %v3273
        %v3402 = vmul.f32 %v3338, %v3274
        %v3403 = vmul.f32 %v3339, %v3275
        %v3404 = vmul.f32 %v3340, %v3276
        %v3405 = vmul.f32 %v3341, %v3277
        %v3406 = vmul.f32 %v3342, %v3278
        %v3407 = vmul.f32 %v3343, %v3279
        %v3408 = vmul.f32 %v3344, %v3280
        %v3409 = vmul.f32 %v3345, %v3281
        %v3410 = vmul.f32 %v3346, %v3282
        %v3411 = vmul.f32 %v3347, %v3283
        %v3412 = vmul.f32 %v3348, %v3284
        %v3413 = vmul.f32 %v3349, %v3285
        %v3414 = vmul.f32 %v3350, %v3286
        %v3415 = vmul.f32 %v3351, %v3287
        %v3416 = vmul.f32 %v3352, %v3288
        %v3417 = vmul.f32 %v3353, %v3289
        %v3418 = vmul.f32 %v3354, %v3290
        %v3419 = vmul.f32 %v3355, %v3291
        %v3420 = vmul.f32 %v3356, %v3292
        %v3421 = vmul.f32 %v3357, %v3293
        %v3422 = vlaneseq
        %v3423 = vshrl.u32 %v3422, 7
        %v3424 = vsub.s32 0, %v3423
        %v3425 = vrot.slane %v2457, %v3424
        %v3426 = vadd.f32 %v3358, %v3425
        %v3427 = vadd.f32 %v3359, %v3425
        %v3428 = vadd.f32 %v3360, %v3425
        %v3429 = vadd.f32 %v3361, %v3425
        %v3430 = vadd.f32 %v3362, %v3425
        %v3431 = vadd.f32 %v3363, %v3425
        %v3432 = vadd.f32 %v3364, %v3425
        %v3433 = vadd.f32 %v3365, %v3425
        %v3434 = vadd.f32 %v3366, %v3425
        %v3435 = vadd.f32 %v3367, %v3425
        %v3436 = vadd.f32 %v3368, %v3425
        %v3437 = vadd.f32 %v3369, %v3425
        %v3438 = vadd.f32 %v3370, %v3425
        %v3439 = vadd.f32 %v3371, %v3425
        %v3440 = vadd.f32 %v3372, %v3425
        %v3441 = vadd.f32 %v3373, %v3425
        %v3442 = vadd.f32 %v3374, %v3425
        %v3443 = vadd.f32 %v3375, %v3425
        %v3444 = vadd.f32 %v3376, %v3425
        %v3445 = vadd.f32 %v3377, %v3425
        %v3446 = vadd.f32 %v3378, %v3425
        %v3447 = vadd.f32 %v3379, %v3425
        %v3448 = vadd.f32 %v3380, %v3425
        %v3449 = vadd.f32 %v3381, %v3425
        %v3450 = vadd.f32 %v3382, %v3425
        %v3451 = vadd.f32 %v3383, %v3425
        %v3452 = vadd.f32 %v3384, %v3425
        %v3453 = vadd.f32 %v3385, %v3425
        %v3454 = vadd.f32 %v3386, %v3425
        %v3455 = vadd.f32 %v3387, %v3425
        %v3456 = vadd.f32 %v3388, %v3425
        %v3457 = vadd.f32 %v3389, %v3425
        %v3458 = vadd.f32 %v3390, %v3425
        %v3459 = vadd.f32 %v3391, %v3425
        %v3460 = vadd.f32 %v3392, %v3425
        %v3461 = vadd.f32 %v3393, %v3425
        %v3462 = vadd.f32 %v3394, %v3425
        %v3463 = vadd.f32 %v3395, %v3425
        %v3464 = vadd.f32 %v3396, %v3425
        %v3465 = vadd.f32 %v3397, %v3425
        %v3466 = vadd.f32 %v3398, %v3425
        %v3467 = vadd.f32 %v3399, %v3425
        %v3468 = vadd.f32 %v3400, %v3425
        %v3469 = vadd.f32 %v3401, %v3425
        %v3470 = vadd.f32 %v3402, %v3425
        %v3471 = vadd.f32 %v3403, %v3425
        %v3472 = vadd.f32 %v3404, %v3425
        %v3473 = vadd.f32 %v3405, %v3425
        %v3474 = vadd.f32 %v3406, %v3425
        %v3475 = vadd.f32 %v3407, %v3425
        %v3476 = vadd.f32 %v3408, %v3425
        %v3477 = vadd.f32 %v3409, %v3425
        %v3478 = vadd.f32 %v3410, %v3425
        %v3479 = vadd.f32 %v3411, %v3425
        %v3480 = vadd.f32 %v3412, %v3425
        %v3481 = vadd.f32 %v3413, %v3425
        %v3482 = vadd.f32 %v3414, %v3425
        %v3483 = vadd.f32 %v3415, %v3425
        %v3484 = vadd.f32 %v3416, %v3425
        %v3485 = vadd.f32 %v3417, %v3425
        %v3486 = vadd.f32 %v3418, %v3425
        %v3487 = vadd.f32 %v3419, %v3425
        %v3488 = vadd.f32 %v3420, %v3425
        %v3489 = vadd.f32 %v3421, %v3425
        %v3490 = vpack.c.bf16 %v3427, %v3426
        %v3491 = vpack.c.bf16 %v3429, %v3428
        %v3492 = vpack.c.bf16 %v3431, %v3430
        %v3493 = vpack.c.bf16 %v3433, %v3432
        %v3494 = vpack.c.bf16 %v3435, %v3434
        %v3495 = vpack.c.bf16 %v3437, %v3436
        %v3496 = vpack.c.bf16 %v3439, %v3438
        %v3497 = vpack.c.bf16 %v3441, %v3440
        %v3498 = vpack.c.bf16 %v3443, %v3442
        %v3499 = vpack.c.bf16 %v3445, %v3444
        %v3500 = vpack.c.bf16 %v3447, %v3446
        %v3501 = vpack.c.bf16 %v3449, %v3448
        %v3502 = vpack.c.bf16 %v3451, %v3450
        %v3503 = vpack.c.bf16 %v3453, %v3452
        %v3504 = vpack.c.bf16 %v3455, %v3454
        %v3505 = vpack.c.bf16 %v3457, %v3456
        %v3506 = vpack.c.bf16 %v3459, %v3458
        %v3507 = vpack.c.bf16 %v3461, %v3460
        %v3508 = vpack.c.bf16 %v3463, %v3462
        %v3509 = vpack.c.bf16 %v3465, %v3464
        %v3510 = vpack.c.bf16 %v3467, %v3466
        %v3511 = vpack.c.bf16 %v3469, %v3468
        %v3512 = vpack.c.bf16 %v3471, %v3470
        %v3513 = vpack.c.bf16 %v3473, %v3472
        %v3514 = vpack.c.bf16 %v3475, %v3474
        %v3515 = vpack.c.bf16 %v3477, %v3476
        %v3516 = vpack.c.bf16 %v3479, %v3478
        %v3517 = vpack.c.bf16 %v3481, %v3480
        %v3518 = vpack.c.bf16 %v3483, %v3482
        %v3519 = vpack.c.bf16 %v3485, %v3484
        %v3520 = vpack.c.bf16 %v3487, %v3486
        %v3521 = vpack.c.bf16 %v3489, %v3488
        %v3522 = vld [vmem:[#allocation8] sm:$0xf]
        %v3523 = vld [vmem:[#allocation8 + $0x4] sm:$0xf]
        %v3524 = vld [vmem:[#allocation8 + $0x8] sm:$0xf]
        %v3525 = vld [vmem:[#allocation8 + $0xc] sm:$0xf]
        %v3526 = vld [vmem:[#allocation8 + $0x10] sm:$0xf]
        %v3527 = vld [vmem:[#allocation8 + $0x14] sm:$0xf]
        %v3528 = vld [vmem:[#allocation8 + $0x18] sm:$0xf]
        %v3529 = vld [vmem:[#allocation8 + $0x1c] sm:$0xf]
        %v3530 = vld [vmem:[#allocation8 + $0x20] sm:$0xf]
        %v3531 = vld [vmem:[#allocation8 + $0x24] sm:$0xf]
        %v3532 = vld [vmem:[#allocation8 + $0x28] sm:$0xf]
        %v3533 = vld [vmem:[#allocation8 + $0x2c] sm:$0xf]
        %v3534 = vld [vmem:[#allocation8 + $0x30] sm:$0xf]
        %v3535 = vld [vmem:[#allocation8 + $0x34] sm:$0xf]
        %v3536 = vld [vmem:[#allocation8 + $0x38] sm:$0xf]
        %v3537 = vld [vmem:[#allocation8 + $0x3c] sm:$0xf]
        %v3538 = vld [vmem:[%s4 + $0x6] sm:$0x1]
        %v3539 = vlaneseq
        %v3540 = vshrl.u32 %v3539, 7
        %v3541 = vsub.s32 0, %v3540
        %v3542 = vrot.slane %v3538, %v3541
        %v3559 = vunpack.c.l.b16 %v3522
        %v3560 = vunpack.c.l.b16 %v3523
        %v3561 = vunpack.c.l.b16 %v3524
        %v3562 = vunpack.c.l.b16 %v3525
        %v3563 = vunpack.c.l.b16 %v3526
        %v3564 = vunpack.c.l.b16 %v3527
        %v3565 = vunpack.c.l.b16 %v3528
        %v3566 = vunpack.c.l.b16 %v3529
        %v3567 = vunpack.c.l.b16 %v3530
        %v3568 = vunpack.c.l.b16 %v3531
        %v3569 = vunpack.c.l.b16 %v3532
        %v3570 = vunpack.c.l.b16 %v3533
        %v3571 = vunpack.c.l.b16 %v3534
        %v3572 = vunpack.c.l.b16 %v3535
        %v3573 = vunpack.c.l.b16 %v3536
        %v3574 = vunpack.c.l.b16 %v3537
        %v3575 = vpack.c.b16 %v3560, %v3559
        %v3576 = vpack.c.b16 %v3562, %v3561
        %v3577 = vpack.c.b16 %v3564, %v3563
        %v3578 = vpack.c.b16 %v3566, %v3565
        %v3579 = vpack.c.b16 %v3568, %v3567
        %v3580 = vpack.c.b16 %v3570, %v3569
        %v3581 = vpack.c.b16 %v3572, %v3571
        %v3582 = vpack.c.b16 %v3574, %v3573
        %3591 = vmatprep.subr.bf16.mxu0 0
        %3592 = vmatpush1.bf16.msra.mxu0 %v3575
        %3593 = vmatprep.subr.bf16.mxu0 0
        %3594 = vmatpush1.bf16.msra.mxu0 %v3576
        %3595 = vmatprep.subr.bf16.mxu0 0
        %3596 = vmatpush1.bf16.msra.mxu0 %v3577
        %3597 = vmatprep.subr.bf16.mxu0 0
        %3598 = vmatpush1.bf16.msra.mxu0 %v3578
        %3599 = vmatprep.subr.bf16.mxu0 0
        %3600 = vmatpush1.bf16.msra.mxu0 %v3579
        %3601 = vmatprep.subr.bf16.mxu0 0
        %3602 = vmatpush1.bf16.msra.mxu0 %v3580
        %3603 = vmatprep.subr.bf16.mxu0 0
        %3604 = vmatpush1.bf16.msra.mxu0 %v3581
        %3605 = vmatprep.subr.bf16.mxu0 0
        %3606 = vmatpush1.bf16.msra.mxu0 %v3582
        %3607 = vmatprep.subr.bf16.mxu0 0
        %3608 = vmatpush1.bf16.msra.mxu0 0
        %3609 = vmatprep.subr.bf16.mxu0 0
        %3610 = vmatpush1.bf16.msra.mxu0 0
        %3611 = vmatprep.subr.bf16.mxu0 0
        %3612 = vmatpush1.bf16.msra.mxu0 0
        %3613 = vmatprep.subr.bf16.mxu0 0
        %3614 = vmatpush1.bf16.msra.mxu0 0
        %3615 = vmatprep.subr.bf16.mxu0 0
        %3616 = vmatpush1.bf16.msra.mxu0 0
        %3617 = vmatprep.subr.bf16.mxu0 0
        %3618 = vmatpush1.bf16.msra.mxu0 0
        %3619 = vmatprep.subr.bf16.mxu0 0
        %3620 = vmatpush1.bf16.msra.mxu0 0
        %3621 = vmatprep.subr.bf16.mxu0 0
        %3622 = vmatpush1.bf16.msra.mxu0 0
        %3623 = vmatprep.mubr.bf16.mxu0 0
        %3624 = vmatmul.mubr.bf16.gmra.mrb[0].mxu0 %v3490
        %v3625 = vpop.f32.mrb[0].mxu0
        %v3626 = vadd.f32 %v3542, %v3625
        %v3627 = vpop.f32.mrb[0].mxu0
        %v3628 = vpop.f32.mrb[0].mxu0
        %v3629 = vadd.f32 %v3542, %v3628
        %v3630 = vpop.f32.mrb[0].mxu0
        %3631 = vmatprep.mubr.bf16.mxu0 0
        %3632 = vmatmul.mubr.bf16.gmra.mrb[0].mxu0 %v3491
        %v3633 = vpop.f32.mrb[0].mxu0
        %v3634 = vadd.f32 %v3542, %v3633
        %v3635 = vpop.f32.mrb[0].mxu0
        %v3636 = vpop.f32.mrb[0].mxu0
        %v3637 = vadd.f32 %v3542, %v3636
        %v3638 = vpop.f32.mrb[0].mxu0
        %3639 = vmatprep.mubr.bf16.mxu0 0
        %3640 = vmatmul.mubr.bf16.gmra.mrb[0].mxu0 %v3492
        %v3641 = vpop.f32.mrb[0].mxu0
        %v3642 = vadd.f32 %v3542, %v3641
        %v3643 = vpop.f32.mrb[0].mxu0
        %v3644 = vpop.f32.mrb[0].mxu0
        %v3645 = vadd.f32 %v3542, %v3644
        %v3646 = vpop.f32.mrb[0].mxu0
        %3647 = vmatprep.mubr.bf16.mxu0 0
        %3648 = vmatmul.mubr.bf16.gmra.mrb[0].mxu0 %v3493
        %v3649 = vpop.f32.mrb[0].mxu0
        %v3650 = vadd.f32 %v3542, %v3649
        %v3651 = vpop.f32.mrb[0].mxu0
        %v3652 = vpop.f32.mrb[0].mxu0
        %v3653 = vadd.f32 %v3542, %v3652
        %v3654 = vpop.f32.mrb[0].mxu0
        %3655 = vmatprep.mubr.bf16.mxu0 0
        %3656 = vmatmul.mubr.bf16.gmra.mrb[0].mxu0 %v3494
        %v3657 = vpop.f32.mrb[0].mxu0
        %v3658 = vadd.f32 %v3542, %v3657
        %v3659 = vpop.f32.mrb[0].mxu0
        %v3660 = vpop.f32.mrb[0].mxu0
        %v3661 = vadd.f32 %v3542, %v3660
        %v3662 = vpop.f32.mrb[0].mxu0
        %3663 = vmatprep.mubr.bf16.mxu0 0
        %3664 = vmatmul.mubr.bf16.gmra.mrb[0].mxu0 %v3495
        %v3665 = vpop.f32.mrb[0].mxu0
        %v3666 = vadd.f32 %v3542, %v3665
        %v3667 = vpop.f32.mrb[0].mxu0
        %v3668 = vpop.f32.mrb[0].mxu0
        %v3669 = vadd.f32 %v3542, %v3668
        %v3670 = vpop.f32.mrb[0].mxu0
        %3671 = vmatprep.mubr.bf16.mxu0 0
        %3672 = vmatmul.mubr.bf16.gmra.mrb[0].mxu0 %v3496
        %v3673 = vpop.f32.mrb[0].mxu0
        %v3674 = vadd.f32 %v3542, %v3673
        %v3675 = vpop.f32.mrb[0].mxu0
        %v3676 = vpop.f32.mrb[0].mxu0
        %v3677 = vadd.f32 %v3542, %v3676
        %v3678 = vpop.f32.mrb[0].mxu0
        %3679 = vmatprep.mubr.bf16.mxu0 0
        %3680 = vmatmul.mubr.bf16.gmra.mrb[0].mxu0 %v3497
        %v3681 = vpop.f32.mrb[0].mxu0
        %v3682 = vadd.f32 %v3542, %v3681
        %v3683 = vpop.f32.mrb[0].mxu0
        %v3684 = vpop.f32.mrb[0].mxu0
        %v3685 = vadd.f32 %v3542, %v3684
        %v3686 = vpop.f32.mrb[0].mxu0
        %3687 = vmatprep.mubr.bf16.mxu0 0
        %3688 = vmatmul.mubr.bf16.gmra.mrb[0].mxu0 %v3498
        %v3689 = vpop.f32.mrb[0].mxu0
        %v3690 = vadd.f32 %v3542, %v3689
        %v3691 = vpop.f32.mrb[0].mxu0
        %v3692 = vpop.f32.mrb[0].mxu0
        %v3693 = vadd.f32 %v3542, %v3692
        %v3694 = vpop.f32.mrb[0].mxu0
        %3695 = vmatprep.mubr.bf16.mxu0 0
        %3696 = vmatmul.mubr.bf16.gmra.mrb[0].mxu0 %v3499
        %v3697 = vpop.f32.mrb[0].mxu0
        %v3698 = vadd.f32 %v3542, %v3697
        %v3699 = vpop.f32.mrb[0].mxu0
        %v3700 = vpop.f32.mrb[0].mxu0
        %v3701 = vadd.f32 %v3542, %v3700
        %v3702 = vpop.f32.mrb[0].mxu0
        %3703 = vmatprep.mubr.bf16.mxu0 0
        %3704 = vmatmul.mubr.bf16.gmra.mrb[0].mxu0 %v3500
        %v3705 = vpop.f32.mrb[0].mxu0
        %v3706 = vadd.f32 %v3542, %v3705
        %v3707 = vpop.f32.mrb[0].mxu0
        %v3708 = vpop.f32.mrb[0].mxu0
        %v3709 = vadd.f32 %v3542, %v3708
        %v3710 = vpop.f32.mrb[0].mxu0
        %3711 = vmatprep.mubr.bf16.mxu0 0
        %3712 = vmatmul.mubr.bf16.gmra.mrb[0].mxu0 %v3501
        %v3713 = vpop.f32.mrb[0].mxu0
        %v3714 = vadd.f32 %v3542, %v3713
        %v3715 = vpop.f32.mrb[0].mxu0
        %v3716 = vpop.f32.mrb[0].mxu0
        %v3717 = vadd.f32 %v3542, %v3716
        %v3718 = vpop.f32.mrb[0].mxu0
        %3719 = vmatprep.mubr.bf16.mxu0 0
        %3720 = vmatmul.mubr.bf16.gmra.mrb[0].mxu0 %v3502
        %v3721 = vpop.f32.mrb[0].mxu0
        %v3722 = vadd.f32 %v3542, %v3721
        %v3723 = vpop.f32.mrb[0].mxu0
        %v3724 = vpop.f32.mrb[0].mxu0
        %v3725 = vadd.f32 %v3542, %v3724
        %v3726 = vpop.f32.mrb[0].mxu0
        %3727 = vmatprep.mubr.bf16.mxu0 0
        %3728 = vmatmul.mubr.bf16.gmra.mrb[0].mxu0 %v3503
        %v3729 = vpop.f32.mrb[0].mxu0
        %v3730 = vadd.f32 %v3542, %v3729
        %v3731 = vpop.f32.mrb[0].mxu0
        %v3732 = vpop.f32.mrb[0].mxu0
        %v3733 = vadd.f32 %v3542, %v3732
        %v3734 = vpop.f32.mrb[0].mxu0
        %3735 = vmatprep.mubr.bf16.mxu0 0
        %3736 = vmatmul.mubr.bf16.gmra.mrb[0].mxu0 %v3504
        %v3737 = vpop.f32.mrb[0].mxu0
        %v3738 = vadd.f32 %v3542, %v3737
        %v3739 = vpop.f32.mrb[0].mxu0
        %v3740 = vpop.f32.mrb[0].mxu0
        %v3741 = vadd.f32 %v3542, %v3740
        %v3742 = vpop.f32.mrb[0].mxu0
        %3743 = vmatprep.mubr.bf16.mxu0 0
        %3744 = vmatmul.mubr.bf16.gmra.mrb[0].mxu0 %v3505
        %v3745 = vpop.f32.mrb[0].mxu0
        %v3746 = vadd.f32 %v3542, %v3745
        %v3747 = vpop.f32.mrb[0].mxu0
        %v3748 = vpop.f32.mrb[0].mxu0
        %v3749 = vadd.f32 %v3542, %v3748
        %v3750 = vpop.f32.mrb[0].mxu0
        %3751 = vmatprep.mubr.bf16.mxu0 0
        %3752 = vmatmul.mubr.bf16.gmra.mrb[0].mxu0 %v3506
        %v3753 = vpop.f32.mrb[0].mxu0
        %v3754 = vadd.f32 %v3542, %v3753
        %v3755 = vpop.f32.mrb[0].mxu0
        %v3756 = vpop.f32.mrb[0].mxu0
        %v3757 = vadd.f32 %v3542, %v3756
        %v3758 = vpop.f32.mrb[0].mxu0
        %3759 = vmatprep.mubr.bf16.mxu0 0
        %3760 = vmatmul.mubr.bf16.gmra.mrb[0].mxu0 %v3507
        %v3761 = vpop.f32.mrb[0].mxu0
        %v3762 = vadd.f32 %v3542, %v3761
        %v3763 = vpop.f32.mrb[0].mxu0
        %v3764 = vpop.f32.mrb[0].mxu0
        %v3765 = vadd.f32 %v3542, %v3764
        %v3766 = vpop.f32.mrb[0].mxu0
        %3767 = vmatprep.mubr.bf16.mxu0 0
        %3768 = vmatmul.mubr.bf16.gmra.mrb[0].mxu0 %v3508
        %v3769 = vpop.f32.mrb[0].mxu0
        %v3770 = vadd.f32 %v3542, %v3769
        %v3771 = vpop.f32.mrb[0].mxu0
        %v3772 = vpop.f32.mrb[0].mxu0
        %v3773 = vadd.f32 %v3542, %v3772
        %v3774 = vpop.f32.mrb[0].mxu0
        %3775 = vmatprep.mubr.bf16.mxu0 0
        %3776 = vmatmul.mubr.bf16.gmra.mrb[0].mxu0 %v3509
        %v3777 = vpop.f32.mrb[0].mxu0
        %v3778 = vadd.f32 %v3542, %v3777
        %v3779 = vpop.f32.mrb[0].mxu0
        %v3780 = vpop.f32.mrb[0].mxu0
        %v3781 = vadd.f32 %v3542, %v3780
        %v3782 = vpop.f32.mrb[0].mxu0
        %3783 = vmatprep.mubr.bf16.mxu0 0
        %3784 = vmatmul.mubr.bf16.gmra.mrb[0].mxu0 %v3510
        %v3785 = vpop.f32.mrb[0].mxu0
        %v3786 = vadd.f32 %v3542, %v3785
        %v3787 = vpop.f32.mrb[0].mxu0
        %v3788 = vpop.f32.mrb[0].mxu0
        %v3789 = vadd.f32 %v3542, %v3788
        %v3790 = vpop.f32.mrb[0].mxu0
        %3791 = vmatprep.mubr.bf16.mxu0 0
        %3792 = vmatmul.mubr.bf16.gmra.mrb[0].mxu0 %v3511
        %v3793 = vpop.f32.mrb[0].mxu0
        %v3794 = vadd.f32 %v3542, %v3793
        %v3795 = vpop.f32.mrb[0].mxu0
        %v3796 = vpop.f32.mrb[0].mxu0
        %v3797 = vadd.f32 %v3542, %v3796
        %v3798 = vpop.f32.mrb[0].mxu0
        %3799 = vmatprep.mubr.bf16.mxu0 0
        %3800 = vmatmul.mubr.bf16.gmra.mrb[0].mxu0 %v3512
        %v3801 = vpop.f32.mrb[0].mxu0
        %v3802 = vadd.f32 %v3542, %v3801
        %v3803 = vpop.f32.mrb[0].mxu0
        %v3804 = vpop.f32.mrb[0].mxu0
        %v3805 = vadd.f32 %v3542, %v3804
        %v3806 = vpop.f32.mrb[0].mxu0
        %3807 = vmatprep.mubr.bf16.mxu0 0
        %3808 = vmatmul.mubr.bf16.gmra.mrb[0].mxu0 %v3513
        %v3809 = vpop.f32.mrb[0].mxu0
        %v3810 = vadd.f32 %v3542, %v3809
        %v3811 = vpop.f32.mrb[0].mxu0
        %v3812 = vpop.f32.mrb[0].mxu0
        %v3813 = vadd.f32 %v3542, %v3812
        %v3814 = vpop.f32.mrb[0].mxu0
        %3815 = vmatprep.mubr.bf16.mxu0 0
        %3816 = vmatmul.mubr.bf16.gmra.mrb[0].mxu0 %v3514
        %v3817 = vpop.f32.mrb[0].mxu0
        %v3818 = vadd.f32 %v3542, %v3817
        %v3819 = vpop.f32.mrb[0].mxu0
        %v3820 = vpop.f32.mrb[0].mxu0
        %v3821 = vadd.f32 %v3542, %v3820
        %v3822 = vpop.f32.mrb[0].mxu0
        %3823 = vmatprep.mubr.bf16.mxu0 0
        %3824 = vmatmul.mubr.bf16.gmra.mrb[0].mxu0 %v3515
        %v3825 = vpop.f32.mrb[0].mxu0
        %v3826 = vadd.f32 %v3542, %v3825
        %v3827 = vpop.f32.mrb[0].mxu0
        %v3828 = vpop.f32.mrb[0].mxu0
        %v3829 = vadd.f32 %v3542, %v3828
        %v3830 = vpop.f32.mrb[0].mxu0
        %3831 = vmatprep.mubr.bf16.mxu0 0
        %3832 = vmatmul.mubr.bf16.gmra.mrb[0].mxu0 %v3516
        %v3833 = vpop.f32.mrb[0].mxu0
        %v3834 = vadd.f32 %v3542, %v3833
        %v3835 = vpop.f32.mrb[0].mxu0
        %v3836 = vpop.f32.mrb[0].mxu0
        %v3837 = vadd.f32 %v3542, %v3836
        %v3838 = vpop.f32.mrb[0].mxu0
        %3839 = vmatprep.mubr.bf16.mxu0 0
        %3840 = vmatmul.mubr.bf16.gmra.mrb[0].mxu0 %v3517
        %v3841 = vpop.f32.mrb[0].mxu0
        %v3842 = vadd.f32 %v3542, %v3841
        %v3843 = vpop.f32.mrb[0].mxu0
        %v3844 = vpop.f32.mrb[0].mxu0
        %v3845 = vadd.f32 %v3542, %v3844
        %v3846 = vpop.f32.mrb[0].mxu0
        %3847 = vmatprep.mubr.bf16.mxu0 0
        %3848 = vmatmul.mubr.bf16.gmra.mrb[0].mxu0 %v3518
        %v3849 = vpop.f32.mrb[0].mxu0
        %v3850 = vadd.f32 %v3542, %v3849
        %v3851 = vpop.f32.mrb[0].mxu0
        %v3852 = vpop.f32.mrb[0].mxu0
        %v3853 = vadd.f32 %v3542, %v3852
        %v3854 = vpop.f32.mrb[0].mxu0
        %3855 = vmatprep.mubr.bf16.mxu0 0
        %3856 = vmatmul.mubr.bf16.gmra.mrb[0].mxu0 %v3519
        %v3857 = vpop.f32.mrb[0].mxu0
        %v3858 = vadd.f32 %v3542, %v3857
        %v3859 = vpop.f32.mrb[0].mxu0
        %v3860 = vpop.f32.mrb[0].mxu0
        %v3861 = vadd.f32 %v3542, %v3860
        %v3862 = vpop.f32.mrb[0].mxu0
        %3863 = vmatprep.mubr.bf16.mxu0 0
        %3864 = vmatmul.mubr.bf16.gmra.mrb[0].mxu0 %v3520
        %v3865 = vpop.f32.mrb[0].mxu0
        %v3866 = vadd.f32 %v3542, %v3865
        %v3867 = vpop.f32.mrb[0].mxu0
        %v3868 = vpop.f32.mrb[0].mxu0
        %v3869 = vadd.f32 %v3542, %v3868
        %v3870 = vpop.f32.mrb[0].mxu0
        %3871 = vmatprep.mubr.bf16.mxu0 0
        %3872 = vmatmul.mubr.bf16.gmra.mrb[0].mxu0 %v3521
        %v3873 = vpop.f32.mrb[0].mxu0
        %v3874 = vadd.f32 %v3542, %v3873
        %v3875 = vpop.f32.mrb[0].mxu0
        %v3876 = vpop.f32.mrb[0].mxu0
        %v3877 = vadd.f32 %v3542, %v3876
        %v3878 = vpop.f32.mrb[0].mxu0
        %3879 = vdwg.mxu0
        %v3880 = vpack.c.bf16 %v3629, %v3626
        %v3881 = vpack.c.bf16 %v3637, %v3634
        %v3882 = vpack.c.bf16 %v3645, %v3642
        %v3883 = vpack.c.bf16 %v3653, %v3650
        %v3884 = vpack.c.bf16 %v3661, %v3658
        %v3885 = vpack.c.bf16 %v3669, %v3666
        %v3886 = vpack.c.bf16 %v3677, %v3674
        %v3887 = vpack.c.bf16 %v3685, %v3682
        %v3888 = vpack.c.bf16 %v3693, %v3690
        %v3889 = vpack.c.bf16 %v3701, %v3698
        %v3890 = vpack.c.bf16 %v3709, %v3706
        %v3891 = vpack.c.bf16 %v3717, %v3714
        %v3892 = vpack.c.bf16 %v3725, %v3722
        %v3893 = vpack.c.bf16 %v3733, %v3730
        %v3894 = vpack.c.bf16 %v3741, %v3738
        %v3895 = vpack.c.bf16 %v3749, %v3746
        %v3896 = vpack.c.bf16 %v3757, %v3754
        %v3897 = vpack.c.bf16 %v3765, %v3762
        %v3898 = vpack.c.bf16 %v3773, %v3770
        %v3899 = vpack.c.bf16 %v3781, %v3778
        %v3900 = vpack.c.bf16 %v3789, %v3786
        %v3901 = vpack.c.bf16 %v3797, %v3794
        %v3902 = vpack.c.bf16 %v3805, %v3802
        %v3903 = vpack.c.bf16 %v3813, %v3810
        %v3904 = vpack.c.bf16 %v3821, %v3818
        %v3905 = vpack.c.bf16 %v3829, %v3826
        %v3906 = vpack.c.bf16 %v3837, %v3834
        %v3907 = vpack.c.bf16 %v3845, %v3842
        %v3908 = vpack.c.bf16 %v3853, %v3850
        %v3909 = vpack.c.bf16 %v3861, %v3858
        %v3910 = vpack.c.bf16 %v3869, %v3866
        %v3911 = vpack.c.bf16 %v3877, %v3874
        %v3944 = vunpack.c.l.b16 %v3880
        %v3945 = vunpack.c.h.b16 %v3880
        %v3946 = vunpack.c.l.b16 %v3881
        %v3947 = vunpack.c.h.b16 %v3881
        %v3948 = vunpack.c.l.b16 %v3882
        %v3949 = vunpack.c.h.b16 %v3882
        %v3950 = vunpack.c.l.b16 %v3883
        %v3951 = vunpack.c.h.b16 %v3883
        %v3952 = vunpack.c.l.b16 %v3884
        %v3953 = vunpack.c.h.b16 %v3884
        %v3954 = vunpack.c.l.b16 %v3885
        %v3955 = vunpack.c.h.b16 %v3885
        %v3956 = vunpack.c.l.b16 %v3886
        %v3957 = vunpack.c.h.b16 %v3886
        %v3958 = vunpack.c.l.b16 %v3887
        %v3959 = vunpack.c.h.b16 %v3887
        %v3960 = vunpack.c.l.b16 %v3888
        %v3961 = vunpack.c.h.b16 %v3888
        %v3962 = vunpack.c.l.b16 %v3889
        %v3963 = vunpack.c.h.b16 %v3889
        %v3964 = vunpack.c.l.b16 %v3890
        %v3965 = vunpack.c.h.b16 %v3890
        %v3966 = vunpack.c.l.b16 %v3891
        %v3967 = vunpack.c.h.b16 %v3891
        %v3968 = vunpack.c.l.b16 %v3892
        %v3969 = vunpack.c.h.b16 %v3892
        %v3970 = vunpack.c.l.b16 %v3893
        %v3971 = vunpack.c.h.b16 %v3893
        %v3972 = vunpack.c.l.b16 %v3894
        %v3973 = vunpack.c.h.b16 %v3894
        %v3974 = vunpack.c.l.b16 %v3895
        %v3975 = vunpack.c.h.b16 %v3895
        %v3976 = vunpack.c.l.b16 %v3896
        %v3977 = vunpack.c.h.b16 %v3896
        %v3978 = vunpack.c.l.b16 %v3897
        %v3979 = vunpack.c.h.b16 %v3897
        %v3980 = vunpack.c.l.b16 %v3898
        %v3981 = vunpack.c.h.b16 %v3898
        %v3982 = vunpack.c.l.b16 %v3899
        %v3983 = vunpack.c.h.b16 %v3899
        %v3984 = vunpack.c.l.b16 %v3900
        %v3985 = vunpack.c.h.b16 %v3900
        %v3986 = vunpack.c.l.b16 %v3901
        %v3987 = vunpack.c.h.b16 %v3901
        %v3988 = vunpack.c.l.b16 %v3902
        %v3989 = vunpack.c.h.b16 %v3902
        %v3990 = vunpack.c.l.b16 %v3903
        %v3991 = vunpack.c.h.b16 %v3903
        %v3992 = vunpack.c.l.b16 %v3904
        %v3993 = vunpack.c.h.b16 %v3904
        %v3994 = vunpack.c.l.b16 %v3905
        %v3995 = vunpack.c.h.b16 %v3905
        %v3996 = vunpack.c.l.b16 %v3906
        %v3997 = vunpack.c.h.b16 %v3906
        %v3998 = vunpack.c.l.b16 %v3907
        %v3999 = vunpack.c.h.b16 %v3907
        %v4000 = vunpack.c.l.b16 %v3908
        %v4001 = vunpack.c.h.b16 %v3908
        %v4002 = vunpack.c.l.b16 %v3909
        %v4003 = vunpack.c.h.b16 %v3909
        %v4004 = vunpack.c.l.b16 %v3910
        %v4005 = vunpack.c.h.b16 %v3910
        %v4006 = vunpack.c.l.b16 %v3911
        %v4007 = vunpack.c.h.b16 %v3911
        %v4008 = vpack.c.b16 %v3944, %v3944
        %v4009 = vpack.c.b16 %v3945, %v3945
        %v4010 = vpack.c.b16 %v3946, %v3946
        %v4011 = vpack.c.b16 %v3947, %v3947
        %v4012 = vpack.c.b16 %v3948, %v3948
        %v4013 = vpack.c.b16 %v3949, %v3949
        %v4014 = vpack.c.b16 %v3950, %v3950
        %v4015 = vpack.c.b16 %v3951, %v3951
        %v4016 = vpack.c.b16 %v3952, %v3952
        %v4017 = vpack.c.b16 %v3953, %v3953
        %v4018 = vpack.c.b16 %v3954, %v3954
        %v4019 = vpack.c.b16 %v3955, %v3955
        %v4020 = vpack.c.b16 %v3956, %v3956
        %v4021 = vpack.c.b16 %v3957, %v3957
        %v4022 = vpack.c.b16 %v3958, %v3958
        %v4023 = vpack.c.b16 %v3959, %v3959
        %v4024 = vpack.c.b16 %v3960, %v3960
        %v4025 = vpack.c.b16 %v3961, %v3961
        %v4026 = vpack.c.b16 %v3962, %v3962
        %v4027 = vpack.c.b16 %v3963, %v3963
        %v4028 = vpack.c.b16 %v3964, %v3964
        %v4029 = vpack.c.b16 %v3965, %v3965
        %v4030 = vpack.c.b16 %v3966, %v3966
        %v4031 = vpack.c.b16 %v3967, %v3967
        %v4032 = vpack.c.b16 %v3968, %v3968
        %v4033 = vpack.c.b16 %v3969, %v3969
        %v4034 = vpack.c.b16 %v3970, %v3970
        %v4035 = vpack.c.b16 %v3971, %v3971
        %v4036 = vpack.c.b16 %v3972, %v3972
        %v4037 = vpack.c.b16 %v3973, %v3973
        %v4038 = vpack.c.b16 %v3974, %v3974
        %v4039 = vpack.c.b16 %v3975, %v3975
        %v4040 = vpack.c.b16 %v3976, %v3976
        %v4041 = vpack.c.b16 %v3977, %v3977
        %v4042 = vpack.c.b16 %v3978, %v3978
        %v4043 = vpack.c.b16 %v3979, %v3979
        %v4044 = vpack.c.b16 %v3980, %v3980
        %v4045 = vpack.c.b16 %v3981, %v3981
        %v4046 = vpack.c.b16 %v3982, %v3982
        %v4047 = vpack.c.b16 %v3983, %v3983
        %v4048 = vpack.c.b16 %v3984, %v3984
        %v4049 = vpack.c.b16 %v3985, %v3985
        %v4050 = vpack.c.b16 %v3986, %v3986
        %v4051 = vpack.c.b16 %v3987, %v3987
        %v4052 = vpack.c.b16 %v3988, %v3988
        %v4053 = vpack.c.b16 %v3989, %v3989
        %v4054 = vpack.c.b16 %v3990, %v3990
        %v4055 = vpack.c.b16 %v3991, %v3991
        %v4056 = vpack.c.b16 %v3992, %v3992
        %v4057 = vpack.c.b16 %v3993, %v3993
        %v4058 = vpack.c.b16 %v3994, %v3994
        %v4059 = vpack.c.b16 %v3995, %v3995
        %v4060 = vpack.c.b16 %v3996, %v3996
        %v4061 = vpack.c.b16 %v3997, %v3997
        %v4062 = vpack.c.b16 %v3998, %v3998
        %v4063 = vpack.c.b16 %v3999, %v3999
        %v4064 = vpack.c.b16 %v4000, %v4000
        %v4065 = vpack.c.b16 %v4001, %v4001
        %v4066 = vpack.c.b16 %v4002, %v4002
        %v4067 = vpack.c.b16 %v4003, %v4003
        %v4068 = vpack.c.b16 %v4004, %v4004
        %v4069 = vpack.c.b16 %v4005, %v4005
        %v4070 = vpack.c.b16 %v4006, %v4006
        %v4071 = vpack.c.b16 %v4007, %v4007
        %4136 = vst [vmem:[%s286] sm:$0xf] %v4008
        %4137 = vst [vmem:[%s286 + $0x4] sm:$0xf] %v4009
        %4138 = vst [vmem:[%s286 + $0x8] sm:$0xf] %v4010
        %4139 = vst [vmem:[%s286 + $0xc] sm:$0xf] %v4011
        %4140 = vst [vmem:[%s286 + $0x10] sm:$0xf] %v4012
        %4141 = vst [vmem:[%s286 + $0x14] sm:$0xf] %v4013
        %4142 = vst [vmem:[%s286 + $0x18] sm:$0xf] %v4014
        %4143 = vst [vmem:[%s286 + $0x1c] sm:$0xf] %v4015
        %4144 = vst [vmem:[%s286 + $0x20] sm:$0xf] %v4016
        %4145 = vst [vmem:[%s286 + $0x24] sm:$0xf] %v4017
        %4146 = vst [vmem:[%s286 + $0x28] sm:$0xf] %v4018
        %4147 = vst [vmem:[%s286 + $0x2c] sm:$0xf] %v4019
        %4148 = vst [vmem:[%s286 + $0x30] sm:$0xf] %v4020
        %4149 = vst [vmem:[%s286 + $0x34] sm:$0xf] %v4021
        %4150 = vst [vmem:[%s286 + $0x38] sm:$0xf] %v4022
        %4151 = vst [vmem:[%s286 + $0x3c] sm:$0xf] %v4023
        %4152 = vst [vmem:[%s286 + $0x40] sm:$0xf] %v4024
        %4153 = vst [vmem:[%s286 + $0x44] sm:$0xf] %v4025
        %4154 = vst [vmem:[%s286 + $0x48] sm:$0xf] %v4026
        %4155 = vst [vmem:[%s286 + $0x4c] sm:$0xf] %v4027
        %4156 = vst [vmem:[%s286 + $0x50] sm:$0xf] %v4028
        %4157 = vst [vmem:[%s286 + $0x54] sm:$0xf] %v4029
        %4158 = vst [vmem:[%s286 + $0x58] sm:$0xf] %v4030
        %4159 = vst [vmem:[%s286 + $0x5c] sm:$0xf] %v4031
        %4160 = vst [vmem:[%s286 + $0x60] sm:$0xf] %v4032
        %4161 = vst [vmem:[%s286 + $0x64] sm:$0xf] %v4033
        %4162 = vst [vmem:[%s286 + $0x68] sm:$0xf] %v4034
        %4163 = vst [vmem:[%s286 + $0x6c] sm:$0xf] %v4035
        %4164 = vst [vmem:[%s286 + $0x70] sm:$0xf] %v4036
        %4165 = vst [vmem:[%s286 + $0x74] sm:$0xf] %v4037
        %4166 = vst [vmem:[%s286 + $0x78] sm:$0xf] %v4038
        %4167 = vst [vmem:[%s286 + $0x7c] sm:$0xf] %v4039
        %4168 = vst [vmem:[%s286 + $0x80] sm:$0xf] %v4040
        %4169 = vst [vmem:[%s286 + $0x84] sm:$0xf] %v4041
        %4170 = vst [vmem:[%s286 + $0x88] sm:$0xf] %v4042
        %4171 = vst [vmem:[%s286 + $0x8c] sm:$0xf] %v4043
        %4172 = vst [vmem:[%s286 + $0x90] sm:$0xf] %v4044
        %4173 = vst [vmem:[%s286 + $0x94] sm:$0xf] %v4045
        %4174 = vst [vmem:[%s286 + $0x98] sm:$0xf] %v4046
        %4175 = vst [vmem:[%s286 + $0x9c] sm:$0xf] %v4047
        %4176 = vst [vmem:[%s286 + $0xa0] sm:$0xf] %v4048
        %4177 = vst [vmem:[%s286 + $0xa4] sm:$0xf] %v4049
        %4178 = vst [vmem:[%s286 + $0xa8] sm:$0xf] %v4050
        %4179 = vst [vmem:[%s286 + $0xac] sm:$0xf] %v4051
        %4180 = vst [vmem:[%s286 + $0xb0] sm:$0xf] %v4052
        %4181 = vst [vmem:[%s286 + $0xb4] sm:$0xf] %v4053
        %4182 = vst [vmem:[%s286 + $0xb8] sm:$0xf] %v4054
        %4183 = vst [vmem:[%s286 + $0xbc] sm:$0xf] %v4055
        %4184 = vst [vmem:[%s286 + $0xc0] sm:$0xf] %v4056
        %4185 = vst [vmem:[%s286 + $0xc4] sm:$0xf] %v4057
        %4186 = vst [vmem:[%s286 + $0xc8] sm:$0xf] %v4058
        %4187 = vst [vmem:[%s286 + $0xcc] sm:$0xf] %v4059
        %4188 = vst [vmem:[%s286 + $0xd0] sm:$0xf] %v4060
        %4189 = vst [vmem:[%s286 + $0xd4] sm:$0xf] %v4061
        %4190 = vst [vmem:[%s286 + $0xd8] sm:$0xf] %v4062
        %4191 = vst [vmem:[%s286 + $0xdc] sm:$0xf] %v4063
        %4192 = vst [vmem:[%s286 + $0xe0] sm:$0xf] %v4064
        %4193 = vst [vmem:[%s286 + $0xe4] sm:$0xf] %v4065
        %4194 = vst [vmem:[%s286 + $0xe8] sm:$0xf] %v4066
        %4195 = vst [vmem:[%s286 + $0xec] sm:$0xf] %v4067
        %4196 = vst [vmem:[%s286 + $0xf0] sm:$0xf] %v4068
        %4197 = vst [vmem:[%s286 + $0xf4] sm:$0xf] %v4069
        %4198 = vst [vmem:[%s286 + $0xf8] sm:$0xf] %v4070
        %4199 = vst [vmem:[%s286 + $0xfc] sm:$0xf] %v4071
        %s4200 = sand.u32 %s142, 1
        %s4201 = scalar_lea.sflag [#allocation4], %s4200
        %s4202 = sand.u32 %s142, 1
        %s4203 = smul.addr %s4202, 256
        %s4204 = scalar_lea.vmem [#allocation10], %s4203
        // Predicated region
        $region57: #{tpu_custom_call.1} parent=39 // pred_check
          %p4205 = pneg %p152
        $region58: #{tpu_custom_call.1} parent=39 // pred_check_branch
          %4207 = sbr.rel (%p4205) target = $region60
        $region59: #{tpu_custom_call.1} parent=39 // pred_region
          %s4208 = smul.u32 64, %s24
          %s4210 = ssub.s32 4096, 4096
          %4211 = vsyncadd %s4201, %s4210
          %s4212 = smul.addr %s4208, 64
          %s4213 = scalar_lea.hbm %s5, %s4212
          %s4214 = sshll.u32 %s4204, 4
          %s4215 = int_to_ptr.vmem [resolvable:$true] %s4214
          %4220 = dma.vmem_to_hbm [thread:$0]  %s4215, 4096, %s4213, %s4201, 64, 64, 4
        $region60: #{tpu_custom_call.1} parent=39 // pred_fallthru
          _
      $region40: #{tpu_custom_call.1} parent=5 // pred_fallthru
        _
      %p4221 = scmp.le.s32.totalorder 2, %s19
      // Predicated region
      $region61: #{tpu_custom_call.1} parent=5 // pred_check
        %p4222 = pneg %p4221
      $region62: #{tpu_custom_call.1} parent=5 // pred_check_branch
        %4224 = sbr.rel (%p4222) target = $region64
      $region63: #{tpu_custom_call.1} parent=5 // pred_region
        %s4225 = ssub.s32 %s19, 2
        // Predicated region
        $region65: #{tpu_custom_call.1} parent=63 // pred_check
          %p4226 = pneg %p158
        $region66: #{tpu_custom_call.1} parent=63 // pred_check_branch
          %4228 = sbr.rel (%p4226) target = $region68
        $region67: #{tpu_custom_call.1} parent=63 // pred_region
          %s4229 = sand.u32 %s143, 1
          %s4230 = scalar_lea.sflag [#allocation4], %s4229
          %s4231 = sand.u32 %s143, 1
          %s4232 = smul.addr %s4231, 256
          %s4233 = scalar_lea.vmem [#allocation10], %s4232
          %4234 = dma.done %s4230, 4096
        $region68: #{tpu_custom_call.1} parent=63 // pred_fallthru
          _
      $region64: #{tpu_custom_call.1} parent=5 // pred_fallthru
        _
    $region6: #{tpu_custom_call.1} parent=1 // loop_footer
      %s23 = sadd.s32 1, %s19
    $region7: #{tpu_custom_call.1} parent=1 // loop_footer_branch
      %18 = sbr.rel target = $region3
    $region8: #{tpu_custom_call.1} parent=1 // loop_exit
      _
    %4235 = vsyncpa [#allocation3], 1
    %s4236 = scalar_lea.sflag [#allocation3], 1
    %4237 = vsyncpa %s4236, 1
    %4238 = vsyncpa [#allocation6], 1
    %4239 = vsyncpa [#allocation9], 1
    %4240 = vsyncpa [#allocation4], 1
    %s4241 = scalar_lea.sflag [#allocation4], 1
    %4242 = vsyncpa %s4241, 1

// kernel: tpu_custom_call.1
$region0: #{tpu_custom_call.1}
  #allocation0 [shape = 'u32[]', space=smem, size = 0x4, offset = 0x4, fixed_abs, tag = 'smem constant byte address 0x4 - core index']
  #allocation1 [shape = 'u32[144,128]{1,0:T(1,128)}', space=vmem, size = 0x12000, scoped, tag = 'internal scratch']
  %s0 = inlined_call_operand.hbm [shape: bf16[1024,128], index: 0, kind: input, shape index: {}]
  %s1 = inlined_call_operand.hbm [shape: bf16[128,128], index: 1, kind: input, shape index: {}]
  %s2 = inlined_call_operand.hbm [shape: bf16[128,128], index: 2, kind: input, shape index: {}]
  %s3 = inlined_call_operand.hbm [shape: bf16[128,128], index: 3, kind: input, shape index: {}]
  %s4 = inlined_call_operand.vmem [shape: f32[8,128], index: 4, kind: input, shape index: {}]
  %s5 = inlined_call_operand.hbm [shape: bf16[1024,128], index: 5, kind: output, shape index: {}]
  %s6 = sld [smem:[#allocation0]]
  $region69: #{tpu_custom_call.1} parent=0
    _
  %s8 = ssub.s32 1, %s6
  %s9 = scalar_select 0, %s8, %s6
  $region1: #{tpu_custom_call.1} parent=0
    #allocation2 [shape = 'u8[262144]{0}', space=vmem, size = 0x40000, scoped, tag = 'input window, operand 0']
    #allocation3 [shape = 's32[2]{0}', space=sflag, size = 0x8, scoped, tag = 'scoped memory for tpu_custom_call.1']
    #allocation4 [shape = 's32[2]{0}', space=sflag, size = 0x8, scoped, tag = 'scoped memory for tpu_custom_call.1']
    #allocation5 [shape = 'u8[32768]{0}', space=vmem, size = 0x8000, scoped, tag = 'input window, operand 1, single buffered']
    #allocation6 [shape = 's32[1]{0}', space=sflag, size = 0x4, scoped, tag = 'scoped memory for tpu_custom_call.1']
    #allocation7 [shape = 'u8[32768]{0}', space=vmem, size = 0x8000, scoped, tag = 'input window, operand 2, single buffered']
    #allocation8 [shape = 'u8[32768]{0}', space=vmem, size = 0x8000, scoped, tag = 'input window, operand 3, single buffered']
    #allocation9 [shape = 's32[1]{0}', space=sflag, size = 0x4, scoped, tag = 'scoped memory for tpu_custom_call.1']
    #allocation10 [shape = 'u8[262144]{0}', space=vmem, size = 0x40000, scoped, tag = 'output window, operand 0']
    %10 = vsyncpa [#allocation3], 0
    %s11 = scalar_lea.sflag [#allocation3], 1
    %12 = vsyncpa %s11, 0
    %13 = vsyncpa [#allocation6], 0
    %14 = vsyncpa [#allocation9], 0
    %15 = vsyncpa [#allocation4], 0
    %s16 = scalar_lea.sflag [#allocation4], 1
    %17 = vsyncpa %s16, 0
    loop: start=0, step=1, limit=4
    $region2: #{tpu_custom_call.1} parent=1 // loop_pre_header
      _
    $region3: #{tpu_custom_call.1} parent=1 // loop_header
      %s19 = sphi 0, %s23
      %p20 = scmp.ge.s32.totalorder %s19, 4
      %s29 = sphi 0, %s31
      %s32 = sphi 0, %s29
      %s33 = sphi 0, %s32
      %s49 = sphi 0, %s33
      %s53 = sphi 0, %s53
      %s55 = sphi 0, %s53
      %s56 = sphi 0, %s55
      %s70 = sphi 0, %s56
      %s74 = sphi 0, %s74
      %s76 = sphi 0, %s74
      %s77 = sphi 0, %s76
      %s91 = sphi 0, %s77
      %s95 = sphi 0, %s95
      %s97 = sphi 0, %s95
      %s98 = sphi 0, %s97
      %s112 = sphi 0, %s98
      %s116 = sphi 0, %s116
      %s118 = sphi 0, %s116
      %s119 = sphi 0, %s118
      %s133 = sphi 0, %s119
      %s139 = sphi 0, %s141
      %s142 = sphi 0, %s139
      %s143 = sphi 0, %s142
      %s159 = sphi 0, %s143
    $region4: #{tpu_custom_call.1} parent=1 // loop_header_branch
      %22 = sbr.rel (%p20) target = $region8
    $region5: #{tpu_custom_call.1} parent=1 // loop_body
      %s24 = ssub.s32 %s19, 1
      %s25 = ssub.s32 %s19, 2
      %s26 = sadd.s32 %s19, 1
      %s27 = ssub.s32 %s19, %s26
      %p28 = scmp.eq.s32.totalorder %s27, 0
      %s30 = sadd.s32 %s29, 1
      %s31 = scalar_select %p28, %s29, %s30
      %p34 = pneg %p28
      %p35 = scmp.eq.s32.totalorder %s19, 1
      %p36 = por %p34, %p35
      %p37 = scmp.ne.s32.totalorder %s29, %s32
      %p38 = scmp.eq.s32.totalorder %s19, 0
      %p39 = por %p37, %p38
      %p40 = scmp.ne.s32.totalorder %s29, %s32
      %p41 = scmp.eq.s32.totalorder %s24, 1
      %p42 = por %p40, %p41
      %p43 = scmp.ne.s32.totalorder %s32, %s33
      %p44 = scmp.eq.s32.totalorder %s24, 0
      %p45 = por %p43, %p44
      %p46 = scmp.ne.s32.totalorder %s32, %s33
      %p47 = scmp.eq.s32.totalorder %s25, 1
      %p48 = por %p46, %p47
      %p50 = scmp.ne.s32.totalorder %s33, %s49
      %p51 = scmp.eq.s32.totalorder %s25, 0
      %p52 = por %p50, %p51
      %s54 = sadd.s32 %s53, 1
      %p57 = scmp.eq.s32.totalorder %s19, 1
      %p58 = scmp.ne.s32.totalorder %s53, %s55
      %p59 = scmp.eq.s32.totalorder %s19, 0
      %p60 = por %p58, %p59
      %p61 = scmp.ne.s32.totalorder %s53, %s55
      %p62 = scmp.eq.s32.totalorder %s24, 1
      %p63 = por %p61, %p62
      %p64 = scmp.ne.s32.totalorder %s55, %s56
      %p65 = scmp.eq.s32.totalorder %s24, 0
      %p66 = por %p64, %p65
      %p67 = scmp.ne.s32.totalorder %s55, %s56
      %p68 = scmp.eq.s32.totalorder %s25, 1
      %p69 = por %p67, %p68
      %p71 = scmp.ne.s32.totalorder %s56, %s70
      %p72 = scmp.eq.s32.totalorder %s25, 0
      %p73 = por %p71, %p72
      %s75 = sadd.s32 %s74, 1
      %p78 = scmp.eq.s32.totalorder %s19, 1
      %p79 = scmp.ne.s32.totalorder %s74, %s76
      %p80 = scmp.eq.s32.totalorder %s19, 0
      %p81 = por %p79, %p80
      %p82 = scmp.ne.s32.totalorder %s74, %s76
      %p83 = scmp.eq.s32.totalorder %s24, 1
      %p84 = por %p82, %p83
      %p85 = scmp.ne.s32.totalorder %s76, %s77
      %p86 = scmp.eq.s32.totalorder %s24, 0
      %p87 = por %p85, %p86
      %p88 = scmp.ne.s32.totalorder %s76, %s77
      %p89 = scmp.eq.s32.totalorder %s25, 1
      %p90 = por %p88, %p89
      %p92 = scmp.ne.s32.totalorder %s77, %s91
      %p93 = scmp.eq.s32.totalorder %s25, 0
      %p94 = por %p92, %p93
      %s96 = sadd.s32 %s95, 1
      %p99 = scmp.eq.s32.totalorder %s19, 1
      %p100 = scmp.ne.s32.totalorder %s95, %s97
      %p101 = scmp.eq.s32.totalorder %s19, 0
      %p102 = por %p100, %p101
      %p103 = scmp.ne.s32.totalorder %s95, %s97
      %p104 = scmp.eq.s32.totalorder %s24, 1
      %p105 = por %p103, %p104
      %p106 = scmp.ne.s32.totalorder %s97, %s98
      %p107 = scmp.eq.s32.totalorder %s24, 0
      %p108 = por %p106, %p107
      %p109 = scmp.ne.s32.totalorder %s97, %s98
      %p110 = scmp.eq.s32.totalorder %s25, 1
      %p111 = por %p109, %p110
      %p113 = scmp.ne.s32.totalorder %s98, %s112
      %p114 = scmp.eq.s32.totalorder %s25, 0
      %p115 = por %p113, %p114
      %s117 = sadd.s32 %s116, 1
      %p120 = scmp.eq.s32.totalorder %s19, 1
      %p121 = scmp.ne.s32.totalorder %s116, %s118
      %p122 = scmp.eq.s32.totalorder %s19, 0
      %p123 = por %p121, %p122
      %p124 = scmp.ne.s32.totalorder %s116, %s118
      %p125 = scmp.eq.s32.totalorder %s24, 1
      %p126 = por %p124, %p125
      %p127 = scmp.ne.s32.totalorder %s118, %s119
      %p128 = scmp.eq.s32.totalorder %s24, 0
      %p129 = por %p127, %p128
      %p130 = scmp.ne.s32.totalorder %s118, %s119
      %p131 = scmp.eq.s32.totalorder %s25, 1
      %p132 = por %p130, %p131
      %p134 = scmp.ne.s32.totalorder %s119, %s133
      %p135 = scmp.eq.s32.totalorder %s25, 0
      %p136 = por %p134, %p135
      %s137 = ssub.s32 %s19, %s26
      %p138 = scmp.eq.s32.totalorder %s137, 0
      %s140 = sadd.s32 %s139, 1
      %s141 = scalar_select %p138, %s139, %s140
      %p144 = pneg %p138
      %p145 = scmp.eq.s32.totalorder %s19, 1
      %p146 = por %p144, %p145
      %p147 = scmp.ne.s32.totalorder %s139, %s142
      %p148 = scmp.eq.s32.totalorder %s19, 0
      %p149 = por %p147, %p148
      %p150 = scmp.ne.s32.totalorder %s139, %s142
      %p151 = scmp.eq.s32.totalorder %s24, 1
      %p152 = por %p150, %p151
      %p153 = scmp.ne.s32.totalorder %s142, %s143
      %p154 = scmp.eq.s32.totalorder %s24, 0
      %p155 = por %p153, %p154
      %p156 = scmp.ne.s32.totalorder %s142, %s143
      %p157 = scmp.eq.s32.totalorder %s25, 1
      %p158 = por %p156, %p157
      %p160 = scmp.ne.s32.totalorder %s143, %s159
      %p161 = scmp.eq.s32.totalorder %s25, 0
      %p162 = por %p160, %p161
      %p163 = scmp.le.s32.totalorder 1, %s19
      %p164 = scmp.lt.s32.totalorder %s19, 3
      %p165 = pnand %p163, %p164
      %p166 = pneg %p165
      // Predicated region
      $region9: #{tpu_custom_call.1} parent=5 // pred_check
        _
      $region10: #{tpu_custom_call.1} parent=5 // pred_check_branch
        %168 = sbr.rel (%p165) target = $region12
      $region11: #{tpu_custom_call.1} parent=5 // pred_region
        %s169 = ssub.s32 %s19, 1
        // Predicated region
        $region13: #{tpu_custom_call.1} parent=11 // pred_check
          %p170 = pneg %p66
        $region14: #{tpu_custom_call.1} parent=11 // pred_check_branch
          %172 = sbr.rel (%p170) target = $region16
        $region15: #{tpu_custom_call.1} parent=11 // pred_region
          %s174 = ssub.s32 1024, 1024
          %175 = vsyncadd [#allocation6], %s174
          %s176 = sshll.u32 [#allocation5], 4
          %s177 = int_to_ptr.vmem [resolvable:$true] %s176
          %182 = dma.hbm_to_vmem [thread:$0]  %s1, 1024, %s177, [#allocation6], 64, 64, 4
        $region16: #{tpu_custom_call.1} parent=11 // pred_fallthru
          _
        // Predicated region
        $region17: #{tpu_custom_call.1} parent=11 // pred_check
          %p183 = pneg %p87
        $region18: #{tpu_custom_call.1} parent=11 // pred_check_branch
          %185 = sbr.rel (%p183) target = $region20
        $region19: #{tpu_custom_call.1} parent=11 // pred_region
          %s187 = ssub.s32 1024, 1024
          %188 = vsyncadd [#allocation6], %s187
          %s189 = sshll.u32 [#allocation7], 4
          %s190 = int_to_ptr.vmem [resolvable:$true] %s189
          %195 = dma.hbm_to_vmem [thread:$0]  %s2, 1024, %s190, [#allocation6], 64, 64, 4
        $region20: #{tpu_custom_call.1} parent=11 // pred_fallthru
          _
        // Predicated region
        $region21: #{tpu_custom_call.1} parent=11 // pred_check
          %p196 = pneg %p108
        $region22: #{tpu_custom_call.1} parent=11 // pred_check_branch
          %198 = sbr.rel (%p196) target = $region24
        $region23: #{tpu_custom_call.1} parent=11 // pred_region
          %s200 = ssub.s32 1024, 1024
          %201 = vsyncadd [#allocation9], %s200
          %s202 = sshll.u32 [#allocation8], 4
          %s203 = int_to_ptr.vmem [resolvable:$true] %s202
          %208 = dma.hbm_to_vmem [thread:$0]  %s3, 1024, %s203, [#allocation9], 64, 64, 4
        $region24: #{tpu_custom_call.1} parent=11 // pred_fallthru
          _
        // Predicated region
        $region25: #{tpu_custom_call.1} parent=11 // pred_check
          %p209 = pneg %p129
        $region26: #{tpu_custom_call.1} parent=11 // pred_check_branch
          %211 = sbr.rel (%p209) target = $region28
        $region27: #{tpu_custom_call.1} parent=11 // pred_region
          _
        $region28: #{tpu_custom_call.1} parent=11 // pred_fallthru
          _
      $region12: #{tpu_custom_call.1} parent=5 // pred_fallthru
        _
      %p212 = scmp.lt.s32.totalorder %s19, 2
      // Predicated region
      $region29: #{tpu_custom_call.1} parent=5 // pred_check
        %p213 = pneg %p212
      $region30: #{tpu_custom_call.1} parent=5 // pred_check_branch
        %215 = sbr.rel (%p213) target = $region32
      $region31: #{tpu_custom_call.1} parent=5 // pred_region
        // Predicated region
        $region33: #{tpu_custom_call.1} parent=31 // pred_check
          %p216 = pneg %p39
        $region34: #{tpu_custom_call.1} parent=31 // pred_check_branch
          %218 = sbr.rel (%p216) target = $region36
        $region35: #{tpu_custom_call.1} parent=31 // pred_region
          %s219 = sand.u32 %s29, 1
          %s220 = scalar_lea.sflag [#allocation3], %s219
          %s221 = sand.u32 %s29, 1
          %s222 = smul.addr %s221, 256
          %s223 = scalar_lea.vmem [#allocation2], %s222
          %s224 = smul.u32 64, %s19
          %s226 = ssub.s32 4096, 4096
          %227 = vsyncadd %s220, %s226
          %s228 = smul.addr %s224, 64
          %s229 = scalar_lea.hbm %s0, %s228
          %s230 = sshll.u32 %s223, 4
          %s231 = int_to_ptr.vmem [resolvable:$true] %s230
          %236 = dma.hbm_to_vmem [thread:$0]  %s229, 4096, %s231, %s220, 64, 64, 4
        $region36: #{tpu_custom_call.1} parent=31 // pred_fallthru
          _
      $region32: #{tpu_custom_call.1} parent=5 // pred_fallthru
        _
      %p237 = scmp.le.s32.totalorder 1, %s19
      %p238 = scmp.lt.s32.totalorder %s19, 3
      %p239 = pnand %p237, %p238
      %p240 = pneg %p239
      // Predicated region
      $region37: #{tpu_custom_call.1} parent=5 // pred_check
        _
      $region38: #{tpu_custom_call.1} parent=5 // pred_check_branch
        %242 = sbr.rel (%p239) target = $region40
      $region39: #{tpu_custom_call.1} parent=5 // pred_region
        %s243 = ssub.s32 %s19, 1
        %s244 = sand.u32 %s32, 1
        %s245 = scalar_lea.sflag [#allocation3], %s244
        %s246 = sand.u32 %s32, 1
        %s247 = smul.addr %s246, 256
        %s248 = scalar_lea.vmem [#allocation2], %s247
        // Predicated region
        $region41: #{tpu_custom_call.1} parent=39 // pred_check
          %p249 = pneg %p45
        $region42: #{tpu_custom_call.1} parent=39 // pred_check_branch
          %251 = sbr.rel (%p249) target = $region44
        $region43: #{tpu_custom_call.1} parent=39 // pred_region
          %252 = dma.done %s245, 4096
        $region44: #{tpu_custom_call.1} parent=39 // pred_fallthru
          _
        // Predicated region
        $region45: #{tpu_custom_call.1} parent=39 // pred_check
          %p253 = pneg %p66
        $region46: #{tpu_custom_call.1} parent=39 // pred_check_branch
          %255 = sbr.rel (%p253) target = $region48
        $region47: #{tpu_custom_call.1} parent=39 // pred_region
          %256 = dma.done [#allocation6], 1024
        $region48: #{tpu_custom_call.1} parent=39 // pred_fallthru
          _
        // Predicated region
        $region49: #{tpu_custom_call.1} parent=39 // pred_check
          %p257 = pneg %p87
        $region50: #{tpu_custom_call.1} parent=39 // pred_check_branch
          %259 = sbr.rel (%p257) target = $region52
        $region51: #{tpu_custom_call.1} parent=39 // pred_region
          %260 = dma.done [#allocation6], 1024
        $region52: #{tpu_custom_call.1} parent=39 // pred_fallthru
          _
        // Predicated region
        $region53: #{tpu_custom_call.1} parent=39 // pred_check
          %p261 = pneg %p108
        $region54: #{tpu_custom_call.1} parent=39 // pred_check_branch
          %263 = sbr.rel (%p261) target = $region56
        $region55: #{tpu_custom_call.1} parent=39 // pred_region
          %264 = dma.done [#allocation9], 1024
        $region56: #{tpu_custom_call.1} parent=39 // pred_fallthru
          _
        %s265 = sand.u32 %s32, 1
        %s266 = scalar_lea.sflag [#allocation3], %s265
        %s267 = sand.u32 %s32, 1
        %s268 = smul.addr %s267, 256
        %s269 = scalar_lea.vmem [#allocation2], %s268
        %p270 = pneg %p45
        %p271 = pneg %p42
        %p272 = pneg %p66
        %p273 = pneg %p63
        %p274 = pneg %p87
        %p275 = pneg %p84
        %p276 = pneg %p108
        %p277 = pneg %p105
        %p278 = pneg %p129
        %p279 = pneg %p126
        %p280 = pneg %p155
        %p281 = pneg %p152
        %s282 = sand.u32 %s142, 1
        %s283 = scalar_lea.sflag [#allocation4], %s282
        %s284 = sand.u32 %s142, 1
        %s285 = smul.addr %s284, 256
        %s286 = scalar_lea.vmem [#allocation10], %s285
        %s287 = smul.u32 64, %s24
        %s288 = smul.u32 64, %s24
        %v290 = vld [vmem:[%s248] sm:$0xf]
        %v291 = vld [vmem:[%s248 + $0x4] sm:$0xf]
        %v292 = vld [vmem:[%s248 + $0x8] sm:$0xf]
        %v293 = vld [vmem:[%s248 + $0xc] sm:$0xf]
        %v294 = vld [vmem:[%s248 + $0x10] sm:$0xf]
        %v295 = vld [vmem:[%s248 + $0x14] sm:$0xf]
        %v296 = vld [vmem:[%s248 + $0x18] sm:$0xf]
        %v297 = vld [vmem:[%s248 + $0x1c] sm:$0xf]
        %v298 = vld [vmem:[%s248 + $0x20] sm:$0xf]
        %v299 = vld [vmem:[%s248 + $0x24] sm:$0xf]
        %v300 = vld [vmem:[%s248 + $0x28] sm:$0xf]
        %v301 = vld [vmem:[%s248 + $0x2c] sm:$0xf]
        %v302 = vld [vmem:[%s248 + $0x30] sm:$0xf]
        %v303 = vld [vmem:[%s248 + $0x34] sm:$0xf]
        %v304 = vld [vmem:[%s248 + $0x38] sm:$0xf]
        %v305 = vld [vmem:[%s248 + $0x3c] sm:$0xf]
        %v306 = vld [vmem:[%s248 + $0x40] sm:$0xf]
        %v307 = vld [vmem:[%s248 + $0x44] sm:$0xf]
        %v308 = vld [vmem:[%s248 + $0x48] sm:$0xf]
        %v309 = vld [vmem:[%s248 + $0x4c] sm:$0xf]
        %v310 = vld [vmem:[%s248 + $0x50] sm:$0xf]
        %v311 = vld [vmem:[%s248 + $0x54] sm:$0xf]
        %v312 = vld [vmem:[%s248 + $0x58] sm:$0xf]
        %v313 = vld [vmem:[%s248 + $0x5c] sm:$0xf]
        %v314 = vld [vmem:[%s248 + $0x60] sm:$0xf]
        %v315 = vld [vmem:[%s248 + $0x64] sm:$0xf]
        %v316 = vld [vmem:[%s248 + $0x68] sm:$0xf]
        %v317 = vld [vmem:[%s248 + $0x6c] sm:$0xf]
        %v318 = vld [vmem:[%s248 + $0x70] sm:$0xf]
        %v319 = vld [vmem:[%s248 + $0x74] sm:$0xf]
        %v320 = vld [vmem:[%s248 + $0x78] sm:$0xf]
        %v321 = vld [vmem:[%s248 + $0x7c] sm:$0xf]
        %v322 = vld [vmem:[%s248 + $0x80] sm:$0xf]
        %v323 = vld [vmem:[%s248 + $0x84] sm:$0xf]
        %v324 = vld [vmem:[%s248 + $0x88] sm:$0xf]
        %v325 = vld [vmem:[%s248 + $0x8c] sm:$0xf]
        %v326 = vld [vmem:[%s248 + $0x90] sm:$0xf]
        %v327 = vld [vmem:[%s248 + $0x94] sm:$0xf]
        %v328 = vld [vmem:[%s248 + $0x98] sm:$0xf]
        %v329 = vld [vmem:[%s248 + $0x9c] sm:$0xf]
        %v330 = vld [vmem:[%s248 + $0xa0] sm:$0xf]
        %v331 = vld [vmem:[%s248 + $0xa4] sm:$0xf]
        %v332 = vld [vmem:[%s248 + $0xa8] sm:$0xf]
        %v333 = vld [vmem:[%s248 + $0xac] sm:$0xf]
        %v334 = vld [vmem:[%s248 + $0xb0] sm:$0xf]
        %v335 = vld [vmem:[%s248 + $0xb4] sm:$0xf]
        %v336 = vld [vmem:[%s248 + $0xb8] sm:$0xf]
        %v337 = vld [vmem:[%s248 + $0xbc] sm:$0xf]
        %v338 = vld [vmem:[%s248 + $0xc0] sm:$0xf]
        %v339 = vld [vmem:[%s248 + $0xc4] sm:$0xf]
        %v340 = vld [vmem:[%s248 + $0xc8] sm:$0xf]
        %v341 = vld [vmem:[%s248 + $0xcc] sm:$0xf]
        %v342 = vld [vmem:[%s248 + $0xd0] sm:$0xf]
        %v343 = vld [vmem:[%s248 + $0xd4] sm:$0xf]
        %v344 = vld [vmem:[%s248 + $0xd8] sm:$0xf]
        %v345 = vld [vmem:[%s248 + $0xdc] sm:$0xf]
        %v346 = vld [vmem:[%s248 + $0xe0] sm:$0xf]
        %v347 = vld [vmem:[%s248 + $0xe4] sm:$0xf]
        %v348 = vld [vmem:[%s248 + $0xe8] sm:$0xf]
        %v349 = vld [vmem:[%s248 + $0xec] sm:$0xf]
        %v350 = vld [vmem:[%s248 + $0xf0] sm:$0xf]
        %v351 = vld [vmem:[%s248 + $0xf4] sm:$0xf]
        %v352 = vld [vmem:[%s248 + $0xf8] sm:$0xf]
        %v353 = vld [vmem:[%s248 + $0xfc] sm:$0xf]
        %v354 = vld [vmem:[#allocation5] sm:$0xf]
        %v355 = vld [vmem:[#allocation5 + $0x4] sm:$0xf]
        %v356 = vld [vmem:[#allocation5 + $0x8] sm:$0xf]
        %v357 = vld [vmem:[#allocation5 + $0xc] sm:$0xf]
        %v358 = vld [vmem:[#allocation5 + $0x10] sm:$0xf]
        %v359 = vld [vmem:[#allocation5 + $0x14] sm:$0xf]
        %v360 = vld [vmem:[#allocation5 + $0x18] sm:$0xf]
        %v361 = vld [vmem:[#allocation5 + $0x1c] sm:$0xf]
        %v362 = vld [vmem:[#allocation5 + $0x20] sm:$0xf]
        %v363 = vld [vmem:[#allocation5 + $0x24] sm:$0xf]
        %v364 = vld [vmem:[#allocation5 + $0x28] sm:$0xf]
        %v365 = vld [vmem:[#allocation5 + $0x2c] sm:$0xf]
        %v366 = vld [vmem:[#allocation5 + $0x30] sm:$0xf]
        %v367 = vld [vmem:[#allocation5 + $0x34] sm:$0xf]
        %v368 = vld [vmem:[#allocation5 + $0x38] sm:$0xf]
        %v369 = vld [vmem:[#allocation5 + $0x3c] sm:$0xf]
        %v370 = vld [vmem:[%s4] sm:$0x1]
        %v371 = vlaneseq
        %v372 = vshrl.u32 %v371, 7
        %v373 = vsub.s32 0, %v372
        %v374 = vrot.slane %v370, %v373
        %v439 = vunpack.c.l.b16 %v290
        %v440 = vunpack.c.l.b16 %v291
        %v441 = vunpack.c.l.b16 %v292
        %v442 = vunpack.c.l.b16 %v293
        %v443 = vunpack.c.l.b16 %v294
        %v444 = vunpack.c.l.b16 %v295
        %v445 = vunpack.c.l.b16 %v296
        %v446 = vunpack.c.l.b16 %v297
        %v447 = vunpack.c.l.b16 %v298
        %v448 = vunpack.c.l.b16 %v299
        %v449 = vunpack.c.l.b16 %v300
        %v450 = vunpack.c.l.b16 %v301
        %v451 = vunpack.c.l.b16 %v302
        %v452 = vunpack.c.l.b16 %v303
        %v453 = vunpack.c.l.b16 %v304
        %v454 = vunpack.c.l.b16 %v305
        %v455 = vunpack.c.l.b16 %v306
        %v456 = vunpack.c.l.b16 %v307
        %v457 = vunpack.c.l.b16 %v308
        %v458 = vunpack.c.l.b16 %v309
        %v459 = vunpack.c.l.b16 %v310
        %v460 = vunpack.c.l.b16 %v311
        %v461 = vunpack.c.l.b16 %v312
        %v462 = vunpack.c.l.b16 %v313
        %v463 = vunpack.c.l.b16 %v314
        %v464 = vunpack.c.l.b16 %v315
        %v465 = vunpack.c.l.b16 %v316
        %v466 = vunpack.c.l.b16 %v317
        %v467 = vunpack.c.l.b16 %v318
        %v468 = vunpack.c.l.b16 %v319
        %v469 = vunpack.c.l.b16 %v320
        %v470 = vunpack.c.l.b16 %v321
        %v471 = vunpack.c.l.b16 %v322
        %v472 = vunpack.c.l.b16 %v323
        %v473 = vunpack.c.l.b16 %v324
        %v474 = vunpack.c.l.b16 %v325
        %v475 = vunpack.c.l.b16 %v326
        %v476 = vunpack.c.l.b16 %v327
        %v477 = vunpack.c.l.b16 %v328
        %v478 = vunpack.c.l.b16 %v329
        %v479 = vunpack.c.l.b16 %v330
        %v480 = vunpack.c.l.b16 %v331
        %v481 = vunpack.c.l.b16 %v332
        %v482 = vunpack.c.l.b16 %v333
        %v483 = vunpack.c.l.b16 %v334
        %v484 = vunpack.c.l.b16 %v335
        %v485 = vunpack.c.l.b16 %v336
        %v486 = vunpack.c.l.b16 %v337
        %v487 = vunpack.c.l.b16 %v338
        %v488 = vunpack.c.l.b16 %v339
        %v489 = vunpack.c.l.b16 %v340
        %v490 = vunpack.c.l.b16 %v341
        %v491 = vunpack.c.l.b16 %v342
        %v492 = vunpack.c.l.b16 %v343
        %v493 = vunpack.c.l.b16 %v344
        %v494 = vunpack.c.l.b16 %v345
        %v495 = vunpack.c.l.b16 %v346
        %v496 = vunpack.c.l.b16 %v347
        %v497 = vunpack.c.l.b16 %v348
        %v498 = vunpack.c.l.b16 %v349
        %v499 = vunpack.c.l.b16 %v350
        %v500 = vunpack.c.l.b16 %v351
        %v501 = vunpack.c.l.b16 %v352
        %v502 = vunpack.c.l.b16 %v353
        %v503 = vpack.c.b16 %v440, %v439
        %v504 = vpack.c.b16 %v442, %v441
        %v505 = vpack.c.b16 %v444, %v443
        %v506 = vpack.c.b16 %v446, %v445
        %v507 = vpack.c.b16 %v448, %v447
        %v508 = vpack.c.b16 %v450, %v449
        %v509 = vpack.c.b16 %v452, %v451
        %v510 = vpack.c.b16 %v454, %v453
        %v511 = vpack.c.b16 %v456, %v455
        %v512 = vpack.c.b16 %v458, %v457
        %v513 = vpack.c.b16 %v460, %v459
        %v514 = vpack.c.b16 %v462, %v461
        %v515 = vpack.c.b16 %v464, %v463
        %v516 = vpack.c.b16 %v466, %v465
        %v517 = vpack.c.b16 %v468, %v467
        %v518 = vpack.c.b16 %v470, %v469
        %v519 = vpack.c.b16 %v472, %v471
        %v520 = vpack.c.b16 %v474, %v473
        %v521 = vpack.c.b16 %v476, %v475
        %v522 = vpack.c.b16 %v478, %v477
        %v523 = vpack.c.b16 %v480, %v479
        %v524 = vpack.c.b16 %v482, %v481
        %v525 = vpack.c.b16 %v484, %v483
        %v526 = vpack.c.b16 %v486, %v485
        %v527 = vpack.c.b16 %v488, %v487
        %v528 = vpack.c.b16 %v490, %v489
        %v529 = vpack.c.b16 %v492, %v491
        %v530 = vpack.c.b16 %v494, %v493
        %v531 = vpack.c.b16 %v496, %v495
        %v532 = vpack.c.b16 %v498, %v497
        %v533 = vpack.c.b16 %v500, %v499
        %v534 = vpack.c.b16 %v502, %v501
        %v583 = vunpack.c.l.b16 %v354
        %v584 = vunpack.c.l.b16 %v355
        %v585 = vunpack.c.l.b16 %v356
        %v586 = vunpack.c.l.b16 %v357
        %v587 = vunpack.c.l.b16 %v358
        %v588 = vunpack.c.l.b16 %v359
        %v589 = vunpack.c.l.b16 %v360
        %v590 = vunpack.c.l.b16 %v361
        %v591 = vunpack.c.l.b16 %v362
        %v592 = vunpack.c.l.b16 %v363
        %v593 = vunpack.c.l.b16 %v364
        %v594 = vunpack.c.l.b16 %v365
        %v595 = vunpack.c.l.b16 %v366
        %v596 = vunpack.c.l.b16 %v367
        %v597 = vunpack.c.l.b16 %v368
        %v598 = vunpack.c.l.b16 %v369
        %v599 = vpack.c.b16 %v584, %v583
        %v600 = vpack.c.b16 %v586, %v585
        %v601 = vpack.c.b16 %v588, %v587
        %v602 = vpack.c.b16 %v590, %v589
        %v603 = vpack.c.b16 %v592, %v591
        %v604 = vpack.c.b16 %v594, %v593
        %v605 = vpack.c.b16 %v596, %v595
        %v606 = vpack.c.b16 %v598, %v597
        %615 = vmatprep.subr.bf16.mxu0 0
        %616 = vmatpush1.bf16.msra.mxu0 %v599
        %617 = vmatprep.subr.bf16.mxu0 0
        %618 = vmatpush1.bf16.msra.mxu0 %v600
        %619 = vmatprep.subr.bf16.mxu0 0
        %620 = vmatpush1.bf16.msra.mxu0 %v601
        %621 = vmatprep.subr.bf16.mxu0 0
        %622 = vmatpush1.bf16.msra.mxu0 %v602
        %623 = vmatprep.subr.bf16.mxu0 0
        %624 = vmatpush1.bf16.msra.mxu0 %v603
        %625 = vmatprep.subr.bf16.mxu0 0
        %626 = vmatpush1.bf16.msra.mxu0 %v604
        %627 = vmatprep.subr.bf16.mxu0 0
        %628 = vmatpush1.bf16.msra.mxu0 %v605
        %629 = vmatprep.subr.bf16.mxu0 0
        %630 = vmatpush1.bf16.msra.mxu0 %v606
        %631 = vmatprep.subr.bf16.mxu0 0
        %632 = vmatpush1.bf16.msra.mxu0 0
        %633 = vmatprep.subr.bf16.mxu0 0
        %634 = vmatpush1.bf16.msra.mxu0 0
        %635 = vmatprep.subr.bf16.mxu0 0
        %636 = vmatpush1.bf16.msra.mxu0 0
        %637 = vmatprep.subr.bf16.mxu0 0
        %638 = vmatpush1.bf16.msra.mxu0 0
        %639 = vmatprep.subr.bf16.mxu0 0
        %640 = vmatpush1.bf16.msra.mxu0 0
        %641 = vmatprep.subr.bf16.mxu0 0
        %642 = vmatpush1.bf16.msra.mxu0 0
        %643 = vmatprep.subr.bf16.mxu0 0
        %644 = vmatpush1.bf16.msra.mxu0 0
        %645 = vmatprep.subr.bf16.mxu0 0
        %646 = vmatpush1.bf16.msra.mxu0 0
        %647 = vmatprep.mubr.bf16.mxu0 0
        %648 = vmatmul.mubr.bf16.gmra.mrb[0].mxu0 %v503
        %v649 = vpop.f32.mrb[0].mxu0
        %v650 = vadd.f32 %v374, %v649
        %v651 = vpop.f32.mrb[0].mxu0
        %v652 = vpop.f32.mrb[0].mxu0
        %v653 = vadd.f32 %v374, %v652
        %v654 = vpop.f32.mrb[0].mxu0
        %655 = vmatprep.mubr.bf16.mxu0 0
        %656 = vmatmul.mubr.bf16.gmra.mrb[0].mxu0 %v504
        %v657 = vpop.f32.mrb[0].mxu0
        %v658 = vadd.f32 %v374, %v657
        %v659 = vpop.f32.mrb[0].mxu0
        %v660 = vpop.f32.mrb[0].mxu0
        %v661 = vadd.f32 %v374, %v660
        %v662 = vpop.f32.mrb[0].mxu0
        %663 = vmatprep.mubr.bf16.mxu0 0
        %664 = vmatmul.mubr.bf16.gmra.mrb[0].mxu0 %v505
        %v665 = vpop.f32.mrb[0].mxu0
        %v666 = vadd.f32 %v374, %v665
        %v667 = vpop.f32.mrb[0].mxu0
        %v668 = vpop.f32.mrb[0].mxu0
        %v669 = vadd.f32 %v374, %v668
        %v670 = vpop.f32.mrb[0].mxu0
        %671 = vmatprep.mubr.bf16.mxu0 0
        %672 = vmatmul.mubr.bf16.gmra.mrb[0].mxu0 %v506
        %v673 = vpop.f32.mrb[0].mxu0
        %v674 = vadd.f32 %v374, %v673
        %v675 = vpop.f32.mrb[0].mxu0
        %v676 = vpop.f32.mrb[0].mxu0
        %v677 = vadd.f32 %v374, %v676
        %v678 = vpop.f32.mrb[0].mxu0
        %679 = vmatprep.mubr.bf16.mxu0 0
        %680 = vmatmul.mubr.bf16.gmra.mrb[0].mxu0 %v507
        %v681 = vpop.f32.mrb[0].mxu0
        %v682 = vadd.f32 %v374, %v681
        %v683 = vpop.f32.mrb[0].mxu0
        %v684 = vpop.f32.mrb[0].mxu0
        %v685 = vadd.f32 %v374, %v684
        %v686 = vpop.f32.mrb[0].mxu0
        %687 = vmatprep.mubr.bf16.mxu0 0
        %688 = vmatmul.mubr.bf16.gmra.mrb[0].mxu0 %v508
        %v689 = vpop.f32.mrb[0].mxu0
        %v690 = vadd.f32 %v374, %v689
        %v691 = vpop.f32.mrb[0].mxu0
        %v692 = vpop.f32.mrb[0].mxu0
        %v693 = vadd.f32 %v374, %v692
        %v694 = vpop.f32.mrb[0].mxu0
        %695 = vmatprep.mubr.bf16.mxu0 0
        %696 = vmatmul.mubr.bf16.gmra.mrb[0].mxu0 %v509
        %v697 = vpop.f32.mrb[0].mxu0
        %v698 = vadd.f32 %v374, %v697
        %v699 = vpop.f32.mrb[0].mxu0
        %v700 = vpop.f32.mrb[0].mxu0
        %v701 = vadd.f32 %v374, %v700
        %v702 = vpop.f32.mrb[0].mxu0
        %703 = vmatprep.mubr.bf16.mxu0 0
        %704 = vmatmul.mubr.bf16.gmra.mrb[0].mxu0 %v510
        %v705 = vpop.f32.mrb[0].mxu0
        %v706 = vadd.f32 %v374, %v705
        %v707 = vpop.f32.mrb[0].mxu0
        %v708 = vpop.f32.mrb[0].mxu0
        %v709 = vadd.f32 %v374, %v708
        %v710 = vpop.f32.mrb[0].mxu0
        %711 = vmatprep.mubr.bf16.mxu0 0
        %712 = vmatmul.mubr.bf16.gmra.mrb[0].mxu0 %v511
        %v713 = vpop.f32.mrb[0].mxu0
        %v714 = vadd.f32 %v374, %v713
        %v715 = vpop.f32.mrb[0].mxu0
        %v716 = vpop.f32.mrb[0].mxu0
        %v717 = vadd.f32 %v374, %v716
        %v718 = vpop.f32.mrb[0].mxu0
        %719 = vmatprep.mubr.bf16.mxu0 0
        %720 = vmatmul.mubr.bf16.gmra.mrb[0].mxu0 %v512
        %v721 = vpop.f32.mrb[0].mxu0
        %v722 = vadd.f32 %v374, %v721
        %v723 = vpop.f32.mrb[0].mxu0
        %v724 = vpop.f32.mrb[0].mxu0
        %v725 = vadd.f32 %v374, %v724
        %v726 = vpop.f32.mrb[0].mxu0
        %727 = vmatprep.mubr.bf16.mxu0 0
        %728 = vmatmul.mubr.bf16.gmra.mrb[0].mxu0 %v513
        %v729 = vpop.f32.mrb[0].mxu0
        %v730 = vadd.f32 %v374, %v729
        %v731 = vpop.f32.mrb[0].mxu0
        %v732 = vpop.f32.mrb[0].mxu0
        %v733 = vadd.f32 %v374, %v732
        %v734 = vpop.f32.mrb[0].mxu0
        %735 = vmatprep.mubr.bf16.mxu0 0
        %736 = vmatmul.mubr.bf16.gmra.mrb[0].mxu0 %v514
        %v737 = vpop.f32.mrb[0].mxu0
        %v738 = vadd.f32 %v374, %v737
        %v739 = vpop.f32.mrb[0].mxu0
        %v740 = vpop.f32.mrb[0].mxu0
        %v741 = vadd.f32 %v374, %v740
        %v742 = vpop.f32.mrb[0].mxu0
        %743 = vmatprep.mubr.bf16.mxu0 0
        %744 = vmatmul.mubr.bf16.gmra.mrb[0].mxu0 %v515
        %v745 = vpop.f32.mrb[0].mxu0
        %v746 = vadd.f32 %v374, %v745
        %v747 = vpop.f32.mrb[0].mxu0
        %v748 = vpop.f32.mrb[0].mxu0
        %v749 = vadd.f32 %v374, %v748
        %v750 = vpop.f32.mrb[0].mxu0
        %751 = vmatprep.mubr.bf16.mxu0 0
        %752 = vmatmul.mubr.bf16.gmra.mrb[0].mxu0 %v516
        %v753 = vpop.f32.mrb[0].mxu0
        %v754 = vadd.f32 %v374, %v753
        %v755 = vpop.f32.mrb[0].mxu0
        %v756 = vpop.f32.mrb[0].mxu0
        %v757 = vadd.f32 %v374, %v756
        %v758 = vpop.f32.mrb[0].mxu0
        %759 = vmatprep.mubr.bf16.mxu0 0
        %760 = vmatmul.mubr.bf16.gmra.mrb[0].mxu0 %v517
        %v761 = vpop.f32.mrb[0].mxu0
        %v762 = vadd.f32 %v374, %v761
        %v763 = vpop.f32.mrb[0].mxu0
        %v764 = vpop.f32.mrb[0].mxu0
        %v765 = vadd.f32 %v374, %v764
        %v766 = vpop.f32.mrb[0].mxu0
        %767 = vmatprep.mubr.bf16.mxu0 0
        %768 = vmatmul.mubr.bf16.gmra.mrb[0].mxu0 %v518
        %v769 = vpop.f32.mrb[0].mxu0
        %v770 = vadd.f32 %v374, %v769
        %v771 = vpop.f32.mrb[0].mxu0
        %v772 = vpop.f32.mrb[0].mxu0
        %v773 = vadd.f32 %v374, %v772
        %v774 = vpop.f32.mrb[0].mxu0
        %775 = vmatprep.mubr.bf16.mxu0 0
        %776 = vmatmul.mubr.bf16.gmra.mrb[0].mxu0 %v519
        %v777 = vpop.f32.mrb[0].mxu0
        %v778 = vadd.f32 %v374, %v777
        %v779 = vpop.f32.mrb[0].mxu0
        %v780 = vpop.f32.mrb[0].mxu0
        %v781 = vadd.f32 %v374, %v780
        %v782 = vpop.f32.mrb[0].mxu0
        %783 = vmatprep.mubr.bf16.mxu0 0
        %784 = vmatmul.mubr.bf16.gmra.mrb[0].mxu0 %v520
        %v785 = vpop.f32.mrb[0].mxu0
        %v786 = vadd.f32 %v374, %v785
        %v787 = vpop.f32.mrb[0].mxu0
        %v788 = vpop.f32.mrb[0].mxu0
        %v789 = vadd.f32 %v374, %v788
        %v790 = vpop.f32.mrb[0].mxu0
        %791 = vmatprep.mubr.bf16.mxu0 0
        %792 = vmatmul.mubr.bf16.gmra.mrb[0].mxu0 %v521
        %v793 = vpop.f32.mrb[0].mxu0
        %v794 = vadd.f32 %v374, %v793
        %v795 = vpop.f32.mrb[0].mxu0
        %v796 = vpop.f32.mrb[0].mxu0
        %v797 = vadd.f32 %v374, %v796
        %v798 = vpop.f32.mrb[0].mxu0
        %799 = vmatprep.mubr.bf16.mxu0 0
        %800 = vmatmul.mubr.bf16.gmra.mrb[0].mxu0 %v522
        %v801 = vpop.f32.mrb[0].mxu0
        %v802 = vadd.f32 %v374, %v801
        %v803 = vpop.f32.mrb[0].mxu0
        %v804 = vpop.f32.mrb[0].mxu0
        %v805 = vadd.f32 %v374, %v804
        %v806 = vpop.f32.mrb[0].mxu0
        %807 = vmatprep.mubr.bf16.mxu0 0
        %808 = vmatmul.mubr.bf16.gmra.mrb[0].mxu0 %v523
        %v809 = vpop.f32.mrb[0].mxu0
        %v810 = vadd.f32 %v374, %v809
        %v811 = vpop.f32.mrb[0].mxu0
        %v812 = vpop.f32.mrb[0].mxu0
        %v813 = vadd.f32 %v374, %v812
        %v814 = vpop.f32.mrb[0].mxu0
        %815 = vmatprep.mubr.bf16.mxu0 0
        %816 = vmatmul.mubr.bf16.gmra.mrb[0].mxu0 %v524
        %v817 = vpop.f32.mrb[0].mxu0
        %v818 = vadd.f32 %v374, %v817
        %v819 = vpop.f32.mrb[0].mxu0
        %v820 = vpop.f32.mrb[0].mxu0
        %v821 = vadd.f32 %v374, %v820
        %v822 = vpop.f32.mrb[0].mxu0
        %823 = vmatprep.mubr.bf16.mxu0 0
        %824 = vmatmul.mubr.bf16.gmra.mrb[0].mxu0 %v525
        %v825 = vpop.f32.mrb[0].mxu0
        %v826 = vadd.f32 %v374, %v825
        %v827 = vpop.f32.mrb[0].mxu0
        %v828 = vpop.f32.mrb[0].mxu0
        %v829 = vadd.f32 %v374, %v828
        %v830 = vpop.f32.mrb[0].mxu0
        %831 = vmatprep.mubr.bf16.mxu0 0
        %832 = vmatmul.mubr.bf16.gmra.mrb[0].mxu0 %v526
        %v833 = vpop.f32.mrb[0].mxu0
        %v834 = vadd.f32 %v374, %v833
        %v835 = vpop.f32.mrb[0].mxu0
        %v836 = vpop.f32.mrb[0].mxu0
        %v837 = vadd.f32 %v374, %v836
        %v838 = vpop.f32.mrb[0].mxu0
        %839 = vmatprep.mubr.bf16.mxu0 0
        %840 = vmatmul.mubr.bf16.gmra.mrb[0].mxu0 %v527
        %v841 = vpop.f32.mrb[0].mxu0
        %v842 = vadd.f32 %v374, %v841
        %v843 = vpop.f32.mrb[0].mxu0
        %v844 = vpop.f32.mrb[0].mxu0
        %v845 = vadd.f32 %v374, %v844
        %v846 = vpop.f32.mrb[0].mxu0
        %847 = vmatprep.mubr.bf16.mxu0 0
        %848 = vmatmul.mubr.bf16.gmra.mrb[0].mxu0 %v528
        %v849 = vpop.f32.mrb[0].mxu0
        %v850 = vadd.f32 %v374, %v849
        %v851 = vpop.f32.mrb[0].mxu0
        %v852 = vpop.f32.mrb[0].mxu0
        %v853 = vadd.f32 %v374, %v852
        %v854 = vpop.f32.mrb[0].mxu0
        %855 = vmatprep.mubr.bf16.mxu0 0
        %856 = vmatmul.mubr.bf16.gmra.mrb[0].mxu0 %v529
        %v857 = vpop.f32.mrb[0].mxu0
        %v858 = vadd.f32 %v374, %v857
        %v859 = vpop.f32.mrb[0].mxu0
        %v860 = vpop.f32.mrb[0].mxu0
        %v861 = vadd.f32 %v374, %v860
        %v862 = vpop.f32.mrb[0].mxu0
        %863 = vmatprep.mubr.bf16.mxu0 0
        %864 = vmatmul.mubr.bf16.gmra.mrb[0].mxu0 %v530
        %v865 = vpop.f32.mrb[0].mxu0
        %v866 = vadd.f32 %v374, %v865
        %v867 = vpop.f32.mrb[0].mxu0
        %v868 = vpop.f32.mrb[0].mxu0
        %v869 = vadd.f32 %v374, %v868
        %v870 = vpop.f32.mrb[0].mxu0
        %871 = vmatprep.mubr.bf16.mxu0 0
        %872 = vmatmul.mubr.bf16.gmra.mrb[0].mxu0 %v531
        %v873 = vpop.f32.mrb[0].mxu0
        %v874 = vadd.f32 %v374, %v873
        %v875 = vpop.f32.mrb[0].mxu0
        %v876 = vpop.f32.mrb[0].mxu0
        %v877 = vadd.f32 %v374, %v876
        %v878 = vpop.f32.mrb[0].mxu0
        %879 = vmatprep.mubr.bf16.mxu0 0
        %880 = vmatmul.mubr.bf16.gmra.mrb[0].mxu0 %v532
        %v881 = vpop.f32.mrb[0].mxu0
        %v882 = vadd.f32 %v374, %v881
        %v883 = vpop.f32.mrb[0].mxu0
        %v884 = vpop.f32.mrb[0].mxu0
        %v885 = vadd.f32 %v374, %v884
        %v886 = vpop.f32.mrb[0].mxu0
        %887 = vmatprep.mubr.bf16.mxu0 0
        %888 = vmatmul.mubr.bf16.gmra.mrb[0].mxu0 %v533
        %v889 = vpop.f32.mrb[0].mxu0
        %v890 = vadd.f32 %v374, %v889
        %v891 = vpop.f32.mrb[0].mxu0
        %v892 = vpop.f32.mrb[0].mxu0
        %v893 = vadd.f32 %v374, %v892
        %v894 = vpop.f32.mrb[0].mxu0
        %895 = vmatprep.mubr.bf16.mxu0 0
        %896 = vmatmul.mubr.bf16.gmra.mrb[0].mxu0 %v534
        %v897 = vpop.f32.mrb[0].mxu0
        %v898 = vadd.f32 %v374, %v897
        %v899 = vpop.f32.mrb[0].mxu0
        %v900 = vpop.f32.mrb[0].mxu0
        %v901 = vadd.f32 %v374, %v900
        %v902 = vpop.f32.mrb[0].mxu0
        %903 = vdwg.mxu0
        %v904 = vmax.f32 %v650, 0.0
        %v905 = vmax.f32 %v653, 0.0
        %v906 = vmax.f32 %v658, 0.0
        %v907 = vmax.f32 %v661, 0.0
        %v908 = vmax.f32 %v666, 0.0
        %v909 = vmax.f32 %v669, 0.0
        %v910 = vmax.f32 %v674, 0.0
        %v911 = vmax.f32 %v677, 0.0
        %v912 = vmax.f32 %v682, 0.0
        %v913 = vmax.f32 %v685, 0.0
        %v914 = vmax.f32 %v690, 0.0
        %v915 = vmax.f32 %v693, 0.0
        %v916 = vmax.f32 %v698, 0.0
        %v917 = vmax.f32 %v701, 0.0
        %v918 = vmax.f32 %v706, 0.0
        %v919 = vmax.f32 %v709, 0.0
        %v920 = vmax.f32 %v714, 0.0
        %v921 = vmax.f32 %v717, 0.0
        %v922 = vmax.f32 %v722, 0.0
        %v923 = vmax.f32 %v725, 0.0
        %v924 = vmax.f32 %v730, 0.0
        %v925 = vmax.f32 %v733, 0.0
        %v926 = vmax.f32 %v738, 0.0
        %v927 = vmax.f32 %v741, 0.0
        %v928 = vmax.f32 %v746, 0.0
        %v929 = vmax.f32 %v749, 0.0
        %v930 = vmax.f32 %v754, 0.0
        %v931 = vmax.f32 %v757, 0.0
        %v932 = vmax.f32 %v762, 0.0
        %v933 = vmax.f32 %v765, 0.0
        %v934 = vmax.f32 %v770, 0.0
        %v935 = vmax.f32 %v773, 0.0
        %v936 = vmax.f32 %v778, 0.0
        %v937 = vmax.f32 %v781, 0.0
        %v938 = vmax.f32 %v786, 0.0
        %v939 = vmax.f32 %v789, 0.0
        %v940 = vmax.f32 %v794, 0.0
        %v941 = vmax.f32 %v797, 0.0
        %v942 = vmax.f32 %v802, 0.0
        %v943 = vmax.f32 %v805, 0.0
        %v944 = vmax.f32 %v810, 0.0
        %v945 = vmax.f32 %v813, 0.0
        %v946 = vmax.f32 %v818, 0.0
        %v947 = vmax.f32 %v821, 0.0
        %v948 = vmax.f32 %v826, 0.0
        %v949 = vmax.f32 %v829, 0.0
        %v950 = vmax.f32 %v834, 0.0
        %v951 = vmax.f32 %v837, 0.0
        %v952 = vmax.f32 %v842, 0.0
        %v953 = vmax.f32 %v845, 0.0
        %v954 = vmax.f32 %v850, 0.0
        %v955 = vmax.f32 %v853, 0.0
        %v956 = vmax.f32 %v858, 0.0
        %v957 = vmax.f32 %v861, 0.0
        %v958 = vmax.f32 %v866, 0.0
        %v959 = vmax.f32 %v869, 0.0
        %v960 = vmax.f32 %v874, 0.0
        %v961 = vmax.f32 %v877, 0.0
        %v962 = vmax.f32 %v882, 0.0
        %v963 = vmax.f32 %v885, 0.0
        %v964 = vmax.f32 %v890, 0.0
        %v965 = vmax.f32 %v893, 0.0
        %v966 = vmax.f32 %v898, 0.0
        %v967 = vmax.f32 %v901, 0.0
        %v968 = vld [vmem:[%s4 + $0x1] sm:$0x1]
        %v969 = vld [vmem:[%s4 + $0x2] sm:$0x1]
        %970 = vadd.xlane.f32.xlu0 %v904
        %v971 = vpop.xlane.xlu0 %970
        %972 = vadd.xlane.f32.xlu0 %v905
        %v973 = vpop.xlane.xlu0 %972
        %974 = vadd.xlane.f32.xlu0 %v906
        %v975 = vpop.xlane.xlu0 %974
        %976 = vadd.xlane.f32.xlu0 %v907
        %v977 = vpop.xlane.xlu0 %976
        %978 = vadd.xlane.f32.xlu0 %v908
        %v979 = vpop.xlane.xlu0 %978
        %980 = vadd.xlane.f32.xlu0 %v909
        %v981 = vpop.xlane.xlu0 %980
        %982 = vadd.xlane.f32.xlu0 %v910
        %v983 = vpop.xlane.xlu0 %982
        %984 = vadd.xlane.f32.xlu0 %v911
        %v985 = vpop.xlane.xlu0 %984
        %986 = vadd.xlane.f32.xlu0 %v912
        %v987 = vpop.xlane.xlu0 %986
        %988 = vadd.xlane.f32.xlu0 %v913
        %v989 = vpop.xlane.xlu0 %988
        %990 = vadd.xlane.f32.xlu0 %v914
        %v991 = vpop.xlane.xlu0 %990
        %992 = vadd.xlane.f32.xlu0 %v915
        %v993 = vpop.xlane.xlu0 %992
        %994 = vadd.xlane.f32.xlu0 %v916
        %v995 = vpop.xlane.xlu0 %994
        %996 = vadd.xlane.f32.xlu0 %v917
        %v997 = vpop.xlane.xlu0 %996
        %998 = vadd.xlane.f32.xlu0 %v918
        %v999 = vpop.xlane.xlu0 %998
        %1000 = vadd.xlane.f32.xlu0 %v919
        %v1001 = vpop.xlane.xlu0 %1000
        %1002 = vadd.xlane.f32.xlu0 %v920
        %v1003 = vpop.xlane.xlu0 %1002
        %1004 = vadd.xlane.f32.xlu0 %v921
        %v1005 = vpop.xlane.xlu0 %1004
        %1006 = vadd.xlane.f32.xlu0 %v922
        %v1007 = vpop.xlane.xlu0 %1006
        %1008 = vadd.xlane.f32.xlu0 %v923
        %v1009 = vpop.xlane.xlu0 %1008
        %1010 = vadd.xlane.f32.xlu0 %v924
        %v1011 = vpop.xlane.xlu0 %1010
        %1012 = vadd.xlane.f32.xlu0 %v925
        %v1013 = vpop.xlane.xlu0 %1012
        %1014 = vadd.xlane.f32.xlu0 %v926
        %v1015 = vpop.xlane.xlu0 %1014
        %1016 = vadd.xlane.f32.xlu0 %v927
        %v1017 = vpop.xlane.xlu0 %1016
        %1018 = vadd.xlane.f32.xlu0 %v928
        %v1019 = vpop.xlane.xlu0 %1018
        %1020 = vadd.xlane.f32.xlu0 %v929
        %v1021 = vpop.xlane.xlu0 %1020
        %1022 = vadd.xlane.f32.xlu0 %v930
        %v1023 = vpop.xlane.xlu0 %1022
        %1024 = vadd.xlane.f32.xlu0 %v931
        %v1025 = vpop.xlane.xlu0 %1024
        %1026 = vadd.xlane.f32.xlu0 %v932
        %v1027 = vpop.xlane.xlu0 %1026
        %1028 = vadd.xlane.f32.xlu0 %v933
        %v1029 = vpop.xlane.xlu0 %1028
        %1030 = vadd.xlane.f32.xlu0 %v934
        %v1031 = vpop.xlane.xlu0 %1030
        %1032 = vadd.xlane.f32.xlu0 %v935
        %v1033 = vpop.xlane.xlu0 %1032
        %1034 = vadd.xlane.f32.xlu0 %v936
        %v1035 = vpop.xlane.xlu0 %1034
        %1036 = vadd.xlane.f32.xlu0 %v937
        %v1037 = vpop.xlane.xlu0 %1036
        %1038 = vadd.xlane.f32.xlu0 %v938
        %v1039 = vpop.xlane.xlu0 %1038
        %1040 = vadd.xlane.f32.xlu0 %v939
        %v1041 = vpop.xlane.xlu0 %1040
        %1042 = vadd.xlane.f32.xlu0 %v940
        %v1043 = vpop.xlane.xlu0 %1042
        %1044 = vadd.xlane.f32.xlu0 %v941
        %v1045 = vpop.xlane.xlu0 %1044
        %1046 = vadd.xlane.f32.xlu0 %v942
        %v1047 = vpop.xlane.xlu0 %1046
        %1048 = vadd.xlane.f32.xlu0 %v943
        %v1049 = vpop.xlane.xlu0 %1048
        %1050 = vadd.xlane.f32.xlu0 %v944
        %v1051 = vpop.xlane.xlu0 %1050
        %1052 = vadd.xlane.f32.xlu0 %v945
        %v1053 = vpop.xlane.xlu0 %1052
        %1054 = vadd.xlane.f32.xlu0 %v946
        %v1055 = vpop.xlane.xlu0 %1054
        %1056 = vadd.xlane.f32.xlu0 %v947
        %v1057 = vpop.xlane.xlu0 %1056
        %1058 = vadd.xlane.f32.xlu0 %v948
        %v1059 = vpop.xlane.xlu0 %1058
        %1060 = vadd.xlane.f32.xlu0 %v949
        %v1061 = vpop.xlane.xlu0 %1060
        %1062 = vadd.xlane.f32.xlu0 %v950
        %v1063 = vpop.xlane.xlu0 %1062
        %1064 = vadd.xlane.f32.xlu0 %v951
        %v1065 = vpop.xlane.xlu0 %1064
        %1066 = vadd.xlane.f32.xlu0 %v952
        %v1067 = vpop.xlane.xlu0 %1066
        %1068 = vadd.xlane.f32.xlu0 %v953
        %v1069 = vpop.xlane.xlu0 %1068
        %1070 = vadd.xlane.f32.xlu0 %v954
        %v1071 = vpop.xlane.xlu0 %1070
        %1072 = vadd.xlane.f32.xlu0 %v955
        %v1073 = vpop.xlane.xlu0 %1072
        %1074 = vadd.xlane.f32.xlu0 %v956
        %v1075 = vpop.xlane.xlu0 %1074
        %1076 = vadd.xlane.f32.xlu0 %v957
        %v1077 = vpop.xlane.xlu0 %1076
        %1078 = vadd.xlane.f32.xlu0 %v958
        %v1079 = vpop.xlane.xlu0 %1078
        %1080 = vadd.xlane.f32.xlu0 %v959
        %v1081 = vpop.xlane.xlu0 %1080
        %1082 = vadd.xlane.f32.xlu0 %v960
        %v1083 = vpop.xlane.xlu0 %1082
        %1084 = vadd.xlane.f32.xlu0 %v961
        %v1085 = vpop.xlane.xlu0 %1084
        %1086 = vadd.xlane.f32.xlu0 %v962
        %v1087 = vpop.xlane.xlu0 %1086
        %1088 = vadd.xlane.f32.xlu0 %v963
        %v1089 = vpop.xlane.xlu0 %1088
        %1090 = vadd.xlane.f32.xlu0 %v964
        %v1091 = vpop.xlane.xlu0 %1090
        %1092 = vadd.xlane.f32.xlu0 %v965
        %v1093 = vpop.xlane.xlu0 %1092
        %1094 = vadd.xlane.f32.xlu0 %v966
        %v1095 = vpop.xlane.xlu0 %1094
        %1096 = vadd.xlane.f32.xlu0 %v967
        %v1097 = vpop.xlane.xlu0 %1096
        %v1098 = vmul.f32 %v904, %v904
        %v1099 = vmul.f32 %v905, %v905
        %v1100 = vmul.f32 %v906, %v906
        %v1101 = vmul.f32 %v907, %v907
        %v1102 = vmul.f32 %v908, %v908
        %v1103 = vmul.f32 %v909, %v909
        %v1104 = vmul.f32 %v910, %v910
        %v1105 = vmul.f32 %v911, %v911
        %v1106 = vmul.f32 %v912, %v912
        %v1107 = vmul.f32 %v913, %v913
        %v1108 = vmul.f32 %v914, %v914
        %v1109 = vmul.f32 %v915, %v915
        %v1110 = vmul.f32 %v916, %v916
        %v1111 = vmul.f32 %v917, %v917
        %v1112 = vmul.f32 %v918, %v918
        %v1113 = vmul.f32 %v919, %v919
        %v1114 = vmul.f32 %v920, %v920
        %v1115 = vmul.f32 %v921, %v921
        %v1116 = vmul.f32 %v922, %v922
        %v1117 = vmul.f32 %v923, %v923
        %v1118 = vmul.f32 %v924, %v924
        %v1119 = vmul.f32 %v925, %v925
        %v1120 = vmul.f32 %v926, %v926
        %v1121 = vmul.f32 %v927, %v927
        %v1122 = vmul.f32 %v928, %v928
        %v1123 = vmul.f32 %v929, %v929
        %v1124 = vmul.f32 %v930, %v930
        %v1125 = vmul.f32 %v931, %v931
        %v1126 = vmul.f32 %v932, %v932
        %v1127 = vmul.f32 %v933, %v933
        %v1128 = vmul.f32 %v934, %v934
        %v1129 = vmul.f32 %v935, %v935
        %v1130 = vmul.f32 %v936, %v936
        %v1131 = vmul.f32 %v937, %v937
        %v1132 = vmul.f32 %v938, %v938
        %v1133 = vmul.f32 %v939, %v939
        %v1134 = vmul.f32 %v940, %v940
        %v1135 = vmul.f32 %v941, %v941
        %v1136 = vmul.f32 %v942, %v942
        %v1137 = vmul.f32 %v943, %v943
        %v1138 = vmul.f32 %v944, %v944
        %v1139 = vmul.f32 %v945, %v945
        %v1140 = vmul.f32 %v946, %v946
        %v1141 = vmul.f32 %v947, %v947
        %v1142 = vmul.f32 %v948, %v948
        %v1143 = vmul.f32 %v949, %v949
        %v1144 = vmul.f32 %v950, %v950
        %v1145 = vmul.f32 %v951, %v951
        %v1146 = vmul.f32 %v952, %v952
        %v1147 = vmul.f32 %v953, %v953
        %v1148 = vmul.f32 %v954, %v954
        %v1149 = vmul.f32 %v955, %v955
        %v1150 = vmul.f32 %v956, %v956
        %v1151 = vmul.f32 %v957, %v957
        %v1152 = vmul.f32 %v958, %v958
        %v1153 = vmul.f32 %v959, %v959
        %v1154 = vmul.f32 %v960, %v960
        %v1155 = vmul.f32 %v961, %v961
        %v1156 = vmul.f32 %v962, %v962
        %v1157 = vmul.f32 %v963, %v963
        %v1158 = vmul.f32 %v964, %v964
        %v1159 = vmul.f32 %v965, %v965
        %v1160 = vmul.f32 %v966, %v966
        %v1161 = vmul.f32 %v967, %v967
        %1162 = vadd.xlane.f32.xlu0 %v1098
        %v1163 = vpop.xlane.xlu0 %1162
        %1164 = vadd.xlane.f32.xlu0 %v1099
        %v1165 = vpop.xlane.xlu0 %1164
        %1166 = vadd.xlane.f32.xlu0 %v1100
        %v1167 = vpop.xlane.xlu0 %1166
        %1168 = vadd.xlane.f32.xlu0 %v1101
        %v1169 = vpop.xlane.xlu0 %1168
        %1170 = vadd.xlane.f32.xlu0 %v1102
        %v1171 = vpop.xlane.xlu0 %1170
        %1172 = vadd.xlane.f32.xlu0 %v1103
        %v1173 = vpop.xlane.xlu0 %1172
        %1174 = vadd.xlane.f32.xlu0 %v1104
        %v1175 = vpop.xlane.xlu0 %1174
        %1176 = vadd.xlane.f32.xlu0 %v1105
        %v1177 = vpop.xlane.xlu0 %1176
        %1178 = vadd.xlane.f32.xlu0 %v1106
        %v1179 = vpop.xlane.xlu0 %1178
        %1180 = vadd.xlane.f32.xlu0 %v1107
        %v1181 = vpop.xlane.xlu0 %1180
        %1182 = vadd.xlane.f32.xlu0 %v1108
        %v1183 = vpop.xlane.xlu0 %1182
        %1184 = vadd.xlane.f32.xlu0 %v1109
        %v1185 = vpop.xlane.xlu0 %1184
        %1186 = vadd.xlane.f32.xlu0 %v1110
        %v1187 = vpop.xlane.xlu0 %1186
        %1188 = vadd.xlane.f32.xlu0 %v1111
        %v1189 = vpop.xlane.xlu0 %1188
        %1190 = vadd.xlane.f32.xlu0 %v1112
        %v1191 = vpop.xlane.xlu0 %1190
        %1192 = vadd.xlane.f32.xlu0 %v1113
        %v1193 = vpop.xlane.xlu0 %1192
        %1194 = vadd.xlane.f32.xlu0 %v1114
        %v1195 = vpop.xlane.xlu0 %1194
        %1196 = vadd.xlane.f32.xlu0 %v1115
        %v1197 = vpop.xlane.xlu0 %1196
        %1198 = vadd.xlane.f32.xlu0 %v1116
        %v1199 = vpop.xlane.xlu0 %1198
        %1200 = vadd.xlane.f32.xlu0 %v1117
        %v1201 = vpop.xlane.xlu0 %1200
        %1202 = vadd.xlane.f32.xlu0 %v1118
        %v1203 = vpop.xlane.xlu0 %1202
        %1204 = vadd.xlane.f32.xlu0 %v1119
        %v1205 = vpop.xlane.xlu0 %1204
        %1206 = vadd.xlane.f32.xlu0 %v1120
        %v1207 = vpop.xlane.xlu0 %1206
        %1208 = vadd.xlane.f32.xlu0 %v1121
        %v1209 = vpop.xlane.xlu0 %1208
        %1210 = vadd.xlane.f32.xlu0 %v1122
        %v1211 = vpop.xlane.xlu0 %1210
        %1212 = vadd.xlane.f32.xlu0 %v1123
        %v1213 = vpop.xlane.xlu0 %1212
        %1214 = vadd.xlane.f32.xlu0 %v1124
        %v1215 = vpop.xlane.xlu0 %1214
        %1216 = vadd.xlane.f32.xlu0 %v1125
        %v1217 = vpop.xlane.xlu0 %1216
        %1218 = vadd.xlane.f32.xlu0 %v1126
        %v1219 = vpop.xlane.xlu0 %1218
        %1220 = vadd.xlane.f32.xlu0 %v1127
        %v1221 = vpop.xlane.xlu0 %1220
        %1222 = vadd.xlane.f32.xlu0 %v1128
        %v1223 = vpop.xlane.xlu0 %1222
        %1224 = vadd.xlane.f32.xlu0 %v1129
        %v1225 = vpop.xlane.xlu0 %1224
        %1226 = vadd.xlane.f32.xlu0 %v1130
        %v1227 = vpop.xlane.xlu0 %1226
        %1228 = vadd.xlane.f32.xlu0 %v1131
        %v1229 = vpop.xlane.xlu0 %1228
        %1230 = vadd.xlane.f32.xlu0 %v1132
        %v1231 = vpop.xlane.xlu0 %1230
        %1232 = vadd.xlane.f32.xlu0 %v1133
        %v1233 = vpop.xlane.xlu0 %1232
        %1234 = vadd.xlane.f32.xlu0 %v1134
        %v1235 = vpop.xlane.xlu0 %1234
        %1236 = vadd.xlane.f32.xlu0 %v1135
        %v1237 = vpop.xlane.xlu0 %1236
        %1238 = vadd.xlane.f32.xlu0 %v1136
        %v1239 = vpop.xlane.xlu0 %1238
        %1240 = vadd.xlane.f32.xlu0 %v1137
        %v1241 = vpop.xlane.xlu0 %1240
        %1242 = vadd.xlane.f32.xlu0 %v1138
        %v1243 = vpop.xlane.xlu0 %1242
        %1244 = vadd.xlane.f32.xlu0 %v1139
        %v1245 = vpop.xlane.xlu0 %1244
        %1246 = vadd.xlane.f32.xlu0 %v1140
        %v1247 = vpop.xlane.xlu0 %1246
        %1248 = vadd.xlane.f32.xlu0 %v1141
        %v1249 = vpop.xlane.xlu0 %1248
        %1250 = vadd.xlane.f32.xlu0 %v1142
        %v1251 = vpop.xlane.xlu0 %1250
        %1252 = vadd.xlane.f32.xlu0 %v1143
        %v1253 = vpop.xlane.xlu0 %1252
        %1254 = vadd.xlane.f32.xlu0 %v1144
        %v1255 = vpop.xlane.xlu0 %1254
        %1256 = vadd.xlane.f32.xlu0 %v1145
        %v1257 = vpop.xlane.xlu0 %1256
        %1258 = vadd.xlane.f32.xlu0 %v1146
        %v1259 = vpop.xlane.xlu0 %1258
        %1260 = vadd.xlane.f32.xlu0 %v1147
        %v1261 = vpop.xlane.xlu0 %1260
        %1262 = vadd.xlane.f32.xlu0 %v1148
        %v1263 = vpop.xlane.xlu0 %1262
        %1264 = vadd.xlane.f32.xlu0 %v1149
        %v1265 = vpop.xlane.xlu0 %1264
        %1266 = vadd.xlane.f32.xlu0 %v1150
        %v1267 = vpop.xlane.xlu0 %1266
        %1268 = vadd.xlane.f32.xlu0 %v1151
        %v1269 = vpop.xlane.xlu0 %1268
        %1270 = vadd.xlane.f32.xlu0 %v1152
        %v1271 = vpop.xlane.xlu0 %1270
        %1272 = vadd.xlane.f32.xlu0 %v1153
        %v1273 = vpop.xlane.xlu0 %1272
        %1274 = vadd.xlane.f32.xlu0 %v1154
        %v1275 = vpop.xlane.xlu0 %1274
        %1276 = vadd.xlane.f32.xlu0 %v1155
        %v1277 = vpop.xlane.xlu0 %1276
        %1278 = vadd.xlane.f32.xlu0 %v1156
        %v1279 = vpop.xlane.xlu0 %1278
        %1280 = vadd.xlane.f32.xlu0 %v1157
        %v1281 = vpop.xlane.xlu0 %1280
        %1282 = vadd.xlane.f32.xlu0 %v1158
        %v1283 = vpop.xlane.xlu0 %1282
        %1284 = vadd.xlane.f32.xlu0 %v1159
        %v1285 = vpop.xlane.xlu0 %1284
        %1286 = vadd.xlane.f32.xlu0 %v1160
        %v1287 = vpop.xlane.xlu0 %1286
        %1288 = vadd.xlane.f32.xlu0 %v1161
        %v1289 = vpop.xlane.xlu0 %1288
        %v1290 = vmul.f32 %v971, 0.015625
        %v1291 = vmul.f32 %v973, 0.015625
        %v1292 = vmul.f32 %v975, 0.015625
        %v1293 = vmul.f32 %v977, 0.015625
        %v1294 = vmul.f32 %v979, 0.015625
        %v1295 = vmul.f32 %v981, 0.015625
        %v1296 = vmul.f32 %v983, 0.015625
        %v1297 = vmul.f32 %v985, 0.015625
        %v1298 = vmul.f32 %v987, 0.015625
        %v1299 = vmul.f32 %v989, 0.015625
        %v1300 = vmul.f32 %v991, 0.015625
        %v1301 = vmul.f32 %v993, 0.015625
        %v1302 = vmul.f32 %v995, 0.015625
        %v1303 = vmul.f32 %v997, 0.015625
        %v1304 = vmul.f32 %v999, 0.015625
        %v1305 = vmul.f32 %v1001, 0.015625
        %v1306 = vmul.f32 %v1003, 0.015625
        %v1307 = vmul.f32 %v1005, 0.015625
        %v1308 = vmul.f32 %v1007, 0.015625
        %v1309 = vmul.f32 %v1009, 0.015625
        %v1310 = vmul.f32 %v1011, 0.015625
        %v1311 = vmul.f32 %v1013, 0.015625
        %v1312 = vmul.f32 %v1015, 0.015625
        %v1313 = vmul.f32 %v1017, 0.015625
        %v1314 = vmul.f32 %v1019, 0.015625
        %v1315 = vmul.f32 %v1021, 0.015625
        %v1316 = vmul.f32 %v1023, 0.015625
        %v1317 = vmul.f32 %v1025, 0.015625
        %v1318 = vmul.f32 %v1027, 0.015625
        %v1319 = vmul.f32 %v1029, 0.015625
        %v1320 = vmul.f32 %v1031, 0.015625
        %v1321 = vmul.f32 %v1033, 0.015625
        %v1322 = vmul.f32 %v1035, 0.015625
        %v1323 = vmul.f32 %v1037, 0.015625
        %v1324 = vmul.f32 %v1039, 0.015625
        %v1325 = vmul.f32 %v1041, 0.015625
        %v1326 = vmul.f32 %v1043, 0.015625
        %v1327 = vmul.f32 %v1045, 0.015625
        %v1328 = vmul.f32 %v1047, 0.015625
        %v1329 = vmul.f32 %v1049, 0.015625
        %v1330 = vmul.f32 %v1051, 0.015625
        %v1331 = vmul.f32 %v1053, 0.015625
        %v1332 = vmul.f32 %v1055, 0.015625
        %v1333 = vmul.f32 %v1057, 0.015625
        %v1334 = vmul.f32 %v1059, 0.015625
        %v1335 = vmul.f32 %v1061, 0.015625
        %v1336 = vmul.f32 %v1063, 0.015625
        %v1337 = vmul.f32 %v1065, 0.015625
        %v1338 = vmul.f32 %v1067, 0.015625
        %v1339 = vmul.f32 %v1069, 0.015625
        %v1340 = vmul.f32 %v1071, 0.015625
        %v1341 = vmul.f32 %v1073, 0.015625
        %v1342 = vmul.f32 %v1075, 0.015625
        %v1343 = vmul.f32 %v1077, 0.015625
        %v1344 = vmul.f32 %v1079, 0.015625
        %v1345 = vmul.f32 %v1081, 0.015625
        %v1346 = vmul.f32 %v1083, 0.015625
        %v1347 = vmul.f32 %v1085, 0.015625
        %v1348 = vmul.f32 %v1087, 0.015625
        %v1349 = vmul.f32 %v1089, 0.015625
        %v1350 = vmul.f32 %v1091, 0.015625
        %v1351 = vmul.f32 %v1093, 0.015625
        %v1352 = vmul.f32 %v1095, 0.015625
        %v1353 = vmul.f32 %v1097, 0.015625
        %v1354 = vmul.f32 %v1163, 0.015625
        %v1355 = vmul.f32 %v1165, 0.015625
        %v1356 = vmul.f32 %v1167, 0.015625
        %v1357 = vmul.f32 %v1169, 0.015625
        %v1358 = vmul.f32 %v1171, 0.015625
        %v1359 = vmul.f32 %v1173, 0.015625
        %v1360 = vmul.f32 %v1175, 0.015625
        %v1361 = vmul.f32 %v1177, 0.015625
        %v1362 = vmul.f32 %v1179, 0.015625
        %v1363 = vmul.f32 %v1181, 0.015625
        %v1364 = vmul.f32 %v1183, 0.015625
        %v1365 = vmul.f32 %v1185, 0.015625
        %v1366 = vmul.f32 %v1187, 0.015625
        %v1367 = vmul.f32 %v1189, 0.015625
        %v1368 = vmul.f32 %v1191, 0.015625
        %v1369 = vmul.f32 %v1193, 0.015625
        %v1370 = vmul.f32 %v1195, 0.015625
        %v1371 = vmul.f32 %v1197, 0.015625
        %v1372 = vmul.f32 %v1199, 0.015625
        %v1373 = vmul.f32 %v1201, 0.015625
        %v1374 = vmul.f32 %v1203, 0.015625
        %v1375 = vmul.f32 %v1205, 0.015625
        %v1376 = vmul.f32 %v1207, 0.015625
        %v1377 = vmul.f32 %v1209, 0.015625
        %v1378 = vmul.f32 %v1211, 0.015625
        %v1379 = vmul.f32 %v1213, 0.015625
        %v1380 = vmul.f32 %v1215, 0.015625
        %v1381 = vmul.f32 %v1217, 0.015625
        %v1382 = vmul.f32 %v1219, 0.015625
        %v1383 = vmul.f32 %v1221, 0.015625
        %v1384 = vmul.f32 %v1223, 0.015625
        %v1385 = vmul.f32 %v1225, 0.015625
        %v1386 = vmul.f32 %v1227, 0.015625
        %v1387 = vmul.f32 %v1229, 0.015625
        %v1388 = vmul.f32 %v1231, 0.015625
        %v1389 = vmul.f32 %v1233, 0.015625
        %v1390 = vmul.f32 %v1235, 0.015625
        %v1391 = vmul.f32 %v1237, 0.015625
        %v1392 = vmul.f32 %v1239, 0.015625
        %v1393 = vmul.f32 %v1241, 0.015625
        %v1394 = vmul.f32 %v1243, 0.015625
        %v1395 = vmul.f32 %v1245, 0.015625
        %v1396 = vmul.f32 %v1247, 0.015625
        %v1397 = vmul.f32 %v1249, 0.015625
        %v1398 = vmul.f32 %v1251, 0.015625
        %v1399 = vmul.f32 %v1253, 0.015625
        %v1400 = vmul.f32 %v1255, 0.015625
        %v1401 = vmul.f32 %v1257, 0.015625
        %v1402 = vmul.f32 %v1259, 0.015625
        %v1403 = vmul.f32 %v1261, 0.015625
        %v1404 = vmul.f32 %v1263, 0.015625
        %v1405 = vmul.f32 %v1265, 0.015625
        %v1406 = vmul.f32 %v1267, 0.015625
        %v1407 = vmul.f32 %v1269, 0.015625
        %v1408 = vmul.f32 %v1271, 0.015625
        %v1409 = vmul.f32 %v1273, 0.015625
        %v1410 = vmul.f32 %v1275, 0.015625
        %v1411 = vmul.f32 %v1277, 0.015625
        %v1412 = vmul.f32 %v1279, 0.015625
        %v1413 = vmul.f32 %v1281, 0.015625
        %v1414 = vmul.f32 %v1283, 0.015625
        %v1415 = vmul.f32 %v1285, 0.015625
        %v1416 = vmul.f32 %v1287, 0.015625
        %v1417 = vmul.f32 %v1289, 0.015625
        %v1418 = vmul.f32 %v1290, %v1290
        %v1419 = vmul.f32 %v1291, %v1291
        %v1420 = vmul.f32 %v1292, %v1292
        %v1421 = vmul.f32 %v1293, %v1293
        %v1422 = vmul.f32 %v1294, %v1294
        %v1423 = vmul.f32 %v1295, %v1295
        %v1424 = vmul.f32 %v1296, %v1296
        %v1425 = vmul.f32 %v1297, %v1297
        %v1426 = vmul.f32 %v1298, %v1298
        %v1427 = vmul.f32 %v1299, %v1299
        %v1428 = vmul.f32 %v1300, %v1300
        %v1429 = vmul.f32 %v1301, %v1301
        %v1430 = vmul.f32 %v1302, %v1302
        %v1431 = vmul.f32 %v1303, %v1303
        %v1432 = vmul.f32 %v1304, %v1304
        %v1433 = vmul.f32 %v1305, %v1305
        %v1434 = vmul.f32 %v1306, %v1306
        %v1435 = vmul.f32 %v1307, %v1307
        %v1436 = vmul.f32 %v1308, %v1308
        %v1437 = vmul.f32 %v1309, %v1309
        %v1438 = vmul.f32 %v1310, %v1310
        %v1439 = vmul.f32 %v1311, %v1311
        %v1440 = vmul.f32 %v1312, %v1312
        %v1441 = vmul.f32 %v1313, %v1313
        %v1442 = vmul.f32 %v1314, %v1314
        %v1443 = vmul.f32 %v1315, %v1315
        %v1444 = vmul.f32 %v1316, %v1316
        %v1445 = vmul.f32 %v1317, %v1317
        %v1446 = vmul.f32 %v1318, %v1318
        %v1447 = vmul.f32 %v1319, %v1319
        %v1448 = vmul.f32 %v1320, %v1320
        %v1449 = vmul.f32 %v1321, %v1321
        %v1450 = vmul.f32 %v1322, %v1322
        %v1451 = vmul.f32 %v1323, %v1323
        %v1452 = vmul.f32 %v1324, %v1324
        %v1453 = vmul.f32 %v1325, %v1325
        %v1454 = vmul.f32 %v1326, %v1326
        %v1455 = vmul.f32 %v1327, %v1327
        %v1456 = vmul.f32 %v1328, %v1328
        %v1457 = vmul.f32 %v1329, %v1329
        %v1458 = vmul.f32 %v1330, %v1330
        %v1459 = vmul.f32 %v1331, %v1331
        %v1460 = vmul.f32 %v1332, %v1332
        %v1461 = vmul.f32 %v1333, %v1333
        %v1462 = vmul.f32 %v1334, %v1334
        %v1463 = vmul.f32 %v1335, %v1335
        %v1464 = vmul.f32 %v1336, %v1336
        %v1465 = vmul.f32 %v1337, %v1337
        %v1466 = vmul.f32 %v1338, %v1338
        %v1467 = vmul.f32 %v1339, %v1339
        %v1468 = vmul.f32 %v1340, %v1340
        %v1469 = vmul.f32 %v1341, %v1341
        %v1470 = vmul.f32 %v1342, %v1342
        %v1471 = vmul.f32 %v1343, %v1343
        %v1472 = vmul.f32 %v1344, %v1344
        %v1473 = vmul.f32 %v1345, %v1345
        %v1474 = vmul.f32 %v1346, %v1346
        %v1475 = vmul.f32 %v1347, %v1347
        %v1476 = vmul.f32 %v1348, %v1348
        %v1477 = vmul.f32 %v1349, %v1349
        %v1478 = vmul.f32 %v1350, %v1350
        %v1479 = vmul.f32 %v1351, %v1351
        %v1480 = vmul.f32 %v1352, %v1352
        %v1481 = vmul.f32 %v1353, %v1353
        %v1482 = vsub.f32 %v1354, %v1418
        %v1483 = vsub.f32 %v1355, %v1419
        %v1484 = vsub.f32 %v1356, %v1420
        %v1485 = vsub.f32 %v1357, %v1421
        %v1486 = vsub.f32 %v1358, %v1422
        %v1487 = vsub.f32 %v1359, %v1423
        %v1488 = vsub.f32 %v1360, %v1424
        %v1489 = vsub.f32 %v1361, %v1425
        %v1490 = vsub.f32 %v1362, %v1426
        %v1491 = vsub.f32 %v1363, %v1427
        %v1492 = vsub.f32 %v1364, %v1428
        %v1493 = vsub.f32 %v1365, %v1429
        %v1494 = vsub.f32 %v1366, %v1430
        %v1495 = vsub.f32 %v1367, %v1431
        %v1496 = vsub.f32 %v1368, %v1432
        %v1497 = vsub.f32 %v1369, %v1433
        %v1498 = vsub.f32 %v1370, %v1434
        %v1499 = vsub.f32 %v1371, %v1435
        %v1500 = vsub.f32 %v1372, %v1436
        %v1501 = vsub.f32 %v1373, %v1437
        %v1502 = vsub.f32 %v1374, %v1438
        %v1503 = vsub.f32 %v1375, %v1439
        %v1504 = vsub.f32 %v1376, %v1440
        %v1505 = vsub.f32 %v1377, %v1441
        %v1506 = vsub.f32 %v1378, %v1442
        %v1507 = vsub.f32 %v1379, %v1443
        %v1508 = vsub.f32 %v1380, %v1444
        %v1509 = vsub.f32 %v1381, %v1445
        %v1510 = vsub.f32 %v1382, %v1446
        %v1511 = vsub.f32 %v1383, %v1447
        %v1512 = vsub.f32 %v1384, %v1448
        %v1513 = vsub.f32 %v1385, %v1449
        %v1514 = vsub.f32 %v1386, %v1450
        %v1515 = vsub.f32 %v1387, %v1451
        %v1516 = vsub.f32 %v1388, %v1452
        %v1517 = vsub.f32 %v1389, %v1453
        %v1518 = vsub.f32 %v1390, %v1454
        %v1519 = vsub.f32 %v1391, %v1455
        %v1520 = vsub.f32 %v1392, %v1456
        %v1521 = vsub.f32 %v1393, %v1457
        %v1522 = vsub.f32 %v1394, %v1458
        %v1523 = vsub.f32 %v1395, %v1459
        %v1524 = vsub.f32 %v1396, %v1460
        %v1525 = vsub.f32 %v1397, %v1461
        %v1526 = vsub.f32 %v1398, %v1462
        %v1527 = vsub.f32 %v1399, %v1463
        %v1528 = vsub.f32 %v1400, %v1464
        %v1529 = vsub.f32 %v1401, %v1465
        %v1530 = vsub.f32 %v1402, %v1466
        %v1531 = vsub.f32 %v1403, %v1467
        %v1532 = vsub.f32 %v1404, %v1468
        %v1533 = vsub.f32 %v1405, %v1469
        %v1534 = vsub.f32 %v1406, %v1470
        %v1535 = vsub.f32 %v1407, %v1471
        %v1536 = vsub.f32 %v1408, %v1472
        %v1537 = vsub.f32 %v1409, %v1473
        %v1538 = vsub.f32 %v1410, %v1474
        %v1539 = vsub.f32 %v1411, %v1475
        %v1540 = vsub.f32 %v1412, %v1476
        %v1541 = vsub.f32 %v1413, %v1477
        %v1542 = vsub.f32 %v1414, %v1478
        %v1543 = vsub.f32 %v1415, %v1479
        %v1544 = vsub.f32 %v1416, %v1480
        %v1545 = vsub.f32 %v1417, %v1481
        %v1546 = vmax.f32 %v1482, 0.0
        %v1547 = vmax.f32 %v1483, 0.0
        %v1548 = vmax.f32 %v1484, 0.0
        %v1549 = vmax.f32 %v1485, 0.0
        %v1550 = vmax.f32 %v1486, 0.0
        %v1551 = vmax.f32 %v1487, 0.0
        %v1552 = vmax.f32 %v1488, 0.0
        %v1553 = vmax.f32 %v1489, 0.0
        %v1554 = vmax.f32 %v1490, 0.0
        %v1555 = vmax.f32 %v1491, 0.0
        %v1556 = vmax.f32 %v1492, 0.0
        %v1557 = vmax.f32 %v1493, 0.0
        %v1558 = vmax.f32 %v1494, 0.0
        %v1559 = vmax.f32 %v1495, 0.0
        %v1560 = vmax.f32 %v1496, 0.0
        %v1561 = vmax.f32 %v1497, 0.0
        %v1562 = vmax.f32 %v1498, 0.0
        %v1563 = vmax.f32 %v1499, 0.0
        %v1564 = vmax.f32 %v1500, 0.0
        %v1565 = vmax.f32 %v1501, 0.0
        %v1566 = vmax.f32 %v1502, 0.0
        %v1567 = vmax.f32 %v1503, 0.0
        %v1568 = vmax.f32 %v1504, 0.0
        %v1569 = vmax.f32 %v1505, 0.0
        %v1570 = vmax.f32 %v1506, 0.0
        %v1571 = vmax.f32 %v1507, 0.0
        %v1572 = vmax.f32 %v1508, 0.0
        %v1573 = vmax.f32 %v1509, 0.0
        %v1574 = vmax.f32 %v1510, 0.0
        %v1575 = vmax.f32 %v1511, 0.0
        %v1576 = vmax.f32 %v1512, 0.0
        %v1577 = vmax.f32 %v1513, 0.0
        %v1578 = vmax.f32 %v1514, 0.0
        %v1579 = vmax.f32 %v1515, 0.0
        %v1580 = vmax.f32 %v1516, 0.0
        %v1581 = vmax.f32 %v1517, 0.0
        %v1582 = vmax.f32 %v1518, 0.0
        %v1583 = vmax.f32 %v1519, 0.0
        %v1584 = vmax.f32 %v1520, 0.0
        %v1585 = vmax.f32 %v1521, 0.0
        %v1586 = vmax.f32 %v1522, 0.0
        %v1587 = vmax.f32 %v1523, 0.0
        %v1588 = vmax.f32 %v1524, 0.0
        %v1589 = vmax.f32 %v1525, 0.0
        %v1590 = vmax.f32 %v1526, 0.0
        %v1591 = vmax.f32 %v1527, 0.0
        %v1592 = vmax.f32 %v1528, 0.0
        %v1593 = vmax.f32 %v1529, 0.0
        %v1594 = vmax.f32 %v1530, 0.0
        %v1595 = vmax.f32 %v1531, 0.0
        %v1596 = vmax.f32 %v1532, 0.0
        %v1597 = vmax.f32 %v1533, 0.0
        %v1598 = vmax.f32 %v1534, 0.0
        %v1599 = vmax.f32 %v1535, 0.0
        %v1600 = vmax.f32 %v1536, 0.0
        %v1601 = vmax.f32 %v1537, 0.0
        %v1602 = vmax.f32 %v1538, 0.0
        %v1603 = vmax.f32 %v1539, 0.0
        %v1604 = vmax.f32 %v1540, 0.0
        %v1605 = vmax.f32 %v1541, 0.0
        %v1606 = vmax.f32 %v1542, 0.0
        %v1607 = vmax.f32 %v1543, 0.0
        %v1608 = vmax.f32 %v1544, 0.0
        %v1609 = vmax.f32 %v1545, 0.0
        %v1610 = vadd.f32 %v1546, 1e-05
        %v1611 = vadd.f32 %v1547, 1e-05
        %v1612 = vadd.f32 %v1548, 1e-05
        %v1613 = vadd.f32 %v1549, 1e-05
        %v1614 = vadd.f32 %v1550, 1e-05
        %v1615 = vadd.f32 %v1551, 1e-05
        %v1616 = vadd.f32 %v1552, 1e-05
        %v1617 = vadd.f32 %v1553, 1e-05
        %v1618 = vadd.f32 %v1554, 1e-05
        %v1619 = vadd.f32 %v1555, 1e-05
        %v1620 = vadd.f32 %v1556, 1e-05
        %v1621 = vadd.f32 %v1557, 1e-05
        %v1622 = vadd.f32 %v1558, 1e-05
        %v1623 = vadd.f32 %v1559, 1e-05
        %v1624 = vadd.f32 %v1560, 1e-05
        %v1625 = vadd.f32 %v1561, 1e-05
        %v1626 = vadd.f32 %v1562, 1e-05
        %v1627 = vadd.f32 %v1563, 1e-05
        %v1628 = vadd.f32 %v1564, 1e-05
        %v1629 = vadd.f32 %v1565, 1e-05
        %v1630 = vadd.f32 %v1566, 1e-05
        %v1631 = vadd.f32 %v1567, 1e-05
        %v1632 = vadd.f32 %v1568, 1e-05
        %v1633 = vadd.f32 %v1569, 1e-05
        %v1634 = vadd.f32 %v1570, 1e-05
        %v1635 = vadd.f32 %v1571, 1e-05
        %v1636 = vadd.f32 %v1572, 1e-05
        %v1637 = vadd.f32 %v1573, 1e-05
        %v1638 = vadd.f32 %v1574, 1e-05
        %v1639 = vadd.f32 %v1575, 1e-05
        %v1640 = vadd.f32 %v1576, 1e-05
        %v1641 = vadd.f32 %v1577, 1e-05
        %v1642 = vadd.f32 %v1578, 1e-05
        %v1643 = vadd.f32 %v1579, 1e-05
        %v1644 = vadd.f32 %v1580, 1e-05
        %v1645 = vadd.f32 %v1581, 1e-05
        %v1646 = vadd.f32 %v1582, 1e-05
        %v1647 = vadd.f32 %v1583, 1e-05
        %v1648 = vadd.f32 %v1584, 1e-05
        %v1649 = vadd.f32 %v1585, 1e-05
        %v1650 = vadd.f32 %v1586, 1e-05
        %v1651 = vadd.f32 %v1587, 1e-05
        %v1652 = vadd.f32 %v1588, 1e-05
        %v1653 = vadd.f32 %v1589, 1e-05
        %v1654 = vadd.f32 %v1590, 1e-05
        %v1655 = vadd.f32 %v1591, 1e-05
        %v1656 = vadd.f32 %v1592, 1e-05
        %v1657 = vadd.f32 %v1593, 1e-05
        %v1658 = vadd.f32 %v1594, 1e-05
        %v1659 = vadd.f32 %v1595, 1e-05
        %v1660 = vadd.f32 %v1596, 1e-05
        %v1661 = vadd.f32 %v1597, 1e-05
        %v1662 = vadd.f32 %v1598, 1e-05
        %v1663 = vadd.f32 %v1599, 1e-05
        %v1664 = vadd.f32 %v1600, 1e-05
        %v1665 = vadd.f32 %v1601, 1e-05
        %v1666 = vadd.f32 %v1602, 1e-05
        %v1667 = vadd.f32 %v1603, 1e-05
        %v1668 = vadd.f32 %v1604, 1e-05
        %v1669 = vadd.f32 %v1605, 1e-05
        %v1670 = vadd.f32 %v1606, 1e-05
        %v1671 = vadd.f32 %v1607, 1e-05
        %v1672 = vadd.f32 %v1608, 1e-05
        %v1673 = vadd.f32 %v1609, 1e-05
        %v1674 = vrsqrt.pop %v1610
        %v1675 = vrsqrt.pop %v1611
        %v1676 = vrsqrt.pop %v1612
        %v1677 = vrsqrt.pop %v1613
        %v1678 = vrsqrt.pop %v1614
        %v1679 = vrsqrt.pop %v1615
        %v1680 = vrsqrt.pop %v1616
        %v1681 = vrsqrt.pop %v1617
        %v1682 = vrsqrt.pop %v1618
        %v1683 = vrsqrt.pop %v1619
        %v1684 = vrsqrt.pop %v1620
        %v1685 = vrsqrt.pop %v1621
        %v1686 = vrsqrt.pop %v1622
        %v1687 = vrsqrt.pop %v1623
        %v1688 = vrsqrt.pop %v1624
        %v1689 = vrsqrt.pop %v1625
        %v1690 = vrsqrt.pop %v1626
        %v1691 = vrsqrt.pop %v1627
        %v1692 = vrsqrt.pop %v1628
        %v1693 = vrsqrt.pop %v1629
        %v1694 = vrsqrt.pop %v1630
        %v1695 = vrsqrt.pop %v1631
        %v1696 = vrsqrt.pop %v1632
        %v1697 = vrsqrt.pop %v1633
        %v1698 = vrsqrt.pop %v1634
        %v1699 = vrsqrt.pop %v1635
        %v1700 = vrsqrt.pop %v1636
        %v1701 = vrsqrt.pop %v1637
        %v1702 = vrsqrt.pop %v1638
        %v1703 = vrsqrt.pop %v1639
        %v1704 = vrsqrt.pop %v1640
        %v1705 = vrsqrt.pop %v1641
        %v1706 = vrsqrt.pop %v1642
        %v1707 = vrsqrt.pop %v1643
        %v1708 = vrsqrt.pop %v1644
        %v1709 = vrsqrt.pop %v1645
        %v1710 = vrsqrt.pop %v1646
        %v1711 = vrsqrt.pop %v1647
        %v1712 = vrsqrt.pop %v1648
        %v1713 = vrsqrt.pop %v1649
        %v1714 = vrsqrt.pop %v1650
        %v1715 = vrsqrt.pop %v1651
        %v1716 = vrsqrt.pop %v1652
        %v1717 = vrsqrt.pop %v1653
        %v1718 = vrsqrt.pop %v1654
        %v1719 = vrsqrt.pop %v1655
        %v1720 = vrsqrt.pop %v1656
        %v1721 = vrsqrt.pop %v1657
        %v1722 = vrsqrt.pop %v1658
        %v1723 = vrsqrt.pop %v1659
        %v1724 = vrsqrt.pop %v1660
        %v1725 = vrsqrt.pop %v1661
        %v1726 = vrsqrt.pop %v1662
        %v1727 = vrsqrt.pop %v1663
        %v1728 = vrsqrt.pop %v1664
        %v1729 = vrsqrt.pop %v1665
        %v1730 = vrsqrt.pop %v1666
        %v1731 = vrsqrt.pop %v1667
        %v1732 = vrsqrt.pop %v1668
        %v1733 = vrsqrt.pop %v1669
        %v1734 = vrsqrt.pop %v1670
        %v1735 = vrsqrt.pop %v1671
        %v1736 = vrsqrt.pop %v1672
        %v1737 = vrsqrt.pop %v1673
        %v1738 = vlaneseq
        %v1739 = vshrl.u32 %v1738, 7
        %v1740 = vsub.s32 0, %v1739
        %v1741 = vrot.slane %v968, %v1740
        %v1742 = vmul.f32 %v1741, %v1674
        %v1743 = vmul.f32 %v1741, %v1675
        %v1744 = vmul.f32 %v1741, %v1676
        %v1745 = vmul.f32 %v1741, %v1677
        %v1746 = vmul.f32 %v1741, %v1678
        %v1747 = vmul.f32 %v1741, %v1679
        %v1748 = vmul.f32 %v1741, %v1680
        %v1749 = vmul.f32 %v1741, %v1681
        %v1750 = vmul.f32 %v1741, %v1682
        %v1751 = vmul.f32 %v1741, %v1683
        %v1752 = vmul.f32 %v1741, %v1684
        %v1753 = vmul.f32 %v1741, %v1685
        %v1754 = vmul.f32 %v1741, %v1686
        %v1755 = vmul.f32 %v1741, %v1687
        %v1756 = vmul.f32 %v1741, %v1688
        %v1757 = vmul.f32 %v1741, %v1689
        %v1758 = vmul.f32 %v1741, %v1690
        %v1759 = vmul.f32 %v1741, %v1691
        %v1760 = vmul.f32 %v1741, %v1692
        %v1761 = vmul.f32 %v1741, %v1693
        %v1762 = vmul.f32 %v1741, %v1694
        %v1763 = vmul.f32 %v1741, %v1695
        %v1764 = vmul.f32 %v1741, %v1696
        %v1765 = vmul.f32 %v1741, %v1697
        %v1766 = vmul.f32 %v1741, %v1698
        %v1767 = vmul.f32 %v1741, %v1699
        %v1768 = vmul.f32 %v1741, %v1700
        %v1769 = vmul.f32 %v1741, %v1701
        %v1770 = vmul.f32 %v1741, %v1702
        %v1771 = vmul.f32 %v1741, %v1703
        %v1772 = vmul.f32 %v1741, %v1704
        %v1773 = vmul.f32 %v1741, %v1705
        %v1774 = vmul.f32 %v1741, %v1706
        %v1775 = vmul.f32 %v1741, %v1707
        %v1776 = vmul.f32 %v1741, %v1708
        %v1777 = vmul.f32 %v1741, %v1709
        %v1778 = vmul.f32 %v1741, %v1710
        %v1779 = vmul.f32 %v1741, %v1711
        %v1780 = vmul.f32 %v1741, %v1712
        %v1781 = vmul.f32 %v1741, %v1713
        %v1782 = vmul.f32 %v1741, %v1714
        %v1783 = vmul.f32 %v1741, %v1715
        %v1784 = vmul.f32 %v1741, %v1716
        %v1785 = vmul.f32 %v1741, %v1717
        %v1786 = vmul.f32 %v1741, %v1718
        %v1787 = vmul.f32 %v1741, %v1719
        %v1788 = vmul.f32 %v1741, %v1720
        %v1789 = vmul.f32 %v1741, %v1721
        %v1790 = vmul.f32 %v1741, %v1722
        %v1791 = vmul.f32 %v1741, %v1723
        %v1792 = vmul.f32 %v1741, %v1724
        %v1793 = vmul.f32 %v1741, %v1725
        %v1794 = vmul.f32 %v1741, %v1726
        %v1795 = vmul.f32 %v1741, %v1727
        %v1796 = vmul.f32 %v1741, %v1728
        %v1797 = vmul.f32 %v1741, %v1729
        %v1798 = vmul.f32 %v1741, %v1730
        %v1799 = vmul.f32 %v1741, %v1731
        %v1800 = vmul.f32 %v1741, %v1732
        %v1801 = vmul.f32 %v1741, %v1733
        %v1802 = vmul.f32 %v1741, %v1734
        %v1803 = vmul.f32 %v1741, %v1735
        %v1804 = vmul.f32 %v1741, %v1736
        %v1805 = vmul.f32 %v1741, %v1737
        %v1806 = vsub.f32 %v904, %v1290
        %v1807 = vsub.f32 %v905, %v1291
        %v1808 = vsub.f32 %v906, %v1292
        %v1809 = vsub.f32 %v907, %v1293
        %v1810 = vsub.f32 %v908, %v1294
        %v1811 = vsub.f32 %v909, %v1295
        %v1812 = vsub.f32 %v910, %v1296
        %v1813 = vsub.f32 %v911, %v1297
        %v1814 = vsub.f32 %v912, %v1298
        %v1815 = vsub.f32 %v913, %v1299
        %v1816 = vsub.f32 %v914, %v1300
        %v1817 = vsub.f32 %v915, %v1301
        %v1818 = vsub.f32 %v916, %v1302
        %v1819 = vsub.f32 %v917, %v1303
        %v1820 = vsub.f32 %v918, %v1304
        %v1821 = vsub.f32 %v919, %v1305
        %v1822 = vsub.f32 %v920, %v1306
        %v1823 = vsub.f32 %v921, %v1307
        %v1824 = vsub.f32 %v922, %v1308
        %v1825 = vsub.f32 %v923, %v1309
        %v1826 = vsub.f32 %v924, %v1310
        %v1827 = vsub.f32 %v925, %v1311
        %v1828 = vsub.f32 %v926, %v1312
        %v1829 = vsub.f32 %v927, %v1313
        %v1830 = vsub.f32 %v928, %v1314
        %v1831 = vsub.f32 %v929, %v1315
        %v1832 = vsub.f32 %v930, %v1316
        %v1833 = vsub.f32 %v931, %v1317
        %v1834 = vsub.f32 %v932, %v1318
        %v1835 = vsub.f32 %v933, %v1319
        %v1836 = vsub.f32 %v934, %v1320
        %v1837 = vsub.f32 %v935, %v1321
        %v1838 = vsub.f32 %v936, %v1322
        %v1839 = vsub.f32 %v937, %v1323
        %v1840 = vsub.f32 %v938, %v1324
        %v1841 = vsub.f32 %v939, %v1325
        %v1842 = vsub.f32 %v940, %v1326
        %v1843 = vsub.f32 %v941, %v1327
        %v1844 = vsub.f32 %v942, %v1328
        %v1845 = vsub.f32 %v943, %v1329
        %v1846 = vsub.f32 %v944, %v1330
        %v1847 = vsub.f32 %v945, %v1331
        %v1848 = vsub.f32 %v946, %v1332
        %v1849 = vsub.f32 %v947, %v1333
        %v1850 = vsub.f32 %v948, %v1334
        %v1851 = vsub.f32 %v949, %v1335
        %v1852 = vsub.f32 %v950, %v1336
        %v1853 = vsub.f32 %v951, %v1337
        %v1854 = vsub.f32 %v952, %v1338
        %v1855 = vsub.f32 %v953, %v1339
        %v1856 = vsub.f32 %v954, %v1340
        %v1857 = vsub.f32 %v955, %v1341
        %v1858 = vsub.f32 %v956, %v1342
        %v1859 = vsub.f32 %v957, %v1343
        %v1860 = vsub.f32 %v958, %v1344
        %v1861 = vsub.f32 %v959, %v1345
        %v1862 = vsub.f32 %v960, %v1346
        %v1863 = vsub.f32 %v961, %v1347
        %v1864 = vsub.f32 %v962, %v1348
        %v1865 = vsub.f32 %v963, %v1349
        %v1866 = vsub.f32 %v964, %v1350
        %v1867 = vsub.f32 %v965, %v1351
        %v1868 = vsub.f32 %v966, %v1352
        %v1869 = vsub.f32 %v967, %v1353
        %v1870 = vmul.f32 %v1806, %v1742
        %v1871 = vmul.f32 %v1807, %v1743
        %v1872 = vmul.f32 %v1808, %v1744
        %v1873 = vmul.f32 %v1809, %v1745
        %v1874 = vmul.f32 %v1810, %v1746
        %v1875 = vmul.f32 %v1811, %v1747
        %v1876 = vmul.f32 %v1812, %v1748
        %v1877 = vmul.f32 %v1813, %v1749
        %v1878 = vmul.f32 %v1814, %v1750
        %v1879 = vmul.f32 %v1815, %v1751
        %v1880 = vmul.f32 %v1816, %v1752
        %v1881 = vmul.f32 %v1817, %v1753
        %v1882 = vmul.f32 %v1818, %v1754
        %v1883 = vmul.f32 %v1819, %v1755
        %v1884 = vmul.f32 %v1820, %v1756
        %v1885 = vmul.f32 %v1821, %v1757
        %v1886 = vmul.f32 %v1822, %v1758
        %v1887 = vmul.f32 %v1823, %v1759
        %v1888 = vmul.f32 %v1824, %v1760
        %v1889 = vmul.f32 %v1825, %v1761
        %v1890 = vmul.f32 %v1826, %v1762
        %v1891 = vmul.f32 %v1827, %v1763
        %v1892 = vmul.f32 %v1828, %v1764
        %v1893 = vmul.f32 %v1829, %v1765
        %v1894 = vmul.f32 %v1830, %v1766
        %v1895 = vmul.f32 %v1831, %v1767
        %v1896 = vmul.f32 %v1832, %v1768
        %v1897 = vmul.f32 %v1833, %v1769
        %v1898 = vmul.f32 %v1834, %v1770
        %v1899 = vmul.f32 %v1835, %v1771
        %v1900 = vmul.f32 %v1836, %v1772
        %v1901 = vmul.f32 %v1837, %v1773
        %v1902 = vmul.f32 %v1838, %v1774
        %v1903 = vmul.f32 %v1839, %v1775
        %v1904 = vmul.f32 %v1840, %v1776
        %v1905 = vmul.f32 %v1841, %v1777
        %v1906 = vmul.f32 %v1842, %v1778
        %v1907 = vmul.f32 %v1843, %v1779
        %v1908 = vmul.f32 %v1844, %v1780
        %v1909 = vmul.f32 %v1845, %v1781
        %v1910 = vmul.f32 %v1846, %v1782
        %v1911 = vmul.f32 %v1847, %v1783
        %v1912 = vmul.f32 %v1848, %v1784
        %v1913 = vmul.f32 %v1849, %v1785
        %v1914 = vmul.f32 %v1850, %v1786
        %v1915 = vmul.f32 %v1851, %v1787
        %v1916 = vmul.f32 %v1852, %v1788
        %v1917 = vmul.f32 %v1853, %v1789
        %v1918 = vmul.f32 %v1854, %v1790
        %v1919 = vmul.f32 %v1855, %v1791
        %v1920 = vmul.f32 %v1856, %v1792
        %v1921 = vmul.f32 %v1857, %v1793
        %v1922 = vmul.f32 %v1858, %v1794
        %v1923 = vmul.f32 %v1859, %v1795
        %v1924 = vmul.f32 %v1860, %v1796
        %v1925 = vmul.f32 %v1861, %v1797
        %v1926 = vmul.f32 %v1862, %v1798
        %v1927 = vmul.f32 %v1863, %v1799
        %v1928 = vmul.f32 %v1864, %v1800
        %v1929 = vmul.f32 %v1865, %v1801
        %v1930 = vmul.f32 %v1866, %v1802
        %v1931 = vmul.f32 %v1867, %v1803
        %v1932 = vmul.f32 %v1868, %v1804
        %v1933 = vmul.f32 %v1869, %v1805
        %v1934 = vlaneseq
        %v1935 = vshrl.u32 %v1934, 7
        %v1936 = vsub.s32 0, %v1935
        %v1937 = vrot.slane %v969, %v1936
        %v1938 = vadd.f32 %v1870, %v1937
        %v1939 = vadd.f32 %v1871, %v1937
        %v1940 = vadd.f32 %v1872, %v1937
        %v1941 = vadd.f32 %v1873, %v1937
        %v1942 = vadd.f32 %v1874, %v1937
        %v1943 = vadd.f32 %v1875, %v1937
        %v1944 = vadd.f32 %v1876, %v1937
        %v1945 = vadd.f32 %v1877, %v1937
        %v1946 = vadd.f32 %v1878, %v1937
        %v1947 = vadd.f32 %v1879, %v1937
        %v1948 = vadd.f32 %v1880, %v1937
        %v1949 = vadd.f32 %v1881, %v1937
        %v1950 = vadd.f32 %v1882, %v1937
        %v1951 = vadd.f32 %v1883, %v1937
        %v1952 = vadd.f32 %v1884, %v1937
        %v1953 = vadd.f32 %v1885, %v1937
        %v1954 = vadd.f32 %v1886, %v1937
        %v1955 = vadd.f32 %v1887, %v1937
        %v1956 = vadd.f32 %v1888, %v1937
        %v1957 = vadd.f32 %v1889, %v1937
        %v1958 = vadd.f32 %v1890, %v1937
        %v1959 = vadd.f32 %v1891, %v1937
        %v1960 = vadd.f32 %v1892, %v1937
        %v1961 = vadd.f32 %v1893, %v1937
        %v1962 = vadd.f32 %v1894, %v1937
        %v1963 = vadd.f32 %v1895, %v1937
        %v1964 = vadd.f32 %v1896, %v1937
        %v1965 = vadd.f32 %v1897, %v1937
        %v1966 = vadd.f32 %v1898, %v1937
        %v1967 = vadd.f32 %v1899, %v1937
        %v1968 = vadd.f32 %v1900, %v1937
        %v1969 = vadd.f32 %v1901, %v1937
        %v1970 = vadd.f32 %v1902, %v1937
        %v1971 = vadd.f32 %v1903, %v1937
        %v1972 = vadd.f32 %v1904, %v1937
        %v1973 = vadd.f32 %v1905, %v1937
        %v1974 = vadd.f32 %v1906, %v1937
        %v1975 = vadd.f32 %v1907, %v1937
        %v1976 = vadd.f32 %v1908, %v1937
        %v1977 = vadd.f32 %v1909, %v1937
        %v1978 = vadd.f32 %v1910, %v1937
        %v1979 = vadd.f32 %v1911, %v1937
        %v1980 = vadd.f32 %v1912, %v1937
        %v1981 = vadd.f32 %v1913, %v1937
        %v1982 = vadd.f32 %v1914, %v1937
        %v1983 = vadd.f32 %v1915, %v1937
        %v1984 = vadd.f32 %v1916, %v1937
        %v1985 = vadd.f32 %v1917, %v1937
        %v1986 = vadd.f32 %v1918, %v1937
        %v1987 = vadd.f32 %v1919, %v1937
        %v1988 = vadd.f32 %v1920, %v1937
        %v1989 = vadd.f32 %v1921, %v1937
        %v1990 = vadd.f32 %v1922, %v1937
        %v1991 = vadd.f32 %v1923, %v1937
        %v1992 = vadd.f32 %v1924, %v1937
        %v1993 = vadd.f32 %v1925, %v1937
        %v1994 = vadd.f32 %v1926, %v1937
        %v1995 = vadd.f32 %v1927, %v1937
        %v1996 = vadd.f32 %v1928, %v1937
        %v1997 = vadd.f32 %v1929, %v1937
        %v1998 = vadd.f32 %v1930, %v1937
        %v1999 = vadd.f32 %v1931, %v1937
        %v2000 = vadd.f32 %v1932, %v1937
        %v2001 = vadd.f32 %v1933, %v1937
        %v2002 = vpack.c.bf16 %v1939, %v1938
        %v2003 = vpack.c.bf16 %v1941, %v1940
        %v2004 = vpack.c.bf16 %v1943, %v1942
        %v2005 = vpack.c.bf16 %v1945, %v1944
        %v2006 = vpack.c.bf16 %v1947, %v1946
        %v2007 = vpack.c.bf16 %v1949, %v1948
        %v2008 = vpack.c.bf16 %v1951, %v1950
        %v2009 = vpack.c.bf16 %v1953, %v1952
        %v2010 = vpack.c.bf16 %v1955, %v1954
        %v2011 = vpack.c.bf16 %v1957, %v1956
        %v2012 = vpack.c.bf16 %v1959, %v1958
        %v2013 = vpack.c.bf16 %v1961, %v1960
        %v2014 = vpack.c.bf16 %v1963, %v1962
        %v2015 = vpack.c.bf16 %v1965, %v1964
        %v2016 = vpack.c.bf16 %v1967, %v1966
        %v2017 = vpack.c.bf16 %v1969, %v1968
        %v2018 = vpack.c.bf16 %v1971, %v1970
        %v2019 = vpack.c.bf16 %v1973, %v1972
        %v2020 = vpack.c.bf16 %v1975, %v1974
        %v2021 = vpack.c.bf16 %v1977, %v1976
        %v2022 = vpack.c.bf16 %v1979, %v1978
        %v2023 = vpack.c.bf16 %v1981, %v1980
        %v2024 = vpack.c.bf16 %v1983, %v1982
        %v2025 = vpack.c.bf16 %v1985, %v1984
        %v2026 = vpack.c.bf16 %v1987, %v1986
        %v2027 = vpack.c.bf16 %v1989, %v1988
        %v2028 = vpack.c.bf16 %v1991, %v1990
        %v2029 = vpack.c.bf16 %v1993, %v1992
        %v2030 = vpack.c.bf16 %v1995, %v1994
        %v2031 = vpack.c.bf16 %v1997, %v1996
        %v2032 = vpack.c.bf16 %v1999, %v1998
        %v2033 = vpack.c.bf16 %v2001, %v2000
        %v2034 = vld [vmem:[#allocation7] sm:$0xf]
        %v2035 = vld [vmem:[#allocation7 + $0x4] sm:$0xf]
        %v2036 = vld [vmem:[#allocation7 + $0x8] sm:$0xf]
        %v2037 = vld [vmem:[#allocation7 + $0xc] sm:$0xf]
        %v2038 = vld [vmem:[#allocation7 + $0x10] sm:$0xf]
        %v2039 = vld [vmem:[#allocation7 + $0x14] sm:$0xf]
        %v2040 = vld [vmem:[#allocation7 + $0x18] sm:$0xf]
        %v2041 = vld [vmem:[#allocation7 + $0x1c] sm:$0xf]
        %v2042 = vld [vmem:[#allocation7 + $0x20] sm:$0xf]
        %v2043 = vld [vmem:[#allocation7 + $0x24] sm:$0xf]
        %v2044 = vld [vmem:[#allocation7 + $0x28] sm:$0xf]
        %v2045 = vld [vmem:[#allocation7 + $0x2c] sm:$0xf]
        %v2046 = vld [vmem:[#allocation7 + $0x30] sm:$0xf]
        %v2047 = vld [vmem:[#allocation7 + $0x34] sm:$0xf]
        %v2048 = vld [vmem:[#allocation7 + $0x38] sm:$0xf]
        %v2049 = vld [vmem:[#allocation7 + $0x3c] sm:$0xf]
        %v2050 = vld [vmem:[%s4 + $0x3] sm:$0x1]
        %v2051 = vlaneseq
        %v2052 = vshrl.u32 %v2051, 7
        %v2053 = vsub.s32 0, %v2052
        %v2054 = vrot.slane %v2050, %v2053
        %v2071 = vunpack.c.l.b16 %v2034
        %v2072 = vunpack.c.l.b16 %v2035
        %v2073 = vunpack.c.l.b16 %v2036
        %v2074 = vunpack.c.l.b16 %v2037
        %v2075 = vunpack.c.l.b16 %v2038
        %v2076 = vunpack.c.l.b16 %v2039
        %v2077 = vunpack.c.l.b16 %v2040
        %v2078 = vunpack.c.l.b16 %v2041
        %v2079 = vunpack.c.l.b16 %v2042
        %v2080 = vunpack.c.l.b16 %v2043
        %v2081 = vunpack.c.l.b16 %v2044
        %v2082 = vunpack.c.l.b16 %v2045
        %v2083 = vunpack.c.l.b16 %v2046
        %v2084 = vunpack.c.l.b16 %v2047
        %v2085 = vunpack.c.l.b16 %v2048
        %v2086 = vunpack.c.l.b16 %v2049
        %v2087 = vpack.c.b16 %v2072, %v2071
        %v2088 = vpack.c.b16 %v2074, %v2073
        %v2089 = vpack.c.b16 %v2076, %v2075
        %v2090 = vpack.c.b16 %v2078, %v2077
        %v2091 = vpack.c.b16 %v2080, %v2079
        %v2092 = vpack.c.b16 %v2082, %v2081
        %v2093 = vpack.c.b16 %v2084, %v2083
        %v2094 = vpack.c.b16 %v2086, %v2085
        %2103 = vmatprep.subr.bf16.mxu0 0
        %2104 = vmatpush1.bf16.msra.mxu0 %v2087
        %2105 = vmatprep.subr.bf16.mxu0 0
        %2106 = vmatpush1.bf16.msra.mxu0 %v2088
        %2107 = vmatprep.subr.bf16.mxu0 0
        %2108 = vmatpush1.bf16.msra.mxu0 %v2089
        %2109 = vmatprep.subr.bf16.mxu0 0
        %2110 = vmatpush1.bf16.msra.mxu0 %v2090
        %2111 = vmatprep.subr.bf16.mxu0 0
        %2112 = vmatpush1.bf16.msra.mxu0 %v2091
        %2113 = vmatprep.subr.bf16.mxu0 0
        %2114 = vmatpush1.bf16.msra.mxu0 %v2092
        %2115 = vmatprep.subr.bf16.mxu0 0
        %2116 = vmatpush1.bf16.msra.mxu0 %v2093
        %2117 = vmatprep.subr.bf16.mxu0 0
        %2118 = vmatpush1.bf16.msra.mxu0 %v2094
        %2119 = vmatprep.subr.bf16.mxu0 0
        %2120 = vmatpush1.bf16.msra.mxu0 0
        %2121 = vmatprep.subr.bf16.mxu0 0
        %2122 = vmatpush1.bf16.msra.mxu0 0
        %2123 = vmatprep.subr.bf16.mxu0 0
        %2124 = vmatpush1.bf16.msra.mxu0 0
        %2125 = vmatprep.subr.bf16.mxu0 0
        %2126 = vmatpush1.bf16.msra.mxu0 0
        %2127 = vmatprep.subr.bf16.mxu0 0
        %2128 = vmatpush1.bf16.msra.mxu0 0
        %2129 = vmatprep.subr.bf16.mxu0 0
        %2130 = vmatpush1.bf16.msra.mxu0 0
        %2131 = vmatprep.subr.bf16.mxu0 0
        %2132 = vmatpush1.bf16.msra.mxu0 0
        %2133 = vmatprep.subr.bf16.mxu0 0
        %2134 = vmatpush1.bf16.msra.mxu0 0
        %2135 = vmatprep.mubr.bf16.mxu0 0
        %2136 = vmatmul.mubr.bf16.gmra.mrb[0].mxu0 %v2002
        %v2137 = vpop.f32.mrb[0].mxu0
        %v2138 = vadd.f32 %v2054, %v2137
        %v2139 = vpop.f32.mrb[0].mxu0
        %v2140 = vpop.f32.mrb[0].mxu0
        %v2141 = vadd.f32 %v2054, %v2140
        %v2142 = vpop.f32.mrb[0].mxu0
        %2143 = vmatprep.mubr.bf16.mxu0 0
        %2144 = vmatmul.mubr.bf16.gmra.mrb[0].mxu0 %v2003
        %v2145 = vpop.f32.mrb[0].mxu0
        %v2146 = vadd.f32 %v2054, %v2145
        %v2147 = vpop.f32.mrb[0].mxu0
        %v2148 = vpop.f32.mrb[0].mxu0
        %v2149 = vadd.f32 %v2054, %v2148
        %v2150 = vpop.f32.mrb[0].mxu0
        %2151 = vmatprep.mubr.bf16.mxu0 0
        %2152 = vmatmul.mubr.bf16.gmra.mrb[0].mxu0 %v2004
        %v2153 = vpop.f32.mrb[0].mxu0
        %v2154 = vadd.f32 %v2054, %v2153
        %v2155 = vpop.f32.mrb[0].mxu0
        %v2156 = vpop.f32.mrb[0].mxu0
        %v2157 = vadd.f32 %v2054, %v2156
        %v2158 = vpop.f32.mrb[0].mxu0
        %2159 = vmatprep.mubr.bf16.mxu0 0
        %2160 = vmatmul.mubr.bf16.gmra.mrb[0].mxu0 %v2005
        %v2161 = vpop.f32.mrb[0].mxu0
        %v2162 = vadd.f32 %v2054, %v2161
        %v2163 = vpop.f32.mrb[0].mxu0
        %v2164 = vpop.f32.mrb[0].mxu0
        %v2165 = vadd.f32 %v2054, %v2164
        %v2166 = vpop.f32.mrb[0].mxu0
        %2167 = vmatprep.mubr.bf16.mxu0 0
        %2168 = vmatmul.mubr.bf16.gmra.mrb[0].mxu0 %v2006
        %v2169 = vpop.f32.mrb[0].mxu0
        %v2170 = vadd.f32 %v2054, %v2169
        %v2171 = vpop.f32.mrb[0].mxu0
        %v2172 = vpop.f32.mrb[0].mxu0
        %v2173 = vadd.f32 %v2054, %v2172
        %v2174 = vpop.f32.mrb[0].mxu0
        %2175 = vmatprep.mubr.bf16.mxu0 0
        %2176 = vmatmul.mubr.bf16.gmra.mrb[0].mxu0 %v2007
        %v2177 = vpop.f32.mrb[0].mxu0
        %v2178 = vadd.f32 %v2054, %v2177
        %v2179 = vpop.f32.mrb[0].mxu0
        %v2180 = vpop.f32.mrb[0].mxu0
        %v2181 = vadd.f32 %v2054, %v2180
        %v2182 = vpop.f32.mrb[0].mxu0
        %2183 = vmatprep.mubr.bf16.mxu0 0
        %2184 = vmatmul.mubr.bf16.gmra.mrb[0].mxu0 %v2008
        %v2185 = vpop.f32.mrb[0].mxu0
        %v2186 = vadd.f32 %v2054, %v2185
        %v2187 = vpop.f32.mrb[0].mxu0
        %v2188 = vpop.f32.mrb[0].mxu0
        %v2189 = vadd.f32 %v2054, %v2188
        %v2190 = vpop.f32.mrb[0].mxu0
        %2191 = vmatprep.mubr.bf16.mxu0 0
        %2192 = vmatmul.mubr.bf16.gmra.mrb[0].mxu0 %v2009
        %v2193 = vpop.f32.mrb[0].mxu0
        %v2194 = vadd.f32 %v2054, %v2193
        %v2195 = vpop.f32.mrb[0].mxu0
        %v2196 = vpop.f32.mrb[0].mxu0
        %v2197 = vadd.f32 %v2054, %v2196
        %v2198 = vpop.f32.mrb[0].mxu0
        %2199 = vmatprep.mubr.bf16.mxu0 0
        %2200 = vmatmul.mubr.bf16.gmra.mrb[0].mxu0 %v2010
        %v2201 = vpop.f32.mrb[0].mxu0
        %v2202 = vadd.f32 %v2054, %v2201
        %v2203 = vpop.f32.mrb[0].mxu0
        %v2204 = vpop.f32.mrb[0].mxu0
        %v2205 = vadd.f32 %v2054, %v2204
        %v2206 = vpop.f32.mrb[0].mxu0
        %2207 = vmatprep.mubr.bf16.mxu0 0
        %2208 = vmatmul.mubr.bf16.gmra.mrb[0].mxu0 %v2011
        %v2209 = vpop.f32.mrb[0].mxu0
        %v2210 = vadd.f32 %v2054, %v2209
        %v2211 = vpop.f32.mrb[0].mxu0
        %v2212 = vpop.f32.mrb[0].mxu0
        %v2213 = vadd.f32 %v2054, %v2212
        %v2214 = vpop.f32.mrb[0].mxu0
        %2215 = vmatprep.mubr.bf16.mxu0 0
        %2216 = vmatmul.mubr.bf16.gmra.mrb[0].mxu0 %v2012
        %v2217 = vpop.f32.mrb[0].mxu0
        %v2218 = vadd.f32 %v2054, %v2217
        %v2219 = vpop.f32.mrb[0].mxu0
        %v2220 = vpop.f32.mrb[0].mxu0
        %v2221 = vadd.f32 %v2054, %v2220
        %v2222 = vpop.f32.mrb[0].mxu0
        %2223 = vmatprep.mubr.bf16.mxu0 0
        %2224 = vmatmul.mubr.bf16.gmra.mrb[0].mxu0 %v2013
        %v2225 = vpop.f32.mrb[0].mxu0
        %v2226 = vadd.f32 %v2054, %v2225
        %v2227 = vpop.f32.mrb[0].mxu0
        %v2228 = vpop.f32.mrb[0].mxu0
        %v2229 = vadd.f32 %v2054, %v2228
        %v2230 = vpop.f32.mrb[0].mxu0
        %2231 = vmatprep.mubr.bf16.mxu0 0
        %2232 = vmatmul.mubr.bf16.gmra.mrb[0].mxu0 %v2014
        %v2233 = vpop.f32.mrb[0].mxu0
        %v2234 = vadd.f32 %v2054, %v2233
        %v2235 = vpop.f32.mrb[0].mxu0
        %v2236 = vpop.f32.mrb[0].mxu0
        %v2237 = vadd.f32 %v2054, %v2236
        %v2238 = vpop.f32.mrb[0].mxu0
        %2239 = vmatprep.mubr.bf16.mxu0 0
        %2240 = vmatmul.mubr.bf16.gmra.mrb[0].mxu0 %v2015
        %v2241 = vpop.f32.mrb[0].mxu0
        %v2242 = vadd.f32 %v2054, %v2241
        %v2243 = vpop.f32.mrb[0].mxu0
        %v2244 = vpop.f32.mrb[0].mxu0
        %v2245 = vadd.f32 %v2054, %v2244
        %v2246 = vpop.f32.mrb[0].mxu0
        %2247 = vmatprep.mubr.bf16.mxu0 0
        %2248 = vmatmul.mubr.bf16.gmra.mrb[0].mxu0 %v2016
        %v2249 = vpop.f32.mrb[0].mxu0
        %v2250 = vadd.f32 %v2054, %v2249
        %v2251 = vpop.f32.mrb[0].mxu0
        %v2252 = vpop.f32.mrb[0].mxu0
        %v2253 = vadd.f32 %v2054, %v2252
        %v2254 = vpop.f32.mrb[0].mxu0
        %2255 = vmatprep.mubr.bf16.mxu0 0
        %2256 = vmatmul.mubr.bf16.gmra.mrb[0].mxu0 %v2017
        %v2257 = vpop.f32.mrb[0].mxu0
        %v2258 = vadd.f32 %v2054, %v2257
        %v2259 = vpop.f32.mrb[0].mxu0
        %v2260 = vpop.f32.mrb[0].mxu0
        %v2261 = vadd.f32 %v2054, %v2260
        %v2262 = vpop.f32.mrb[0].mxu0
        %2263 = vmatprep.mubr.bf16.mxu0 0
        %2264 = vmatmul.mubr.bf16.gmra.mrb[0].mxu0 %v2018
        %v2265 = vpop.f32.mrb[0].mxu0
        %v2266 = vadd.f32 %v2054, %v2265
        %v2267 = vpop.f32.mrb[0].mxu0
        %v2268 = vpop.f32.mrb[0].mxu0
        %v2269 = vadd.f32 %v2054, %v2268
        %v2270 = vpop.f32.mrb[0].mxu0
        %2271 = vmatprep.mubr.bf16.mxu0 0
        %2272 = vmatmul.mubr.bf16.gmra.mrb[0].mxu0 %v2019
        %v2273 = vpop.f32.mrb[0].mxu0
        %v2274 = vadd.f32 %v2054, %v2273
        %v2275 = vpop.f32.mrb[0].mxu0
        %v2276 = vpop.f32.mrb[0].mxu0
        %v2277 = vadd.f32 %v2054, %v2276
        %v2278 = vpop.f32.mrb[0].mxu0
        %2279 = vmatprep.mubr.bf16.mxu0 0
        %2280 = vmatmul.mubr.bf16.gmra.mrb[0].mxu0 %v2020
        %v2281 = vpop.f32.mrb[0].mxu0
        %v2282 = vadd.f32 %v2054, %v2281
        %v2283 = vpop.f32.mrb[0].mxu0
        %v2284 = vpop.f32.mrb[0].mxu0
        %v2285 = vadd.f32 %v2054, %v2284
        %v2286 = vpop.f32.mrb[0].mxu0
        %2287 = vmatprep.mubr.bf16.mxu0 0
        %2288 = vmatmul.mubr.bf16.gmra.mrb[0].mxu0 %v2021
        %v2289 = vpop.f32.mrb[0].mxu0
        %v2290 = vadd.f32 %v2054, %v2289
        %v2291 = vpop.f32.mrb[0].mxu0
        %v2292 = vpop.f32.mrb[0].mxu0
        %v2293 = vadd.f32 %v2054, %v2292
        %v2294 = vpop.f32.mrb[0].mxu0
        %2295 = vmatprep.mubr.bf16.mxu0 0
        %2296 = vmatmul.mubr.bf16.gmra.mrb[0].mxu0 %v2022
        %v2297 = vpop.f32.mrb[0].mxu0
        %v2298 = vadd.f32 %v2054, %v2297
        %v2299 = vpop.f32.mrb[0].mxu0
        %v2300 = vpop.f32.mrb[0].mxu0
        %v2301 = vadd.f32 %v2054, %v2300
        %v2302 = vpop.f32.mrb[0].mxu0
        %2303 = vmatprep.mubr.bf16.mxu0 0
        %2304 = vmatmul.mubr.bf16.gmra.mrb[0].mxu0 %v2023
        %v2305 = vpop.f32.mrb[0].mxu0
        %v2306 = vadd.f32 %v2054, %v2305
        %v2307 = vpop.f32.mrb[0].mxu0
        %v2308 = vpop.f32.mrb[0].mxu0
        %v2309 = vadd.f32 %v2054, %v2308
        %v2310 = vpop.f32.mrb[0].mxu0
        %2311 = vmatprep.mubr.bf16.mxu0 0
        %2312 = vmatmul.mubr.bf16.gmra.mrb[0].mxu0 %v2024
        %v2313 = vpop.f32.mrb[0].mxu0
        %v2314 = vadd.f32 %v2054, %v2313
        %v2315 = vpop.f32.mrb[0].mxu0
        %v2316 = vpop.f32.mrb[0].mxu0
        %v2317 = vadd.f32 %v2054, %v2316
        %v2318 = vpop.f32.mrb[0].mxu0
        %2319 = vmatprep.mubr.bf16.mxu0 0
        %2320 = vmatmul.mubr.bf16.gmra.mrb[0].mxu0 %v2025
        %v2321 = vpop.f32.mrb[0].mxu0
        %v2322 = vadd.f32 %v2054, %v2321
        %v2323 = vpop.f32.mrb[0].mxu0
        %v2324 = vpop.f32.mrb[0].mxu0
        %v2325 = vadd.f32 %v2054, %v2324
        %v2326 = vpop.f32.mrb[0].mxu0
        %2327 = vmatprep.mubr.bf16.mxu0 0
        %2328 = vmatmul.mubr.bf16.gmra.mrb[0].mxu0 %v2026
        %v2329 = vpop.f32.mrb[0].mxu0
        %v2330 = vadd.f32 %v2054, %v2329
        %v2331 = vpop.f32.mrb[0].mxu0
        %v2332 = vpop.f32.mrb[0].mxu0
        %v2333 = vadd.f32 %v2054, %v2332
        %v2334 = vpop.f32.mrb[0].mxu0
        %2335 = vmatprep.mubr.bf16.mxu0 0
        %2336 = vmatmul.mubr.bf16.gmra.mrb[0].mxu0 %v2027
        %v2337 = vpop.f32.mrb[0].mxu0
        %v2338 = vadd.f32 %v2054, %v2337
        %v2339 = vpop.f32.mrb[0].mxu0
        %v2340 = vpop.f32.mrb[0].mxu0
        %v2341 = vadd.f32 %v2054, %v2340
        %v2342 = vpop.f32.mrb[0].mxu0
        %2343 = vmatprep.mubr.bf16.mxu0 0
        %2344 = vmatmul.mubr.bf16.gmra.mrb[0].mxu0 %v2028
        %v2345 = vpop.f32.mrb[0].mxu0
        %v2346 = vadd.f32 %v2054, %v2345
        %v2347 = vpop.f32.mrb[0].mxu0
        %v2348 = vpop.f32.mrb[0].mxu0
        %v2349 = vadd.f32 %v2054, %v2348
        %v2350 = vpop.f32.mrb[0].mxu0
        %2351 = vmatprep.mubr.bf16.mxu0 0
        %2352 = vmatmul.mubr.bf16.gmra.mrb[0].mxu0 %v2029
        %v2353 = vpop.f32.mrb[0].mxu0
        %v2354 = vadd.f32 %v2054, %v2353
        %v2355 = vpop.f32.mrb[0].mxu0
        %v2356 = vpop.f32.mrb[0].mxu0
        %v2357 = vadd.f32 %v2054, %v2356
        %v2358 = vpop.f32.mrb[0].mxu0
        %2359 = vmatprep.mubr.bf16.mxu0 0
        %2360 = vmatmul.mubr.bf16.gmra.mrb[0].mxu0 %v2030
        %v2361 = vpop.f32.mrb[0].mxu0
        %v2362 = vadd.f32 %v2054, %v2361
        %v2363 = vpop.f32.mrb[0].mxu0
        %v2364 = vpop.f32.mrb[0].mxu0
        %v2365 = vadd.f32 %v2054, %v2364
        %v2366 = vpop.f32.mrb[0].mxu0
        %2367 = vmatprep.mubr.bf16.mxu0 0
        %2368 = vmatmul.mubr.bf16.gmra.mrb[0].mxu0 %v2031
        %v2369 = vpop.f32.mrb[0].mxu0
        %v2370 = vadd.f32 %v2054, %v2369
        %v2371 = vpop.f32.mrb[0].mxu0
        %v2372 = vpop.f32.mrb[0].mxu0
        %v2373 = vadd.f32 %v2054, %v2372
        %v2374 = vpop.f32.mrb[0].mxu0
        %2375 = vmatprep.mubr.bf16.mxu0 0
        %2376 = vmatmul.mubr.bf16.gmra.mrb[0].mxu0 %v2032
        %v2377 = vpop.f32.mrb[0].mxu0
        %v2378 = vadd.f32 %v2054, %v2377
        %v2379 = vpop.f32.mrb[0].mxu0
        %v2380 = vpop.f32.mrb[0].mxu0
        %v2381 = vadd.f32 %v2054, %v2380
        %v2382 = vpop.f32.mrb[0].mxu0
        %2383 = vmatprep.mubr.bf16.mxu0 0
        %2384 = vmatmul.mubr.bf16.gmra.mrb[0].mxu0 %v2033
        %v2385 = vpop.f32.mrb[0].mxu0
        %v2386 = vadd.f32 %v2054, %v2385
        %v2387 = vpop.f32.mrb[0].mxu0
        %v2388 = vpop.f32.mrb[0].mxu0
        %v2389 = vadd.f32 %v2054, %v2388
        %v2390 = vpop.f32.mrb[0].mxu0
        %2391 = vdwg.mxu0
        %v2392 = vmax.f32 %v2138, 0.0
        %v2393 = vmax.f32 %v2141, 0.0
        %v2394 = vmax.f32 %v2146, 0.0
        %v2395 = vmax.f32 %v2149, 0.0
        %v2396 = vmax.f32 %v2154, 0.0
        %v2397 = vmax.f32 %v2157, 0.0
        %v2398 = vmax.f32 %v2162, 0.0
        %v2399 = vmax.f32 %v2165, 0.0
        %v2400 = vmax.f32 %v2170, 0.0
        %v2401 = vmax.f32 %v2173, 0.0
        %v2402 = vmax.f32 %v2178, 0.0
        %v2403 = vmax.f32 %v2181, 0.0
        %v2404 = vmax.f32 %v2186, 0.0
        %v2405 = vmax.f32 %v2189, 0.0
        %v2406 = vmax.f32 %v2194, 0.0
        %v2407 = vmax.f32 %v2197, 0.0
        %v2408 = vmax.f32 %v2202, 0.0
        %v2409 = vmax.f32 %v2205, 0.0
        %v2410 = vmax.f32 %v2210, 0.0
        %v2411 = vmax.f32 %v2213, 0.0
        %v2412 = vmax.f32 %v2218, 0.0
        %v2413 = vmax.f32 %v2221, 0.0
        %v2414 = vmax.f32 %v2226, 0.0
        %v2415 = vmax.f32 %v2229, 0.0
        %v2416 = vmax.f32 %v2234, 0.0
        %v2417 = vmax.f32 %v2237, 0.0
        %v2418 = vmax.f32 %v2242, 0.0
        %v2419 = vmax.f32 %v2245, 0.0
        %v2420 = vmax.f32 %v2250, 0.0
        %v2421 = vmax.f32 %v2253, 0.0
        %v2422 = vmax.f32 %v2258, 0.0
        %v2423 = vmax.f32 %v2261, 0.0
        %v2424 = vmax.f32 %v2266, 0.0
        %v2425 = vmax.f32 %v2269, 0.0
        %v2426 = vmax.f32 %v2274, 0.0
        %v2427 = vmax.f32 %v2277, 0.0
        %v2428 = vmax.f32 %v2282, 0.0
        %v2429 = vmax.f32 %v2285, 0.0
        %v2430 = vmax.f32 %v2290, 0.0
        %v2431 = vmax.f32 %v2293, 0.0
        %v2432 = vmax.f32 %v2298, 0.0
        %v2433 = vmax.f32 %v2301, 0.0
        %v2434 = vmax.f32 %v2306, 0.0
        %v2435 = vmax.f32 %v2309, 0.0
        %v2436 = vmax.f32 %v2314, 0.0
        %v2437 = vmax.f32 %v2317, 0.0
        %v2438 = vmax.f32 %v2322, 0.0
        %v2439 = vmax.f32 %v2325, 0.0
        %v2440 = vmax.f32 %v2330, 0.0
        %v2441 = vmax.f32 %v2333, 0.0
        %v2442 = vmax.f32 %v2338, 0.0
        %v2443 = vmax.f32 %v2341, 0.0
        %v2444 = vmax.f32 %v2346, 0.0
        %v2445 = vmax.f32 %v2349, 0.0
        %v2446 = vmax.f32 %v2354, 0.0
        %v2447 = vmax.f32 %v2357, 0.0
        %v2448 = vmax.f32 %v2362, 0.0
        %v2449 = vmax.f32 %v2365, 0.0
        %v2450 = vmax.f32 %v2370, 0.0
        %v2451 = vmax.f32 %v2373, 0.0
        %v2452 = vmax.f32 %v2378, 0.0
        %v2453 = vmax.f32 %v2381, 0.0
        %v2454 = vmax.f32 %v2386, 0.0
        %v2455 = vmax.f32 %v2389, 0.0
        %v2456 = vld [vmem:[%s4 + $0x4] sm:$0x1]
        %v2457 = vld [vmem:[%s4 + $0x5] sm:$0x1]
        %2458 = vadd.xlane.f32.xlu0 %v2392
        %v2459 = vpop.xlane.xlu0 %2458
        %2460 = vadd.xlane.f32.xlu0 %v2393
        %v2461 = vpop.xlane.xlu0 %2460
        %2462 = vadd.xlane.f32.xlu0 %v2394
        %v2463 = vpop.xlane.xlu0 %2462
        %2464 = vadd.xlane.f32.xlu0 %v2395
        %v2465 = vpop.xlane.xlu0 %2464
        %2466 = vadd.xlane.f32.xlu0 %v2396
        %v2467 = vpop.xlane.xlu0 %2466
        %2468 = vadd.xlane.f32.xlu0 %v2397
        %v2469 = vpop.xlane.xlu0 %2468
        %2470 = vadd.xlane.f32.xlu0 %v2398
        %v2471 = vpop.xlane.xlu0 %2470
        %2472 = vadd.xlane.f32.xlu0 %v2399
        %v2473 = vpop.xlane.xlu0 %2472
        %2474 = vadd.xlane.f32.xlu0 %v2400
        %v2475 = vpop.xlane.xlu0 %2474
        %2476 = vadd.xlane.f32.xlu0 %v2401
        %v2477 = vpop.xlane.xlu0 %2476
        %2478 = vadd.xlane.f32.xlu0 %v2402
        %v2479 = vpop.xlane.xlu0 %2478
        %2480 = vadd.xlane.f32.xlu0 %v2403
        %v2481 = vpop.xlane.xlu0 %2480
        %2482 = vadd.xlane.f32.xlu0 %v2404
        %v2483 = vpop.xlane.xlu0 %2482
        %2484 = vadd.xlane.f32.xlu0 %v2405
        %v2485 = vpop.xlane.xlu0 %2484
        %2486 = vadd.xlane.f32.xlu0 %v2406
        %v2487 = vpop.xlane.xlu0 %2486
        %2488 = vadd.xlane.f32.xlu0 %v2407
        %v2489 = vpop.xlane.xlu0 %2488
        %2490 = vadd.xlane.f32.xlu0 %v2408
        %v2491 = vpop.xlane.xlu0 %2490
        %2492 = vadd.xlane.f32.xlu0 %v2409
        %v2493 = vpop.xlane.xlu0 %2492
        %2494 = vadd.xlane.f32.xlu0 %v2410
        %v2495 = vpop.xlane.xlu0 %2494
        %2496 = vadd.xlane.f32.xlu0 %v2411
        %v2497 = vpop.xlane.xlu0 %2496
        %2498 = vadd.xlane.f32.xlu0 %v2412
        %v2499 = vpop.xlane.xlu0 %2498
        %2500 = vadd.xlane.f32.xlu0 %v2413
        %v2501 = vpop.xlane.xlu0 %2500
        %2502 = vadd.xlane.f32.xlu0 %v2414
        %v2503 = vpop.xlane.xlu0 %2502
        %2504 = vadd.xlane.f32.xlu0 %v2415
        %v2505 = vpop.xlane.xlu0 %2504
        %2506 = vadd.xlane.f32.xlu0 %v2416
        %v2507 = vpop.xlane.xlu0 %2506
        %2508 = vadd.xlane.f32.xlu0 %v2417
        %v2509 = vpop.xlane.xlu0 %2508
        %2510 = vadd.xlane.f32.xlu0 %v2418
        %v2511 = vpop.xlane.xlu0 %2510
        %2512 = vadd.xlane.f32.xlu0 %v2419
        %v2513 = vpop.xlane.xlu0 %2512
        %2514 = vadd.xlane.f32.xlu0 %v2420
        %v2515 = vpop.xlane.xlu0 %2514
        %2516 = vadd.xlane.f32.xlu0 %v2421
        %v2517 = vpop.xlane.xlu0 %2516
        %2518 = vadd.xlane.f32.xlu0 %v2422
        %v2519 = vpop.xlane.xlu0 %2518
        %2520 = vadd.xlane.f32.xlu0 %v2423
        %v2521 = vpop.xlane.xlu0 %2520
        %2522 = vadd.xlane.f32.xlu0 %v2424
        %v2523 = vpop.xlane.xlu0 %2522
        %2524 = vadd.xlane.f32.xlu0 %v2425
        %v2525 = vpop.xlane.xlu0 %2524
        %2526 = vadd.xlane.f32.xlu0 %v2426
        %v2527 = vpop.xlane.xlu0 %2526
        %2528 = vadd.xlane.f32.xlu0 %v2427
        %v2529 = vpop.xlane.xlu0 %2528
        %2530 = vadd.xlane.f32.xlu0 %v2428
        %v2531 = vpop.xlane.xlu0 %2530
        %2532 = vadd.xlane.f32.xlu0 %v2429
        %v2533 = vpop.xlane.xlu0 %2532
        %2534 = vadd.xlane.f32.xlu0 %v2430
        %v2535 = vpop.xlane.xlu0 %2534
        %2536 = vadd.xlane.f32.xlu0 %v2431
        %v2537 = vpop.xlane.xlu0 %2536
        %2538 = vadd.xlane.f32.xlu0 %v2432
        %v2539 = vpop.xlane.xlu0 %2538
        %2540 = vadd.xlane.f32.xlu0 %v2433
        %v2541 = vpop.xlane.xlu0 %2540
        %2542 = vadd.xlane.f32.xlu0 %v2434
        %v2543 = vpop.xlane.xlu0 %2542
        %2544 = vadd.xlane.f32.xlu0 %v2435
        %v2545 = vpop.xlane.xlu0 %2544
        %2546 = vadd.xlane.f32.xlu0 %v2436
        %v2547 = vpop.xlane.xlu0 %2546
        %2548 = vadd.xlane.f32.xlu0 %v2437
        %v2549 = vpop.xlane.xlu0 %2548
        %2550 = vadd.xlane.f32.xlu0 %v2438
        %v2551 = vpop.xlane.xlu0 %2550
        %2552 = vadd.xlane.f32.xlu0 %v2439
        %v2553 = vpop.xlane.xlu0 %2552
        %2554 = vadd.xlane.f32.xlu0 %v2440
        %v2555 = vpop.xlane.xlu0 %2554
        %2556 = vadd.xlane.f32.xlu0 %v2441
        %v2557 = vpop.xlane.xlu0 %2556
        %2558 = vadd.xlane.f32.xlu0 %v2442
        %v2559 = vpop.xlane.xlu0 %2558
        %2560 = vadd.xlane.f32.xlu0 %v2443
        %v2561 = vpop.xlane.xlu0 %2560
        %2562 = vadd.xlane.f32.xlu0 %v2444
        %v2563 = vpop.xlane.xlu0 %2562
        %2564 = vadd.xlane.f32.xlu0 %v2445
        %v2565 = vpop.xlane.xlu0 %2564
        %2566 = vadd.xlane.f32.xlu0 %v2446
        %v2567 = vpop.xlane.xlu0 %2566
        %2568 = vadd.xlane.f32.xlu0 %v2447
        %v2569 = vpop.xlane.xlu0 %2568
        %2570 = vadd.xlane.f32.xlu0 %v2448
        %v2571 = vpop.xlane.xlu0 %2570
        %2572 = vadd.xlane.f32.xlu0 %v2449
        %v2573 = vpop.xlane.xlu0 %2572
        %2574 = vadd.xlane.f32.xlu0 %v2450
        %v2575 = vpop.xlane.xlu0 %2574
        %2576 = vadd.xlane.f32.xlu0 %v2451
        %v2577 = vpop.xlane.xlu0 %2576
        %2578 = vadd.xlane.f32.xlu0 %v2452
        %v2579 = vpop.xlane.xlu0 %2578
        %2580 = vadd.xlane.f32.xlu0 %v2453
        %v2581 = vpop.xlane.xlu0 %2580
        %2582 = vadd.xlane.f32.xlu0 %v2454
        %v2583 = vpop.xlane.xlu0 %2582
        %2584 = vadd.xlane.f32.xlu0 %v2455
        %v2585 = vpop.xlane.xlu0 %2584
        %v2586 = vmul.f32 %v2392, %v2392
        %v2587 = vmul.f32 %v2393, %v2393
        %v2588 = vmul.f32 %v2394, %v2394
        %v2589 = vmul.f32 %v2395, %v2395
        %v2590 = vmul.f32 %v2396, %v2396
        %v2591 = vmul.f32 %v2397, %v2397
        %v2592 = vmul.f32 %v2398, %v2398
        %v2593 = vmul.f32 %v2399, %v2399
        %v2594 = vmul.f32 %v2400, %v2400
        %v2595 = vmul.f32 %v2401, %v2401
        %v2596 = vmul.f32 %v2402, %v2402
        %v2597 = vmul.f32 %v2403, %v2403
        %v2598 = vmul.f32 %v2404, %v2404
        %v2599 = vmul.f32 %v2405, %v2405
        %v2600 = vmul.f32 %v2406, %v2406
        %v2601 = vmul.f32 %v2407, %v2407
        %v2602 = vmul.f32 %v2408, %v2408
        %v2603 = vmul.f32 %v2409, %v2409
        %v2604 = vmul.f32 %v2410, %v2410
        %v2605 = vmul.f32 %v2411, %v2411
        %v2606 = vmul.f32 %v2412, %v2412
        %v2607 = vmul.f32 %v2413, %v2413
        %v2608 = vmul.f32 %v2414, %v2414
        %v2609 = vmul.f32 %v2415, %v2415
        %v2610 = vmul.f32 %v2416, %v2416
        %v2611 = vmul.f32 %v2417, %v2417
        %v2612 = vmul.f32 %v2418, %v2418
        %v2613 = vmul.f32 %v2419, %v2419
        %v2614 = vmul.f32 %v2420, %v2420
        %v2615 = vmul.f32 %v2421, %v2421
        %v2616 = vmul.f32 %v2422, %v2422
        %v2617 = vmul.f32 %v2423, %v2423
        %v2618 = vmul.f32 %v2424, %v2424
        %v2619 = vmul.f32 %v2425, %v2425
        %v2620 = vmul.f32 %v2426, %v2426
        %v2621 = vmul.f32 %v2427, %v2427
        %v2622 = vmul.f32 %v2428, %v2428
        %v2623 = vmul.f32 %v2429, %v2429
        %v2624 = vmul.f32 %v2430, %v2430
        %v2625 = vmul.f32 %v2431, %v2431
        %v2626 = vmul.f32 %v2432, %v2432
        %v2627 = vmul.f32 %v2433, %v2433
        %v2628 = vmul.f32 %v2434, %v2434
        %v2629 = vmul.f32 %v2435, %v2435
        %v2630 = vmul.f32 %v2436, %v2436
        %v2631 = vmul.f32 %v2437, %v2437
        %v2632 = vmul.f32 %v2438, %v2438
        %v2633 = vmul.f32 %v2439, %v2439
        %v2634 = vmul.f32 %v2440, %v2440
        %v2635 = vmul.f32 %v2441, %v2441
        %v2636 = vmul.f32 %v2442, %v2442
        %v2637 = vmul.f32 %v2443, %v2443
        %v2638 = vmul.f32 %v2444, %v2444
        %v2639 = vmul.f32 %v2445, %v2445
        %v2640 = vmul.f32 %v2446, %v2446
        %v2641 = vmul.f32 %v2447, %v2447
        %v2642 = vmul.f32 %v2448, %v2448
        %v2643 = vmul.f32 %v2449, %v2449
        %v2644 = vmul.f32 %v2450, %v2450
        %v2645 = vmul.f32 %v2451, %v2451
        %v2646 = vmul.f32 %v2452, %v2452
        %v2647 = vmul.f32 %v2453, %v2453
        %v2648 = vmul.f32 %v2454, %v2454
        %v2649 = vmul.f32 %v2455, %v2455
        %2650 = vadd.xlane.f32.xlu0 %v2586
        %v2651 = vpop.xlane.xlu0 %2650
        %2652 = vadd.xlane.f32.xlu0 %v2587
        %v2653 = vpop.xlane.xlu0 %2652
        %2654 = vadd.xlane.f32.xlu0 %v2588
        %v2655 = vpop.xlane.xlu0 %2654
        %2656 = vadd.xlane.f32.xlu0 %v2589
        %v2657 = vpop.xlane.xlu0 %2656
        %2658 = vadd.xlane.f32.xlu0 %v2590
        %v2659 = vpop.xlane.xlu0 %2658
        %2660 = vadd.xlane.f32.xlu0 %v2591
        %v2661 = vpop.xlane.xlu0 %2660
        %2662 = vadd.xlane.f32.xlu0 %v2592
        %v2663 = vpop.xlane.xlu0 %2662
        %2664 = vadd.xlane.f32.xlu0 %v2593
        %v2665 = vpop.xlane.xlu0 %2664
        %2666 = vadd.xlane.f32.xlu0 %v2594
        %v2667 = vpop.xlane.xlu0 %2666
        %2668 = vadd.xlane.f32.xlu0 %v2595
        %v2669 = vpop.xlane.xlu0 %2668
        %2670 = vadd.xlane.f32.xlu0 %v2596
        %v2671 = vpop.xlane.xlu0 %2670
        %2672 = vadd.xlane.f32.xlu0 %v2597
        %v2673 = vpop.xlane.xlu0 %2672
        %2674 = vadd.xlane.f32.xlu0 %v2598
        %v2675 = vpop.xlane.xlu0 %2674
        %2676 = vadd.xlane.f32.xlu0 %v2599
        %v2677 = vpop.xlane.xlu0 %2676
        %2678 = vadd.xlane.f32.xlu0 %v2600
        %v2679 = vpop.xlane.xlu0 %2678
        %2680 = vadd.xlane.f32.xlu0 %v2601
        %v2681 = vpop.xlane.xlu0 %2680
        %2682 = vadd.xlane.f32.xlu0 %v2602
        %v2683 = vpop.xlane.xlu0 %2682
        %2684 = vadd.xlane.f32.xlu0 %v2603
        %v2685 = vpop.xlane.xlu0 %2684
        %2686 = vadd.xlane.f32.xlu0 %v2604
        %v2687 = vpop.xlane.xlu0 %2686
        %2688 = vadd.xlane.f32.xlu0 %v2605
        %v2689 = vpop.xlane.xlu0 %2688
        %2690 = vadd.xlane.f32.xlu0 %v2606
        %v2691 = vpop.xlane.xlu0 %2690
        %2692 = vadd.xlane.f32.xlu0 %v2607
        %v2693 = vpop.xlane.xlu0 %2692
        %2694 = vadd.xlane.f32.xlu0 %v2608
        %v2695 = vpop.xlane.xlu0 %2694
        %2696 = vadd.xlane.f32.xlu0 %v2609
        %v2697 = vpop.xlane.xlu0 %2696
        %2698 = vadd.xlane.f32.xlu0 %v2610
        %v2699 = vpop.xlane.xlu0 %2698
        %2700 = vadd.xlane.f32.xlu0 %v2611
        %v2701 = vpop.xlane.xlu0 %2700
        %2702 = vadd.xlane.f32.xlu0 %v2612
        %v2703 = vpop.xlane.xlu0 %2702
        %2704 = vadd.xlane.f32.xlu0 %v2613
        %v2705 = vpop.xlane.xlu0 %2704
        %2706 = vadd.xlane.f32.xlu0 %v2614
        %v2707 = vpop.xlane.xlu0 %2706
        %2708 = vadd.xlane.f32.xlu0 %v2615
        %v2709 = vpop.xlane.xlu0 %2708
        %2710 = vadd.xlane.f32.xlu0 %v2616
        %v2711 = vpop.xlane.xlu0 %2710
        %2712 = vadd.xlane.f32.xlu0 %v2617
        %v2713 = vpop.xlane.xlu0 %2712
        %2714 = vadd.xlane.f32.xlu0 %v2618
        %v2715 = vpop.xlane.xlu0 %2714
        %2716 = vadd.xlane.f32.xlu0 %v2619
        %v2717 = vpop.xlane.xlu0 %2716
        %2718 = vadd.xlane.f32.xlu0 %v2620
        %v2719 = vpop.xlane.xlu0 %2718
        %2720 = vadd.xlane.f32.xlu0 %v2621
        %v2721 = vpop.xlane.xlu0 %2720
        %2722 = vadd.xlane.f32.xlu0 %v2622
        %v2723 = vpop.xlane.xlu0 %2722
        %2724 = vadd.xlane.f32.xlu0 %v2623
        %v2725 = vpop.xlane.xlu0 %2724
        %2726 = vadd.xlane.f32.xlu0 %v2624
        %v2727 = vpop.xlane.xlu0 %2726
        %2728 = vadd.xlane.f32.xlu0 %v2625
        %v2729 = vpop.xlane.xlu0 %2728
        %2730 = vadd.xlane.f32.xlu0 %v2626
        %v2731 = vpop.xlane.xlu0 %2730
        %2732 = vadd.xlane.f32.xlu0 %v2627
        %v2733 = vpop.xlane.xlu0 %2732
        %2734 = vadd.xlane.f32.xlu0 %v2628
        %v2735 = vpop.xlane.xlu0 %2734
        %2736 = vadd.xlane.f32.xlu0 %v2629
        %v2737 = vpop.xlane.xlu0 %2736
        %2738 = vadd.xlane.f32.xlu0 %v2630
        %v2739 = vpop.xlane.xlu0 %2738
        %2740 = vadd.xlane.f32.xlu0 %v2631
        %v2741 = vpop.xlane.xlu0 %2740
        %2742 = vadd.xlane.f32.xlu0 %v2632
        %v2743 = vpop.xlane.xlu0 %2742
        %2744 = vadd.xlane.f32.xlu0 %v2633
        %v2745 = vpop.xlane.xlu0 %2744
        %2746 = vadd.xlane.f32.xlu0 %v2634
        %v2747 = vpop.xlane.xlu0 %2746
        %2748 = vadd.xlane.f32.xlu0 %v2635
        %v2749 = vpop.xlane.xlu0 %2748
        %2750 = vadd.xlane.f32.xlu0 %v2636
        %v2751 = vpop.xlane.xlu0 %2750
        %2752 = vadd.xlane.f32.xlu0 %v2637
        %v2753 = vpop.xlane.xlu0 %2752
        %2754 = vadd.xlane.f32.xlu0 %v2638
        %v2755 = vpop.xlane.xlu0 %2754
        %2756 = vadd.xlane.f32.xlu0 %v2639
        %v2757 = vpop.xlane.xlu0 %2756
        %2758 = vadd.xlane.f32.xlu0 %v2640
        %v2759 = vpop.xlane.xlu0 %2758
        %2760 = vadd.xlane.f32.xlu0 %v2641
        %v2761 = vpop.xlane.xlu0 %2760
        %2762 = vadd.xlane.f32.xlu0 %v2642
        %v2763 = vpop.xlane.xlu0 %2762
        %2764 = vadd.xlane.f32.xlu0 %v2643
        %v2765 = vpop.xlane.xlu0 %2764
        %2766 = vadd.xlane.f32.xlu0 %v2644
        %v2767 = vpop.xlane.xlu0 %2766
        %2768 = vadd.xlane.f32.xlu0 %v2645
        %v2769 = vpop.xlane.xlu0 %2768
        %2770 = vadd.xlane.f32.xlu0 %v2646
        %v2771 = vpop.xlane.xlu0 %2770
        %2772 = vadd.xlane.f32.xlu0 %v2647
        %v2773 = vpop.xlane.xlu0 %2772
        %2774 = vadd.xlane.f32.xlu0 %v2648
        %v2775 = vpop.xlane.xlu0 %2774
        %2776 = vadd.xlane.f32.xlu0 %v2649
        %v2777 = vpop.xlane.xlu0 %2776
        %v2778 = vmul.f32 %v2459, 0.015625
        %v2779 = vmul.f32 %v2461, 0.015625
        %v2780 = vmul.f32 %v2463, 0.015625
        %v2781 = vmul.f32 %v2465, 0.015625
        %v2782 = vmul.f32 %v2467, 0.015625
        %v2783 = vmul.f32 %v2469, 0.015625
        %v2784 = vmul.f32 %v2471, 0.015625
        %v2785 = vmul.f32 %v2473, 0.015625
        %v2786 = vmul.f32 %v2475, 0.015625
        %v2787 = vmul.f32 %v2477, 0.015625
        %v2788 = vmul.f32 %v2479, 0.015625
        %v2789 = vmul.f32 %v2481, 0.015625
        %v2790 = vmul.f32 %v2483, 0.015625
        %v2791 = vmul.f32 %v2485, 0.015625
        %v2792 = vmul.f32 %v2487, 0.015625
        %v2793 = vmul.f32 %v2489, 0.015625
        %v2794 = vmul.f32 %v2491, 0.015625
        %v2795 = vmul.f32 %v2493, 0.015625
        %v2796 = vmul.f32 %v2495, 0.015625
        %v2797 = vmul.f32 %v2497, 0.015625
        %v2798 = vmul.f32 %v2499, 0.015625
        %v2799 = vmul.f32 %v2501, 0.015625
        %v2800 = vmul.f32 %v2503, 0.015625
        %v2801 = vmul.f32 %v2505, 0.015625
        %v2802 = vmul.f32 %v2507, 0.015625
        %v2803 = vmul.f32 %v2509, 0.015625
        %v2804 = vmul.f32 %v2511, 0.015625
        %v2805 = vmul.f32 %v2513, 0.015625
        %v2806 = vmul.f32 %v2515, 0.015625
        %v2807 = vmul.f32 %v2517, 0.015625
        %v2808 = vmul.f32 %v2519, 0.015625
        %v2809 = vmul.f32 %v2521, 0.015625
        %v2810 = vmul.f32 %v2523, 0.015625
        %v2811 = vmul.f32 %v2525, 0.015625
        %v2812 = vmul.f32 %v2527, 0.015625
        %v2813 = vmul.f32 %v2529, 0.015625
        %v2814 = vmul.f32 %v2531, 0.015625
        %v2815 = vmul.f32 %v2533, 0.015625
        %v2816 = vmul.f32 %v2535, 0.015625
        %v2817 = vmul.f32 %v2537, 0.015625
        %v2818 = vmul.f32 %v2539, 0.015625
        %v2819 = vmul.f32 %v2541, 0.015625
        %v2820 = vmul.f32 %v2543, 0.015625
        %v2821 = vmul.f32 %v2545, 0.015625
        %v2822 = vmul.f32 %v2547, 0.015625
        %v2823 = vmul.f32 %v2549, 0.015625
        %v2824 = vmul.f32 %v2551, 0.015625
        %v2825 = vmul.f32 %v2553, 0.015625
        %v2826 = vmul.f32 %v2555, 0.015625
        %v2827 = vmul.f32 %v2557, 0.015625
        %v2828 = vmul.f32 %v2559, 0.015625
        %v2829 = vmul.f32 %v2561, 0.015625
        %v2830 = vmul.f32 %v2563, 0.015625
        %v2831 = vmul.f32 %v2565, 0.015625
        %v2832 = vmul.f32 %v2567, 0.015625
        %v2833 = vmul.f32 %v2569, 0.015625
        %v2834 = vmul.f32 %v2571, 0.015625
        %v2835 = vmul.f32 %v2573, 0.015625
        %v2836 = vmul.f32 %v2575, 0.015625
        %v2837 = vmul.f32 %v2577, 0.015625
        %v2838 = vmul.f32 %v2579, 0.015625
        %v2839 = vmul.f32 %v2581, 0.015625
        %v2840 = vmul.f32 %v2583, 0.015625
        %v2841 = vmul.f32 %v2585, 0.015625
        %v2842 = vmul.f32 %v2651, 0.015625
        %v2843 = vmul.f32 %v2653, 0.015625
        %v2844 = vmul.f32 %v2655, 0.015625
        %v2845 = vmul.f32 %v2657, 0.015625
        %v2846 = vmul.f32 %v2659, 0.015625
        %v2847 = vmul.f32 %v2661, 0.015625
        %v2848 = vmul.f32 %v2663, 0.015625
        %v2849 = vmul.f32 %v2665, 0.015625
        %v2850 = vmul.f32 %v2667, 0.015625
        %v2851 = vmul.f32 %v2669, 0.015625
        %v2852 = vmul.f32 %v2671, 0.015625
        %v2853 = vmul.f32 %v2673, 0.015625
        %v2854 = vmul.f32 %v2675, 0.015625
        %v2855 = vmul.f32 %v2677, 0.015625
        %v2856 = vmul.f32 %v2679, 0.015625
        %v2857 = vmul.f32 %v2681, 0.015625
        %v2858 = vmul.f32 %v2683, 0.015625
        %v2859 = vmul.f32 %v2685, 0.015625
        %v2860 = vmul.f32 %v2687, 0.015625
        %v2861 = vmul.f32 %v2689, 0.015625
        %v2862 = vmul.f32 %v2691, 0.015625
        %v2863 = vmul.f32 %v2693, 0.015625
        %v2864 = vmul.f32 %v2695, 0.015625
        %v2865 = vmul.f32 %v2697, 0.015625
        %v2866 = vmul.f32 %v2699, 0.015625
        %v2867 = vmul.f32 %v2701, 0.015625
        %v2868 = vmul.f32 %v2703, 0.015625
        %v2869 = vmul.f32 %v2705, 0.015625
        %v2870 = vmul.f32 %v2707, 0.015625
        %v2871 = vmul.f32 %v2709, 0.015625
        %v2872 = vmul.f32 %v2711, 0.015625
        %v2873 = vmul.f32 %v2713, 0.015625
        %v2874 = vmul.f32 %v2715, 0.015625
        %v2875 = vmul.f32 %v2717, 0.015625
        %v2876 = vmul.f32 %v2719, 0.015625
        %v2877 = vmul.f32 %v2721, 0.015625
        %v2878 = vmul.f32 %v2723, 0.015625
        %v2879 = vmul.f32 %v2725, 0.015625
        %v2880 = vmul.f32 %v2727, 0.015625
        %v2881 = vmul.f32 %v2729, 0.015625
        %v2882 = vmul.f32 %v2731, 0.015625
        %v2883 = vmul.f32 %v2733, 0.015625
        %v2884 = vmul.f32 %v2735, 0.015625
        %v2885 = vmul.f32 %v2737, 0.015625
        %v2886 = vmul.f32 %v2739, 0.015625
        %v2887 = vmul.f32 %v2741, 0.015625
        %v2888 = vmul.f32 %v2743, 0.015625
        %v2889 = vmul.f32 %v2745, 0.015625
        %v2890 = vmul.f32 %v2747, 0.015625
        %v2891 = vmul.f32 %v2749, 0.015625
        %v2892 = vmul.f32 %v2751, 0.015625
        %v2893 = vmul.f32 %v2753, 0.015625
        %v2894 = vmul.f32 %v2755, 0.015625
        %v2895 = vmul.f32 %v2757, 0.015625
        %v2896 = vmul.f32 %v2759, 0.015625
        %v2897 = vmul.f32 %v2761, 0.015625
        %v2898 = vmul.f32 %v2763, 0.015625
        %v2899 = vmul.f32 %v2765, 0.015625
        %v2900 = vmul.f32 %v2767, 0.015625
        %v2901 = vmul.f32 %v2769, 0.015625
        %v2902 = vmul.f32 %v2771, 0.015625
        %v2903 = vmul.f32 %v2773, 0.015625
        %v2904 = vmul.f32 %v2775, 0.015625
        %v2905 = vmul.f32 %v2777, 0.015625
        %v2906 = vmul.f32 %v2778, %v2778
        %v2907 = vmul.f32 %v2779, %v2779
        %v2908 = vmul.f32 %v2780, %v2780
        %v2909 = vmul.f32 %v2781, %v2781
        %v2910 = vmul.f32 %v2782, %v2782
        %v2911 = vmul.f32 %v2783, %v2783
        %v2912 = vmul.f32 %v2784, %v2784
        %v2913 = vmul.f32 %v2785, %v2785
        %v2914 = vmul.f32 %v2786, %v2786
        %v2915 = vmul.f32 %v2787, %v2787
        %v2916 = vmul.f32 %v2788, %v2788
        %v2917 = vmul.f32 %v2789, %v2789
        %v2918 = vmul.f32 %v2790, %v2790
        %v2919 = vmul.f32 %v2791, %v2791
        %v2920 = vmul.f32 %v2792, %v2792
        %v2921 = vmul.f32 %v2793, %v2793
        %v2922 = vmul.f32 %v2794, %v2794
        %v2923 = vmul.f32 %v2795, %v2795
        %v2924 = vmul.f32 %v2796, %v2796
        %v2925 = vmul.f32 %v2797, %v2797
        %v2926 = vmul.f32 %v2798, %v2798
        %v2927 = vmul.f32 %v2799, %v2799
        %v2928 = vmul.f32 %v2800, %v2800
        %v2929 = vmul.f32 %v2801, %v2801
        %v2930 = vmul.f32 %v2802, %v2802
        %v2931 = vmul.f32 %v2803, %v2803
        %v2932 = vmul.f32 %v2804, %v2804
        %v2933 = vmul.f32 %v2805, %v2805
        %v2934 = vmul.f32 %v2806, %v2806
        %v2935 = vmul.f32 %v2807, %v2807
        %v2936 = vmul.f32 %v2808, %v2808
        %v2937 = vmul.f32 %v2809, %v2809
        %v2938 = vmul.f32 %v2810, %v2810
        %v2939 = vmul.f32 %v2811, %v2811
        %v2940 = vmul.f32 %v2812, %v2812
        %v2941 = vmul.f32 %v2813, %v2813
        %v2942 = vmul.f32 %v2814, %v2814
        %v2943 = vmul.f32 %v2815, %v2815
        %v2944 = vmul.f32 %v2816, %v2816
        %v2945 = vmul.f32 %v2817, %v2817
        %v2946 = vmul.f32 %v2818, %v2818
        %v2947 = vmul.f32 %v2819, %v2819
        %v2948 = vmul.f32 %v2820, %v2820
        %v2949 = vmul.f32 %v2821, %v2821
        %v2950 = vmul.f32 %v2822, %v2822
        %v2951 = vmul.f32 %v2823, %v2823
        %v2952 = vmul.f32 %v2824, %v2824
        %v2953 = vmul.f32 %v2825, %v2825
        %v2954 = vmul.f32 %v2826, %v2826
        %v2955 = vmul.f32 %v2827, %v2827
        %v2956 = vmul.f32 %v2828, %v2828
        %v2957 = vmul.f32 %v2829, %v2829
        %v2958 = vmul.f32 %v2830, %v2830
        %v2959 = vmul.f32 %v2831, %v2831
        %v2960 = vmul.f32 %v2832, %v2832
        %v2961 = vmul.f32 %v2833, %v2833
        %v2962 = vmul.f32 %v2834, %v2834
        %v2963 = vmul.f32 %v2835, %v2835
        %v2964 = vmul.f32 %v2836, %v2836
        %v2965 = vmul.f32 %v2837, %v2837
        %v2966 = vmul.f32 %v2838, %v2838
        %v2967 = vmul.f32 %v2839, %v2839
        %v2968 = vmul.f32 %v2840, %v2840
        %v2969 = vmul.f32 %v2841, %v2841
        %v2970 = vsub.f32 %v2842, %v2906
        %v2971 = vsub.f32 %v2843, %v2907
        %v2972 = vsub.f32 %v2844, %v2908
        %v2973 = vsub.f32 %v2845, %v2909
        %v2974 = vsub.f32 %v2846, %v2910
        %v2975 = vsub.f32 %v2847, %v2911
        %v2976 = vsub.f32 %v2848, %v2912
        %v2977 = vsub.f32 %v2849, %v2913
        %v2978 = vsub.f32 %v2850, %v2914
        %v2979 = vsub.f32 %v2851, %v2915
        %v2980 = vsub.f32 %v2852, %v2916
        %v2981 = vsub.f32 %v2853, %v2917
        %v2982 = vsub.f32 %v2854, %v2918
        %v2983 = vsub.f32 %v2855, %v2919
        %v2984 = vsub.f32 %v2856, %v2920
        %v2985 = vsub.f32 %v2857, %v2921
        %v2986 = vsub.f32 %v2858, %v2922
        %v2987 = vsub.f32 %v2859, %v2923
        %v2988 = vsub.f32 %v2860, %v2924
        %v2989 = vsub.f32 %v2861, %v2925
        %v2990 = vsub.f32 %v2862, %v2926
        %v2991 = vsub.f32 %v2863, %v2927
        %v2992 = vsub.f32 %v2864, %v2928
        %v2993 = vsub.f32 %v2865, %v2929
        %v2994 = vsub.f32 %v2866, %v2930
        %v2995 = vsub.f32 %v2867, %v2931
        %v2996 = vsub.f32 %v2868, %v2932
        %v2997 = vsub.f32 %v2869, %v2933
        %v2998 = vsub.f32 %v2870, %v2934
        %v2999 = vsub.f32 %v2871, %v2935
        %v3000 = vsub.f32 %v2872, %v2936
        %v3001 = vsub.f32 %v2873, %v2937
        %v3002 = vsub.f32 %v2874, %v2938
        %v3003 = vsub.f32 %v2875, %v2939
        %v3004 = vsub.f32 %v2876, %v2940
        %v3005 = vsub.f32 %v2877, %v2941
        %v3006 = vsub.f32 %v2878, %v2942
        %v3007 = vsub.f32 %v2879, %v2943
        %v3008 = vsub.f32 %v2880, %v2944
        %v3009 = vsub.f32 %v2881, %v2945
        %v3010 = vsub.f32 %v2882, %v2946
        %v3011 = vsub.f32 %v2883, %v2947
        %v3012 = vsub.f32 %v2884, %v2948
        %v3013 = vsub.f32 %v2885, %v2949
        %v3014 = vsub.f32 %v2886, %v2950
        %v3015 = vsub.f32 %v2887, %v2951
        %v3016 = vsub.f32 %v2888, %v2952
        %v3017 = vsub.f32 %v2889, %v2953
        %v3018 = vsub.f32 %v2890, %v2954
        %v3019 = vsub.f32 %v2891, %v2955
        %v3020 = vsub.f32 %v2892, %v2956
        %v3021 = vsub.f32 %v2893, %v2957
        %v3022 = vsub.f32 %v2894, %v2958
        %v3023 = vsub.f32 %v2895, %v2959
        %v3024 = vsub.f32 %v2896, %v2960
        %v3025 = vsub.f32 %v2897, %v2961
        %v3026 = vsub.f32 %v2898, %v2962
        %v3027 = vsub.f32 %v2899, %v2963
        %v3028 = vsub.f32 %v2900, %v2964
        %v3029 = vsub.f32 %v2901, %v2965
        %v3030 = vsub.f32 %v2902, %v2966
        %v3031 = vsub.f32 %v2903, %v2967
        %v3032 = vsub.f32 %v2904, %v2968
        %v3033 = vsub.f32 %v2905, %v2969
        %v3034 = vmax.f32 %v2970, 0.0
        %v3035 = vmax.f32 %v2971, 0.0
        %v3036 = vmax.f32 %v2972, 0.0
        %v3037 = vmax.f32 %v2973, 0.0
        %v3038 = vmax.f32 %v2974, 0.0
        %v3039 = vmax.f32 %v2975, 0.0
        %v3040 = vmax.f32 %v2976, 0.0
        %v3041 = vmax.f32 %v2977, 0.0
        %v3042 = vmax.f32 %v2978, 0.0
        %v3043 = vmax.f32 %v2979, 0.0
        %v3044 = vmax.f32 %v2980, 0.0
        %v3045 = vmax.f32 %v2981, 0.0
        %v3046 = vmax.f32 %v2982, 0.0
        %v3047 = vmax.f32 %v2983, 0.0
        %v3048 = vmax.f32 %v2984, 0.0
        %v3049 = vmax.f32 %v2985, 0.0
        %v3050 = vmax.f32 %v2986, 0.0
        %v3051 = vmax.f32 %v2987, 0.0
        %v3052 = vmax.f32 %v2988, 0.0
        %v3053 = vmax.f32 %v2989, 0.0
        %v3054 = vmax.f32 %v2990, 0.0
        %v3055 = vmax.f32 %v2991, 0.0
        %v3056 = vmax.f32 %v2992, 0.0
        %v3057 = vmax.f32 %v2993, 0.0
        %v3058 = vmax.f32 %v2994, 0.0
        %v3059 = vmax.f32 %v2995, 0.0
        %v3060 = vmax.f32 %v2996, 0.0
        %v3061 = vmax.f32 %v2997, 0.0
        %v3062 = vmax.f32 %v2998, 0.0
        %v3063 = vmax.f32 %v2999, 0.0
        %v3064 = vmax.f32 %v3000, 0.0
        %v3065 = vmax.f32 %v3001, 0.0
        %v3066 = vmax.f32 %v3002, 0.0
        %v3067 = vmax.f32 %v3003, 0.0
        %v3068 = vmax.f32 %v3004, 0.0
        %v3069 = vmax.f32 %v3005, 0.0
        %v3070 = vmax.f32 %v3006, 0.0
        %v3071 = vmax.f32 %v3007, 0.0
        %v3072 = vmax.f32 %v3008, 0.0
        %v3073 = vmax.f32 %v3009, 0.0
        %v3074 = vmax.f32 %v3010, 0.0
        %v3075 = vmax.f32 %v3011, 0.0
        %v3076 = vmax.f32 %v3012, 0.0
        %v3077 = vmax.f32 %v3013, 0.0
        %v3078 = vmax.f32 %v3014, 0.0
        %v3079 = vmax.f32 %v3015, 0.0
        %v3080 = vmax.f32 %v3016, 0.0
        %v3081 = vmax.f32 %v3017, 0.0
        %v3082 = vmax.f32 %v3018, 0.0
        %v3083 = vmax.f32 %v3019, 0.0
        %v3084 = vmax.f32 %v3020, 0.0
        %v3085 = vmax.f32 %v3021, 0.0
        %v3086 = vmax.f32 %v3022, 0.0
        %v3087 = vmax.f32 %v3023, 0.0
        %v3088 = vmax.f32 %v3024, 0.0
        %v3089 = vmax.f32 %v3025, 0.0
        %v3090 = vmax.f32 %v3026, 0.0
        %v3091 = vmax.f32 %v3027, 0.0
        %v3092 = vmax.f32 %v3028, 0.0
        %v3093 = vmax.f32 %v3029, 0.0
        %v3094 = vmax.f32 %v3030, 0.0
        %v3095 = vmax.f32 %v3031, 0.0
        %v3096 = vmax.f32 %v3032, 0.0
        %v3097 = vmax.f32 %v3033, 0.0
        %v3098 = vadd.f32 %v3034, 1e-05
        %v3099 = vadd.f32 %v3035, 1e-05
        %v3100 = vadd.f32 %v3036, 1e-05
        %v3101 = vadd.f32 %v3037, 1e-05
        %v3102 = vadd.f32 %v3038, 1e-05
        %v3103 = vadd.f32 %v3039, 1e-05
        %v3104 = vadd.f32 %v3040, 1e-05
        %v3105 = vadd.f32 %v3041, 1e-05
        %v3106 = vadd.f32 %v3042, 1e-05
        %v3107 = vadd.f32 %v3043, 1e-05
        %v3108 = vadd.f32 %v3044, 1e-05
        %v3109 = vadd.f32 %v3045, 1e-05
        %v3110 = vadd.f32 %v3046, 1e-05
        %v3111 = vadd.f32 %v3047, 1e-05
        %v3112 = vadd.f32 %v3048, 1e-05
        %v3113 = vadd.f32 %v3049, 1e-05
        %v3114 = vadd.f32 %v3050, 1e-05
        %v3115 = vadd.f32 %v3051, 1e-05
        %v3116 = vadd.f32 %v3052, 1e-05
        %v3117 = vadd.f32 %v3053, 1e-05
        %v3118 = vadd.f32 %v3054, 1e-05
        %v3119 = vadd.f32 %v3055, 1e-05
        %v3120 = vadd.f32 %v3056, 1e-05
        %v3121 = vadd.f32 %v3057, 1e-05
        %v3122 = vadd.f32 %v3058, 1e-05
        %v3123 = vadd.f32 %v3059, 1e-05
        %v3124 = vadd.f32 %v3060, 1e-05
        %v3125 = vadd.f32 %v3061, 1e-05
        %v3126 = vadd.f32 %v3062, 1e-05
        %v3127 = vadd.f32 %v3063, 1e-05
        %v3128 = vadd.f32 %v3064, 1e-05
        %v3129 = vadd.f32 %v3065, 1e-05
        %v3130 = vadd.f32 %v3066, 1e-05
        %v3131 = vadd.f32 %v3067, 1e-05
        %v3132 = vadd.f32 %v3068, 1e-05
        %v3133 = vadd.f32 %v3069, 1e-05
        %v3134 = vadd.f32 %v3070, 1e-05
        %v3135 = vadd.f32 %v3071, 1e-05
        %v3136 = vadd.f32 %v3072, 1e-05
        %v3137 = vadd.f32 %v3073, 1e-05
        %v3138 = vadd.f32 %v3074, 1e-05
        %v3139 = vadd.f32 %v3075, 1e-05
        %v3140 = vadd.f32 %v3076, 1e-05
        %v3141 = vadd.f32 %v3077, 1e-05
        %v3142 = vadd.f32 %v3078, 1e-05
        %v3143 = vadd.f32 %v3079, 1e-05
        %v3144 = vadd.f32 %v3080, 1e-05
        %v3145 = vadd.f32 %v3081, 1e-05
        %v3146 = vadd.f32 %v3082, 1e-05
        %v3147 = vadd.f32 %v3083, 1e-05
        %v3148 = vadd.f32 %v3084, 1e-05
        %v3149 = vadd.f32 %v3085, 1e-05
        %v3150 = vadd.f32 %v3086, 1e-05
        %v3151 = vadd.f32 %v3087, 1e-05
        %v3152 = vadd.f32 %v3088, 1e-05
        %v3153 = vadd.f32 %v3089, 1e-05
        %v3154 = vadd.f32 %v3090, 1e-05
        %v3155 = vadd.f32 %v3091, 1e-05
        %v3156 = vadd.f32 %v3092, 1e-05
        %v3157 = vadd.f32 %v3093, 1e-05
        %v3158 = vadd.f32 %v3094, 1e-05
        %v3159 = vadd.f32 %v3095, 1e-05
        %v3160 = vadd.f32 %v3096, 1e-05
        %v3161 = vadd.f32 %v3097, 1e-05
        %v3162 = vrsqrt.pop %v3098
        %v3163 = vrsqrt.pop %v3099
        %v3164 = vrsqrt.pop %v3100
        %v3165 = vrsqrt.pop %v3101
        %v3166 = vrsqrt.pop %v3102
        %v3167 = vrsqrt.pop %v3103
        %v3168 = vrsqrt.pop %v3104
        %v3169 = vrsqrt.pop %v3105
        %v3170 = vrsqrt.pop %v3106
        %v3171 = vrsqrt.pop %v3107
        %v3172 = vrsqrt.pop %v3108
        %v3173 = vrsqrt.pop %v3109
        %v3174 = vrsqrt.pop %v3110
        %v3175 = vrsqrt.pop %v3111
        %v3176 = vrsqrt.pop %v3112
        %v3177 = vrsqrt.pop %v3113
        %v3178 = vrsqrt.pop %v3114
        %v3179 = vrsqrt.pop %v3115
        %v3180 = vrsqrt.pop %v3116
        %v3181 = vrsqrt.pop %v3117
        %v3182 = vrsqrt.pop %v3118
        %v3183 = vrsqrt.pop %v3119
        %v3184 = vrsqrt.pop %v3120
        %v3185 = vrsqrt.pop %v3121
        %v3186 = vrsqrt.pop %v3122
        %v3187 = vrsqrt.pop %v3123
        %v3188 = vrsqrt.pop %v3124
        %v3189 = vrsqrt.pop %v3125
        %v3190 = vrsqrt.pop %v3126
        %v3191 = vrsqrt.pop %v3127
        %v3192 = vrsqrt.pop %v3128
        %v3193 = vrsqrt.pop %v3129
        %v3194 = vrsqrt.pop %v3130
        %v3195 = vrsqrt.pop %v3131
        %v3196 = vrsqrt.pop %v3132
        %v3197 = vrsqrt.pop %v3133
        %v3198 = vrsqrt.pop %v3134
        %v3199 = vrsqrt.pop %v3135
        %v3200 = vrsqrt.pop %v3136
        %v3201 = vrsqrt.pop %v3137
        %v3202 = vrsqrt.pop %v3138
        %v3203 = vrsqrt.pop %v3139
        %v3204 = vrsqrt.pop %v3140
        %v3205 = vrsqrt.pop %v3141
        %v3206 = vrsqrt.pop %v3142
        %v3207 = vrsqrt.pop %v3143
        %v3208 = vrsqrt.pop %v3144
        %v3209 = vrsqrt.pop %v3145
        %v3210 = vrsqrt.pop %v3146
        %v3211 = vrsqrt.pop %v3147
        %v3212 = vrsqrt.pop %v3148
        %v3213 = vrsqrt.pop %v3149
        %v3214 = vrsqrt.pop %v3150
        %v3215 = vrsqrt.pop %v3151
        %v3216 = vrsqrt.pop %v3152
        %v3217 = vrsqrt.pop %v3153
        %v3218 = vrsqrt.pop %v3154
        %v3219 = vrsqrt.pop %v3155
        %v3220 = vrsqrt.pop %v3156
        %v3221 = vrsqrt.pop %v3157
        %v3222 = vrsqrt.pop %v3158
        %v3223 = vrsqrt.pop %v3159
        %v3224 = vrsqrt.pop %v3160
        %v3225 = vrsqrt.pop %v3161
        %v3226 = vlaneseq
        %v3227 = vshrl.u32 %v3226, 7
        %v3228 = vsub.s32 0, %v3227
        %v3229 = vrot.slane %v2456, %v3228
        %v3230 = vmul.f32 %v3229, %v3162
        %v3231 = vmul.f32 %v3229, %v3163
        %v3232 = vmul.f32 %v3229, %v3164
        %v3233 = vmul.f32 %v3229, %v3165
        %v3234 = vmul.f32 %v3229, %v3166
        %v3235 = vmul.f32 %v3229, %v3167
        %v3236 = vmul.f32 %v3229, %v3168
        %v3237 = vmul.f32 %v3229, %v3169
        %v3238 = vmul.f32 %v3229, %v3170
        %v3239 = vmul.f32 %v3229, %v3171
        %v3240 = vmul.f32 %v3229, %v3172
        %v3241 = vmul.f32 %v3229, %v3173
        %v3242 = vmul.f32 %v3229, %v3174
        %v3243 = vmul.f32 %v3229, %v3175
        %v3244 = vmul.f32 %v3229, %v3176
        %v3245 = vmul.f32 %v3229, %v3177
        %v3246 = vmul.f32 %v3229, %v3178
        %v3247 = vmul.f32 %v3229, %v3179
        %v3248 = vmul.f32 %v3229, %v3180
        %v3249 = vmul.f32 %v3229, %v3181
        %v3250 = vmul.f32 %v3229, %v3182
        %v3251 = vmul.f32 %v3229, %v3183
        %v3252 = vmul.f32 %v3229, %v3184
        %v3253 = vmul.f32 %v3229, %v3185
        %v3254 = vmul.f32 %v3229, %v3186
        %v3255 = vmul.f32 %v3229, %v3187
        %v3256 = vmul.f32 %v3229, %v3188
        %v3257 = vmul.f32 %v3229, %v3189
        %v3258 = vmul.f32 %v3229, %v3190
        %v3259 = vmul.f32 %v3229, %v3191
        %v3260 = vmul.f32 %v3229, %v3192
        %v3261 = vmul.f32 %v3229, %v3193
        %v3262 = vmul.f32 %v3229, %v3194
        %v3263 = vmul.f32 %v3229, %v3195
        %v3264 = vmul.f32 %v3229, %v3196
        %v3265 = vmul.f32 %v3229, %v3197
        %v3266 = vmul.f32 %v3229, %v3198
        %v3267 = vmul.f32 %v3229, %v3199
        %v3268 = vmul.f32 %v3229, %v3200
        %v3269 = vmul.f32 %v3229, %v3201
        %v3270 = vmul.f32 %v3229, %v3202
        %v3271 = vmul.f32 %v3229, %v3203
        %v3272 = vmul.f32 %v3229, %v3204
        %v3273 = vmul.f32 %v3229, %v3205
        %v3274 = vmul.f32 %v3229, %v3206
        %v3275 = vmul.f32 %v3229, %v3207
        %v3276 = vmul.f32 %v3229, %v3208
        %v3277 = vmul.f32 %v3229, %v3209
        %v3278 = vmul.f32 %v3229, %v3210
        %v3279 = vmul.f32 %v3229, %v3211
        %v3280 = vmul.f32 %v3229, %v3212
        %v3281 = vmul.f32 %v3229, %v3213
        %v3282 = vmul.f32 %v3229, %v3214
        %v3283 = vmul.f32 %v3229, %v3215
        %v3284 = vmul.f32 %v3229, %v3216
        %v3285 = vmul.f32 %v3229, %v3217
        %v3286 = vmul.f32 %v3229, %v3218
        %v3287 = vmul.f32 %v3229, %v3219
        %v3288 = vmul.f32 %v3229, %v3220
        %v3289 = vmul.f32 %v3229, %v3221
        %v3290 = vmul.f32 %v3229, %v3222
        %v3291 = vmul.f32 %v3229, %v3223
        %v3292 = vmul.f32 %v3229, %v3224
        %v3293 = vmul.f32 %v3229, %v3225
        %v3294 = vsub.f32 %v2392, %v2778
        %v3295 = vsub.f32 %v2393, %v2779
        %v3296 = vsub.f32 %v2394, %v2780
        %v3297 = vsub.f32 %v2395, %v2781
        %v3298 = vsub.f32 %v2396, %v2782
        %v3299 = vsub.f32 %v2397, %v2783
        %v3300 = vsub.f32 %v2398, %v2784
        %v3301 = vsub.f32 %v2399, %v2785
        %v3302 = vsub.f32 %v2400, %v2786
        %v3303 = vsub.f32 %v2401, %v2787
        %v3304 = vsub.f32 %v2402, %v2788
        %v3305 = vsub.f32 %v2403, %v2789
        %v3306 = vsub.f32 %v2404, %v2790
        %v3307 = vsub.f32 %v2405, %v2791
        %v3308 = vsub.f32 %v2406, %v2792
        %v3309 = vsub.f32 %v2407, %v2793
        %v3310 = vsub.f32 %v2408, %v2794
        %v3311 = vsub.f32 %v2409, %v2795
        %v3312 = vsub.f32 %v2410, %v2796
        %v3313 = vsub.f32 %v2411, %v2797
        %v3314 = vsub.f32 %v2412, %v2798
        %v3315 = vsub.f32 %v2413, %v2799
        %v3316 = vsub.f32 %v2414, %v2800
        %v3317 = vsub.f32 %v2415, %v2801
        %v3318 = vsub.f32 %v2416, %v2802
        %v3319 = vsub.f32 %v2417, %v2803
        %v3320 = vsub.f32 %v2418, %v2804
        %v3321 = vsub.f32 %v2419, %v2805
        %v3322 = vsub.f32 %v2420, %v2806
        %v3323 = vsub.f32 %v2421, %v2807
        %v3324 = vsub.f32 %v2422, %v2808
        %v3325 = vsub.f32 %v2423, %v2809
        %v3326 = vsub.f32 %v2424, %v2810
        %v3327 = vsub.f32 %v2425, %v2811
        %v3328 = vsub.f32 %v2426, %v2812
        %v3329 = vsub.f32 %v2427, %v2813
        %v3330 = vsub.f32 %v2428, %v2814
        %v3331 = vsub.f32 %v2429, %v2815
        %v3332 = vsub.f32 %v2430, %v2816
        %v3333 = vsub.f32 %v2431, %v2817
        %v3334 = vsub.f32 %v2432, %v2818
        %v3335 = vsub.f32 %v2433, %v2819
        %v3336 = vsub.f32 %v2434, %v2820
        %v3337 = vsub.f32 %v2435, %v2821
        %v3338 = vsub.f32 %v2436, %v2822
        %v3339 = vsub.f32 %v2437, %v2823
        %v3340 = vsub.f32 %v2438, %v2824
        %v3341 = vsub.f32 %v2439, %v2825
        %v3342 = vsub.f32 %v2440, %v2826
        %v3343 = vsub.f32 %v2441, %v2827
        %v3344 = vsub.f32 %v2442, %v2828
        %v3345 = vsub.f32 %v2443, %v2829
        %v3346 = vsub.f32 %v2444, %v2830
        %v3347 = vsub.f32 %v2445, %v2831
        %v3348 = vsub.f32 %v2446, %v2832
        %v3349 = vsub.f32 %v2447, %v2833
        %v3350 = vsub.f32 %v2448, %v2834
        %v3351 = vsub.f32 %v2449, %v2835
        %v3352 = vsub.f32 %v2450, %v2836
        %v3353 = vsub.f32 %v2451, %v2837
        %v3354 = vsub.f32 %v2452, %v2838
        %v3355 = vsub.f32 %v2453, %v2839
        %v3356 = vsub.f32 %v2454, %v2840
        %v3357 = vsub.f32 %v2455, %v2841
        %v3358 = vmul.f32 %v3294, %v3230
        %v3359 = vmul.f32 %v3295, %v3231
        %v3360 = vmul.f32 %v3296, %v3232
        %v3361 = vmul.f32 %v3297, %v3233
        %v3362 = vmul.f32 %v3298, %v3234
        %v3363 = vmul.f32 %v3299, %v3235
        %v3364 = vmul.f32 %v3300, %v3236
        %v3365 = vmul.f32 %v3301, %v3237
        %v3366 = vmul.f32 %v3302, %v3238
        %v3367 = vmul.f32 %v3303, %v3239
        %v3368 = vmul.f32 %v3304, %v3240
        %v3369 = vmul.f32 %v3305, %v3241
        %v3370 = vmul.f32 %v3306, %v3242
        %v3371 = vmul.f32 %v3307, %v3243
        %v3372 = vmul.f32 %v3308, %v3244
        %v3373 = vmul.f32 %v3309, %v3245
        %v3374 = vmul.f32 %v3310, %v3246
        %v3375 = vmul.f32 %v3311, %v3247
        %v3376 = vmul.f32 %v3312, %v3248
        %v3377 = vmul.f32 %v3313, %v3249
        %v3378 = vmul.f32 %v3314, %v3250
        %v3379 = vmul.f32 %v3315, %v3251
        %v3380 = vmul.f32 %v3316, %v3252
        %v3381 = vmul.f32 %v3317, %v3253
        %v3382 = vmul.f32 %v3318, %v3254
        %v3383 = vmul.f32 %v3319, %v3255
        %v3384 = vmul.f32 %v3320, %v3256
        %v3385 = vmul.f32 %v3321, %v3257
        %v3386 = vmul.f32 %v3322, %v3258
        %v3387 = vmul.f32 %v3323, %v3259
        %v3388 = vmul.f32 %v3324, %v3260
        %v3389 = vmul.f32 %v3325, %v3261
        %v3390 = vmul.f32 %v3326, %v3262
        %v3391 = vmul.f32 %v3327, %v3263
        %v3392 = vmul.f32 %v3328, %v3264
        %v3393 = vmul.f32 %v3329, %v3265
        %v3394 = vmul.f32 %v3330, %v3266
        %v3395 = vmul.f32 %v3331, %v3267
        %v3396 = vmul.f32 %v3332, %v3268
        %v3397 = vmul.f32 %v3333, %v3269
        %v3398 = vmul.f32 %v3334, %v3270
        %v3399 = vmul.f32 %v3335, %v3271
        %v3400 = vmul.f32 %v3336, %v3272
        %v3401 = vmul.f32 %v3337, %v3273
        %v3402 = vmul.f32 %v3338, %v3274
        %v3403 = vmul.f32 %v3339, %v3275
        %v3404 = vmul.f32 %v3340, %v3276
        %v3405 = vmul.f32 %v3341, %v3277
        %v3406 = vmul.f32 %v3342, %v3278
        %v3407 = vmul.f32 %v3343, %v3279
        %v3408 = vmul.f32 %v3344, %v3280
        %v3409 = vmul.f32 %v3345, %v3281
        %v3410 = vmul.f32 %v3346, %v3282
        %v3411 = vmul.f32 %v3347, %v3283
        %v3412 = vmul.f32 %v3348, %v3284
        %v3413 = vmul.f32 %v3349, %v3285
        %v3414 = vmul.f32 %v3350, %v3286
        %v3415 = vmul.f32 %v3351, %v3287
        %v3416 = vmul.f32 %v3352, %v3288
        %v3417 = vmul.f32 %v3353, %v3289
        %v3418 = vmul.f32 %v3354, %v3290
        %v3419 = vmul.f32 %v3355, %v3291
        %v3420 = vmul.f32 %v3356, %v3292
        %v3421 = vmul.f32 %v3357, %v3293
        %v3422 = vlaneseq
        %v3423 = vshrl.u32 %v3422, 7
        %v3424 = vsub.s32 0, %v3423
        %v3425 = vrot.slane %v2457, %v3424
        %v3426 = vadd.f32 %v3358, %v3425
        %v3427 = vadd.f32 %v3359, %v3425
        %v3428 = vadd.f32 %v3360, %v3425
        %v3429 = vadd.f32 %v3361, %v3425
        %v3430 = vadd.f32 %v3362, %v3425
        %v3431 = vadd.f32 %v3363, %v3425
        %v3432 = vadd.f32 %v3364, %v3425
        %v3433 = vadd.f32 %v3365, %v3425
        %v3434 = vadd.f32 %v3366, %v3425
        %v3435 = vadd.f32 %v3367, %v3425
        %v3436 = vadd.f32 %v3368, %v3425
        %v3437 = vadd.f32 %v3369, %v3425
        %v3438 = vadd.f32 %v3370, %v3425
        %v3439 = vadd.f32 %v3371, %v3425
        %v3440 = vadd.f32 %v3372, %v3425
        %v3441 = vadd.f32 %v3373, %v3425
        %v3442 = vadd.f32 %v3374, %v3425
        %v3443 = vadd.f32 %v3375, %v3425
        %v3444 = vadd.f32 %v3376, %v3425
        %v3445 = vadd.f32 %v3377, %v3425
        %v3446 = vadd.f32 %v3378, %v3425
        %v3447 = vadd.f32 %v3379, %v3425
        %v3448 = vadd.f32 %v3380, %v3425
        %v3449 = vadd.f32 %v3381, %v3425
        %v3450 = vadd.f32 %v3382, %v3425
        %v3451 = vadd.f32 %v3383, %v3425
        %v3452 = vadd.f32 %v3384, %v3425
        %v3453 = vadd.f32 %v3385, %v3425
        %v3454 = vadd.f32 %v3386, %v3425
        %v3455 = vadd.f32 %v3387, %v3425
        %v3456 = vadd.f32 %v3388, %v3425
        %v3457 = vadd.f32 %v3389, %v3425
        %v3458 = vadd.f32 %v3390, %v3425
        %v3459 = vadd.f32 %v3391, %v3425
        %v3460 = vadd.f32 %v3392, %v3425
        %v3461 = vadd.f32 %v3393, %v3425
        %v3462 = vadd.f32 %v3394, %v3425
        %v3463 = vadd.f32 %v3395, %v3425
        %v3464 = vadd.f32 %v3396, %v3425
        %v3465 = vadd.f32 %v3397, %v3425
        %v3466 = vadd.f32 %v3398, %v3425
        %v3467 = vadd.f32 %v3399, %v3425
        %v3468 = vadd.f32 %v3400, %v3425
        %v3469 = vadd.f32 %v3401, %v3425
        %v3470 = vadd.f32 %v3402, %v3425
        %v3471 = vadd.f32 %v3403, %v3425
        %v3472 = vadd.f32 %v3404, %v3425
        %v3473 = vadd.f32 %v3405, %v3425
        %v3474 = vadd.f32 %v3406, %v3425
        %v3475 = vadd.f32 %v3407, %v3425
        %v3476 = vadd.f32 %v3408, %v3425
        %v3477 = vadd.f32 %v3409, %v3425
        %v3478 = vadd.f32 %v3410, %v3425
        %v3479 = vadd.f32 %v3411, %v3425
        %v3480 = vadd.f32 %v3412, %v3425
        %v3481 = vadd.f32 %v3413, %v3425
        %v3482 = vadd.f32 %v3414, %v3425
        %v3483 = vadd.f32 %v3415, %v3425
        %v3484 = vadd.f32 %v3416, %v3425
        %v3485 = vadd.f32 %v3417, %v3425
        %v3486 = vadd.f32 %v3418, %v3425
        %v3487 = vadd.f32 %v3419, %v3425
        %v3488 = vadd.f32 %v3420, %v3425
        %v3489 = vadd.f32 %v3421, %v3425
        %v3490 = vpack.c.bf16 %v3427, %v3426
        %v3491 = vpack.c.bf16 %v3429, %v3428
        %v3492 = vpack.c.bf16 %v3431, %v3430
        %v3493 = vpack.c.bf16 %v3433, %v3432
        %v3494 = vpack.c.bf16 %v3435, %v3434
        %v3495 = vpack.c.bf16 %v3437, %v3436
        %v3496 = vpack.c.bf16 %v3439, %v3438
        %v3497 = vpack.c.bf16 %v3441, %v3440
        %v3498 = vpack.c.bf16 %v3443, %v3442
        %v3499 = vpack.c.bf16 %v3445, %v3444
        %v3500 = vpack.c.bf16 %v3447, %v3446
        %v3501 = vpack.c.bf16 %v3449, %v3448
        %v3502 = vpack.c.bf16 %v3451, %v3450
        %v3503 = vpack.c.bf16 %v3453, %v3452
        %v3504 = vpack.c.bf16 %v3455, %v3454
        %v3505 = vpack.c.bf16 %v3457, %v3456
        %v3506 = vpack.c.bf16 %v3459, %v3458
        %v3507 = vpack.c.bf16 %v3461, %v3460
        %v3508 = vpack.c.bf16 %v3463, %v3462
        %v3509 = vpack.c.bf16 %v3465, %v3464
        %v3510 = vpack.c.bf16 %v3467, %v3466
        %v3511 = vpack.c.bf16 %v3469, %v3468
        %v3512 = vpack.c.bf16 %v3471, %v3470
        %v3513 = vpack.c.bf16 %v3473, %v3472
        %v3514 = vpack.c.bf16 %v3475, %v3474
        %v3515 = vpack.c.bf16 %v3477, %v3476
        %v3516 = vpack.c.bf16 %v3479, %v3478
        %v3517 = vpack.c.bf16 %v3481, %v3480
        %v3518 = vpack.c.bf16 %v3483, %v3482
        %v3519 = vpack.c.bf16 %v3485, %v3484
        %v3520 = vpack.c.bf16 %v3487, %v3486
        %v3521 = vpack.c.bf16 %v3489, %v3488
        %v3522 = vld [vmem:[#allocation8] sm:$0xf]
        %v3523 = vld [vmem:[#allocation8 + $0x4] sm:$0xf]
        %v3524 = vld [vmem:[#allocation8 + $0x8] sm:$0xf]
        %v3525 = vld [vmem:[#allocation8 + $0xc] sm:$0xf]
        %v3526 = vld [vmem:[#allocation8 + $0x10] sm:$0xf]
        %v3527 = vld [vmem:[#allocation8 + $0x14] sm:$0xf]
        %v3528 = vld [vmem:[#allocation8 + $0x18] sm:$0xf]
        %v3529 = vld [vmem:[#allocation8 + $0x1c] sm:$0xf]
        %v3530 = vld [vmem:[#allocation8 + $0x20] sm:$0xf]
        %v3531 = vld [vmem:[#allocation8 + $0x24] sm:$0xf]
        %v3532 = vld [vmem:[#allocation8 + $0x28] sm:$0xf]
        %v3533 = vld [vmem:[#allocation8 + $0x2c] sm:$0xf]
        %v3534 = vld [vmem:[#allocation8 + $0x30] sm:$0xf]
        %v3535 = vld [vmem:[#allocation8 + $0x34] sm:$0xf]
        %v3536 = vld [vmem:[#allocation8 + $0x38] sm:$0xf]
        %v3537 = vld [vmem:[#allocation8 + $0x3c] sm:$0xf]
        %v3538 = vld [vmem:[%s4 + $0x6] sm:$0x1]
        %v3539 = vlaneseq
        %v3540 = vshrl.u32 %v3539, 7
        %v3541 = vsub.s32 0, %v3540
        %v3542 = vrot.slane %v3538, %v3541
        %v3559 = vunpack.c.l.b16 %v3522
        %v3560 = vunpack.c.l.b16 %v3523
        %v3561 = vunpack.c.l.b16 %v3524
        %v3562 = vunpack.c.l.b16 %v3525
        %v3563 = vunpack.c.l.b16 %v3526
        %v3564 = vunpack.c.l.b16 %v3527
        %v3565 = vunpack.c.l.b16 %v3528
        %v3566 = vunpack.c.l.b16 %v3529
        %v3567 = vunpack.c.l.b16 %v3530
        %v3568 = vunpack.c.l.b16 %v3531
        %v3569 = vunpack.c.l.b16 %v3532
        %v3570 = vunpack.c.l.b16 %v3533
        %v3571 = vunpack.c.l.b16 %v3534
        %v3572 = vunpack.c.l.b16 %v3535
        %v3573 = vunpack.c.l.b16 %v3536
        %v3574 = vunpack.c.l.b16 %v3537
        %v3575 = vpack.c.b16 %v3560, %v3559
        %v3576 = vpack.c.b16 %v3562, %v3561
        %v3577 = vpack.c.b16 %v3564, %v3563
        %v3578 = vpack.c.b16 %v3566, %v3565
        %v3579 = vpack.c.b16 %v3568, %v3567
        %v3580 = vpack.c.b16 %v3570, %v3569
        %v3581 = vpack.c.b16 %v3572, %v3571
        %v3582 = vpack.c.b16 %v3574, %v3573
        %3591 = vmatprep.subr.bf16.mxu0 0
        %3592 = vmatpush1.bf16.msra.mxu0 %v3575
        %3593 = vmatprep.subr.bf16.mxu0 0
        %3594 = vmatpush1.bf16.msra.mxu0 %v3576
        %3595 = vmatprep.subr.bf16.mxu0 0
        %3596 = vmatpush1.bf16.msra.mxu0 %v3577
        %3597 = vmatprep.subr.bf16.mxu0 0
        %3598 = vmatpush1.bf16.msra.mxu0 %v3578
        %3599 = vmatprep.subr.bf16.mxu0 0
        %3600 = vmatpush1.bf16.msra.mxu0 %v3579
        %3601 = vmatprep.subr.bf16.mxu0 0
        %3602 = vmatpush1.bf16.msra.mxu0 %v3580
        %3603 = vmatprep.subr.bf16.mxu0 0
        %3604 = vmatpush1.bf16.msra.mxu0 %v3581
        %3605 = vmatprep.subr.bf16.mxu0 0
        %3606 = vmatpush1.bf16.msra.mxu0 %v3582
        %3607 = vmatprep.subr.bf16.mxu0 0
        %3608 = vmatpush1.bf16.msra.mxu0 0
        %3609 = vmatprep.subr.bf16.mxu0 0
        %3610 = vmatpush1.bf16.msra.mxu0 0
        %3611 = vmatprep.subr.bf16.mxu0 0
        %3612 = vmatpush1.bf16.msra.mxu0 0
        %3613 = vmatprep.subr.bf16.mxu0 0
        %3614 = vmatpush1.bf16.msra.mxu0 0
        %3615 = vmatprep.subr.bf16.mxu0 0
        %3616 = vmatpush1.bf16.msra.mxu0 0
        %3617 = vmatprep.subr.bf16.mxu0 0
        %3618 = vmatpush1.bf16.msra.mxu0 0
        %3619 = vmatprep.subr.bf16.mxu0 0
        %3620 = vmatpush1.bf16.msra.mxu0 0
        %3621 = vmatprep.subr.bf16.mxu0 0
        %3622 = vmatpush1.bf16.msra.mxu0 0
        %3623 = vmatprep.mubr.bf16.mxu0 0
        %3624 = vmatmul.mubr.bf16.gmra.mrb[0].mxu0 %v3490
        %v3625 = vpop.f32.mrb[0].mxu0
        %v3626 = vadd.f32 %v3542, %v3625
        %v3627 = vpop.f32.mrb[0].mxu0
        %v3628 = vpop.f32.mrb[0].mxu0
        %v3629 = vadd.f32 %v3542, %v3628
        %v3630 = vpop.f32.mrb[0].mxu0
        %3631 = vmatprep.mubr.bf16.mxu0 0
        %3632 = vmatmul.mubr.bf16.gmra.mrb[0].mxu0 %v3491
        %v3633 = vpop.f32.mrb[0].mxu0
        %v3634 = vadd.f32 %v3542, %v3633
        %v3635 = vpop.f32.mrb[0].mxu0
        %v3636 = vpop.f32.mrb[0].mxu0
        %v3637 = vadd.f32 %v3542, %v3636
        %v3638 = vpop.f32.mrb[0].mxu0
        %3639 = vmatprep.mubr.bf16.mxu0 0
        %3640 = vmatmul.mubr.bf16.gmra.mrb[0].mxu0 %v3492
        %v3641 = vpop.f32.mrb[0].mxu0
        %v3642 = vadd.f32 %v3542, %v3641
        %v3643 = vpop.f32.mrb[0].mxu0
        %v3644 = vpop.f32.mrb[0].mxu0
        %v3645 = vadd.f32 %v3542, %v3644
        %v3646 = vpop.f32.mrb[0].mxu0
        %3647 = vmatprep.mubr.bf16.mxu0 0
        %3648 = vmatmul.mubr.bf16.gmra.mrb[0].mxu0 %v3493
        %v3649 = vpop.f32.mrb[0].mxu0
        %v3650 = vadd.f32 %v3542, %v3649
        %v3651 = vpop.f32.mrb[0].mxu0
        %v3652 = vpop.f32.mrb[0].mxu0
        %v3653 = vadd.f32 %v3542, %v3652
        %v3654 = vpop.f32.mrb[0].mxu0
        %3655 = vmatprep.mubr.bf16.mxu0 0
        %3656 = vmatmul.mubr.bf16.gmra.mrb[0].mxu0 %v3494
        %v3657 = vpop.f32.mrb[0].mxu0
        %v3658 = vadd.f32 %v3542, %v3657
        %v3659 = vpop.f32.mrb[0].mxu0
        %v3660 = vpop.f32.mrb[0].mxu0
        %v3661 = vadd.f32 %v3542, %v3660
        %v3662 = vpop.f32.mrb[0].mxu0
        %3663 = vmatprep.mubr.bf16.mxu0 0
        %3664 = vmatmul.mubr.bf16.gmra.mrb[0].mxu0 %v3495
        %v3665 = vpop.f32.mrb[0].mxu0
        %v3666 = vadd.f32 %v3542, %v3665
        %v3667 = vpop.f32.mrb[0].mxu0
        %v3668 = vpop.f32.mrb[0].mxu0
        %v3669 = vadd.f32 %v3542, %v3668
        %v3670 = vpop.f32.mrb[0].mxu0
        %3671 = vmatprep.mubr.bf16.mxu0 0
        %3672 = vmatmul.mubr.bf16.gmra.mrb[0].mxu0 %v3496
        %v3673 = vpop.f32.mrb[0].mxu0
        %v3674 = vadd.f32 %v3542, %v3673
        %v3675 = vpop.f32.mrb[0].mxu0
        %v3676 = vpop.f32.mrb[0].mxu0
        %v3677 = vadd.f32 %v3542, %v3676
        %v3678 = vpop.f32.mrb[0].mxu0
        %3679 = vmatprep.mubr.bf16.mxu0 0
        %3680 = vmatmul.mubr.bf16.gmra.mrb[0].mxu0 %v3497
        %v3681 = vpop.f32.mrb[0].mxu0
        %v3682 = vadd.f32 %v3542, %v3681
        %v3683 = vpop.f32.mrb[0].mxu0
        %v3684 = vpop.f32.mrb[0].mxu0
        %v3685 = vadd.f32 %v3542, %v3684
        %v3686 = vpop.f32.mrb[0].mxu0
        %3687 = vmatprep.mubr.bf16.mxu0 0
        %3688 = vmatmul.mubr.bf16.gmra.mrb[0].mxu0 %v3498
        %v3689 = vpop.f32.mrb[0].mxu0
        %v3690 = vadd.f32 %v3542, %v3689
        %v3691 = vpop.f32.mrb[0].mxu0
        %v3692 = vpop.f32.mrb[0].mxu0
        %v3693 = vadd.f32 %v3542, %v3692
        %v3694 = vpop.f32.mrb[0].mxu0
        %3695 = vmatprep.mubr.bf16.mxu0 0
        %3696 = vmatmul.mubr.bf16.gmra.mrb[0].mxu0 %v3499
        %v3697 = vpop.f32.mrb[0].mxu0
        %v3698 = vadd.f32 %v3542, %v3697
        %v3699 = vpop.f32.mrb[0].mxu0
        %v3700 = vpop.f32.mrb[0].mxu0
        %v3701 = vadd.f32 %v3542, %v3700
        %v3702 = vpop.f32.mrb[0].mxu0
        %3703 = vmatprep.mubr.bf16.mxu0 0
        %3704 = vmatmul.mubr.bf16.gmra.mrb[0].mxu0 %v3500
        %v3705 = vpop.f32.mrb[0].mxu0
        %v3706 = vadd.f32 %v3542, %v3705
        %v3707 = vpop.f32.mrb[0].mxu0
        %v3708 = vpop.f32.mrb[0].mxu0
        %v3709 = vadd.f32 %v3542, %v3708
        %v3710 = vpop.f32.mrb[0].mxu0
        %3711 = vmatprep.mubr.bf16.mxu0 0
        %3712 = vmatmul.mubr.bf16.gmra.mrb[0].mxu0 %v3501
        %v3713 = vpop.f32.mrb[0].mxu0
        %v3714 = vadd.f32 %v3542, %v3713
        %v3715 = vpop.f32.mrb[0].mxu0
        %v3716 = vpop.f32.mrb[0].mxu0
        %v3717 = vadd.f32 %v3542, %v3716
        %v3718 = vpop.f32.mrb[0].mxu0
        %3719 = vmatprep.mubr.bf16.mxu0 0
        %3720 = vmatmul.mubr.bf16.gmra.mrb[0].mxu0 %v3502
        %v3721 = vpop.f32.mrb[0].mxu0
        %v3722 = vadd.f32 %v3542, %v3721
        %v3723 = vpop.f32.mrb[0].mxu0
        %v3724 = vpop.f32.mrb[0].mxu0
        %v3725 = vadd.f32 %v3542, %v3724
        %v3726 = vpop.f32.mrb[0].mxu0
        %3727 = vmatprep.mubr.bf16.mxu0 0
        %3728 = vmatmul.mubr.bf16.gmra.mrb[0].mxu0 %v3503
        %v3729 = vpop.f32.mrb[0].mxu0
        %v3730 = vadd.f32 %v3542, %v3729
        %v3731 = vpop.f32.mrb[0].mxu0
        %v3732 = vpop.f32.mrb[0].mxu0
        %v3733 = vadd.f32 %v3542, %v3732
        %v3734 = vpop.f32.mrb[0].mxu0
        %3735 = vmatprep.mubr.bf16.mxu0 0
        %3736 = vmatmul.mubr.bf16.gmra.mrb[0].mxu0 %v3504
        %v3737 = vpop.f32.mrb[0].mxu0
        %v3738 = vadd.f32 %v3542, %v3737
        %v3739 = vpop.f32.mrb[0].mxu0
        %v3740 = vpop.f32.mrb[0].mxu0
        %v3741 = vadd.f32 %v3542, %v3740
        %v3742 = vpop.f32.mrb[0].mxu0
        %3743 = vmatprep.mubr.bf16.mxu0 0
        %3744 = vmatmul.mubr.bf16.gmra.mrb[0].mxu0 %v3505
        %v3745 = vpop.f32.mrb[0].mxu0
        %v3746 = vadd.f32 %v3542, %v3745
        %v3747 = vpop.f32.mrb[0].mxu0
        %v3748 = vpop.f32.mrb[0].mxu0
        %v3749 = vadd.f32 %v3542, %v3748
        %v3750 = vpop.f32.mrb[0].mxu0
        %3751 = vmatprep.mubr.bf16.mxu0 0
        %3752 = vmatmul.mubr.bf16.gmra.mrb[0].mxu0 %v3506
        %v3753 = vpop.f32.mrb[0].mxu0
        %v3754 = vadd.f32 %v3542, %v3753
        %v3755 = vpop.f32.mrb[0].mxu0
        %v3756 = vpop.f32.mrb[0].mxu0
        %v3757 = vadd.f32 %v3542, %v3756
        %v3758 = vpop.f32.mrb[0].mxu0
        %3759 = vmatprep.mubr.bf16.mxu0 0
        %3760 = vmatmul.mubr.bf16.gmra.mrb[0].mxu0 %v3507
        %v3761 = vpop.f32.mrb[0].mxu0
        %v3762 = vadd.f32 %v3542, %v3761
        %v3763 = vpop.f32.mrb[0].mxu0
        %v3764 = vpop.f32.mrb[0].mxu0
        %v3765 = vadd.f32 %v3542, %v3764
        %v3766 = vpop.f32.mrb[0].mxu0
        %3767 = vmatprep.mubr.bf16.mxu0 0
        %3768 = vmatmul.mubr.bf16.gmra.mrb[0].mxu0 %v3508
        %v3769 = vpop.f32.mrb[0].mxu0
        %v3770 = vadd.f32 %v3542, %v3769
        %v3771 = vpop.f32.mrb[0].mxu0
        %v3772 = vpop.f32.mrb[0].mxu0
        %v3773 = vadd.f32 %v3542, %v3772
        %v3774 = vpop.f32.mrb[0].mxu0
        %3775 = vmatprep.mubr.bf16.mxu0 0
        %3776 = vmatmul.mubr.bf16.gmra.mrb[0].mxu0 %v3509
        %v3777 = vpop.f32.mrb[0].mxu0
        %v3778 = vadd.f32 %v3542, %v3777
        %v3779 = vpop.f32.mrb[0].mxu0
        %v3780 = vpop.f32.mrb[0].mxu0
        %v3781 = vadd.f32 %v3542, %v3780
        %v3782 = vpop.f32.mrb[0].mxu0
        %3783 = vmatprep.mubr.bf16.mxu0 0
        %3784 = vmatmul.mubr.bf16.gmra.mrb[0].mxu0 %v3510
        %v3785 = vpop.f32.mrb[0].mxu0
        %v3786 = vadd.f32 %v3542, %v3785
        %v3787 = vpop.f32.mrb[0].mxu0
        %v3788 = vpop.f32.mrb[0].mxu0
        %v3789 = vadd.f32 %v3542, %v3788
        %v3790 = vpop.f32.mrb[0].mxu0
        %3791 = vmatprep.mubr.bf16.mxu0 0
        %3792 = vmatmul.mubr.bf16.gmra.mrb[0].mxu0 %v3511
        %v3793 = vpop.f32.mrb[0].mxu0
        %v3794 = vadd.f32 %v3542, %v3793
        %v3795 = vpop.f32.mrb[0].mxu0
        %v3796 = vpop.f32.mrb[0].mxu0
        %v3797 = vadd.f32 %v3542, %v3796
        %v3798 = vpop.f32.mrb[0].mxu0
        %3799 = vmatprep.mubr.bf16.mxu0 0
        %3800 = vmatmul.mubr.bf16.gmra.mrb[0].mxu0 %v3512
        %v3801 = vpop.f32.mrb[0].mxu0
        %v3802 = vadd.f32 %v3542, %v3801
        %v3803 = vpop.f32.mrb[0].mxu0
        %v3804 = vpop.f32.mrb[0].mxu0
        %v3805 = vadd.f32 %v3542, %v3804
        %v3806 = vpop.f32.mrb[0].mxu0
        %3807 = vmatprep.mubr.bf16.mxu0 0
        %3808 = vmatmul.mubr.bf16.gmra.mrb[0].mxu0 %v3513
        %v3809 = vpop.f32.mrb[0].mxu0
        %v3810 = vadd.f32 %v3542, %v3809
        %v3811 = vpop.f32.mrb[0].mxu0
        %v3812 = vpop.f32.mrb[0].mxu0
        %v3813 = vadd.f32 %v3542, %v3812
        %v3814 = vpop.f32.mrb[0].mxu0
        %3815 = vmatprep.mubr.bf16.mxu0 0
        %3816 = vmatmul.mubr.bf16.gmra.mrb[0].mxu0 %v3514
        %v3817 = vpop.f32.mrb[0].mxu0
        %v3818 = vadd.f32 %v3542, %v3817
        %v3819 = vpop.f32.mrb[0].mxu0
        %v3820 = vpop.f32.mrb[0].mxu0
        %v3821 = vadd.f32 %v3542, %v3820
        %v3822 = vpop.f32.mrb[0].mxu0
        %3823 = vmatprep.mubr.bf16.mxu0 0
        %3824 = vmatmul.mubr.bf16.gmra.mrb[0].mxu0 %v3515
        %v3825 = vpop.f32.mrb[0].mxu0
        %v3826 = vadd.f32 %v3542, %v3825
        %v3827 = vpop.f32.mrb[0].mxu0
        %v3828 = vpop.f32.mrb[0].mxu0
        %v3829 = vadd.f32 %v3542, %v3828
        %v3830 = vpop.f32.mrb[0].mxu0
        %3831 = vmatprep.mubr.bf16.mxu0 0
        %3832 = vmatmul.mubr.bf16.gmra.mrb[0].mxu0 %v3516
        %v3833 = vpop.f32.mrb[0].mxu0
        %v3834 = vadd.f32 %v3542, %v3833
        %v3835 = vpop.f32.mrb[0].mxu0
        %v3836 = vpop.f32.mrb[0].mxu0
        %v3837 = vadd.f32 %v3542, %v3836
        %v3838 = vpop.f32.mrb[0].mxu0
        %3839 = vmatprep.mubr.bf16.mxu0 0
        %3840 = vmatmul.mubr.bf16.gmra.mrb[0].mxu0 %v3517
        %v3841 = vpop.f32.mrb[0].mxu0
        %v3842 = vadd.f32 %v3542, %v3841
        %v3843 = vpop.f32.mrb[0].mxu0
        %v3844 = vpop.f32.mrb[0].mxu0
        %v3845 = vadd.f32 %v3542, %v3844
        %v3846 = vpop.f32.mrb[0].mxu0
        %3847 = vmatprep.mubr.bf16.mxu0 0
        %3848 = vmatmul.mubr.bf16.gmra.mrb[0].mxu0 %v3518
        %v3849 = vpop.f32.mrb[0].mxu0
        %v3850 = vadd.f32 %v3542, %v3849
        %v3851 = vpop.f32.mrb[0].mxu0
        %v3852 = vpop.f32.mrb[0].mxu0
        %v3853 = vadd.f32 %v3542, %v3852
        %v3854 = vpop.f32.mrb[0].mxu0
        %3855 = vmatprep.mubr.bf16.mxu0 0
        %3856 = vmatmul.mubr.bf16.gmra.mrb[0].mxu0 %v3519
        %v3857 = vpop.f32.mrb[0].mxu0
        %v3858 = vadd.f32 %v3542, %v3857
        %v3859 = vpop.f32.mrb[0].mxu0
        %v3860 = vpop.f32.mrb[0].mxu0
        %v3861 = vadd.f32 %v3542, %v3860
        %v3862 = vpop.f32.mrb[0].mxu0
        %3863 = vmatprep.mubr.bf16.mxu0 0
        %3864 = vmatmul.mubr.bf16.gmra.mrb[0].mxu0 %v3520
        %v3865 = vpop.f32.mrb[0].mxu0
        %v3866 = vadd.f32 %v3542, %v3865
        %v3867 = vpop.f32.mrb[0].mxu0
        %v3868 = vpop.f32.mrb[0].mxu0
        %v3869 = vadd.f32 %v3542, %v3868
        %v3870 = vpop.f32.mrb[0].mxu0
        %3871 = vmatprep.mubr.bf16.mxu0 0
        %3872 = vmatmul.mubr.bf16.gmra.mrb[0].mxu0 %v3521
        %v3873 = vpop.f32.mrb[0].mxu0
        %v3874 = vadd.f32 %v3542, %v3873
        %v3875 = vpop.f32.mrb[0].mxu0
        %v3876 = vpop.f32.mrb[0].mxu0
        %v3877 = vadd.f32 %v3542, %v3876
        %v3878 = vpop.f32.mrb[0].mxu0
        %3879 = vdwg.mxu0
        %v3880 = vpack.c.bf16 %v3629, %v3626
        %v3881 = vpack.c.bf16 %v3637, %v3634
        %v3882 = vpack.c.bf16 %v3645, %v3642
        %v3883 = vpack.c.bf16 %v3653, %v3650
        %v3884 = vpack.c.bf16 %v3661, %v3658
        %v3885 = vpack.c.bf16 %v3669, %v3666
        %v3886 = vpack.c.bf16 %v3677, %v3674
        %v3887 = vpack.c.bf16 %v3685, %v3682
        %v3888 = vpack.c.bf16 %v3693, %v3690
        %v3889 = vpack.c.bf16 %v3701, %v3698
        %v3890 = vpack.c.bf16 %v3709, %v3706
        %v3891 = vpack.c.bf16 %v3717, %v3714
        %v3892 = vpack.c.bf16 %v3725, %v3722
        %v3893 = vpack.c.bf16 %v3733, %v3730
        %v3894 = vpack.c.bf16 %v3741, %v3738
        %v3895 = vpack.c.bf16 %v3749, %v3746
        %v3896 = vpack.c.bf16 %v3757, %v3754
        %v3897 = vpack.c.bf16 %v3765, %v3762
        %v3898 = vpack.c.bf16 %v3773, %v3770
        %v3899 = vpack.c.bf16 %v3781, %v3778
        %v3900 = vpack.c.bf16 %v3789, %v3786
        %v3901 = vpack.c.bf16 %v3797, %v3794
        %v3902 = vpack.c.bf16 %v3805, %v3802
        %v3903 = vpack.c.bf16 %v3813, %v3810
        %v3904 = vpack.c.bf16 %v3821, %v3818
        %v3905 = vpack.c.bf16 %v3829, %v3826
        %v3906 = vpack.c.bf16 %v3837, %v3834
        %v3907 = vpack.c.bf16 %v3845, %v3842
        %v3908 = vpack.c.bf16 %v3853, %v3850
        %v3909 = vpack.c.bf16 %v3861, %v3858
        %v3910 = vpack.c.bf16 %v3869, %v3866
        %v3911 = vpack.c.bf16 %v3877, %v3874
        %v3944 = vunpack.c.l.b16 %v3880
        %v3945 = vunpack.c.h.b16 %v3880
        %v3946 = vunpack.c.l.b16 %v3881
        %v3947 = vunpack.c.h.b16 %v3881
        %v3948 = vunpack.c.l.b16 %v3882
        %v3949 = vunpack.c.h.b16 %v3882
        %v3950 = vunpack.c.l.b16 %v3883
        %v3951 = vunpack.c.h.b16 %v3883
        %v3952 = vunpack.c.l.b16 %v3884
        %v3953 = vunpack.c.h.b16 %v3884
        %v3954 = vunpack.c.l.b16 %v3885
        %v3955 = vunpack.c.h.b16 %v3885
        %v3956 = vunpack.c.l.b16 %v3886
        %v3957 = vunpack.c.h.b16 %v3886
        %v3958 = vunpack.c.l.b16 %v3887
        %v3959 = vunpack.c.h.b16 %v3887
        %v3960 = vunpack.c.l.b16 %v3888
        %v3961 = vunpack.c.h.b16 %v3888
        %v3962 = vunpack.c.l.b16 %v3889
        %v3963 = vunpack.c.h.b16 %v3889
        %v3964 = vunpack.c.l.b16 %v3890
        %v3965 = vunpack.c.h.b16 %v3890
        %v3966 = vunpack.c.l.b16 %v3891
        %v3967 = vunpack.c.h.b16 %v3891
        %v3968 = vunpack.c.l.b16 %v3892
        %v3969 = vunpack.c.h.b16 %v3892
        %v3970 = vunpack.c.l.b16 %v3893
        %v3971 = vunpack.c.h.b16 %v3893
        %v3972 = vunpack.c.l.b16 %v3894
        %v3973 = vunpack.c.h.b16 %v3894
        %v3974 = vunpack.c.l.b16 %v3895
        %v3975 = vunpack.c.h.b16 %v3895
        %v3976 = vunpack.c.l.b16 %v3896
        %v3977 = vunpack.c.h.b16 %v3896
        %v3978 = vunpack.c.l.b16 %v3897
        %v3979 = vunpack.c.h.b16 %v3897
        %v3980 = vunpack.c.l.b16 %v3898
        %v3981 = vunpack.c.h.b16 %v3898
        %v3982 = vunpack.c.l.b16 %v3899
        %v3983 = vunpack.c.h.b16 %v3899
        %v3984 = vunpack.c.l.b16 %v3900
        %v3985 = vunpack.c.h.b16 %v3900
        %v3986 = vunpack.c.l.b16 %v3901
        %v3987 = vunpack.c.h.b16 %v3901
        %v3988 = vunpack.c.l.b16 %v3902
        %v3989 = vunpack.c.h.b16 %v3902
        %v3990 = vunpack.c.l.b16 %v3903
        %v3991 = vunpack.c.h.b16 %v3903
        %v3992 = vunpack.c.l.b16 %v3904
        %v3993 = vunpack.c.h.b16 %v3904
        %v3994 = vunpack.c.l.b16 %v3905
        %v3995 = vunpack.c.h.b16 %v3905
        %v3996 = vunpack.c.l.b16 %v3906
        %v3997 = vunpack.c.h.b16 %v3906
        %v3998 = vunpack.c.l.b16 %v3907
        %v3999 = vunpack.c.h.b16 %v3907
        %v4000 = vunpack.c.l.b16 %v3908
        %v4001 = vunpack.c.h.b16 %v3908
        %v4002 = vunpack.c.l.b16 %v3909
        %v4003 = vunpack.c.h.b16 %v3909
        %v4004 = vunpack.c.l.b16 %v3910
        %v4005 = vunpack.c.h.b16 %v3910
        %v4006 = vunpack.c.l.b16 %v3911
        %v4007 = vunpack.c.h.b16 %v3911
        %v4008 = vpack.c.b16 %v3944, %v3944
        %v4009 = vpack.c.b16 %v3945, %v3945
        %v4010 = vpack.c.b16 %v3946, %v3946
        %v4011 = vpack.c.b16 %v3947, %v3947
        %v4012 = vpack.c.b16 %v3948, %v3948
        %v4013 = vpack.c.b16 %v3949, %v3949
        %v4014 = vpack.c.b16 %v3950, %v3950
        %v4015 = vpack.c.b16 %v3951, %v3951
        %v4016 = vpack.c.b16 %v3952, %v3952
        %v4017 = vpack.c.b16 %v3953, %v3953
        %v4018 = vpack.c.b16 %v3954, %v3954
        %v4019 = vpack.c.b16 %v3955, %v3955
        %v4020 = vpack.c.b16 %v3956, %v3956
        %v4021 = vpack.c.b16 %v3957, %v3957
        %v4022 = vpack.c.b16 %v3958, %v3958
        %v4023 = vpack.c.b16 %v3959, %v3959
        %v4024 = vpack.c.b16 %v3960, %v3960
        %v4025 = vpack.c.b16 %v3961, %v3961
        %v4026 = vpack.c.b16 %v3962, %v3962
        %v4027 = vpack.c.b16 %v3963, %v3963
        %v4028 = vpack.c.b16 %v3964, %v3964
        %v4029 = vpack.c.b16 %v3965, %v3965
        %v4030 = vpack.c.b16 %v3966, %v3966
        %v4031 = vpack.c.b16 %v3967, %v3967
        %v4032 = vpack.c.b16 %v3968, %v3968
        %v4033 = vpack.c.b16 %v3969, %v3969
        %v4034 = vpack.c.b16 %v3970, %v3970
        %v4035 = vpack.c.b16 %v3971, %v3971
        %v4036 = vpack.c.b16 %v3972, %v3972
        %v4037 = vpack.c.b16 %v3973, %v3973
        %v4038 = vpack.c.b16 %v3974, %v3974
        %v4039 = vpack.c.b16 %v3975, %v3975
        %v4040 = vpack.c.b16 %v3976, %v3976
        %v4041 = vpack.c.b16 %v3977, %v3977
        %v4042 = vpack.c.b16 %v3978, %v3978
        %v4043 = vpack.c.b16 %v3979, %v3979
        %v4044 = vpack.c.b16 %v3980, %v3980
        %v4045 = vpack.c.b16 %v3981, %v3981
        %v4046 = vpack.c.b16 %v3982, %v3982
        %v4047 = vpack.c.b16 %v3983, %v3983
        %v4048 = vpack.c.b16 %v3984, %v3984
        %v4049 = vpack.c.b16 %v3985, %v3985
        %v4050 = vpack.c.b16 %v3986, %v3986
        %v4051 = vpack.c.b16 %v3987, %v3987
        %v4052 = vpack.c.b16 %v3988, %v3988
        %v4053 = vpack.c.b16 %v3989, %v3989
        %v4054 = vpack.c.b16 %v3990, %v3990
        %v4055 = vpack.c.b16 %v3991, %v3991
        %v4056 = vpack.c.b16 %v3992, %v3992
        %v4057 = vpack.c.b16 %v3993, %v3993
        %v4058 = vpack.c.b16 %v3994, %v3994
        %v4059 = vpack.c.b16 %v3995, %v3995
        %v4060 = vpack.c.b16 %v3996, %v3996
        %v4061 = vpack.c.b16 %v3997, %v3997
        %v4062 = vpack.c.b16 %v3998, %v3998
        %v4063 = vpack.c.b16 %v3999, %v3999
        %v4064 = vpack.c.b16 %v4000, %v4000
        %v4065 = vpack.c.b16 %v4001, %v4001
        %v4066 = vpack.c.b16 %v4002, %v4002
        %v4067 = vpack.c.b16 %v4003, %v4003
        %v4068 = vpack.c.b16 %v4004, %v4004
        %v4069 = vpack.c.b16 %v4005, %v4005
        %v4070 = vpack.c.b16 %v4006, %v4006
        %v4071 = vpack.c.b16 %v4007, %v4007
        %4136 = vst [vmem:[%s286] sm:$0xf] %v4008
        %4137 = vst [vmem:[%s286 + $0x4] sm:$0xf] %v4009
        %4138 = vst [vmem:[%s286 + $0x8] sm:$0xf] %v4010
        %4139 = vst [vmem:[%s286 + $0xc] sm:$0xf] %v4011
        %4140 = vst [vmem:[%s286 + $0x10] sm:$0xf] %v4012
        %4141 = vst [vmem:[%s286 + $0x14] sm:$0xf] %v4013
        %4142 = vst [vmem:[%s286 + $0x18] sm:$0xf] %v4014
        %4143 = vst [vmem:[%s286 + $0x1c] sm:$0xf] %v4015
        %4144 = vst [vmem:[%s286 + $0x20] sm:$0xf] %v4016
        %4145 = vst [vmem:[%s286 + $0x24] sm:$0xf] %v4017
        %4146 = vst [vmem:[%s286 + $0x28] sm:$0xf] %v4018
        %4147 = vst [vmem:[%s286 + $0x2c] sm:$0xf] %v4019
        %4148 = vst [vmem:[%s286 + $0x30] sm:$0xf] %v4020
        %4149 = vst [vmem:[%s286 + $0x34] sm:$0xf] %v4021
        %4150 = vst [vmem:[%s286 + $0x38] sm:$0xf] %v4022
        %4151 = vst [vmem:[%s286 + $0x3c] sm:$0xf] %v4023
        %4152 = vst [vmem:[%s286 + $0x40] sm:$0xf] %v4024
        %4153 = vst [vmem:[%s286 + $0x44] sm:$0xf] %v4025
        %4154 = vst [vmem:[%s286 + $0x48] sm:$0xf] %v4026
        %4155 = vst [vmem:[%s286 + $0x4c] sm:$0xf] %v4027
        %4156 = vst [vmem:[%s286 + $0x50] sm:$0xf] %v4028
        %4157 = vst [vmem:[%s286 + $0x54] sm:$0xf] %v4029
        %4158 = vst [vmem:[%s286 + $0x58] sm:$0xf] %v4030
        %4159 = vst [vmem:[%s286 + $0x5c] sm:$0xf] %v4031
        %4160 = vst [vmem:[%s286 + $0x60] sm:$0xf] %v4032
        %4161 = vst [vmem:[%s286 + $0x64] sm:$0xf] %v4033
        %4162 = vst [vmem:[%s286 + $0x68] sm:$0xf] %v4034
        %4163 = vst [vmem:[%s286 + $0x6c] sm:$0xf] %v4035
        %4164 = vst [vmem:[%s286 + $0x70] sm:$0xf] %v4036
        %4165 = vst [vmem:[%s286 + $0x74] sm:$0xf] %v4037
        %4166 = vst [vmem:[%s286 + $0x78] sm:$0xf] %v4038
        %4167 = vst [vmem:[%s286 + $0x7c] sm:$0xf] %v4039
        %4168 = vst [vmem:[%s286 + $0x80] sm:$0xf] %v4040
        %4169 = vst [vmem:[%s286 + $0x84] sm:$0xf] %v4041
        %4170 = vst [vmem:[%s286 + $0x88] sm:$0xf] %v4042
        %4171 = vst [vmem:[%s286 + $0x8c] sm:$0xf] %v4043
        %4172 = vst [vmem:[%s286 + $0x90] sm:$0xf] %v4044
        %4173 = vst [vmem:[%s286 + $0x94] sm:$0xf] %v4045
        %4174 = vst [vmem:[%s286 + $0x98] sm:$0xf] %v4046
        %4175 = vst [vmem:[%s286 + $0x9c] sm:$0xf] %v4047
        %4176 = vst [vmem:[%s286 + $0xa0] sm:$0xf] %v4048
        %4177 = vst [vmem:[%s286 + $0xa4] sm:$0xf] %v4049
        %4178 = vst [vmem:[%s286 + $0xa8] sm:$0xf] %v4050
        %4179 = vst [vmem:[%s286 + $0xac] sm:$0xf] %v4051
        %4180 = vst [vmem:[%s286 + $0xb0] sm:$0xf] %v4052
        %4181 = vst [vmem:[%s286 + $0xb4] sm:$0xf] %v4053
        %4182 = vst [vmem:[%s286 + $0xb8] sm:$0xf] %v4054
        %4183 = vst [vmem:[%s286 + $0xbc] sm:$0xf] %v4055
        %4184 = vst [vmem:[%s286 + $0xc0] sm:$0xf] %v4056
        %4185 = vst [vmem:[%s286 + $0xc4] sm:$0xf] %v4057
        %4186 = vst [vmem:[%s286 + $0xc8] sm:$0xf] %v4058
        %4187 = vst [vmem:[%s286 + $0xcc] sm:$0xf] %v4059
        %4188 = vst [vmem:[%s286 + $0xd0] sm:$0xf] %v4060
        %4189 = vst [vmem:[%s286 + $0xd4] sm:$0xf] %v4061
        %4190 = vst [vmem:[%s286 + $0xd8] sm:$0xf] %v4062
        %4191 = vst [vmem:[%s286 + $0xdc] sm:$0xf] %v4063
        %4192 = vst [vmem:[%s286 + $0xe0] sm:$0xf] %v4064
        %4193 = vst [vmem:[%s286 + $0xe4] sm:$0xf] %v4065
        %4194 = vst [vmem:[%s286 + $0xe8] sm:$0xf] %v4066
        %4195 = vst [vmem:[%s286 + $0xec] sm:$0xf] %v4067
        %4196 = vst [vmem:[%s286 + $0xf0] sm:$0xf] %v4068
        %4197 = vst [vmem:[%s286 + $0xf4] sm:$0xf] %v4069
        %4198 = vst [vmem:[%s286 + $0xf8] sm:$0xf] %v4070
        %4199 = vst [vmem:[%s286 + $0xfc] sm:$0xf] %v4071
        %s4200 = sand.u32 %s142, 1
        %s4201 = scalar_lea.sflag [#allocation4], %s4200
        %s4202 = sand.u32 %s142, 1
        %s4203 = smul.addr %s4202, 256
        %s4204 = scalar_lea.vmem [#allocation10], %s4203
        // Predicated region
        $region57: #{tpu_custom_call.1} parent=39 // pred_check
          %p4205 = pneg %p152
        $region58: #{tpu_custom_call.1} parent=39 // pred_check_branch
          %4207 = sbr.rel (%p4205) target = $region60
        $region59: #{tpu_custom_call.1} parent=39 // pred_region
          %s4208 = smul.u32 64, %s24
          %s4210 = ssub.s32 4096, 4096
          %4211 = vsyncadd %s4201, %s4210
          %s4212 = smul.addr %s4208, 64
          %s4213 = scalar_lea.hbm %s5, %s4212
          %s4214 = sshll.u32 %s4204, 4
          %s4215 = int_to_ptr.vmem [resolvable:$true] %s4214
          %4220 = dma.vmem_to_hbm [thread:$0]  %s4215, 4096, %s4213, %s4201, 64, 64, 4
        $region60: #{tpu_custom_call.1} parent=39 // pred_fallthru
          _
      $region40: #{tpu_custom_call.1} parent=5 // pred_fallthru
        _
      %p4221 = scmp.le.s32.totalorder 2, %s19
      // Predicated region
      $region61: #{tpu_custom_call.1} parent=5 // pred_check
        %p4222 = pneg %p4221
      $region62: #{tpu_custom_call.1} parent=5 // pred_check_branch
        %4224 = sbr.rel (%p4222) target = $region64
      $region63: #{tpu_custom_call.1} parent=5 // pred_region
        %s4225 = ssub.s32 %s19, 2
        // Predicated region
        $region65: #{tpu_custom_call.1} parent=63 // pred_check
          %p4226 = pneg %p158
        $region66: #{tpu_custom_call.1} parent=63 // pred_check_branch
          %4228 = sbr.rel (%p4226) target = $region68
        $region67: #{tpu_custom_call.1} parent=63 // pred_region
          %s4229 = sand.u32 %s143, 1
          %s4230 = scalar_lea.sflag [#allocation4], %s4229
          %s4231 = sand.u32 %s143, 1
          %s4232 = smul.addr %s4231, 256
          %s4233 = scalar_lea.vmem [#allocation10], %s4232
          %4234 = dma.done %s4230, 4096
        $region68: #{tpu_custom_call.1} parent=63 // pred_fallthru
          _
      $region64: #{tpu_custom_call.1} parent=5 // pred_fallthru
        _
    $region6: #{tpu_custom_call.1} parent=1 // loop_footer
      %s23 = sadd.s32 1, %s19
    $region7: #{tpu_custom_call.1} parent=1 // loop_footer_branch
      %18 = sbr.rel target = $region3
    $region8: #{tpu_custom_call.1} parent=1 // loop_exit
      _
    %4235 = vsyncpa [#allocation3], 1
    %s4236 = scalar_lea.sflag [#allocation3], 1
    %4237 = vsyncpa %s4236, 1
    %4238 = vsyncpa [#allocation6], 1
    %4239 = vsyncpa [#allocation9], 1
    %4240 = vsyncpa [#allocation4], 1
    %s4241 = scalar_lea.sflag [#allocation4], 1
    %4242 = vsyncpa %s4241, 1

</llo_original>
